<compile_context>
chip_gen: v7x
topology: tpu7x:2x2x1
jax: 0.10.0
libtpu: 0.0.40
codegen_flags: <defaults>
</compile_context>

<pallas_src>
import numpy as np
import jax
import jax.numpy as jnp
from jax.experimental import pallas as pl
from jax.experimental.pallas import tpu as pltpu


# ----------------------------------------------------------------------------
# GRU cell update from precomputed gate pre-activations (PyTorch semantics)
#   gi = x @ W_ih + b_ih     (input gates,  order [r, z, n])
#   gh = h @ W_hh + b_hh     (hidden gates, order [r, z, n])
# ----------------------------------------------------------------------------
def _gru_from_gates(gi, gh, h):
    H = h.shape[-1]
    i_r, i_z, i_n = gi[:, :H], gi[:, H:2 * H], gi[:, 2 * H:]
    h_r, h_z, h_n = gh[:, :H], gh[:, H:2 * H], gh[:, 2 * H:]
    r = jax.nn.sigmoid(i_r + h_r)
    z = jax.nn.sigmoid(i_z + h_z)
    n = jnp.tanh(i_n + r * h_n)
    return (1.0 - z) * n + z * h


# ----------------------------------------------------------------------------
# single fused kernel: encoder GRU -> attention decoder GRU -> vocab projection
# ----------------------------------------------------------------------------
def seq2seq_fused_kernel(vlen_ref,                       # scalar prefetch (SMEM): (B,) int32
                         enc_emb_ref, dec_emb_ref,
                         enc_w_ih_ref, enc_w_hh_ref, enc_b_ih_ref, enc_b_hh_ref,
                         wk_ref, wv_ref,
                         dec_w_hq_ref, dec_w_ih_ctx_ref, dec_w_ih_emb_ref,
                         dec_b_ih_ref, dec_b_hh_ref,
                         wout_ref, bout_ref,
                         out_ref, keys_ref, hfin_ref,
                         enc_gi_scr, dec_gi_scr, pkeys_scr, hs_scr):
    B, Tenc, E = enc_emb_ref.shape
    Tdec = dec_emb_ref.shape[1]
    H = enc_w_hh_ref.shape[0]
    f32 = jnp.float32
    mxu_t = enc_w_ih_ref.dtype           # bf16 on v6e/v7x (f32 also supported)

    # --- time-batched input-gate projections: one MXU matmul each, results
    #     staged in VMEM scratch so the loops read per-step ref slices --------
    enc_gi_scr[...] = (
        jnp.dot(enc_emb_ref[...].reshape(B * Tenc, E), enc_w_ih_ref[...],
                preferred_element_type=f32)
        + enc_b_ih_ref[...]).reshape(B, Tenc, 3 * H)
    dec_gi_scr[...] = (
        jnp.dot(dec_emb_ref[...].reshape(B * Tdec, E), dec_w_ih_emb_ref[...],
                preferred_element_type=f32)
        + dec_b_ih_ref[...]).reshape(B, Tdec, 3 * H)

    # --- encoder GRU recurrence (static unroll: Tenc is small & compile-time) -
    # TODO(synk): use lax.fori_loop(unroll=2..4) + pl.ds for long sequences.
    e_whh = enc_w_hh_ref[...]
    e_bhh = enc_b_hh_ref[...]
    h = jnp.zeros((B, H), f32)
    for t in range(Tenc):
        gh = jnp.dot(h.astype(mxu_t), e_whh, preferred_element_type=f32) + e_bhh
        h = _gru_from_gates(enc_gi_scr[:, t, :], gh, h)
        keys_ref[:, t, :] = h             # encoder outputs == attention keys/values

    # --- loop-invariant decoder prep ------------------------------------------
    # key projection (keys @ W_k) computed once for all decoder steps
    pkeys_scr[...] = jnp.dot(
        keys_ref[...].reshape(B * Tenc, H).astype(mxu_t), wk_ref[...],
        preferred_element_type=f32).reshape(B, Tenc, H)

    # additive softmax mask from int32 valid lengths held in SMEM
    # (d2l masked_softmax semantics: -1e6 fill -> uniform attention if len==0)
    row = jax.lax.broadcasted_iota(jnp.int32, (B, Tenc), 0)
    pos = jax.lax.broadcasted_iota(jnp.int32, (B, Tenc), 1)
    vl = jnp.zeros((B, Tenc), jnp.int32)
    for b in range(B):                                   # B is tiny & static
        vl = jnp.where(row == b, vlen_ref[b], vl)
    bias = jnp.where(pos < vl, 0.0, -1e6).astype(f32)    # (B, Tenc)

    # hoisted broadcast of the additive-attention scoring vector w_v
    wv_b = jnp.broadcast_to(wv_ref[...].reshape(1, 1, H), (B, Tenc, H))

    w_hq = dec_w_hq_ref[...]              # fused [W_q | W_hh], (H, 4H = 128 lanes)
    w_ctx = dec_w_ih_ctx_ref[...]
    d_bhh = dec_b_hh_ref[...]

    # --- decoder: additive attention + GRU per step ---------------------------
    for t in range(Tdec):
        # ONE h-dependent MXU matmul per step: [q | gh] = h @ [W_q | W_hh]
        hq = jnp.dot(h.astype(mxu_t), w_hq, preferred_element_type=f32)  # (B, 4H)
        q = hq[:, :H]
        gh = hq[:, H:] + d_bhh

        # AdditiveAttention: w_v . tanh(W_q q + W_k k)  (W_k k precomputed)
        feats = jnp.tanh(pkeys_scr[...] + q[:, None, :])                 # (B,Tenc,H)
        scores = jnp.sum(feats * wv_b, axis=-1) + bias                   # (B,Tenc)
        scores = scores - jnp.max(scores, axis=-1, keepdims=True)
        e = jnp.exp(scores)
        attn = e * pl.reciprocal(jnp.sum(e, axis=-1, keepdims=True), approx=True)

        # context vector as an MXU contraction (was VPU mult + XLU reduce)
        ctx = jnp.einsum('bqt,bth->bqh', attn[:, None, :], keys_ref[...],
                         preferred_element_type=f32)[:, 0, :]            # (B, H)

        # GRU input = concat(context, embedded token) -> split matmuls;
        # the embedding part (+ b_ih) was precomputed into dec_gi_scr.
        gi = (jnp.dot(ctx.astype(mxu_t), w_ctx, preferred_element_type=f32)
              + dec_gi_scr[:, t, :])
        h = _gru_from_gates(gi, gh, h)
        hs_scr[:, t, :] = h

    hfin_ref[...] = h

    # --- batched vocab projection: one (B*Tdec, H) @ (H, VP) matmul, where
    #     VP is the vocab axis padded to a multiple of 128 -> unmasked stores.
    out_ref[...] = (jnp.dot(hs_scr[...].reshape(B * Tdec, H).astype(mxu_t),
                            wout_ref[...], preferred_element_type=f32)
                    + bout_ref[...])
    # TODO(synk): for production vocabs tile this matmul over V with its own
    #             "parallel" grid axis instead of keeping full logits in VMEM.


def run_seq2seq(enc_emb, dec_emb, vlen_i32, p):
    B, Tenc, E = enc_emb.shape
    Tdec = dec_emb.shape[1]
    H = p["enc_w_hh"].shape[0]
    V = p["w_out"].shape[1]
    VP = ((V + 127) // 128) * 128        # lane-pad vocab axis for dense stores

    # fused decoder h-weights: one matmul yields both q and the hidden gates
    dec_w_hq = jnp.concatenate([p["w_q"], p["dec_w_hh"]], axis=1)      # (H, 4H)
    w_out_p = jnp.zeros((H, VP), p["w_out"].dtype).at[:, :V].set(p["w_out"])
    b_out_p = jnp.zeros((1, VP), jnp.float32).at[:, :V].set(
        p["b_out"].astype(jnp.float32))

    def full(shape):
        rank = len(shape)

        def idx(i, vlen):                 # scalar-prefetch ref passed positionally
            return (0,) * rank

        return pl.BlockSpec(shape, idx)

    out_p, keys, hfin = pl.pallas_call(
        seq2seq_fused_kernel,
        out_shape=(jax.ShapeDtypeStruct((B * Tdec, VP), jnp.float32),
                   jax.ShapeDtypeStruct((B, Tenc, H), jnp.float32),
                   jax.ShapeDtypeStruct((B, H), jnp.float32)),
        grid_spec=pltpu.PrefetchScalarGridSpec(
            num_scalar_prefetch=1, grid=(1,),
            in_specs=[full((B, Tenc, E)), full((B, Tdec, E)),
                      full((E, 3 * H)), full((H, 3 * H)),
                      full((1, 3 * H)), full((1, 3 * H)),
                      full((H, H)), full((1, H)),
                      full((H, 4 * H)), full((H, 3 * H)), full((E, 3 * H)),
                      full((1, 3 * H)), full((1, 3 * H)),
                      full((H, VP)), full((1, VP))],
            out_specs=[full((B * Tdec, VP)), full((B, Tenc, H)), full((B, H))],
            scratch_shapes=[pltpu.VMEM((B, Tenc, 3 * H), jnp.float32),   # enc_gi
                            pltpu.VMEM((B, Tdec, 3 * H), jnp.float32),   # dec_gi
                            pltpu.VMEM((B, Tenc, H), jnp.float32),       # pkeys
                            pltpu.VMEM((B, Tdec, H), jnp.float32)]),     # dec hs
        compiler_params=pltpu.CompilerParams(
            dimension_semantics=("arbitrary",),
            vmem_limit_bytes=32 * 1024 * 1024),
    )(vlen_i32,
      enc_emb, dec_emb,
      p["enc_w_ih"], p["enc_w_hh"], p["enc_b_ih"], p["enc_b_hh"],
      p["w_k"], p["w_v"],
      dec_w_hq, p["dec_w_ih_ctx"], p["dec_w_ih_emb"],
      p["dec_b_ih"], p["dec_b_hh"],
      w_out_p, b_out_p)
    return out_p, keys, hfin


# ----------------------------------------------------------------------------
# full EncoderDecoder.forward (glue: embedding lookups + un-padding only)
# ----------------------------------------------------------------------------
def encoder_decoder_forward(enc_tokens, dec_tokens, enc_valid_lens, p):
    enc_emb = jnp.take(p["enc_emb"], enc_tokens, axis=0)      # (B, Tenc, E)
    dec_emb = jnp.take(p["dec_emb"], dec_tokens, axis=0)      # (B, Tdec, E)
    out_p, keys, h_fin = run_seq2seq(enc_emb, dec_emb,
                                     enc_valid_lens.astype(jnp.int32), p)
    B, Tdec = dec_tokens.shape
    V = p["w_out"].shape[1]
    out = out_p[:, :V].reshape(B, Tdec, V)                    # strip vocab pad
    # decoder state = [enc_outputs (B,Tenc,H), hidden_state, enc_valid_lens]
    return out, (keys, h_fin, enc_valid_lens)


# ----------------------------------------------------------------------------
# pure-JAX reference (d2l semantics, f32 math on the same stored weights)
# ----------------------------------------------------------------------------
def reference_forward(enc_tokens, dec_tokens, valid_lens, p):
    f32 = jnp.float32
    q = {k: v.astype(f32) for k, v in p.items()}
    B = enc_tokens.shape[0]
    H = q["enc_w_hh"].shape[0]
    enc_x = jnp.transpose(jnp.take(q["enc_emb"], enc_tokens, axis=0), (1, 0, 2))

    def gru(h, gi, w_hh, b_hh):
        gh = h @ w_hh + b_hh
        i_r, i_z, i_n = jnp.split(gi, 3, axis=-1)
        h_r, h_z, h_n = jnp.split(gh, 3, axis=-1)
        r = jax.nn.sigmoid(i_r + h_r)
        z = jax.nn.sigmoid(i_z + h_z)
        n = jnp.tanh(i_n + r * h_n)
        return (1 - z) * n + z * h

    def enc_step(h, x):
        hn = gru(h, x @ q["enc_w_ih"] + q["enc_b_ih"], q["enc_w_hh"], q["enc_b_hh"])
        return hn, hn

    h_fin, enc_out = jax.lax.scan(enc_step, jnp.zeros((B, H), f32), enc_x)
    keys = jnp.transpose(enc_out, (1, 0, 2))
    Tenc = keys.shape[1]
    dec_x = jnp.transpose(jnp.take(q["dec_emb"], dec_tokens, axis=0), (1, 0, 2))

    def dec_step(h, x):
        qq = h @ q["w_q"]
        k = keys @ q["w_k"]
        feats = jnp.tanh(k + qq[:, None, :])
        scores = jnp.sum(feats * q["w_v"][None, :, :], axis=-1)
        mask = jnp.arange(Tenc)[None, :] < valid_lens[:, None]
        scores = jnp.where(mask, scores, -1e6)
        attn = jax.nn.softmax(scores, axis=-1)
        ctx = jnp.sum(attn[:, :, None] * keys, axis=1)
        gi = ctx @ q["dec_w_ih_ctx"] + x @ q["dec_w_ih_emb"] + q["dec_b_ih"]
        hn = gru(h, gi, q["dec_w_hh"], q["dec_b_hh"])
        return hn, hn @ q["w_out"] + q["b_out"]

    _, ys = jax.lax.scan(dec_step, h_fin, dec_x)
    return jnp.transpose(ys, (1, 0, 2))


# ----------------------------------------------------------------------------
if __name__ == "__main__":
    B, T_ENC, T_DEC = 2, 8, 8
    V, E, H = 24, 16, 32

    key = jax.random.PRNGKey(0)
    ks = jax.random.split(key, 18)
    bf16 = jnp.bfloat16

    def rnd(k, s, dtype=jnp.float32):
        return (0.1 * jax.random.normal(k, s)).astype(dtype)

    # Matmul weights / embedding tables stored in bf16 (full-rate MXU on
    # v6e/v7x, half the weight VMEM/DMA).  Biases and the additive-attention
    # scoring vector w_v (pure VPU use) stay in f32, as does all recurrent
    # state / softmax / accumulation inside the kernel.
    p = {
        # encoder: Embedding(V,E) + GRU(E,H)
        "enc_emb": rnd(ks[0], (V, E), bf16),
        "enc_w_ih": rnd(ks[1], (E, 3 * H), bf16),
        "enc_w_hh": rnd(ks[2], (H, 3 * H), bf16),
        "enc_b_ih": rnd(ks[3], (1, 3 * H)),
        "enc_b_hh": rnd(ks[4], (1, 3 * H)),
        # decoder: Embedding(V,E) + AdditiveAttention(H,H,H) + GRU(E+H,H) + Linear(H,V)
        "dec_emb": rnd(ks[5], (V, E), bf16),
        "w_q": rnd(ks[6], (H, H), bf16),
        "w_k": rnd(ks[7], (H, H), bf16),
        "w_v": rnd(ks[8], (1, H)),                 # Linear(H, 1, bias=False), stored as row
        "dec_w_ih_ctx": rnd(ks[9], (H, 3 * H), bf16),    # GRU W_ih rows for context part
        "dec_w_ih_emb": rnd(ks[10], (E, 3 * H), bf16),   # GRU W_ih rows for embedding part
        "dec_w_hh": rnd(ks[11], (H, 3 * H), bf16),
        "dec_b_ih": rnd(ks[12], (1, 3 * H)),
        "dec_b_hh": rnd(ks[13], (1, 3 * H)),
        "w_out": rnd(ks[14], (H, V), bf16),
        "b_out": rnd(ks[15], (1, V)),
    }

    enc_tokens = jax.random.randint(ks[16], (B, T_ENC), 0, V)
    dec_tokens = jax.random.randint(ks[17], (B, T_DEC), 0, V)
    enc_valid_lens = jnp.array([T_ENC, 5], dtype=jnp.int32)

    out, state = encoder_decoder_forward(enc_tokens, dec_tokens, enc_valid_lens, p)
    jax.block_until_ready(out)

    ref = reference_forward(enc_tokens, dec_tokens, enc_valid_lens, p)
    # The reference runs the same bf16-stored weights in f32 math; remaining
    # differences come from bf16 casts of in-kernel activations fed to the MXU
    # and the EUP approx reciprocal in the softmax denominator.
    np.testing.assert_allclose(np.asarray(out), np.asarray(ref),
                               rtol=5e-2, atol=1e-2)
    print("KERNEL_OK")
</pallas_src>

<mosaic_0001>
module attributes {stable_mosaic.version = 11 : i64} {
  func.func @seq2seq_fused_kernel(%arg0: i32, %arg1: memref<2xi32, #tpu.memory_space<smem>>, %arg2: memref<2x8x16xbf16, #tpu.memory_space<vmem>>, %arg3: memref<2x8x16xbf16, #tpu.memory_space<vmem>>, %arg4: memref<16x96xbf16, #tpu.memory_space<vmem>>, %arg5: memref<32x96xbf16, #tpu.memory_space<vmem>>, %arg6: memref<1x96xf32, #tpu.memory_space<vmem>>, %arg7: memref<1x96xf32, #tpu.memory_space<vmem>>, %arg8: memref<32x32xbf16, #tpu.memory_space<vmem>>, %arg9: memref<1x32xf32, #tpu.memory_space<vmem>>, %arg10: memref<32x128xbf16, #tpu.memory_space<vmem>>, %arg11: memref<32x96xbf16, #tpu.memory_space<vmem>>, %arg12: memref<16x96xbf16, #tpu.memory_space<vmem>>, %arg13: memref<1x96xf32, #tpu.memory_space<vmem>>, %arg14: memref<1x96xf32, #tpu.memory_space<vmem>>, %arg15: memref<32x128xbf16, #tpu.memory_space<vmem>>, %arg16: memref<1x128xf32, #tpu.memory_space<vmem>>, %arg17: memref<16x128xf32, #tpu.memory_space<vmem>>, %arg18: memref<2x8x32xf32, #tpu.memory_space<vmem>>, %arg19: memref<2x32xf32, #tpu.memory_space<vmem>>, %arg20: memref<2x8x96xf32, #tpu.memory_space<vmem>>, %arg21: memref<2x8x96xf32, #tpu.memory_space<vmem>>, %arg22: memref<2x8x32xf32, #tpu.memory_space<vmem>>, %arg23: memref<2x8x32xf32, #tpu.memory_space<vmem>>) attributes {dimension_semantics = [#tpu.dimension_semantics<arbitrary>], iteration_bounds = array<i64: 1>, scalar_prefetch = 1 : i64, scratch_operands = 4 : i64, tpu.core_type = #tpu.core_type<tc>, window_params = [{pipeline_mode = #tpu.pipeline_mode<synchronous>, transform_indices = @transform_0, window_bounds = array<i64: 2, 8, 16>}, {pipeline_mode = #tpu.pipeline_mode<synchronous>, transform_indices = @transform_1, window_bounds = array<i64: 2, 8, 16>}, {pipeline_mode = #tpu.pipeline_mode<synchronous>, transform_indices = @transform_2, window_bounds = array<i64: 16, 96>}, {pipeline_mode = #tpu.pipeline_mode<synchronous>, transform_indices = @transform_3, window_bounds = array<i64: 32, 96>}, {pipeline_mode = #tpu.pipeline_mode<synchronous>, transform_indices = @transform_4, window_bounds = array<i64: 1, 96>}, {pipeline_mode = #tpu.pipeline_mode<synchronous>, transform_indices = @transform_5, window_bounds = array<i64: 1, 96>}, {pipeline_mode = #tpu.pipeline_mode<synchronous>, transform_indices = @transform_6, window_bounds = array<i64: 32, 32>}, {pipeline_mode = #tpu.pipeline_mode<synchronous>, transform_indices = @transform_7, window_bounds = array<i64: 1, 32>}, {pipeline_mode = #tpu.pipeline_mode<synchronous>, transform_indices = @transform_8, window_bounds = array<i64: 32, 128>}, {pipeline_mode = #tpu.pipeline_mode<synchronous>, transform_indices = @transform_9, window_bounds = array<i64: 32, 96>}, {pipeline_mode = #tpu.pipeline_mode<synchronous>, transform_indices = @transform_10, window_bounds = array<i64: 16, 96>}, {pipeline_mode = #tpu.pipeline_mode<synchronous>, transform_indices = @transform_11, window_bounds = array<i64: 1, 96>}, {pipeline_mode = #tpu.pipeline_mode<synchronous>, transform_indices = @transform_12, window_bounds = array<i64: 1, 96>}, {pipeline_mode = #tpu.pipeline_mode<synchronous>, transform_indices = @transform_13, window_bounds = array<i64: 32, 128>}, {pipeline_mode = #tpu.pipeline_mode<synchronous>, transform_indices = @transform_14, window_bounds = array<i64: 1, 128>}, {pipeline_mode = #tpu.pipeline_mode<synchronous>, transform_indices = @transform_15, window_bounds = array<i64: 16, 128>}, {pipeline_mode = #tpu.pipeline_mode<synchronous>, transform_indices = @transform_16, window_bounds = array<i64: 2, 8, 32>}, {pipeline_mode = #tpu.pipeline_mode<synchronous>, transform_indices = @transform_17, window_bounds = array<i64: 2, 32>}]} {
    %c0 = arith.constant 0 : index
    %c0_0 = arith.constant 0 : index
    %c0_1 = arith.constant 0 : index
    %0 = vector.load %arg2[%c0, %c0_0, %c0_1] : memref<2x8x16xbf16, #tpu.memory_space<vmem>>, vector<2x8x16xbf16>
    %1 = vector.shape_cast %0 : vector<2x8x16xbf16> to vector<16x16xbf16>
    %c0_2 = arith.constant 0 : index
    %c0_3 = arith.constant 0 : index
    %2 = vector.load %arg4[%c0_2, %c0_3] : memref<16x96xbf16, #tpu.memory_space<vmem>>, vector<16x96xbf16>
    %cst = arith.constant dense<0.000000e+00> : vector<16x96xf32>
    %3 = tpu.matmul %1, %2, %cst {dimension_numbers = #tpu.dot_dimension_numbers<[1], [0], [0], [1], [0, 0, 1, 1], [], []>} : vector<16x16xbf16>, vector<16x96xbf16>, vector<16x96xf32> -> vector<16x96xf32>
    %c0_4 = arith.constant 0 : index
    %c0_5 = arith.constant 0 : index
    %4 = vector.load %arg6[%c0_4, %c0_5] : memref<1x96xf32, #tpu.memory_space<vmem>>, vector<1x96xf32>
    %5 = vector.broadcast %4 : vector<1x96xf32> to vector<16x96xf32>
    %6 = arith.addf %3, %5 : vector<16x96xf32>
    %7 = vector.shape_cast %6 : vector<16x96xf32> to vector<2x8x96xf32>
    %c0_6 = arith.constant 0 : index
    %c0_7 = arith.constant 0 : index
    %c0_8 = arith.constant 0 : index
    %8 = vector.load %arg20[%c0_6, %c0_7, %c0_8] : memref<2x8x96xf32, #tpu.memory_space<vmem>>, vector<2x8x96xf32>
    tpu.vector_store %arg20[%c0_6, %c0_7, %c0_8], %7 {strides = array<i32>} : memref<2x8x96xf32, #tpu.memory_space<vmem>>, vector<2x8x96xf32>,
    %c0_9 = arith.constant 0 : index
    %c0_10 = arith.constant 0 : index
    %c0_11 = arith.constant 0 : index
    %9 = vector.load %arg3[%c0_9, %c0_10, %c0_11] : memref<2x8x16xbf16, #tpu.memory_space<vmem>>, vector<2x8x16xbf16>
    %10 = vector.shape_cast %9 : vector<2x8x16xbf16> to vector<16x16xbf16>
    %c0_12 = arith.constant 0 : index
    %c0_13 = arith.constant 0 : index
    %11 = vector.load %arg12[%c0_12, %c0_13] : memref<16x96xbf16, #tpu.memory_space<vmem>>, vector<16x96xbf16>
    %cst_14 = arith.constant dense<0.000000e+00> : vector<16x96xf32>
    %12 = tpu.matmul %10, %11, %cst_14 {dimension_numbers = #tpu.dot_dimension_numbers<[1], [0], [0], [1], [0, 0, 1, 1], [], []>} : vector<16x16xbf16>, vector<16x96xbf16>, vector<16x96xf32> -> vector<16x96xf32>
    %c0_15 = arith.constant 0 : index
    %c0_16 = arith.constant 0 : index
    %13 = vector.load %arg13[%c0_15, %c0_16] : memref<1x96xf32, #tpu.memory_space<vmem>>, vector<1x96xf32>
    %14 = vector.broadcast %13 : vector<1x96xf32> to vector<16x96xf32>
    %15 = arith.addf %12, %14 : vector<16x96xf32>
    %16 = vector.shape_cast %15 : vector<16x96xf32> to vector<2x8x96xf32>
    %c0_17 = arith.constant 0 : index
    %c0_18 = arith.constant 0 : index
    %c0_19 = arith.constant 0 : index
    %17 = vector.load %arg21[%c0_17, %c0_18, %c0_19] : memref<2x8x96xf32, #tpu.memory_space<vmem>>, vector<2x8x96xf32>
    tpu.vector_store %arg21[%c0_17, %c0_18, %c0_19], %16 {strides = array<i32>} : memref<2x8x96xf32, #tpu.memory_space<vmem>>, vector<2x8x96xf32>,
    %c0_20 = arith.constant 0 : index
    %c0_21 = arith.constant 0 : index
    %18 = vector.load %arg5[%c0_20, %c0_21] : memref<32x96xbf16, #tpu.memory_space<vmem>>, vector<32x96xbf16>
    %c0_22 = arith.constant 0 : index
    %c0_23 = arith.constant 0 : index
    %19 = vector.load %arg7[%c0_22, %c0_23] : memref<1x96xf32, #tpu.memory_space<vmem>>, vector<1x96xf32>
    %cst_24 = arith.constant 0.000000e+00 : f32
    %20 = vector.broadcast %cst_24 : f32 to vector<2x32xf32>
    %21 = arith.truncf %20 : vector<2x32xf32> to vector<2x32xbf16>
    %cst_25 = arith.constant dense<0.000000e+00> : vector<2x96xf32>
    %22 = tpu.matmul %21, %18, %cst_25 {dimension_numbers = #tpu.dot_dimension_numbers<[1], [0], [0], [1], [0, 0, 1, 1], [], []>} : vector<2x32xbf16>, vector<32x96xbf16>, vector<2x96xf32> -> vector<2x96xf32>
    %23 = vector.broadcast %19 : vector<1x96xf32> to vector<2x96xf32>
    %24 = arith.addf %22, %23 : vector<2x96xf32>
    %c0_26 = arith.constant 0 : index
    %c0_27 = arith.constant 0 : index
    %c0_28 = arith.constant 0 : index
    %25 = vector.load %arg20[%c0_26, %c0_27, %c0_28] : memref<2x8x96xf32, #tpu.memory_space<vmem>>, vector<2x1x96xf32>
    %26 = vector.shape_cast %25 : vector<2x1x96xf32> to vector<2x96xf32>
    %27 = vector.extract_strided_slice %26 {offsets = [0, 0], sizes = [2, 32], strides = [1, 1]} : vector<2x96xf32> to vector<2x32xf32>
    %28 = vector.extract_strided_slice %26 {offsets = [0, 32], sizes = [2, 32], strides = [1, 1]} : vector<2x96xf32> to vector<2x32xf32>
    %29 = vector.extract_strided_slice %26 {offsets = [0, 64], sizes = [2, 32], strides = [1, 1]} : vector<2x96xf32> to vector<2x32xf32>
    %30 = vector.extract_strided_slice %24 {offsets = [0, 0], sizes = [2, 32], strides = [1, 1]} : vector<2x96xf32> to vector<2x32xf32>
    %31 = vector.extract_strided_slice %24 {offsets = [0, 32], sizes = [2, 32], strides = [1, 1]} : vector<2x96xf32> to vector<2x32xf32>
    %32 = vector.extract_strided_slice %24 {offsets = [0, 64], sizes = [2, 32], strides = [1, 1]} : vector<2x96xf32> to vector<2x32xf32>
    %33 = arith.addf %27, %30 : vector<2x32xf32>
    %34 = arith.negf %33 : vector<2x32xf32>
    %35 = math.exp %34 : vector<2x32xf32>
    %cst_29 = arith.constant 1.000000e+00 : f32
    %36 = vector.broadcast %cst_29 : f32 to vector<2x32xf32>
    %37 = arith.addf %36, %35 : vector<2x32xf32>
    %38 = arith.divf %36, %37 : vector<2x32xf32>
    %39 = arith.addf %28, %31 : vector<2x32xf32>
    %40 = arith.negf %39 : vector<2x32xf32>
    %41 = math.exp %40 : vector<2x32xf32>
    %cst_30 = arith.constant 1.000000e+00 : f32
    %42 = vector.broadcast %cst_30 : f32 to vector<2x32xf32>
    %43 = arith.addf %42, %41 : vector<2x32xf32>
    %44 = arith.divf %42, %43 : vector<2x32xf32>
    %45 = arith.mulf %38, %32 : vector<2x32xf32>
    %46 = arith.addf %29, %45 : vector<2x32xf32>
    %47 = math.tanh %46 : vector<2x32xf32>
    %cst_31 = arith.constant 1.000000e+00 : f32
    %48 = vector.broadcast %cst_31 : f32 to vector<2x32xf32>
    %49 = arith.subf %48, %44 : vector<2x32xf32>
    %50 = arith.mulf %49, %47 : vector<2x32xf32>
    %51 = arith.mulf %44, %20 : vector<2x32xf32>
    %52 = arith.addf %50, %51 : vector<2x32xf32>
    %c0_32 = arith.constant 0 : index
    %c0_33 = arith.constant 0 : index
    %c0_34 = arith.constant 0 : index
    %53 = vector.load %arg18[%c0_32, %c0_33, %c0_34] : memref<2x8x32xf32, #tpu.memory_space<vmem>>, vector<2x1x32xf32>
    %54 = vector.shape_cast %53 : vector<2x1x32xf32> to vector<2x32xf32>
    %55 = vector.shape_cast %52 : vector<2x32xf32> to vector<2x1x32xf32>
    tpu.vector_store %arg18[%c0_32, %c0_33, %c0_34], %55 {strides = array<i32>} : memref<2x8x32xf32, #tpu.memory_space<vmem>>, vector<2x1x32xf32>,
    %56 = arith.truncf %52 : vector<2x32xf32> to vector<2x32xbf16>
    %cst_35 = arith.constant dense<0.000000e+00> : vector<2x96xf32>
    %57 = tpu.matmul %56, %18, %cst_35 {dimension_numbers = #tpu.dot_dimension_numbers<[1], [0], [0], [1], [0, 0, 1, 1], [], []>} : vector<2x32xbf16>, vector<32x96xbf16>, vector<2x96xf32> -> vector<2x96xf32>
    %58 = vector.broadcast %19 : vector<1x96xf32> to vector<2x96xf32>
    %59 = arith.addf %57, %58 : vector<2x96xf32>
    %c0_36 = arith.constant 0 : index
    %c1 = arith.constant 1 : index
    %c0_37 = arith.constant 0 : index
    %60 = vector.load %arg20[%c0_36, %c1, %c0_37] : memref<2x8x96xf32, #tpu.memory_space<vmem>>, vector<2x1x96xf32>
    %61 = vector.shape_cast %60 : vector<2x1x96xf32> to vector<2x96xf32>
    %62 = vector.extract_strided_slice %61 {offsets = [0, 0], sizes = [2, 32], strides = [1, 1]} : vector<2x96xf32> to vector<2x32xf32>
    %63 = vector.extract_strided_slice %61 {offsets = [0, 32], sizes = [2, 32], strides = [1, 1]} : vector<2x96xf32> to vector<2x32xf32>
    %64 = vector.extract_strided_slice %61 {offsets = [0, 64], sizes = [2, 32], strides = [1, 1]} : vector<2x96xf32> to vector<2x32xf32>
    %65 = vector.extract_strided_slice %59 {offsets = [0, 0], sizes = [2, 32], strides = [1, 1]} : vector<2x96xf32> to vector<2x32xf32>
    %66 = vector.extract_strided_slice %59 {offsets = [0, 32], sizes = [2, 32], strides = [1, 1]} : vector<2x96xf32> to vector<2x32xf32>
    %67 = vector.extract_strided_slice %59 {offsets = [0, 64], sizes = [2, 32], strides = [1, 1]} : vector<2x96xf32> to vector<2x32xf32>
    %68 = arith.addf %62, %65 : vector<2x32xf32>
    %69 = arith.negf %68 : vector<2x32xf32>
    %70 = math.exp %69 : vector<2x32xf32>
    %cst_38 = arith.constant 1.000000e+00 : f32
    %71 = vector.broadcast %cst_38 : f32 to vector<2x32xf32>
    %72 = arith.addf %71, %70 : vector<2x32xf32>
    %73 = arith.divf %71, %72 : vector<2x32xf32>
    %74 = arith.addf %63, %66 : vector<2x32xf32>
    %75 = arith.negf %74 : vector<2x32xf32>
    %76 = math.exp %75 : vector<2x32xf32>
    %cst_39 = arith.constant 1.000000e+00 : f32
    %77 = vector.broadcast %cst_39 : f32 to vector<2x32xf32>
    %78 = arith.addf %77, %76 : vector<2x32xf32>
    %79 = arith.divf %77, %78 : vector<2x32xf32>
    %80 = arith.mulf %73, %67 : vector<2x32xf32>
    %81 = arith.addf %64, %80 : vector<2x32xf32>
    %82 = math.tanh %81 : vector<2x32xf32>
    %cst_40 = arith.constant 1.000000e+00 : f32
    %83 = vector.broadcast %cst_40 : f32 to vector<2x32xf32>
    %84 = arith.subf %83, %79 : vector<2x32xf32>
    %85 = arith.mulf %84, %82 : vector<2x32xf32>
    %86 = arith.mulf %79, %52 : vector<2x32xf32>
    %87 = arith.addf %85, %86 : vector<2x32xf32>
    %c0_41 = arith.constant 0 : index
    %c1_42 = arith.constant 1 : index
    %c0_43 = arith.constant 0 : index
    %88 = vector.load %arg18[%c0_41, %c1_42, %c0_43] : memref<2x8x32xf32, #tpu.memory_space<vmem>>, vector<2x1x32xf32>
    %89 = vector.shape_cast %88 : vector<2x1x32xf32> to vector<2x32xf32>
    %90 = vector.shape_cast %87 : vector<2x32xf32> to vector<2x1x32xf32>
    tpu.vector_store %arg18[%c0_41, %c1_42, %c0_43], %90 {strides = array<i32>} : memref<2x8x32xf32, #tpu.memory_space<vmem>>, vector<2x1x32xf32>,
    %91 = arith.truncf %87 : vector<2x32xf32> to vector<2x32xbf16>
    %cst_44 = arith.constant dense<0.000000e+00> : vector<2x96xf32>
    %92 = tpu.matmul %91, %18, %cst_44 {dimension_numbers = #tpu.dot_dimension_numbers<[1], [0], [0], [1], [0, 0, 1, 1], [], []>} : vector<2x32xbf16>, vector<32x96xbf16>, vector<2x96xf32> -> vector<2x96xf32>
    %93 = vector.broadcast %19 : vector<1x96xf32> to vector<2x96xf32>
    %94 = arith.addf %92, %93 : vector<2x96xf32>
    %c0_45 = arith.constant 0 : index
    %c2 = arith.constant 2 : index
    %c0_46 = arith.constant 0 : index
    %95 = vector.load %arg20[%c0_45, %c2, %c0_46] : memref<2x8x96xf32, #tpu.memory_space<vmem>>, vector<2x1x96xf32>
    %96 = vector.shape_cast %95 : vector<2x1x96xf32> to vector<2x96xf32>
    %97 = vector.extract_strided_slice %96 {offsets = [0, 0], sizes = [2, 32], strides = [1, 1]} : vector<2x96xf32> to vector<2x32xf32>
    %98 = vector.extract_strided_slice %96 {offsets = [0, 32], sizes = [2, 32], strides = [1, 1]} : vector<2x96xf32> to vector<2x32xf32>
    %99 = vector.extract_strided_slice %96 {offsets = [0, 64], sizes = [2, 32], strides = [1, 1]} : vector<2x96xf32> to vector<2x32xf32>
    %100 = vector.extract_strided_slice %94 {offsets = [0, 0], sizes = [2, 32], strides = [1, 1]} : vector<2x96xf32> to vector<2x32xf32>
    %101 = vector.extract_strided_slice %94 {offsets = [0, 32], sizes = [2, 32], strides = [1, 1]} : vector<2x96xf32> to vector<2x32xf32>
    %102 = vector.extract_strided_slice %94 {offsets = [0, 64], sizes = [2, 32], strides = [1, 1]} : vector<2x96xf32> to vector<2x32xf32>
    %103 = arith.addf %97, %100 : vector<2x32xf32>
    %104 = arith.negf %103 : vector<2x32xf32>
    %105 = math.exp %104 : vector<2x32xf32>
    %cst_47 = arith.constant 1.000000e+00 : f32
    %106 = vector.broadcast %cst_47 : f32 to vector<2x32xf32>
    %107 = arith.addf %106, %105 : vector<2x32xf32>
    %108 = arith.divf %106, %107 : vector<2x32xf32>
    %109 = arith.addf %98, %101 : vector<2x32xf32>
    %110 = arith.negf %109 : vector<2x32xf32>
    %111 = math.exp %110 : vector<2x32xf32>
    %cst_48 = arith.constant 1.000000e+00 : f32
    %112 = vector.broadcast %cst_48 : f32 to vector<2x32xf32>
    %113 = arith.addf %112, %111 : vector<2x32xf32>
    %114 = arith.divf %112, %113 : vector<2x32xf32>
    %115 = arith.mulf %108, %102 : vector<2x32xf32>
    %116 = arith.addf %99, %115 : vector<2x32xf32>
    %117 = math.tanh %116 : vector<2x32xf32>
    %cst_49 = arith.constant 1.000000e+00 : f32
    %118 = vector.broadcast %cst_49 : f32 to vector<2x32xf32>
    %119 = arith.subf %118, %114 : vector<2x32xf32>
    %120 = arith.mulf %119, %117 : vector<2x32xf32>
    %121 = arith.mulf %114, %87 : vector<2x32xf32>
    %122 = arith.addf %120, %121 : vector<2x32xf32>
    %c0_50 = arith.constant 0 : index
    %c2_51 = arith.constant 2 : index
    %c0_52 = arith.constant 0 : index
    %123 = vector.load %arg18[%c0_50, %c2_51, %c0_52] : memref<2x8x32xf32, #tpu.memory_space<vmem>>, vector<2x1x32xf32>
    %124 = vector.shape_cast %123 : vector<2x1x32xf32> to vector<2x32xf32>
    %125 = vector.shape_cast %122 : vector<2x32xf32> to vector<2x1x32xf32>
    tpu.vector_store %arg18[%c0_50, %c2_51, %c0_52], %125 {strides = array<i32>} : memref<2x8x32xf32, #tpu.memory_space<vmem>>, vector<2x1x32xf32>,
    %126 = arith.truncf %122 : vector<2x32xf32> to vector<2x32xbf16>
    %cst_53 = arith.constant dense<0.000000e+00> : vector<2x96xf32>
    %127 = tpu.matmul %126, %18, %cst_53 {dimension_numbers = #tpu.dot_dimension_numbers<[1], [0], [0], [1], [0, 0, 1, 1], [], []>} : vector<2x32xbf16>, vector<32x96xbf16>, vector<2x96xf32> -> vector<2x96xf32>
    %128 = vector.broadcast %19 : vector<1x96xf32> to vector<2x96xf32>
    %129 = arith.addf %127, %128 : vector<2x96xf32>
    %c0_54 = arith.constant 0 : index
    %c3 = arith.constant 3 : index
    %c0_55 = arith.constant 0 : index
    %130 = vector.load %arg20[%c0_54, %c3, %c0_55] : memref<2x8x96xf32, #tpu.memory_space<vmem>>, vector<2x1x96xf32>
    %131 = vector.shape_cast %130 : vector<2x1x96xf32> to vector<2x96xf32>
    %132 = vector.extract_strided_slice %131 {offsets = [0, 0], sizes = [2, 32], strides = [1, 1]} : vector<2x96xf32> to vector<2x32xf32>
    %133 = vector.extract_strided_slice %131 {offsets = [0, 32], sizes = [2, 32], strides = [1, 1]} : vector<2x96xf32> to vector<2x32xf32>
    %134 = vector.extract_strided_slice %131 {offsets = [0, 64], sizes = [2, 32], strides = [1, 1]} : vector<2x96xf32> to vector<2x32xf32>
    %135 = vector.extract_strided_slice %129 {offsets = [0, 0], sizes = [2, 32], strides = [1, 1]} : vector<2x96xf32> to vector<2x32xf32>
    %136 = vector.extract_strided_slice %129 {offsets = [0, 32], sizes = [2, 32], strides = [1, 1]} : vector<2x96xf32> to vector<2x32xf32>
    %137 = vector.extract_strided_slice %129 {offsets = [0, 64], sizes = [2, 32], strides = [1, 1]} : vector<2x96xf32> to vector<2x32xf32>
    %138 = arith.addf %132, %135 : vector<2x32xf32>
    %139 = arith.negf %138 : vector<2x32xf32>
    %140 = math.exp %139 : vector<2x32xf32>
    %cst_56 = arith.constant 1.000000e+00 : f32
    %141 = vector.broadcast %cst_56 : f32 to vector<2x32xf32>
    %142 = arith.addf %141, %140 : vector<2x32xf32>
    %143 = arith.divf %141, %142 : vector<2x32xf32>
    %144 = arith.addf %133, %136 : vector<2x32xf32>
    %145 = arith.negf %144 : vector<2x32xf32>
    %146 = math.exp %145 : vector<2x32xf32>
    %cst_57 = arith.constant 1.000000e+00 : f32
    %147 = vector.broadcast %cst_57 : f32 to vector<2x32xf32>
    %148 = arith.addf %147, %146 : vector<2x32xf32>
    %149 = arith.divf %147, %148 : vector<2x32xf32>
    %150 = arith.mulf %143, %137 : vector<2x32xf32>
    %151 = arith.addf %134, %150 : vector<2x32xf32>
    %152 = math.tanh %151 : vector<2x32xf32>
    %cst_58 = arith.constant 1.000000e+00 : f32
    %153 = vector.broadcast %cst_58 : f32 to vector<2x32xf32>
    %154 = arith.subf %153, %149 : vector<2x32xf32>
    %155 = arith.mulf %154, %152 : vector<2x32xf32>
    %156 = arith.mulf %149, %122 : vector<2x32xf32>
    %157 = arith.addf %155, %156 : vector<2x32xf32>
    %c0_59 = arith.constant 0 : index
    %c3_60 = arith.constant 3 : index
    %c0_61 = arith.constant 0 : index
    %158 = vector.load %arg18[%c0_59, %c3_60, %c0_61] : memref<2x8x32xf32, #tpu.memory_space<vmem>>, vector<2x1x32xf32>
    %159 = vector.shape_cast %158 : vector<2x1x32xf32> to vector<2x32xf32>
    %160 = vector.shape_cast %157 : vector<2x32xf32> to vector<2x1x32xf32>
    tpu.vector_store %arg18[%c0_59, %c3_60, %c0_61], %160 {strides = array<i32>} : memref<2x8x32xf32, #tpu.memory_space<vmem>>, vector<2x1x32xf32>,
    %161 = arith.truncf %157 : vector<2x32xf32> to vector<2x32xbf16>
    %cst_62 = arith.constant dense<0.000000e+00> : vector<2x96xf32>
    %162 = tpu.matmul %161, %18, %cst_62 {dimension_numbers = #tpu.dot_dimension_numbers<[1], [0], [0], [1], [0, 0, 1, 1], [], []>} : vector<2x32xbf16>, vector<32x96xbf16>, vector<2x96xf32> -> vector<2x96xf32>
    %163 = vector.broadcast %19 : vector<1x96xf32> to vector<2x96xf32>
    %164 = arith.addf %162, %163 : vector<2x96xf32>
    %c0_63 = arith.constant 0 : index
    %c4 = arith.constant 4 : index
    %c0_64 = arith.constant 0 : index
    %165 = vector.load %arg20[%c0_63, %c4, %c0_64] : memref<2x8x96xf32, #tpu.memory_space<vmem>>, vector<2x1x96xf32>
    %166 = vector.shape_cast %165 : vector<2x1x96xf32> to vector<2x96xf32>
    %167 = vector.extract_strided_slice %166 {offsets = [0, 0], sizes = [2, 32], strides = [1, 1]} : vector<2x96xf32> to vector<2x32xf32>
    %168 = vector.extract_strided_slice %166 {offsets = [0, 32], sizes = [2, 32], strides = [1, 1]} : vector<2x96xf32> to vector<2x32xf32>
    %169 = vector.extract_strided_slice %166 {offsets = [0, 64], sizes = [2, 32], strides = [1, 1]} : vector<2x96xf32> to vector<2x32xf32>
    %170 = vector.extract_strided_slice %164 {offsets = [0, 0], sizes = [2, 32], strides = [1, 1]} : vector<2x96xf32> to vector<2x32xf32>
    %171 = vector.extract_strided_slice %164 {offsets = [0, 32], sizes = [2, 32], strides = [1, 1]} : vector<2x96xf32> to vector<2x32xf32>
    %172 = vector.extract_strided_slice %164 {offsets = [0, 64], sizes = [2, 32], strides = [1, 1]} : vector<2x96xf32> to vector<2x32xf32>
    %173 = arith.addf %167, %170 : vector<2x32xf32>
    %174 = arith.negf %173 : vector<2x32xf32>
    %175 = math.exp %174 : vector<2x32xf32>
    %cst_65 = arith.constant 1.000000e+00 : f32
    %176 = vector.broadcast %cst_65 : f32 to vector<2x32xf32>
    %177 = arith.addf %176, %175 : vector<2x32xf32>
    %178 = arith.divf %176, %177 : vector<2x32xf32>
    %179 = arith.addf %168, %171 : vector<2x32xf32>
    %180 = arith.negf %179 : vector<2x32xf32>
    %181 = math.exp %180 : vector<2x32xf32>
    %cst_66 = arith.constant 1.000000e+00 : f32
    %182 = vector.broadcast %cst_66 : f32 to vector<2x32xf32>
    %183 = arith.addf %182, %181 : vector<2x32xf32>
    %184 = arith.divf %182, %183 : vector<2x32xf32>
    %185 = arith.mulf %178, %172 : vector<2x32xf32>
    %186 = arith.addf %169, %185 : vector<2x32xf32>
    %187 = math.tanh %186 : vector<2x32xf32>
    %cst_67 = arith.constant 1.000000e+00 : f32
    %188 = vector.broadcast %cst_67 : f32 to vector<2x32xf32>
    %189 = arith.subf %188, %184 : vector<2x32xf32>
    %190 = arith.mulf %189, %187 : vector<2x32xf32>
    %191 = arith.mulf %184, %157 : vector<2x32xf32>
    %192 = arith.addf %190, %191 : vector<2x32xf32>
    %c0_68 = arith.constant 0 : index
    %c4_69 = arith.constant 4 : index
    %c0_70 = arith.constant 0 : index
    %193 = vector.load %arg18[%c0_68, %c4_69, %c0_70] : memref<2x8x32xf32, #tpu.memory_space<vmem>>, vector<2x1x32xf32>
    %194 = vector.shape_cast %193 : vector<2x1x32xf32> to vector<2x32xf32>
    %195 = vector.shape_cast %192 : vector<2x32xf32> to vector<2x1x32xf32>
    tpu.vector_store %arg18[%c0_68, %c4_69, %c0_70], %195 {strides = array<i32>} : memref<2x8x32xf32, #tpu.memory_space<vmem>>, vector<2x1x32xf32>,
    %196 = arith.truncf %192 : vector<2x32xf32> to vector<2x32xbf16>
    %cst_71 = arith.constant dense<0.000000e+00> : vector<2x96xf32>
    %197 = tpu.matmul %196, %18, %cst_71 {dimension_numbers = #tpu.dot_dimension_numbers<[1], [0], [0], [1], [0, 0, 1, 1], [], []>} : vector<2x32xbf16>, vector<32x96xbf16>, vector<2x96xf32> -> vector<2x96xf32>
    %198 = vector.broadcast %19 : vector<1x96xf32> to vector<2x96xf32>
    %199 = arith.addf %197, %198 : vector<2x96xf32>
    %c0_72 = arith.constant 0 : index
    %c5 = arith.constant 5 : index
    %c0_73 = arith.constant 0 : index
    %200 = vector.load %arg20[%c0_72, %c5, %c0_73] : memref<2x8x96xf32, #tpu.memory_space<vmem>>, vector<2x1x96xf32>
    %201 = vector.shape_cast %200 : vector<2x1x96xf32> to vector<2x96xf32>
    %202 = vector.extract_strided_slice %201 {offsets = [0, 0], sizes = [2, 32], strides = [1, 1]} : vector<2x96xf32> to vector<2x32xf32>
    %203 = vector.extract_strided_slice %201 {offsets = [0, 32], sizes = [2, 32], strides = [1, 1]} : vector<2x96xf32> to vector<2x32xf32>
    %204 = vector.extract_strided_slice %201 {offsets = [0, 64], sizes = [2, 32], strides = [1, 1]} : vector<2x96xf32> to vector<2x32xf32>
    %205 = vector.extract_strided_slice %199 {offsets = [0, 0], sizes = [2, 32], strides = [1, 1]} : vector<2x96xf32> to vector<2x32xf32>
    %206 = vector.extract_strided_slice %199 {offsets = [0, 32], sizes = [2, 32], strides = [1, 1]} : vector<2x96xf32> to vector<2x32xf32>
    %207 = vector.extract_strided_slice %199 {offsets = [0, 64], sizes = [2, 32], strides = [1, 1]} : vector<2x96xf32> to vector<2x32xf32>
    %208 = arith.addf %202, %205 : vector<2x32xf32>
    %209 = arith.negf %208 : vector<2x32xf32>
    %210 = math.exp %209 : vector<2x32xf32>
    %cst_74 = arith.constant 1.000000e+00 : f32
    %211 = vector.broadcast %cst_74 : f32 to vector<2x32xf32>
    %212 = arith.addf %211, %210 : vector<2x32xf32>
    %213 = arith.divf %211, %212 : vector<2x32xf32>
    %214 = arith.addf %203, %206 : vector<2x32xf32>
    %215 = arith.negf %214 : vector<2x32xf32>
    %216 = math.exp %215 : vector<2x32xf32>
    %cst_75 = arith.constant 1.000000e+00 : f32
    %217 = vector.broadcast %cst_75 : f32 to vector<2x32xf32>
    %218 = arith.addf %217, %216 : vector<2x32xf32>
    %219 = arith.divf %217, %218 : vector<2x32xf32>
    %220 = arith.mulf %213, %207 : vector<2x32xf32>
    %221 = arith.addf %204, %220 : vector<2x32xf32>
    %222 = math.tanh %221 : vector<2x32xf32>
    %cst_76 = arith.constant 1.000000e+00 : f32
    %223 = vector.broadcast %cst_76 : f32 to vector<2x32xf32>
    %224 = arith.subf %223, %219 : vector<2x32xf32>
    %225 = arith.mulf %224, %222 : vector<2x32xf32>
    %226 = arith.mulf %219, %192 : vector<2x32xf32>
    %227 = arith.addf %225, %226 : vector<2x32xf32>
    %c0_77 = arith.constant 0 : index
    %c5_78 = arith.constant 5 : index
    %c0_79 = arith.constant 0 : index
    %228 = vector.load %arg18[%c0_77, %c5_78, %c0_79] : memref<2x8x32xf32, #tpu.memory_space<vmem>>, vector<2x1x32xf32>
    %229 = vector.shape_cast %228 : vector<2x1x32xf32> to vector<2x32xf32>
    %230 = vector.shape_cast %227 : vector<2x32xf32> to vector<2x1x32xf32>
    tpu.vector_store %arg18[%c0_77, %c5_78, %c0_79], %230 {strides = array<i32>} : memref<2x8x32xf32, #tpu.memory_space<vmem>>, vector<2x1x32xf32>,
    %231 = arith.truncf %227 : vector<2x32xf32> to vector<2x32xbf16>
    %cst_80 = arith.constant dense<0.000000e+00> : vector<2x96xf32>
    %232 = tpu.matmul %231, %18, %cst_80 {dimension_numbers = #tpu.dot_dimension_numbers<[1], [0], [0], [1], [0, 0, 1, 1], [], []>} : vector<2x32xbf16>, vector<32x96xbf16>, vector<2x96xf32> -> vector<2x96xf32>
    %233 = vector.broadcast %19 : vector<1x96xf32> to vector<2x96xf32>
    %234 = arith.addf %232, %233 : vector<2x96xf32>
    %c0_81 = arith.constant 0 : index
    %c6 = arith.constant 6 : index
    %c0_82 = arith.constant 0 : index
    %235 = vector.load %arg20[%c0_81, %c6, %c0_82] : memref<2x8x96xf32, #tpu.memory_space<vmem>>, vector<2x1x96xf32>
    %236 = vector.shape_cast %235 : vector<2x1x96xf32> to vector<2x96xf32>
    %237 = vector.extract_strided_slice %236 {offsets = [0, 0], sizes = [2, 32], strides = [1, 1]} : vector<2x96xf32> to vector<2x32xf32>
    %238 = vector.extract_strided_slice %236 {offsets = [0, 32], sizes = [2, 32], strides = [1, 1]} : vector<2x96xf32> to vector<2x32xf32>
    %239 = vector.extract_strided_slice %236 {offsets = [0, 64], sizes = [2, 32], strides = [1, 1]} : vector<2x96xf32> to vector<2x32xf32>
    %240 = vector.extract_strided_slice %234 {offsets = [0, 0], sizes = [2, 32], strides = [1, 1]} : vector<2x96xf32> to vector<2x32xf32>
    %241 = vector.extract_strided_slice %234 {offsets = [0, 32], sizes = [2, 32], strides = [1, 1]} : vector<2x96xf32> to vector<2x32xf32>
    %242 = vector.extract_strided_slice %234 {offsets = [0, 64], sizes = [2, 32], strides = [1, 1]} : vector<2x96xf32> to vector<2x32xf32>
    %243 = arith.addf %237, %240 : vector<2x32xf32>
    %244 = arith.negf %243 : vector<2x32xf32>
    %245 = math.exp %244 : vector<2x32xf32>
    %cst_83 = arith.constant 1.000000e+00 : f32
    %246 = vector.broadcast %cst_83 : f32 to vector<2x32xf32>
    %247 = arith.addf %246, %245 : vector<2x32xf32>
    %248 = arith.divf %246, %247 : vector<2x32xf32>
    %249 = arith.addf %238, %241 : vector<2x32xf32>
    %250 = arith.negf %249 : vector<2x32xf32>
    %251 = math.exp %250 : vector<2x32xf32>
    %cst_84 = arith.constant 1.000000e+00 : f32
    %252 = vector.broadcast %cst_84 : f32 to vector<2x32xf32>
    %253 = arith.addf %252, %251 : vector<2x32xf32>
    %254 = arith.divf %252, %253 : vector<2x32xf32>
    %255 = arith.mulf %248, %242 : vector<2x32xf32>
    %256 = arith.addf %239, %255 : vector<2x32xf32>
    %257 = math.tanh %256 : vector<2x32xf32>
    %cst_85 = arith.constant 1.000000e+00 : f32
    %258 = vector.broadcast %cst_85 : f32 to vector<2x32xf32>
    %259 = arith.subf %258, %254 : vector<2x32xf32>
    %260 = arith.mulf %259, %257 : vector<2x32xf32>
    %261 = arith.mulf %254, %227 : vector<2x32xf32>
    %262 = arith.addf %260, %261 : vector<2x32xf32>
    %c0_86 = arith.constant 0 : index
    %c6_87 = arith.constant 6 : index
    %c0_88 = arith.constant 0 : index
    %263 = vector.load %arg18[%c0_86, %c6_87, %c0_88] : memref<2x8x32xf32, #tpu.memory_space<vmem>>, vector<2x1x32xf32>
    %264 = vector.shape_cast %263 : vector<2x1x32xf32> to vector<2x32xf32>
    %265 = vector.shape_cast %262 : vector<2x32xf32> to vector<2x1x32xf32>
    tpu.vector_store %arg18[%c0_86, %c6_87, %c0_88], %265 {strides = array<i32>} : memref<2x8x32xf32, #tpu.memory_space<vmem>>, vector<2x1x32xf32>,
    %266 = arith.truncf %262 : vector<2x32xf32> to vector<2x32xbf16>
    %cst_89 = arith.constant dense<0.000000e+00> : vector<2x96xf32>
    %267 = tpu.matmul %266, %18, %cst_89 {dimension_numbers = #tpu.dot_dimension_numbers<[1], [0], [0], [1], [0, 0, 1, 1], [], []>} : vector<2x32xbf16>, vector<32x96xbf16>, vector<2x96xf32> -> vector<2x96xf32>
    %268 = vector.broadcast %19 : vector<1x96xf32> to vector<2x96xf32>
    %269 = arith.addf %267, %268 : vector<2x96xf32>
    %c0_90 = arith.constant 0 : index
    %c7 = arith.constant 7 : index
    %c0_91 = arith.constant 0 : index
    %270 = vector.load %arg20[%c0_90, %c7, %c0_91] : memref<2x8x96xf32, #tpu.memory_space<vmem>>, vector<2x1x96xf32>
    %271 = vector.shape_cast %270 : vector<2x1x96xf32> to vector<2x96xf32>
    %272 = vector.extract_strided_slice %271 {offsets = [0, 0], sizes = [2, 32], strides = [1, 1]} : vector<2x96xf32> to vector<2x32xf32>
    %273 = vector.extract_strided_slice %271 {offsets = [0, 32], sizes = [2, 32], strides = [1, 1]} : vector<2x96xf32> to vector<2x32xf32>
    %274 = vector.extract_strided_slice %271 {offsets = [0, 64], sizes = [2, 32], strides = [1, 1]} : vector<2x96xf32> to vector<2x32xf32>
    %275 = vector.extract_strided_slice %269 {offsets = [0, 0], sizes = [2, 32], strides = [1, 1]} : vector<2x96xf32> to vector<2x32xf32>
    %276 = vector.extract_strided_slice %269 {offsets = [0, 32], sizes = [2, 32], strides = [1, 1]} : vector<2x96xf32> to vector<2x32xf32>
    %277 = vector.extract_strided_slice %269 {offsets = [0, 64], sizes = [2, 32], strides = [1, 1]} : vector<2x96xf32> to vector<2x32xf32>
    %278 = arith.addf %272, %275 : vector<2x32xf32>
    %279 = arith.negf %278 : vector<2x32xf32>
    %280 = math.exp %279 : vector<2x32xf32>
    %cst_92 = arith.constant 1.000000e+00 : f32
    %281 = vector.broadcast %cst_92 : f32 to vector<2x32xf32>
    %282 = arith.addf %281, %280 : vector<2x32xf32>
    %283 = arith.divf %281, %282 : vector<2x32xf32>
    %284 = arith.addf %273, %276 : vector<2x32xf32>
    %285 = arith.negf %284 : vector<2x32xf32>
    %286 = math.exp %285 : vector<2x32xf32>
    %cst_93 = arith.constant 1.000000e+00 : f32
    %287 = vector.broadcast %cst_93 : f32 to vector<2x32xf32>
    %288 = arith.addf %287, %286 : vector<2x32xf32>
    %289 = arith.divf %287, %288 : vector<2x32xf32>
    %290 = arith.mulf %283, %277 : vector<2x32xf32>
    %291 = arith.addf %274, %290 : vector<2x32xf32>
    %292 = math.tanh %291 : vector<2x32xf32>
    %cst_94 = arith.constant 1.000000e+00 : f32
    %293 = vector.broadcast %cst_94 : f32 to vector<2x32xf32>
    %294 = arith.subf %293, %289 : vector<2x32xf32>
    %295 = arith.mulf %294, %292 : vector<2x32xf32>
    %296 = arith.mulf %289, %262 : vector<2x32xf32>
    %297 = arith.addf %295, %296 : vector<2x32xf32>
    %c0_95 = arith.constant 0 : index
    %c7_96 = arith.constant 7 : index
    %c0_97 = arith.constant 0 : index
    %298 = vector.load %arg18[%c0_95, %c7_96, %c0_97] : memref<2x8x32xf32, #tpu.memory_space<vmem>>, vector<2x1x32xf32>
    %299 = vector.shape_cast %298 : vector<2x1x32xf32> to vector<2x32xf32>
    %300 = vector.shape_cast %297 : vector<2x32xf32> to vector<2x1x32xf32>
    tpu.vector_store %arg18[%c0_95, %c7_96, %c0_97], %300 {strides = array<i32>} : memref<2x8x32xf32, #tpu.memory_space<vmem>>, vector<2x1x32xf32>,
    %c0_98 = arith.constant 0 : index
    %c0_99 = arith.constant 0 : index
    %c0_100 = arith.constant 0 : index
    %301 = vector.load %arg18[%c0_98, %c0_99, %c0_100] : memref<2x8x32xf32, #tpu.memory_space<vmem>>, vector<2x8x32xf32>
    %302 = vector.shape_cast %301 : vector<2x8x32xf32> to vector<16x32xf32>
    %303 = arith.truncf %302 : vector<16x32xf32> to vector<16x32xbf16>
    %c0_101 = arith.constant 0 : index
    %c0_102 = arith.constant 0 : index
    %304 = vector.load %arg8[%c0_101, %c0_102] : memref<32x32xbf16, #tpu.memory_space<vmem>>, vector<32x32xbf16>
    %cst_103 = arith.constant dense<0.000000e+00> : vector<16x32xf32>
    %305 = tpu.matmul %303, %304, %cst_103 {dimension_numbers = #tpu.dot_dimension_numbers<[1], [0], [0], [1], [0, 0, 1, 1], [], []>} : vector<16x32xbf16>, vector<32x32xbf16>, vector<16x32xf32> -> vector<16x32xf32>
    %306 = vector.shape_cast %305 : vector<16x32xf32> to vector<2x8x32xf32>
    %c0_104 = arith.constant 0 : index
    %c0_105 = arith.constant 0 : index
    %c0_106 = arith.constant 0 : index
    %307 = vector.load %arg22[%c0_104, %c0_105, %c0_106] : memref<2x8x32xf32, #tpu.memory_space<vmem>>, vector<2x8x32xf32>
    tpu.vector_store %arg22[%c0_104, %c0_105, %c0_106], %306 {strides = array<i32>} : memref<2x8x32xf32, #tpu.memory_space<vmem>>, vector<2x8x32xf32>,
    %308 = tpu.iota {dimensions = array<i32: 0>} : vector<2x8xi32>
    %309 = tpu.iota {dimensions = array<i32: 1>} : vector<2x8xi32>
    %c0_i32 = arith.constant 0 : i32
    %310 = vector.broadcast %c0_i32 : i32 to vector<2x8xi32>
    %c0_i32_107 = arith.constant 0 : i32
    %311 = vector.broadcast %c0_i32_107 : i32 to vector<2x8xi32>
    %312 = arith.cmpi eq, %308, %311 : vector<2x8xi32>
    %c0_108 = arith.constant 0 : index
    %313 = memref.load %arg1[%c0_108] : memref<2xi32, #tpu.memory_space<smem>>
    %314 = vector.broadcast %313 : i32 to vector<2x8xi32>
    %315 = arith.select %312, %314, %310 : vector<2x8xi1>, vector<2x8xi32>
    %c1_i32 = arith.constant 1 : i32
    %316 = vector.broadcast %c1_i32 : i32 to vector<2x8xi32>
    %317 = arith.cmpi eq, %308, %316 : vector<2x8xi32>
    %c1_109 = arith.constant 1 : index
    %318 = memref.load %arg1[%c1_109] : memref<2xi32, #tpu.memory_space<smem>>
    %319 = vector.broadcast %318 : i32 to vector<2x8xi32>
    %320 = arith.select %317, %319, %315 : vector<2x8xi1>, vector<2x8xi32>
    %321 = arith.cmpi slt, %309, %320 : vector<2x8xi32>
    %cst_110 = arith.constant 0.000000e+00 : f32
    %cst_111 = arith.constant -1.000000e+06 : f32
    %322 = vector.broadcast %cst_110 : f32 to vector<2x8xf32>
    %323 = vector.broadcast %cst_111 : f32 to vector<2x8xf32>
    %324 = arith.select %321, %322, %323 : vector<2x8xi1>, vector<2x8xf32>
    %c0_112 = arith.constant 0 : index
    %c0_113 = arith.constant 0 : index
    %325 = vector.load %arg9[%c0_112, %c0_113] : memref<1x32xf32, #tpu.memory_space<vmem>>, vector<1x32xf32>
    %326 = vector.shape_cast %325 : vector<1x32xf32> to vector<1x1x32xf32>
    %327 = vector.shape_cast %326 : vector<1x1x32xf32> to vector<1x1x32xf32>
    %328 = vector.broadcast %327 : vector<1x1x32xf32> to vector<2x8x32xf32>
    %c0_114 = arith.constant 0 : index
    %c0_115 = arith.constant 0 : index
    %329 = vector.load %arg10[%c0_114, %c0_115] : memref<32x128xbf16, #tpu.memory_space<vmem>>, vector<32x128xbf16>
    %c0_116 = arith.constant 0 : index
    %c0_117 = arith.constant 0 : index
    %330 = vector.load %arg11[%c0_116, %c0_117] : memref<32x96xbf16, #tpu.memory_space<vmem>>, vector<32x96xbf16>
    %c0_118 = arith.constant 0 : index
    %c0_119 = arith.constant 0 : index
    %331 = vector.load %arg14[%c0_118, %c0_119] : memref<1x96xf32, #tpu.memory_space<vmem>>, vector<1x96xf32>
    %332 = arith.truncf %297 : vector<2x32xf32> to vector<2x32xbf16>
    %cst_120 = arith.constant dense<0.000000e+00> : vector<2x128xf32>
    %333 = tpu.matmul %332, %329, %cst_120 {dimension_numbers = #tpu.dot_dimension_numbers<[1], [0], [0], [1], [0, 0, 1, 1], [], []>} : vector<2x32xbf16>, vector<32x128xbf16>, vector<2x128xf32> -> vector<2x128xf32>
    %334 = vector.extract_strided_slice %333 {offsets = [0, 0], sizes = [2, 32], strides = [1, 1]} : vector<2x128xf32> to vector<2x32xf32>
    %335 = vector.extract_strided_slice %333 {offsets = [0, 32], sizes = [2, 96], strides = [1, 1]} : vector<2x128xf32> to vector<2x96xf32>
    %336 = vector.broadcast %331 : vector<1x96xf32> to vector<2x96xf32>
    %337 = arith.addf %335, %336 : vector<2x96xf32>
    %c0_121 = arith.constant 0 : index
    %c0_122 = arith.constant 0 : index
    %c0_123 = arith.constant 0 : index
    %338 = vector.load %arg22[%c0_121, %c0_122, %c0_123] : memref<2x8x32xf32, #tpu.memory_space<vmem>>, vector<2x8x32xf32>
    %339 = vector.shape_cast %334 : vector<2x32xf32> to vector<2x1x32xf32>
    %340 = vector.broadcast %339 : vector<2x1x32xf32> to vector<2x8x32xf32>
    %341 = arith.addf %338, %340 : vector<2x8x32xf32>
    %342 = math.tanh %341 : vector<2x8x32xf32>
    %343 = arith.mulf %342, %328 : vector<2x8x32xf32>
    %cst_124 = arith.constant dense<0.000000e+00> : vector<2x8xf32>
    %344 = vector.multi_reduction <add>, %343, %cst_124 [2] : vector<2x8x32xf32> to vector<2x8xf32>
    %345 = arith.addf %344, %324 : vector<2x8xf32>
    %cst_125 = arith.constant dense<0xFF800000> : vector<2xf32>
    %346 = vector.multi_reduction <maximumf>, %345, %cst_125 [1] : vector<2x8xf32> to vector<2xf32>
    %347 = vector.shape_cast %346 : vector<2xf32> to vector<2x1xf32>
    %348 = vector.broadcast %347 : vector<2x1xf32> to vector<2x8xf32>
    %349 = arith.subf %345, %348 : vector<2x8xf32>
    %350 = math.exp %349 : vector<2x8xf32>
    %cst_126 = arith.constant dense<0.000000e+00> : vector<2xf32>
    %351 = vector.multi_reduction <add>, %350, %cst_126 [1] : vector<2x8xf32> to vector<2xf32>
    %352 = vector.shape_cast %351 : vector<2xf32> to vector<2x1xf32>
    %353 = tpu.reciprocal %352 {approx = true} : vector<2x1xf32> -> vector<2x1xf32>
    %354 = vector.broadcast %353 : vector<2x1xf32> to vector<2x8xf32>
    %355 = arith.mulf %350, %354 : vector<2x8xf32>
    %356 = vector.shape_cast %355 : vector<2x8xf32> to vector<2x1x8xf32>
    %c0_127 = arith.constant 0 : index
    %c0_128 = arith.constant 0 : index
    %c0_129 = arith.constant 0 : index
    %357 = vector.load %arg18[%c0_127, %c0_128, %c0_129] : memref<2x8x32xf32, #tpu.memory_space<vmem>>, vector<2x8x32xf32>
    "tpu.trace_start"() <{level = 10 : i32, message = "bqt,bth->bqh"}> : () -> ()
    %cst_130 = arith.constant dense<0.000000e+00> : vector<2x1x32xf32>
    %358 = tpu.matmul %356, %357, %cst_130 {dimension_numbers = #tpu.dot_dimension_numbers<[2], [1], [1], [2], [0, 0, 0, 1, 1, 2], [0], [0]>} : vector<2x1x8xf32>, vector<2x8x32xf32>, vector<2x1x32xf32> -> vector<2x1x32xf32>
    "tpu.trace_stop"() : () -> ()
    %359 = vector.shape_cast %358 : vector<2x1x32xf32> to vector<2x32xf32>
    %360 = arith.truncf %359 : vector<2x32xf32> to vector<2x32xbf16>
    %cst_131 = arith.constant dense<0.000000e+00> : vector<2x96xf32>
    %361 = tpu.matmul %360, %330, %cst_131 {dimension_numbers = #tpu.dot_dimension_numbers<[1], [0], [0], [1], [0, 0, 1, 1], [], []>} : vector<2x32xbf16>, vector<32x96xbf16>, vector<2x96xf32> -> vector<2x96xf32>
    %c0_132 = arith.constant 0 : index
    %c0_133 = arith.constant 0 : index
    %c0_134 = arith.constant 0 : index
    %362 = vector.load %arg21[%c0_132, %c0_133, %c0_134] : memref<2x8x96xf32, #tpu.memory_space<vmem>>, vector<2x1x96xf32>
    %363 = vector.shape_cast %362 : vector<2x1x96xf32> to vector<2x96xf32>
    %364 = arith.addf %361, %363 : vector<2x96xf32>
    %365 = vector.extract_strided_slice %364 {offsets = [0, 0], sizes = [2, 32], strides = [1, 1]} : vector<2x96xf32> to vector<2x32xf32>
    %366 = vector.extract_strided_slice %364 {offsets = [0, 32], sizes = [2, 32], strides = [1, 1]} : vector<2x96xf32> to vector<2x32xf32>
    %367 = vector.extract_strided_slice %364 {offsets = [0, 64], sizes = [2, 32], strides = [1, 1]} : vector<2x96xf32> to vector<2x32xf32>
    %368 = vector.extract_strided_slice %337 {offsets = [0, 0], sizes = [2, 32], strides = [1, 1]} : vector<2x96xf32> to vector<2x32xf32>
    %369 = vector.extract_strided_slice %337 {offsets = [0, 32], sizes = [2, 32], strides = [1, 1]} : vector<2x96xf32> to vector<2x32xf32>
    %370 = vector.extract_strided_slice %337 {offsets = [0, 64], sizes = [2, 32], strides = [1, 1]} : vector<2x96xf32> to vector<2x32xf32>
    %371 = arith.addf %365, %368 : vector<2x32xf32>
    %372 = arith.negf %371 : vector<2x32xf32>
    %373 = math.exp %372 : vector<2x32xf32>
    %cst_135 = arith.constant 1.000000e+00 : f32
    %374 = vector.broadcast %cst_135 : f32 to vector<2x32xf32>
    %375 = arith.addf %374, %373 : vector<2x32xf32>
    %376 = arith.divf %374, %375 : vector<2x32xf32>
    %377 = arith.addf %366, %369 : vector<2x32xf32>
    %378 = arith.negf %377 : vector<2x32xf32>
    %379 = math.exp %378 : vector<2x32xf32>
    %cst_136 = arith.constant 1.000000e+00 : f32
    %380 = vector.broadcast %cst_136 : f32 to vector<2x32xf32>
    %381 = arith.addf %380, %379 : vector<2x32xf32>
    %382 = arith.divf %380, %381 : vector<2x32xf32>
    %383 = arith.mulf %376, %370 : vector<2x32xf32>
    %384 = arith.addf %367, %383 : vector<2x32xf32>
    %385 = math.tanh %384 : vector<2x32xf32>
    %cst_137 = arith.constant 1.000000e+00 : f32
    %386 = vector.broadcast %cst_137 : f32 to vector<2x32xf32>
    %387 = arith.subf %386, %382 : vector<2x32xf32>
    %388 = arith.mulf %387, %385 : vector<2x32xf32>
    %389 = arith.mulf %382, %297 : vector<2x32xf32>
    %390 = arith.addf %388, %389 : vector<2x32xf32>
    %c0_138 = arith.constant 0 : index
    %c0_139 = arith.constant 0 : index
    %c0_140 = arith.constant 0 : index
    %391 = vector.load %arg23[%c0_138, %c0_139, %c0_140] : memref<2x8x32xf32, #tpu.memory_space<vmem>>, vector<2x1x32xf32>
    %392 = vector.shape_cast %391 : vector<2x1x32xf32> to vector<2x32xf32>
    %393 = vector.shape_cast %390 : vector<2x32xf32> to vector<2x1x32xf32>
    tpu.vector_store %arg23[%c0_138, %c0_139, %c0_140], %393 {strides = array<i32>} : memref<2x8x32xf32, #tpu.memory_space<vmem>>, vector<2x1x32xf32>,
    %394 = arith.truncf %390 : vector<2x32xf32> to vector<2x32xbf16>
    %cst_141 = arith.constant dense<0.000000e+00> : vector<2x128xf32>
    %395 = tpu.matmul %394, %329, %cst_141 {dimension_numbers = #tpu.dot_dimension_numbers<[1], [0], [0], [1], [0, 0, 1, 1], [], []>} : vector<2x32xbf16>, vector<32x128xbf16>, vector<2x128xf32> -> vector<2x128xf32>
    %396 = vector.extract_strided_slice %395 {offsets = [0, 0], sizes = [2, 32], strides = [1, 1]} : vector<2x128xf32> to vector<2x32xf32>
    %397 = vector.extract_strided_slice %395 {offsets = [0, 32], sizes = [2, 96], strides = [1, 1]} : vector<2x128xf32> to vector<2x96xf32>
    %398 = vector.broadcast %331 : vector<1x96xf32> to vector<2x96xf32>
    %399 = arith.addf %397, %398 : vector<2x96xf32>
    %c0_142 = arith.constant 0 : index
    %c0_143 = arith.constant 0 : index
    %c0_144 = arith.constant 0 : index
    %400 = vector.load %arg22[%c0_142, %c0_143, %c0_144] : memref<2x8x32xf32, #tpu.memory_space<vmem>>, vector<2x8x32xf32>
    %401 = vector.shape_cast %396 : vector<2x32xf32> to vector<2x1x32xf32>
    %402 = vector.broadcast %401 : vector<2x1x32xf32> to vector<2x8x32xf32>
    %403 = arith.addf %400, %402 : vector<2x8x32xf32>
    %404 = math.tanh %403 : vector<2x8x32xf32>
    %405 = arith.mulf %404, %328 : vector<2x8x32xf32>
    %cst_145 = arith.constant dense<0.000000e+00> : vector<2x8xf32>
    %406 = vector.multi_reduction <add>, %405, %cst_145 [2] : vector<2x8x32xf32> to vector<2x8xf32>
    %407 = arith.addf %406, %324 : vector<2x8xf32>
    %cst_146 = arith.constant dense<0xFF800000> : vector<2xf32>
    %408 = vector.multi_reduction <maximumf>, %407, %cst_146 [1] : vector<2x8xf32> to vector<2xf32>
    %409 = vector.shape_cast %408 : vector<2xf32> to vector<2x1xf32>
    %410 = vector.broadcast %409 : vector<2x1xf32> to vector<2x8xf32>
    %411 = arith.subf %407, %410 : vector<2x8xf32>
    %412 = math.exp %411 : vector<2x8xf32>
    %cst_147 = arith.constant dense<0.000000e+00> : vector<2xf32>
    %413 = vector.multi_reduction <add>, %412, %cst_147 [1] : vector<2x8xf32> to vector<2xf32>
    %414 = vector.shape_cast %413 : vector<2xf32> to vector<2x1xf32>
    %415 = tpu.reciprocal %414 {approx = true} : vector<2x1xf32> -> vector<2x1xf32>
    %416 = vector.broadcast %415 : vector<2x1xf32> to vector<2x8xf32>
    %417 = arith.mulf %412, %416 : vector<2x8xf32>
    %418 = vector.shape_cast %417 : vector<2x8xf32> to vector<2x1x8xf32>
    %c0_148 = arith.constant 0 : index
    %c0_149 = arith.constant 0 : index
    %c0_150 = arith.constant 0 : index
    %419 = vector.load %arg18[%c0_148, %c0_149, %c0_150] : memref<2x8x32xf32, #tpu.memory_space<vmem>>, vector<2x8x32xf32>
    "tpu.trace_start"() <{level = 10 : i32, message = "bqt,bth->bqh"}> : () -> ()
    %cst_151 = arith.constant dense<0.000000e+00> : vector<2x1x32xf32>
    %420 = tpu.matmul %418, %419, %cst_151 {dimension_numbers = #tpu.dot_dimension_numbers<[2], [1], [1], [2], [0, 0, 0, 1, 1, 2], [0], [0]>} : vector<2x1x8xf32>, vector<2x8x32xf32>, vector<2x1x32xf32> -> vector<2x1x32xf32>
    "tpu.trace_stop"() : () -> ()
    %421 = vector.shape_cast %420 : vector<2x1x32xf32> to vector<2x32xf32>
    %422 = arith.truncf %421 : vector<2x32xf32> to vector<2x32xbf16>
    %cst_152 = arith.constant dense<0.000000e+00> : vector<2x96xf32>
    %423 = tpu.matmul %422, %330, %cst_152 {dimension_numbers = #tpu.dot_dimension_numbers<[1], [0], [0], [1], [0, 0, 1, 1], [], []>} : vector<2x32xbf16>, vector<32x96xbf16>, vector<2x96xf32> -> vector<2x96xf32>
    %c0_153 = arith.constant 0 : index
    %c1_154 = arith.constant 1 : index
    %c0_155 = arith.constant 0 : index
    %424 = vector.load %arg21[%c0_153, %c1_154, %c0_155] : memref<2x8x96xf32, #tpu.memory_space<vmem>>, vector<2x1x96xf32>
    %425 = vector.shape_cast %424 : vector<2x1x96xf32> to vector<2x96xf32>
    %426 = arith.addf %423, %425 : vector<2x96xf32>
    %427 = vector.extract_strided_slice %426 {offsets = [0, 0], sizes = [2, 32], strides = [1, 1]} : vector<2x96xf32> to vector<2x32xf32>
    %428 = vector.extract_strided_slice %426 {offsets = [0, 32], sizes = [2, 32], strides = [1, 1]} : vector<2x96xf32> to vector<2x32xf32>
    %429 = vector.extract_strided_slice %426 {offsets = [0, 64], sizes = [2, 32], strides = [1, 1]} : vector<2x96xf32> to vector<2x32xf32>
    %430 = vector.extract_strided_slice %399 {offsets = [0, 0], sizes = [2, 32], strides = [1, 1]} : vector<2x96xf32> to vector<2x32xf32>
    %431 = vector.extract_strided_slice %399 {offsets = [0, 32], sizes = [2, 32], strides = [1, 1]} : vector<2x96xf32> to vector<2x32xf32>
    %432 = vector.extract_strided_slice %399 {offsets = [0, 64], sizes = [2, 32], strides = [1, 1]} : vector<2x96xf32> to vector<2x32xf32>
    %433 = arith.addf %427, %430 : vector<2x32xf32>
    %434 = arith.negf %433 : vector<2x32xf32>
    %435 = math.exp %434 : vector<2x32xf32>
    %cst_156 = arith.constant 1.000000e+00 : f32
    %436 = vector.broadcast %cst_156 : f32 to vector<2x32xf32>
    %437 = arith.addf %436, %435 : vector<2x32xf32>
    %438 = arith.divf %436, %437 : vector<2x32xf32>
    %439 = arith.addf %428, %431 : vector<2x32xf32>
    %440 = arith.negf %439 : vector<2x32xf32>
    %441 = math.exp %440 : vector<2x32xf32>
    %cst_157 = arith.constant 1.000000e+00 : f32
    %442 = vector.broadcast %cst_157 : f32 to vector<2x32xf32>
    %443 = arith.addf %442, %441 : vector<2x32xf32>
    %444 = arith.divf %442, %443 : vector<2x32xf32>
    %445 = arith.mulf %438, %432 : vector<2x32xf32>
    %446 = arith.addf %429, %445 : vector<2x32xf32>
    %447 = math.tanh %446 : vector<2x32xf32>
    %cst_158 = arith.constant 1.000000e+00 : f32
    %448 = vector.broadcast %cst_158 : f32 to vector<2x32xf32>
    %449 = arith.subf %448, %444 : vector<2x32xf32>
    %450 = arith.mulf %449, %447 : vector<2x32xf32>
    %451 = arith.mulf %444, %390 : vector<2x32xf32>
    %452 = arith.addf %450, %451 : vector<2x32xf32>
    %c0_159 = arith.constant 0 : index
    %c1_160 = arith.constant 1 : index
    %c0_161 = arith.constant 0 : index
    %453 = vector.load %arg23[%c0_159, %c1_160, %c0_161] : memref<2x8x32xf32, #tpu.memory_space<vmem>>, vector<2x1x32xf32>
    %454 = vector.shape_cast %453 : vector<2x1x32xf32> to vector<2x32xf32>
    %455 = vector.shape_cast %452 : vector<2x32xf32> to vector<2x1x32xf32>
    tpu.vector_store %arg23[%c0_159, %c1_160, %c0_161], %455 {strides = array<i32>} : memref<2x8x32xf32, #tpu.memory_space<vmem>>, vector<2x1x32xf32>,
    %456 = arith.truncf %452 : vector<2x32xf32> to vector<2x32xbf16>
    %cst_162 = arith.constant dense<0.000000e+00> : vector<2x128xf32>
    %457 = tpu.matmul %456, %329, %cst_162 {dimension_numbers = #tpu.dot_dimension_numbers<[1], [0], [0], [1], [0, 0, 1, 1], [], []>} : vector<2x32xbf16>, vector<32x128xbf16>, vector<2x128xf32> -> vector<2x128xf32>
    %458 = vector.extract_strided_slice %457 {offsets = [0, 0], sizes = [2, 32], strides = [1, 1]} : vector<2x128xf32> to vector<2x32xf32>
    %459 = vector.extract_strided_slice %457 {offsets = [0, 32], sizes = [2, 96], strides = [1, 1]} : vector<2x128xf32> to vector<2x96xf32>
    %460 = vector.broadcast %331 : vector<1x96xf32> to vector<2x96xf32>
    %461 = arith.addf %459, %460 : vector<2x96xf32>
    %c0_163 = arith.constant 0 : index
    %c0_164 = arith.constant 0 : index
    %c0_165 = arith.constant 0 : index
    %462 = vector.load %arg22[%c0_163, %c0_164, %c0_165] : memref<2x8x32xf32, #tpu.memory_space<vmem>>, vector<2x8x32xf32>
    %463 = vector.shape_cast %458 : vector<2x32xf32> to vector<2x1x32xf32>
    %464 = vector.broadcast %463 : vector<2x1x32xf32> to vector<2x8x32xf32>
    %465 = arith.addf %462, %464 : vector<2x8x32xf32>
    %466 = math.tanh %465 : vector<2x8x32xf32>
    %467 = arith.mulf %466, %328 : vector<2x8x32xf32>
    %cst_166 = arith.constant dense<0.000000e+00> : vector<2x8xf32>
    %468 = vector.multi_reduction <add>, %467, %cst_166 [2] : vector<2x8x32xf32> to vector<2x8xf32>
    %469 = arith.addf %468, %324 : vector<2x8xf32>
    %cst_167 = arith.constant dense<0xFF800000> : vector<2xf32>
    %470 = vector.multi_reduction <maximumf>, %469, %cst_167 [1] : vector<2x8xf32> to vector<2xf32>
    %471 = vector.shape_cast %470 : vector<2xf32> to vector<2x1xf32>
    %472 = vector.broadcast %471 : vector<2x1xf32> to vector<2x8xf32>
    %473 = arith.subf %469, %472 : vector<2x8xf32>
    %474 = math.exp %473 : vector<2x8xf32>
    %cst_168 = arith.constant dense<0.000000e+00> : vector<2xf32>
    %475 = vector.multi_reduction <add>, %474, %cst_168 [1] : vector<2x8xf32> to vector<2xf32>
    %476 = vector.shape_cast %475 : vector<2xf32> to vector<2x1xf32>
    %477 = tpu.reciprocal %476 {approx = true} : vector<2x1xf32> -> vector<2x1xf32>
    %478 = vector.broadcast %477 : vector<2x1xf32> to vector<2x8xf32>
    %479 = arith.mulf %474, %478 : vector<2x8xf32>
    %480 = vector.shape_cast %479 : vector<2x8xf32> to vector<2x1x8xf32>
    %c0_169 = arith.constant 0 : index
    %c0_170 = arith.constant 0 : index
    %c0_171 = arith.constant 0 : index
    %481 = vector.load %arg18[%c0_169, %c0_170, %c0_171] : memref<2x8x32xf32, #tpu.memory_space<vmem>>, vector<2x8x32xf32>
    "tpu.trace_start"() <{level = 10 : i32, message = "bqt,bth->bqh"}> : () -> ()
    %cst_172 = arith.constant dense<0.000000e+00> : vector<2x1x32xf32>
    %482 = tpu.matmul %480, %481, %cst_172 {dimension_numbers = #tpu.dot_dimension_numbers<[2], [1], [1], [2], [0, 0, 0, 1, 1, 2], [0], [0]>} : vector<2x1x8xf32>, vector<2x8x32xf32>, vector<2x1x32xf32> -> vector<2x1x32xf32>
    "tpu.trace_stop"() : () -> ()
    %483 = vector.shape_cast %482 : vector<2x1x32xf32> to vector<2x32xf32>
    %484 = arith.truncf %483 : vector<2x32xf32> to vector<2x32xbf16>
    %cst_173 = arith.constant dense<0.000000e+00> : vector<2x96xf32>
    %485 = tpu.matmul %484, %330, %cst_173 {dimension_numbers = #tpu.dot_dimension_numbers<[1], [0], [0], [1], [0, 0, 1, 1], [], []>} : vector<2x32xbf16>, vector<32x96xbf16>, vector<2x96xf32> -> vector<2x96xf32>
    %c0_174 = arith.constant 0 : index
    %c2_175 = arith.constant 2 : index
    %c0_176 = arith.constant 0 : index
    %486 = vector.load %arg21[%c0_174, %c2_175, %c0_176] : memref<2x8x96xf32, #tpu.memory_space<vmem>>, vector<2x1x96xf32>
    %487 = vector.shape_cast %486 : vector<2x1x96xf32> to vector<2x96xf32>
    %488 = arith.addf %485, %487 : vector<2x96xf32>
    %489 = vector.extract_strided_slice %488 {offsets = [0, 0], sizes = [2, 32], strides = [1, 1]} : vector<2x96xf32> to vector<2x32xf32>
    %490 = vector.extract_strided_slice %488 {offsets = [0, 32], sizes = [2, 32], strides = [1, 1]} : vector<2x96xf32> to vector<2x32xf32>
    %491 = vector.extract_strided_slice %488 {offsets = [0, 64], sizes = [2, 32], strides = [1, 1]} : vector<2x96xf32> to vector<2x32xf32>
    %492 = vector.extract_strided_slice %461 {offsets = [0, 0], sizes = [2, 32], strides = [1, 1]} : vector<2x96xf32> to vector<2x32xf32>
    %493 = vector.extract_strided_slice %461 {offsets = [0, 32], sizes = [2, 32], strides = [1, 1]} : vector<2x96xf32> to vector<2x32xf32>
    %494 = vector.extract_strided_slice %461 {offsets = [0, 64], sizes = [2, 32], strides = [1, 1]} : vector<2x96xf32> to vector<2x32xf32>
    %495 = arith.addf %489, %492 : vector<2x32xf32>
    %496 = arith.negf %495 : vector<2x32xf32>
    %497 = math.exp %496 : vector<2x32xf32>
    %cst_177 = arith.constant 1.000000e+00 : f32
    %498 = vector.broadcast %cst_177 : f32 to vector<2x32xf32>
    %499 = arith.addf %498, %497 : vector<2x32xf32>
    %500 = arith.divf %498, %499 : vector<2x32xf32>
    %501 = arith.addf %490, %493 : vector<2x32xf32>
    %502 = arith.negf %501 : vector<2x32xf32>
    %503 = math.exp %502 : vector<2x32xf32>
    %cst_178 = arith.constant 1.000000e+00 : f32
    %504 = vector.broadcast %cst_178 : f32 to vector<2x32xf32>
    %505 = arith.addf %504, %503 : vector<2x32xf32>
    %506 = arith.divf %504, %505 : vector<2x32xf32>
    %507 = arith.mulf %500, %494 : vector<2x32xf32>
    %508 = arith.addf %491, %507 : vector<2x32xf32>
    %509 = math.tanh %508 : vector<2x32xf32>
    %cst_179 = arith.constant 1.000000e+00 : f32
    %510 = vector.broadcast %cst_179 : f32 to vector<2x32xf32>
    %511 = arith.subf %510, %506 : vector<2x32xf32>
    %512 = arith.mulf %511, %509 : vector<2x32xf32>
    %513 = arith.mulf %506, %452 : vector<2x32xf32>
    %514 = arith.addf %512, %513 : vector<2x32xf32>
    %c0_180 = arith.constant 0 : index
    %c2_181 = arith.constant 2 : index
    %c0_182 = arith.constant 0 : index
    %515 = vector.load %arg23[%c0_180, %c2_181, %c0_182] : memref<2x8x32xf32, #tpu.memory_space<vmem>>, vector<2x1x32xf32>
    %516 = vector.shape_cast %515 : vector<2x1x32xf32> to vector<2x32xf32>
    %517 = vector.shape_cast %514 : vector<2x32xf32> to vector<2x1x32xf32>
    tpu.vector_store %arg23[%c0_180, %c2_181, %c0_182], %517 {strides = array<i32>} : memref<2x8x32xf32, #tpu.memory_space<vmem>>, vector<2x1x32xf32>,
    %518 = arith.truncf %514 : vector<2x32xf32> to vector<2x32xbf16>
    %cst_183 = arith.constant dense<0.000000e+00> : vector<2x128xf32>
    %519 = tpu.matmul %518, %329, %cst_183 {dimension_numbers = #tpu.dot_dimension_numbers<[1], [0], [0], [1], [0, 0, 1, 1], [], []>} : vector<2x32xbf16>, vector<32x128xbf16>, vector<2x128xf32> -> vector<2x128xf32>
    %520 = vector.extract_strided_slice %519 {offsets = [0, 0], sizes = [2, 32], strides = [1, 1]} : vector<2x128xf32> to vector<2x32xf32>
    %521 = vector.extract_strided_slice %519 {offsets = [0, 32], sizes = [2, 96], strides = [1, 1]} : vector<2x128xf32> to vector<2x96xf32>
    %522 = vector.broadcast %331 : vector<1x96xf32> to vector<2x96xf32>
    %523 = arith.addf %521, %522 : vector<2x96xf32>
    %c0_184 = arith.constant 0 : index
    %c0_185 = arith.constant 0 : index
    %c0_186 = arith.constant 0 : index
    %524 = vector.load %arg22[%c0_184, %c0_185, %c0_186] : memref<2x8x32xf32, #tpu.memory_space<vmem>>, vector<2x8x32xf32>
    %525 = vector.shape_cast %520 : vector<2x32xf32> to vector<2x1x32xf32>
    %526 = vector.broadcast %525 : vector<2x1x32xf32> to vector<2x8x32xf32>
    %527 = arith.addf %524, %526 : vector<2x8x32xf32>
    %528 = math.tanh %527 : vector<2x8x32xf32>
    %529 = arith.mulf %528, %328 : vector<2x8x32xf32>
    %cst_187 = arith.constant dense<0.000000e+00> : vector<2x8xf32>
    %530 = vector.multi_reduction <add>, %529, %cst_187 [2] : vector<2x8x32xf32> to vector<2x8xf32>
    %531 = arith.addf %530, %324 : vector<2x8xf32>
    %cst_188 = arith.constant dense<0xFF800000> : vector<2xf32>
    %532 = vector.multi_reduction <maximumf>, %531, %cst_188 [1] : vector<2x8xf32> to vector<2xf32>
    %533 = vector.shape_cast %532 : vector<2xf32> to vector<2x1xf32>
    %534 = vector.broadcast %533 : vector<2x1xf32> to vector<2x8xf32>
    %535 = arith.subf %531, %534 : vector<2x8xf32>
    %536 = math.exp %535 : vector<2x8xf32>
    %cst_189 = arith.constant dense<0.000000e+00> : vector<2xf32>
    %537 = vector.multi_reduction <add>, %536, %cst_189 [1] : vector<2x8xf32> to vector<2xf32>
    %538 = vector.shape_cast %537 : vector<2xf32> to vector<2x1xf32>
    %539 = tpu.reciprocal %538 {approx = true} : vector<2x1xf32> -> vector<2x1xf32>
    %540 = vector.broadcast %539 : vector<2x1xf32> to vector<2x8xf32>
    %541 = arith.mulf %536, %540 : vector<2x8xf32>
    %542 = vector.shape_cast %541 : vector<2x8xf32> to vector<2x1x8xf32>
    %c0_190 = arith.constant 0 : index
    %c0_191 = arith.constant 0 : index
    %c0_192 = arith.constant 0 : index
    %543 = vector.load %arg18[%c0_190, %c0_191, %c0_192] : memref<2x8x32xf32, #tpu.memory_space<vmem>>, vector<2x8x32xf32>
    "tpu.trace_start"() <{level = 10 : i32, message = "bqt,bth->bqh"}> : () -> ()
    %cst_193 = arith.constant dense<0.000000e+00> : vector<2x1x32xf32>
    %544 = tpu.matmul %542, %543, %cst_193 {dimension_numbers = #tpu.dot_dimension_numbers<[2], [1], [1], [2], [0, 0, 0, 1, 1, 2], [0], [0]>} : vector<2x1x8xf32>, vector<2x8x32xf32>, vector<2x1x32xf32> -> vector<2x1x32xf32>
    "tpu.trace_stop"() : () -> ()
    %545 = vector.shape_cast %544 : vector<2x1x32xf32> to vector<2x32xf32>
    %546 = arith.truncf %545 : vector<2x32xf32> to vector<2x32xbf16>
    %cst_194 = arith.constant dense<0.000000e+00> : vector<2x96xf32>
    %547 = tpu.matmul %546, %330, %cst_194 {dimension_numbers = #tpu.dot_dimension_numbers<[1], [0], [0], [1], [0, 0, 1, 1], [], []>} : vector<2x32xbf16>, vector<32x96xbf16>, vector<2x96xf32> -> vector<2x96xf32>
    %c0_195 = arith.constant 0 : index
    %c3_196 = arith.constant 3 : index
    %c0_197 = arith.constant 0 : index
    %548 = vector.load %arg21[%c0_195, %c3_196, %c0_197] : memref<2x8x96xf32, #tpu.memory_space<vmem>>, vector<2x1x96xf32>
    %549 = vector.shape_cast %548 : vector<2x1x96xf32> to vector<2x96xf32>
    %550 = arith.addf %547, %549 : vector<2x96xf32>
    %551 = vector.extract_strided_slice %550 {offsets = [0, 0], sizes = [2, 32], strides = [1, 1]} : vector<2x96xf32> to vector<2x32xf32>
    %552 = vector.extract_strided_slice %550 {offsets = [0, 32], sizes = [2, 32], strides = [1, 1]} : vector<2x96xf32> to vector<2x32xf32>
    %553 = vector.extract_strided_slice %550 {offsets = [0, 64], sizes = [2, 32], strides = [1, 1]} : vector<2x96xf32> to vector<2x32xf32>
    %554 = vector.extract_strided_slice %523 {offsets = [0, 0], sizes = [2, 32], strides = [1, 1]} : vector<2x96xf32> to vector<2x32xf32>
    %555 = vector.extract_strided_slice %523 {offsets = [0, 32], sizes = [2, 32], strides = [1, 1]} : vector<2x96xf32> to vector<2x32xf32>
    %556 = vector.extract_strided_slice %523 {offsets = [0, 64], sizes = [2, 32], strides = [1, 1]} : vector<2x96xf32> to vector<2x32xf32>
    %557 = arith.addf %551, %554 : vector<2x32xf32>
    %558 = arith.negf %557 : vector<2x32xf32>
    %559 = math.exp %558 : vector<2x32xf32>
    %cst_198 = arith.constant 1.000000e+00 : f32
    %560 = vector.broadcast %cst_198 : f32 to vector<2x32xf32>
    %561 = arith.addf %560, %559 : vector<2x32xf32>
    %562 = arith.divf %560, %561 : vector<2x32xf32>
    %563 = arith.addf %552, %555 : vector<2x32xf32>
    %564 = arith.negf %563 : vector<2x32xf32>
    %565 = math.exp %564 : vector<2x32xf32>
    %cst_199 = arith.constant 1.000000e+00 : f32
    %566 = vector.broadcast %cst_199 : f32 to vector<2x32xf32>
    %567 = arith.addf %566, %565 : vector<2x32xf32>
    %568 = arith.divf %566, %567 : vector<2x32xf32>
    %569 = arith.mulf %562, %556 : vector<2x32xf32>
    %570 = arith.addf %553, %569 : vector<2x32xf32>
    %571 = math.tanh %570 : vector<2x32xf32>
    %cst_200 = arith.constant 1.000000e+00 : f32
    %572 = vector.broadcast %cst_200 : f32 to vector<2x32xf32>
    %573 = arith.subf %572, %568 : vector<2x32xf32>
    %574 = arith.mulf %573, %571 : vector<2x32xf32>
    %575 = arith.mulf %568, %514 : vector<2x32xf32>
    %576 = arith.addf %574, %575 : vector<2x32xf32>
    %c0_201 = arith.constant 0 : index
    %c3_202 = arith.constant 3 : index
    %c0_203 = arith.constant 0 : index
    %577 = vector.load %arg23[%c0_201, %c3_202, %c0_203] : memref<2x8x32xf32, #tpu.memory_space<vmem>>, vector<2x1x32xf32>
    %578 = vector.shape_cast %577 : vector<2x1x32xf32> to vector<2x32xf32>
    %579 = vector.shape_cast %576 : vector<2x32xf32> to vector<2x1x32xf32>
    tpu.vector_store %arg23[%c0_201, %c3_202, %c0_203], %579 {strides = array<i32>} : memref<2x8x32xf32, #tpu.memory_space<vmem>>, vector<2x1x32xf32>,
    %580 = arith.truncf %576 : vector<2x32xf32> to vector<2x32xbf16>
    %cst_204 = arith.constant dense<0.000000e+00> : vector<2x128xf32>
    %581 = tpu.matmul %580, %329, %cst_204 {dimension_numbers = #tpu.dot_dimension_numbers<[1], [0], [0], [1], [0, 0, 1, 1], [], []>} : vector<2x32xbf16>, vector<32x128xbf16>, vector<2x128xf32> -> vector<2x128xf32>
    %582 = vector.extract_strided_slice %581 {offsets = [0, 0], sizes = [2, 32], strides = [1, 1]} : vector<2x128xf32> to vector<2x32xf32>
    %583 = vector.extract_strided_slice %581 {offsets = [0, 32], sizes = [2, 96], strides = [1, 1]} : vector<2x128xf32> to vector<2x96xf32>
    %584 = vector.broadcast %331 : vector<1x96xf32> to vector<2x96xf32>
    %585 = arith.addf %583, %584 : vector<2x96xf32>
    %c0_205 = arith.constant 0 : index
    %c0_206 = arith.constant 0 : index
    %c0_207 = arith.constant 0 : index
    %586 = vector.load %arg22[%c0_205, %c0_206, %c0_207] : memref<2x8x32xf32, #tpu.memory_space<vmem>>, vector<2x8x32xf32>
    %587 = vector.shape_cast %582 : vector<2x32xf32> to vector<2x1x32xf32>
    %588 = vector.broadcast %587 : vector<2x1x32xf32> to vector<2x8x32xf32>
    %589 = arith.addf %586, %588 : vector<2x8x32xf32>
    %590 = math.tanh %589 : vector<2x8x32xf32>
    %591 = arith.mulf %590, %328 : vector<2x8x32xf32>
    %cst_208 = arith.constant dense<0.000000e+00> : vector<2x8xf32>
    %592 = vector.multi_reduction <add>, %591, %cst_208 [2] : vector<2x8x32xf32> to vector<2x8xf32>
    %593 = arith.addf %592, %324 : vector<2x8xf32>
    %cst_209 = arith.constant dense<0xFF800000> : vector<2xf32>
    %594 = vector.multi_reduction <maximumf>, %593, %cst_209 [1] : vector<2x8xf32> to vector<2xf32>
    %595 = vector.shape_cast %594 : vector<2xf32> to vector<2x1xf32>
    %596 = vector.broadcast %595 : vector<2x1xf32> to vector<2x8xf32>
    %597 = arith.subf %593, %596 : vector<2x8xf32>
    %598 = math.exp %597 : vector<2x8xf32>
    %cst_210 = arith.constant dense<0.000000e+00> : vector<2xf32>
    %599 = vector.multi_reduction <add>, %598, %cst_210 [1] : vector<2x8xf32> to vector<2xf32>
    %600 = vector.shape_cast %599 : vector<2xf32> to vector<2x1xf32>
    %601 = tpu.reciprocal %600 {approx = true} : vector<2x1xf32> -> vector<2x1xf32>
    %602 = vector.broadcast %601 : vector<2x1xf32> to vector<2x8xf32>
    %603 = arith.mulf %598, %602 : vector<2x8xf32>
    %604 = vector.shape_cast %603 : vector<2x8xf32> to vector<2x1x8xf32>
    %c0_211 = arith.constant 0 : index
    %c0_212 = arith.constant 0 : index
    %c0_213 = arith.constant 0 : index
    %605 = vector.load %arg18[%c0_211, %c0_212, %c0_213] : memref<2x8x32xf32, #tpu.memory_space<vmem>>, vector<2x8x32xf32>
    "tpu.trace_start"() <{level = 10 : i32, message = "bqt,bth->bqh"}> : () -> ()
    %cst_214 = arith.constant dense<0.000000e+00> : vector<2x1x32xf32>
    %606 = tpu.matmul %604, %605, %cst_214 {dimension_numbers = #tpu.dot_dimension_numbers<[2], [1], [1], [2], [0, 0, 0, 1, 1, 2], [0], [0]>} : vector<2x1x8xf32>, vector<2x8x32xf32>, vector<2x1x32xf32> -> vector<2x1x32xf32>
    "tpu.trace_stop"() : () -> ()
    %607 = vector.shape_cast %606 : vector<2x1x32xf32> to vector<2x32xf32>
    %608 = arith.truncf %607 : vector<2x32xf32> to vector<2x32xbf16>
    %cst_215 = arith.constant dense<0.000000e+00> : vector<2x96xf32>
    %609 = tpu.matmul %608, %330, %cst_215 {dimension_numbers = #tpu.dot_dimension_numbers<[1], [0], [0], [1], [0, 0, 1, 1], [], []>} : vector<2x32xbf16>, vector<32x96xbf16>, vector<2x96xf32> -> vector<2x96xf32>
    %c0_216 = arith.constant 0 : index
    %c4_217 = arith.constant 4 : index
    %c0_218 = arith.constant 0 : index
    %610 = vector.load %arg21[%c0_216, %c4_217, %c0_218] : memref<2x8x96xf32, #tpu.memory_space<vmem>>, vector<2x1x96xf32>
    %611 = vector.shape_cast %610 : vector<2x1x96xf32> to vector<2x96xf32>
    %612 = arith.addf %609, %611 : vector<2x96xf32>
    %613 = vector.extract_strided_slice %612 {offsets = [0, 0], sizes = [2, 32], strides = [1, 1]} : vector<2x96xf32> to vector<2x32xf32>
    %614 = vector.extract_strided_slice %612 {offsets = [0, 32], sizes = [2, 32], strides = [1, 1]} : vector<2x96xf32> to vector<2x32xf32>
    %615 = vector.extract_strided_slice %612 {offsets = [0, 64], sizes = [2, 32], strides = [1, 1]} : vector<2x96xf32> to vector<2x32xf32>
    %616 = vector.extract_strided_slice %585 {offsets = [0, 0], sizes = [2, 32], strides = [1, 1]} : vector<2x96xf32> to vector<2x32xf32>
    %617 = vector.extract_strided_slice %585 {offsets = [0, 32], sizes = [2, 32], strides = [1, 1]} : vector<2x96xf32> to vector<2x32xf32>
    %618 = vector.extract_strided_slice %585 {offsets = [0, 64], sizes = [2, 32], strides = [1, 1]} : vector<2x96xf32> to vector<2x32xf32>
    %619 = arith.addf %613, %616 : vector<2x32xf32>
    %620 = arith.negf %619 : vector<2x32xf32>
    %621 = math.exp %620 : vector<2x32xf32>
    %cst_219 = arith.constant 1.000000e+00 : f32
    %622 = vector.broadcast %cst_219 : f32 to vector<2x32xf32>
    %623 = arith.addf %622, %621 : vector<2x32xf32>
    %624 = arith.divf %622, %623 : vector<2x32xf32>
    %625 = arith.addf %614, %617 : vector<2x32xf32>
    %626 = arith.negf %625 : vector<2x32xf32>
    %627 = math.exp %626 : vector<2x32xf32>
    %cst_220 = arith.constant 1.000000e+00 : f32
    %628 = vector.broadcast %cst_220 : f32 to vector<2x32xf32>
    %629 = arith.addf %628, %627 : vector<2x32xf32>
    %630 = arith.divf %628, %629 : vector<2x32xf32>
    %631 = arith.mulf %624, %618 : vector<2x32xf32>
    %632 = arith.addf %615, %631 : vector<2x32xf32>
    %633 = math.tanh %632 : vector<2x32xf32>
    %cst_221 = arith.constant 1.000000e+00 : f32
    %634 = vector.broadcast %cst_221 : f32 to vector<2x32xf32>
    %635 = arith.subf %634, %630 : vector<2x32xf32>
    %636 = arith.mulf %635, %633 : vector<2x32xf32>
    %637 = arith.mulf %630, %576 : vector<2x32xf32>
    %638 = arith.addf %636, %637 : vector<2x32xf32>
    %c0_222 = arith.constant 0 : index
    %c4_223 = arith.constant 4 : index
    %c0_224 = arith.constant 0 : index
    %639 = vector.load %arg23[%c0_222, %c4_223, %c0_224] : memref<2x8x32xf32, #tpu.memory_space<vmem>>, vector<2x1x32xf32>
    %640 = vector.shape_cast %639 : vector<2x1x32xf32> to vector<2x32xf32>
    %641 = vector.shape_cast %638 : vector<2x32xf32> to vector<2x1x32xf32>
    tpu.vector_store %arg23[%c0_222, %c4_223, %c0_224], %641 {strides = array<i32>} : memref<2x8x32xf32, #tpu.memory_space<vmem>>, vector<2x1x32xf32>,
    %642 = arith.truncf %638 : vector<2x32xf32> to vector<2x32xbf16>
    %cst_225 = arith.constant dense<0.000000e+00> : vector<2x128xf32>
    %643 = tpu.matmul %642, %329, %cst_225 {dimension_numbers = #tpu.dot_dimension_numbers<[1], [0], [0], [1], [0, 0, 1, 1], [], []>} : vector<2x32xbf16>, vector<32x128xbf16>, vector<2x128xf32> -> vector<2x128xf32>
    %644 = vector.extract_strided_slice %643 {offsets = [0, 0], sizes = [2, 32], strides = [1, 1]} : vector<2x128xf32> to vector<2x32xf32>
    %645 = vector.extract_strided_slice %643 {offsets = [0, 32], sizes = [2, 96], strides = [1, 1]} : vector<2x128xf32> to vector<2x96xf32>
    %646 = vector.broadcast %331 : vector<1x96xf32> to vector<2x96xf32>
    %647 = arith.addf %645, %646 : vector<2x96xf32>
    %c0_226 = arith.constant 0 : index
    %c0_227 = arith.constant 0 : index
    %c0_228 = arith.constant 0 : index
    %648 = vector.load %arg22[%c0_226, %c0_227, %c0_228] : memref<2x8x32xf32, #tpu.memory_space<vmem>>, vector<2x8x32xf32>
    %649 = vector.shape_cast %644 : vector<2x32xf32> to vector<2x1x32xf32>
    %650 = vector.broadcast %649 : vector<2x1x32xf32> to vector<2x8x32xf32>
    %651 = arith.addf %648, %650 : vector<2x8x32xf32>
    %652 = math.tanh %651 : vector<2x8x32xf32>
    %653 = arith.mulf %652, %328 : vector<2x8x32xf32>
    %cst_229 = arith.constant dense<0.000000e+00> : vector<2x8xf32>
    %654 = vector.multi_reduction <add>, %653, %cst_229 [2] : vector<2x8x32xf32> to vector<2x8xf32>
    %655 = arith.addf %654, %324 : vector<2x8xf32>
    %cst_230 = arith.constant dense<0xFF800000> : vector<2xf32>
    %656 = vector.multi_reduction <maximumf>, %655, %cst_230 [1] : vector<2x8xf32> to vector<2xf32>
    %657 = vector.shape_cast %656 : vector<2xf32> to vector<2x1xf32>
    %658 = vector.broadcast %657 : vector<2x1xf32> to vector<2x8xf32>
    %659 = arith.subf %655, %658 : vector<2x8xf32>
    %660 = math.exp %659 : vector<2x8xf32>
    %cst_231 = arith.constant dense<0.000000e+00> : vector<2xf32>
    %661 = vector.multi_reduction <add>, %660, %cst_231 [1] : vector<2x8xf32> to vector<2xf32>
    %662 = vector.shape_cast %661 : vector<2xf32> to vector<2x1xf32>
    %663 = tpu.reciprocal %662 {approx = true} : vector<2x1xf32> -> vector<2x1xf32>
    %664 = vector.broadcast %663 : vector<2x1xf32> to vector<2x8xf32>
    %665 = arith.mulf %660, %664 : vector<2x8xf32>
    %666 = vector.shape_cast %665 : vector<2x8xf32> to vector<2x1x8xf32>
    %c0_232 = arith.constant 0 : index
    %c0_233 = arith.constant 0 : index
    %c0_234 = arith.constant 0 : index
    %667 = vector.load %arg18[%c0_232, %c0_233, %c0_234] : memref<2x8x32xf32, #tpu.memory_space<vmem>>, vector<2x8x32xf32>
    "tpu.trace_start"() <{level = 10 : i32, message = "bqt,bth->bqh"}> : () -> ()
    %cst_235 = arith.constant dense<0.000000e+00> : vector<2x1x32xf32>
    %668 = tpu.matmul %666, %667, %cst_235 {dimension_numbers = #tpu.dot_dimension_numbers<[2], [1], [1], [2], [0, 0, 0, 1, 1, 2], [0], [0]>} : vector<2x1x8xf32>, vector<2x8x32xf32>, vector<2x1x32xf32> -> vector<2x1x32xf32>
    "tpu.trace_stop"() : () -> ()
    %669 = vector.shape_cast %668 : vector<2x1x32xf32> to vector<2x32xf32>
    %670 = arith.truncf %669 : vector<2x32xf32> to vector<2x32xbf16>
    %cst_236 = arith.constant dense<0.000000e+00> : vector<2x96xf32>
    %671 = tpu.matmul %670, %330, %cst_236 {dimension_numbers = #tpu.dot_dimension_numbers<[1], [0], [0], [1], [0, 0, 1, 1], [], []>} : vector<2x32xbf16>, vector<32x96xbf16>, vector<2x96xf32> -> vector<2x96xf32>
    %c0_237 = arith.constant 0 : index
    %c5_238 = arith.constant 5 : index
    %c0_239 = arith.constant 0 : index
    %672 = vector.load %arg21[%c0_237, %c5_238, %c0_239] : memref<2x8x96xf32, #tpu.memory_space<vmem>>, vector<2x1x96xf32>
    %673 = vector.shape_cast %672 : vector<2x1x96xf32> to vector<2x96xf32>
    %674 = arith.addf %671, %673 : vector<2x96xf32>
    %675 = vector.extract_strided_slice %674 {offsets = [0, 0], sizes = [2, 32], strides = [1, 1]} : vector<2x96xf32> to vector<2x32xf32>
    %676 = vector.extract_strided_slice %674 {offsets = [0, 32], sizes = [2, 32], strides = [1, 1]} : vector<2x96xf32> to vector<2x32xf32>
    %677 = vector.extract_strided_slice %674 {offsets = [0, 64], sizes = [2, 32], strides = [1, 1]} : vector<2x96xf32> to vector<2x32xf32>
    %678 = vector.extract_strided_slice %647 {offsets = [0, 0], sizes = [2, 32], strides = [1, 1]} : vector<2x96xf32> to vector<2x32xf32>
    %679 = vector.extract_strided_slice %647 {offsets = [0, 32], sizes = [2, 32], strides = [1, 1]} : vector<2x96xf32> to vector<2x32xf32>
    %680 = vector.extract_strided_slice %647 {offsets = [0, 64], sizes = [2, 32], strides = [1, 1]} : vector<2x96xf32> to vector<2x32xf32>
    %681 = arith.addf %675, %678 : vector<2x32xf32>
    %682 = arith.negf %681 : vector<2x32xf32>
    %683 = math.exp %682 : vector<2x32xf32>
    %cst_240 = arith.constant 1.000000e+00 : f32
    %684 = vector.broadcast %cst_240 : f32 to vector<2x32xf32>
    %685 = arith.addf %684, %683 : vector<2x32xf32>
    %686 = arith.divf %684, %685 : vector<2x32xf32>
    %687 = arith.addf %676, %679 : vector<2x32xf32>
    %688 = arith.negf %687 : vector<2x32xf32>
    %689 = math.exp %688 : vector<2x32xf32>
    %cst_241 = arith.constant 1.000000e+00 : f32
    %690 = vector.broadcast %cst_241 : f32 to vector<2x32xf32>
    %691 = arith.addf %690, %689 : vector<2x32xf32>
    %692 = arith.divf %690, %691 : vector<2x32xf32>
    %693 = arith.mulf %686, %680 : vector<2x32xf32>
    %694 = arith.addf %677, %693 : vector<2x32xf32>
    %695 = math.tanh %694 : vector<2x32xf32>
    %cst_242 = arith.constant 1.000000e+00 : f32
    %696 = vector.broadcast %cst_242 : f32 to vector<2x32xf32>
    %697 = arith.subf %696, %692 : vector<2x32xf32>
    %698 = arith.mulf %697, %695 : vector<2x32xf32>
    %699 = arith.mulf %692, %638 : vector<2x32xf32>
    %700 = arith.addf %698, %699 : vector<2x32xf32>
    %c0_243 = arith.constant 0 : index
    %c5_244 = arith.constant 5 : index
    %c0_245 = arith.constant 0 : index
    %701 = vector.load %arg23[%c0_243, %c5_244, %c0_245] : memref<2x8x32xf32, #tpu.memory_space<vmem>>, vector<2x1x32xf32>
    %702 = vector.shape_cast %701 : vector<2x1x32xf32> to vector<2x32xf32>
    %703 = vector.shape_cast %700 : vector<2x32xf32> to vector<2x1x32xf32>
    tpu.vector_store %arg23[%c0_243, %c5_244, %c0_245], %703 {strides = array<i32>} : memref<2x8x32xf32, #tpu.memory_space<vmem>>, vector<2x1x32xf32>,
    %704 = arith.truncf %700 : vector<2x32xf32> to vector<2x32xbf16>
    %cst_246 = arith.constant dense<0.000000e+00> : vector<2x128xf32>
    %705 = tpu.matmul %704, %329, %cst_246 {dimension_numbers = #tpu.dot_dimension_numbers<[1], [0], [0], [1], [0, 0, 1, 1], [], []>} : vector<2x32xbf16>, vector<32x128xbf16>, vector<2x128xf32> -> vector<2x128xf32>
    %706 = vector.extract_strided_slice %705 {offsets = [0, 0], sizes = [2, 32], strides = [1, 1]} : vector<2x128xf32> to vector<2x32xf32>
    %707 = vector.extract_strided_slice %705 {offsets = [0, 32], sizes = [2, 96], strides = [1, 1]} : vector<2x128xf32> to vector<2x96xf32>
    %708 = vector.broadcast %331 : vector<1x96xf32> to vector<2x96xf32>
    %709 = arith.addf %707, %708 : vector<2x96xf32>
    %c0_247 = arith.constant 0 : index
    %c0_248 = arith.constant 0 : index
    %c0_249 = arith.constant 0 : index
    %710 = vector.load %arg22[%c0_247, %c0_248, %c0_249] : memref<2x8x32xf32, #tpu.memory_space<vmem>>, vector<2x8x32xf32>
    %711 = vector.shape_cast %706 : vector<2x32xf32> to vector<2x1x32xf32>
    %712 = vector.broadcast %711 : vector<2x1x32xf32> to vector<2x8x32xf32>
    %713 = arith.addf %710, %712 : vector<2x8x32xf32>
    %714 = math.tanh %713 : vector<2x8x32xf32>
    %715 = arith.mulf %714, %328 : vector<2x8x32xf32>
    %cst_250 = arith.constant dense<0.000000e+00> : vector<2x8xf32>
    %716 = vector.multi_reduction <add>, %715, %cst_250 [2] : vector<2x8x32xf32> to vector<2x8xf32>
    %717 = arith.addf %716, %324 : vector<2x8xf32>
    %cst_251 = arith.constant dense<0xFF800000> : vector<2xf32>
    %718 = vector.multi_reduction <maximumf>, %717, %cst_251 [1] : vector<2x8xf32> to vector<2xf32>
    %719 = vector.shape_cast %718 : vector<2xf32> to vector<2x1xf32>
    %720 = vector.broadcast %719 : vector<2x1xf32> to vector<2x8xf32>
    %721 = arith.subf %717, %720 : vector<2x8xf32>
    %722 = math.exp %721 : vector<2x8xf32>
    %cst_252 = arith.constant dense<0.000000e+00> : vector<2xf32>
    %723 = vector.multi_reduction <add>, %722, %cst_252 [1] : vector<2x8xf32> to vector<2xf32>
    %724 = vector.shape_cast %723 : vector<2xf32> to vector<2x1xf32>
    %725 = tpu.reciprocal %724 {approx = true} : vector<2x1xf32> -> vector<2x1xf32>
    %726 = vector.broadcast %725 : vector<2x1xf32> to vector<2x8xf32>
    %727 = arith.mulf %722, %726 : vector<2x8xf32>
    %728 = vector.shape_cast %727 : vector<2x8xf32> to vector<2x1x8xf32>
    %c0_253 = arith.constant 0 : index
    %c0_254 = arith.constant 0 : index
    %c0_255 = arith.constant 0 : index
    %729 = vector.load %arg18[%c0_253, %c0_254, %c0_255] : memref<2x8x32xf32, #tpu.memory_space<vmem>>, vector<2x8x32xf32>
    "tpu.trace_start"() <{level = 10 : i32, message = "bqt,bth->bqh"}> : () -> ()
    %cst_256 = arith.constant dense<0.000000e+00> : vector<2x1x32xf32>
    %730 = tpu.matmul %728, %729, %cst_256 {dimension_numbers = #tpu.dot_dimension_numbers<[2], [1], [1], [2], [0, 0, 0, 1, 1, 2], [0], [0]>} : vector<2x1x8xf32>, vector<2x8x32xf32>, vector<2x1x32xf32> -> vector<2x1x32xf32>
    "tpu.trace_stop"() : () -> ()
    %731 = vector.shape_cast %730 : vector<2x1x32xf32> to vector<2x32xf32>
    %732 = arith.truncf %731 : vector<2x32xf32> to vector<2x32xbf16>
    %cst_257 = arith.constant dense<0.000000e+00> : vector<2x96xf32>
    %733 = tpu.matmul %732, %330, %cst_257 {dimension_numbers = #tpu.dot_dimension_numbers<[1], [0], [0], [1], [0, 0, 1, 1], [], []>} : vector<2x32xbf16>, vector<32x96xbf16>, vector<2x96xf32> -> vector<2x96xf32>
    %c0_258 = arith.constant 0 : index
    %c6_259 = arith.constant 6 : index
    %c0_260 = arith.constant 0 : index
    %734 = vector.load %arg21[%c0_258, %c6_259, %c0_260] : memref<2x8x96xf32, #tpu.memory_space<vmem>>, vector<2x1x96xf32>
    %735 = vector.shape_cast %734 : vector<2x1x96xf32> to vector<2x96xf32>
    %736 = arith.addf %733, %735 : vector<2x96xf32>
    %737 = vector.extract_strided_slice %736 {offsets = [0, 0], sizes = [2, 32], strides = [1, 1]} : vector<2x96xf32> to vector<2x32xf32>
    %738 = vector.extract_strided_slice %736 {offsets = [0, 32], sizes = [2, 32], strides = [1, 1]} : vector<2x96xf32> to vector<2x32xf32>
    %739 = vector.extract_strided_slice %736 {offsets = [0, 64], sizes = [2, 32], strides = [1, 1]} : vector<2x96xf32> to vector<2x32xf32>
    %740 = vector.extract_strided_slice %709 {offsets = [0, 0], sizes = [2, 32], strides = [1, 1]} : vector<2x96xf32> to vector<2x32xf32>
    %741 = vector.extract_strided_slice %709 {offsets = [0, 32], sizes = [2, 32], strides = [1, 1]} : vector<2x96xf32> to vector<2x32xf32>
    %742 = vector.extract_strided_slice %709 {offsets = [0, 64], sizes = [2, 32], strides = [1, 1]} : vector<2x96xf32> to vector<2x32xf32>
    %743 = arith.addf %737, %740 : vector<2x32xf32>
    %744 = arith.negf %743 : vector<2x32xf32>
    %745 = math.exp %744 : vector<2x32xf32>
    %cst_261 = arith.constant 1.000000e+00 : f32
    %746 = vector.broadcast %cst_261 : f32 to vector<2x32xf32>
    %747 = arith.addf %746, %745 : vector<2x32xf32>
    %748 = arith.divf %746, %747 : vector<2x32xf32>
    %749 = arith.addf %738, %741 : vector<2x32xf32>
    %750 = arith.negf %749 : vector<2x32xf32>
    %751 = math.exp %750 : vector<2x32xf32>
    %cst_262 = arith.constant 1.000000e+00 : f32
    %752 = vector.broadcast %cst_262 : f32 to vector<2x32xf32>
    %753 = arith.addf %752, %751 : vector<2x32xf32>
    %754 = arith.divf %752, %753 : vector<2x32xf32>
    %755 = arith.mulf %748, %742 : vector<2x32xf32>
    %756 = arith.addf %739, %755 : vector<2x32xf32>
    %757 = math.tanh %756 : vector<2x32xf32>
    %cst_263 = arith.constant 1.000000e+00 : f32
    %758 = vector.broadcast %cst_263 : f32 to vector<2x32xf32>
    %759 = arith.subf %758, %754 : vector<2x32xf32>
    %760 = arith.mulf %759, %757 : vector<2x32xf32>
    %761 = arith.mulf %754, %700 : vector<2x32xf32>
    %762 = arith.addf %760, %761 : vector<2x32xf32>
    %c0_264 = arith.constant 0 : index
    %c6_265 = arith.constant 6 : index
    %c0_266 = arith.constant 0 : index
    %763 = vector.load %arg23[%c0_264, %c6_265, %c0_266] : memref<2x8x32xf32, #tpu.memory_space<vmem>>, vector<2x1x32xf32>
    %764 = vector.shape_cast %763 : vector<2x1x32xf32> to vector<2x32xf32>
    %765 = vector.shape_cast %762 : vector<2x32xf32> to vector<2x1x32xf32>
    tpu.vector_store %arg23[%c0_264, %c6_265, %c0_266], %765 {strides = array<i32>} : memref<2x8x32xf32, #tpu.memory_space<vmem>>, vector<2x1x32xf32>,
    %766 = arith.truncf %762 : vector<2x32xf32> to vector<2x32xbf16>
    %cst_267 = arith.constant dense<0.000000e+00> : vector<2x128xf32>
    %767 = tpu.matmul %766, %329, %cst_267 {dimension_numbers = #tpu.dot_dimension_numbers<[1], [0], [0], [1], [0, 0, 1, 1], [], []>} : vector<2x32xbf16>, vector<32x128xbf16>, vector<2x128xf32> -> vector<2x128xf32>
    %768 = vector.extract_strided_slice %767 {offsets = [0, 0], sizes = [2, 32], strides = [1, 1]} : vector<2x128xf32> to vector<2x32xf32>
    %769 = vector.extract_strided_slice %767 {offsets = [0, 32], sizes = [2, 96], strides = [1, 1]} : vector<2x128xf32> to vector<2x96xf32>
    %770 = vector.broadcast %331 : vector<1x96xf32> to vector<2x96xf32>
    %771 = arith.addf %769, %770 : vector<2x96xf32>
    %c0_268 = arith.constant 0 : index
    %c0_269 = arith.constant 0 : index
    %c0_270 = arith.constant 0 : index
    %772 = vector.load %arg22[%c0_268, %c0_269, %c0_270] : memref<2x8x32xf32, #tpu.memory_space<vmem>>, vector<2x8x32xf32>
    %773 = vector.shape_cast %768 : vector<2x32xf32> to vector<2x1x32xf32>
    %774 = vector.broadcast %773 : vector<2x1x32xf32> to vector<2x8x32xf32>
    %775 = arith.addf %772, %774 : vector<2x8x32xf32>
    %776 = math.tanh %775 : vector<2x8x32xf32>
    %777 = arith.mulf %776, %328 : vector<2x8x32xf32>
    %cst_271 = arith.constant dense<0.000000e+00> : vector<2x8xf32>
    %778 = vector.multi_reduction <add>, %777, %cst_271 [2] : vector<2x8x32xf32> to vector<2x8xf32>
    %779 = arith.addf %778, %324 : vector<2x8xf32>
    %cst_272 = arith.constant dense<0xFF800000> : vector<2xf32>
    %780 = vector.multi_reduction <maximumf>, %779, %cst_272 [1] : vector<2x8xf32> to vector<2xf32>
    %781 = vector.shape_cast %780 : vector<2xf32> to vector<2x1xf32>
    %782 = vector.broadcast %781 : vector<2x1xf32> to vector<2x8xf32>
    %783 = arith.subf %779, %782 : vector<2x8xf32>
    %784 = math.exp %783 : vector<2x8xf32>
    %cst_273 = arith.constant dense<0.000000e+00> : vector<2xf32>
    %785 = vector.multi_reduction <add>, %784, %cst_273 [1] : vector<2x8xf32> to vector<2xf32>
    %786 = vector.shape_cast %785 : vector<2xf32> to vector<2x1xf32>
    %787 = tpu.reciprocal %786 {approx = true} : vector<2x1xf32> -> vector<2x1xf32>
    %788 = vector.broadcast %787 : vector<2x1xf32> to vector<2x8xf32>
    %789 = arith.mulf %784, %788 : vector<2x8xf32>
    %790 = vector.shape_cast %789 : vector<2x8xf32> to vector<2x1x8xf32>
    %c0_274 = arith.constant 0 : index
    %c0_275 = arith.constant 0 : index
    %c0_276 = arith.constant 0 : index
    %791 = vector.load %arg18[%c0_274, %c0_275, %c0_276] : memref<2x8x32xf32, #tpu.memory_space<vmem>>, vector<2x8x32xf32>
    "tpu.trace_start"() <{level = 10 : i32, message = "bqt,bth->bqh"}> : () -> ()
    %cst_277 = arith.constant dense<0.000000e+00> : vector<2x1x32xf32>
    %792 = tpu.matmul %790, %791, %cst_277 {dimension_numbers = #tpu.dot_dimension_numbers<[2], [1], [1], [2], [0, 0, 0, 1, 1, 2], [0], [0]>} : vector<2x1x8xf32>, vector<2x8x32xf32>, vector<2x1x32xf32> -> vector<2x1x32xf32>
    "tpu.trace_stop"() : () -> ()
    %793 = vector.shape_cast %792 : vector<2x1x32xf32> to vector<2x32xf32>
    %794 = arith.truncf %793 : vector<2x32xf32> to vector<2x32xbf16>
    %cst_278 = arith.constant dense<0.000000e+00> : vector<2x96xf32>
    %795 = tpu.matmul %794, %330, %cst_278 {dimension_numbers = #tpu.dot_dimension_numbers<[1], [0], [0], [1], [0, 0, 1, 1], [], []>} : vector<2x32xbf16>, vector<32x96xbf16>, vector<2x96xf32> -> vector<2x96xf32>
    %c0_279 = arith.constant 0 : index
    %c7_280 = arith.constant 7 : index
    %c0_281 = arith.constant 0 : index
    %796 = vector.load %arg21[%c0_279, %c7_280, %c0_281] : memref<2x8x96xf32, #tpu.memory_space<vmem>>, vector<2x1x96xf32>
    %797 = vector.shape_cast %796 : vector<2x1x96xf32> to vector<2x96xf32>
    %798 = arith.addf %795, %797 : vector<2x96xf32>
    %799 = vector.extract_strided_slice %798 {offsets = [0, 0], sizes = [2, 32], strides = [1, 1]} : vector<2x96xf32> to vector<2x32xf32>
    %800 = vector.extract_strided_slice %798 {offsets = [0, 32], sizes = [2, 32], strides = [1, 1]} : vector<2x96xf32> to vector<2x32xf32>
    %801 = vector.extract_strided_slice %798 {offsets = [0, 64], sizes = [2, 32], strides = [1, 1]} : vector<2x96xf32> to vector<2x32xf32>
    %802 = vector.extract_strided_slice %771 {offsets = [0, 0], sizes = [2, 32], strides = [1, 1]} : vector<2x96xf32> to vector<2x32xf32>
    %803 = vector.extract_strided_slice %771 {offsets = [0, 32], sizes = [2, 32], strides = [1, 1]} : vector<2x96xf32> to vector<2x32xf32>
    %804 = vector.extract_strided_slice %771 {offsets = [0, 64], sizes = [2, 32], strides = [1, 1]} : vector<2x96xf32> to vector<2x32xf32>
    %805 = arith.addf %799, %802 : vector<2x32xf32>
    %806 = arith.negf %805 : vector<2x32xf32>
    %807 = math.exp %806 : vector<2x32xf32>
    %cst_282 = arith.constant 1.000000e+00 : f32
    %808 = vector.broadcast %cst_282 : f32 to vector<2x32xf32>
    %809 = arith.addf %808, %807 : vector<2x32xf32>
    %810 = arith.divf %808, %809 : vector<2x32xf32>
    %811 = arith.addf %800, %803 : vector<2x32xf32>
    %812 = arith.negf %811 : vector<2x32xf32>
    %813 = math.exp %812 : vector<2x32xf32>
    %cst_283 = arith.constant 1.000000e+00 : f32
    %814 = vector.broadcast %cst_283 : f32 to vector<2x32xf32>
    %815 = arith.addf %814, %813 : vector<2x32xf32>
    %816 = arith.divf %814, %815 : vector<2x32xf32>
    %817 = arith.mulf %810, %804 : vector<2x32xf32>
    %818 = arith.addf %801, %817 : vector<2x32xf32>
    %819 = math.tanh %818 : vector<2x32xf32>
    %cst_284 = arith.constant 1.000000e+00 : f32
    %820 = vector.broadcast %cst_284 : f32 to vector<2x32xf32>
    %821 = arith.subf %820, %816 : vector<2x32xf32>
    %822 = arith.mulf %821, %819 : vector<2x32xf32>
    %823 = arith.mulf %816, %762 : vector<2x32xf32>
    %824 = arith.addf %822, %823 : vector<2x32xf32>
    %c0_285 = arith.constant 0 : index
    %c7_286 = arith.constant 7 : index
    %c0_287 = arith.constant 0 : index
    %825 = vector.load %arg23[%c0_285, %c7_286, %c0_287] : memref<2x8x32xf32, #tpu.memory_space<vmem>>, vector<2x1x32xf32>
    %826 = vector.shape_cast %825 : vector<2x1x32xf32> to vector<2x32xf32>
    %827 = vector.shape_cast %824 : vector<2x32xf32> to vector<2x1x32xf32>
    tpu.vector_store %arg23[%c0_285, %c7_286, %c0_287], %827 {strides = array<i32>} : memref<2x8x32xf32, #tpu.memory_space<vmem>>, vector<2x1x32xf32>,
    %c0_288 = arith.constant 0 : index
    %c0_289 = arith.constant 0 : index
    %828 = vector.load %arg19[%c0_288, %c0_289] : memref<2x32xf32, #tpu.memory_space<vmem>>, vector<2x32xf32>
    tpu.vector_store %arg19[%c0_288, %c0_289], %824 {strides = array<i32>} : memref<2x32xf32, #tpu.memory_space<vmem>>, vector<2x32xf32>,
    %c0_290 = arith.constant 0 : index
    %c0_291 = arith.constant 0 : index
    %c0_292 = arith.constant 0 : index
    %829 = vector.load %arg23[%c0_290, %c0_291, %c0_292] : memref<2x8x32xf32, #tpu.memory_space<vmem>>, vector<2x8x32xf32>
    %830 = vector.shape_cast %829 : vector<2x8x32xf32> to vector<16x32xf32>
    %831 = arith.truncf %830 : vector<16x32xf32> to vector<16x32xbf16>
    %c0_293 = arith.constant 0 : index
    %c0_294 = arith.constant 0 : index
    %832 = vector.load %arg15[%c0_293, %c0_294] : memref<32x128xbf16, #tpu.memory_space<vmem>>, vector<32x128xbf16>
    %cst_295 = arith.constant dense<0.000000e+00> : vector<16x128xf32>
    %833 = tpu.matmul %831, %832, %cst_295 {dimension_numbers = #tpu.dot_dimension_numbers<[1], [0], [0], [1], [0, 0, 1, 1], [], []>} : vector<16x32xbf16>, vector<32x128xbf16>, vector<16x128xf32> -> vector<16x128xf32>
    %c0_296 = arith.constant 0 : index
    %c0_297 = arith.constant 0 : index
    %834 = vector.load %arg16[%c0_296, %c0_297] : memref<1x128xf32, #tpu.memory_space<vmem>>, vector<1x128xf32>
    %835 = vector.broadcast %834 : vector<1x128xf32> to vector<16x128xf32>
    %836 = arith.addf %833, %835 : vector<16x128xf32>
    %c0_298 = arith.constant 0 : index
    %c0_299 = arith.constant 0 : index
    %837 = vector.load %arg17[%c0_298, %c0_299] : memref<16x128xf32, #tpu.memory_space<vmem>>, vector<16x128xf32>
    tpu.vector_store %arg17[%c0_298, %c0_299], %836 {strides = array<i32>} : memref<16x128xf32, #tpu.memory_space<vmem>>, vector<16x128xf32>,
    return
  }
  func.func @transform_0(%arg0: i32, %arg1: memref<2xi32, #tpu.memory_space<smem>>) -> (i32, i32, i32) {
    %c0_i32 = arith.constant 0 : i32
    %c0_i32_0 = arith.constant 0 : i32
    %c0_i32_1 = arith.constant 0 : i32
    %c0_i32_2 = arith.constant 0 : i32
    return %c0_i32, %c0_i32_0, %c0_i32_1 : i32, i32, i32
  }
  func.func @transform_1(%arg0: i32, %arg1: memref<2xi32, #tpu.memory_space<smem>>) -> (i32, i32, i32) {
    %c0_i32 = arith.constant 0 : i32
    %c0_i32_0 = arith.constant 0 : i32
    %c0_i32_1 = arith.constant 0 : i32
    %c0_i32_2 = arith.constant 0 : i32
    return %c0_i32, %c0_i32_0, %c0_i32_1 : i32, i32, i32
  }
  func.func @transform_2(%arg0: i32, %arg1: memref<2xi32, #tpu.memory_space<smem>>) -> (i32, i32) {
    %c0_i32 = arith.constant 0 : i32
    %c0_i32_0 = arith.constant 0 : i32
    %c0_i32_1 = arith.constant 0 : i32
    return %c0_i32, %c0_i32_0 : i32, i32
  }
  func.func @transform_3(%arg0: i32, %arg1: memref<2xi32, #tpu.memory_space<smem>>) -> (i32, i32) {
    %c0_i32 = arith.constant 0 : i32
    %c0_i32_0 = arith.constant 0 : i32
    %c0_i32_1 = arith.constant 0 : i32
    return %c0_i32, %c0_i32_0 : i32, i32
  }
  func.func @transform_4(%arg0: i32, %arg1: memref<2xi32, #tpu.memory_space<smem>>) -> (i32, i32) {
    %c0_i32 = arith.constant 0 : i32
    %c0_i32_0 = arith.constant 0 : i32
    %c0_i32_1 = arith.constant 0 : i32
    return %c0_i32, %c0_i32_0 : i32, i32
  }
  func.func @transform_5(%arg0: i32, %arg1: memref<2xi32, #tpu.memory_space<smem>>) -> (i32, i32) {
    %c0_i32 = arith.constant 0 : i32
    %c0_i32_0 = arith.constant 0 : i32
    %c0_i32_1 = arith.constant 0 : i32
    return %c0_i32, %c0_i32_0 : i32, i32
  }
  func.func @transform_6(%arg0: i32, %arg1: memref<2xi32, #tpu.memory_space<smem>>) -> (i32, i32) {
    %c0_i32 = arith.constant 0 : i32
    %c0_i32_0 = arith.constant 0 : i32
    %c0_i32_1 = arith.constant 0 : i32
    return %c0_i32, %c0_i32_0 : i32, i32
  }
  func.func @transform_7(%arg0: i32, %arg1: memref<2xi32, #tpu.memory_space<smem>>) -> (i32, i32) {
    %c0_i32 = arith.constant 0 : i32
    %c0_i32_0 = arith.constant 0 : i32
    %c0_i32_1 = arith.constant 0 : i32
    return %c0_i32, %c0_i32_0 : i32, i32
  }
  func.func @transform_8(%arg0: i32, %arg1: memref<2xi32, #tpu.memory_space<smem>>) -> (i32, i32) {
    %c0_i32 = arith.constant 0 : i32
    %c0_i32_0 = arith.constant 0 : i32
    %c0_i32_1 = arith.constant 0 : i32
    return %c0_i32, %c0_i32_0 : i32, i32
  }
  func.func @transform_9(%arg0: i32, %arg1: memref<2xi32, #tpu.memory_space<smem>>) -> (i32, i32) {
    %c0_i32 = arith.constant 0 : i32
    %c0_i32_0 = arith.constant 0 : i32
    %c0_i32_1 = arith.constant 0 : i32
    return %c0_i32, %c0_i32_0 : i32, i32
  }
  func.func @transform_10(%arg0: i32, %arg1: memref<2xi32, #tpu.memory_space<smem>>) -> (i32, i32) {
    %c0_i32 = arith.constant 0 : i32
    %c0_i32_0 = arith.constant 0 : i32
    %c0_i32_1 = arith.constant 0 : i32
    return %c0_i32, %c0_i32_0 : i32, i32
  }
  func.func @transform_11(%arg0: i32, %arg1: memref<2xi32, #tpu.memory_space<smem>>) -> (i32, i32) {
    %c0_i32 = arith.constant 0 : i32
    %c0_i32_0 = arith.constant 0 : i32
    %c0_i32_1 = arith.constant 0 : i32
    return %c0_i32, %c0_i32_0 : i32, i32
  }
  func.func @transform_12(%arg0: i32, %arg1: memref<2xi32, #tpu.memory_space<smem>>) -> (i32, i32) {
    %c0_i32 = arith.constant 0 : i32
    %c0_i32_0 = arith.constant 0 : i32
    %c0_i32_1 = arith.constant 0 : i32
    return %c0_i32, %c0_i32_0 : i32, i32
  }
  func.func @transform_13(%arg0: i32, %arg1: memref<2xi32, #tpu.memory_space<smem>>) -> (i32, i32) {
    %c0_i32 = arith.constant 0 : i32
    %c0_i32_0 = arith.constant 0 : i32
    %c0_i32_1 = arith.constant 0 : i32
    return %c0_i32, %c0_i32_0 : i32, i32
  }
  func.func @transform_14(%arg0: i32, %arg1: memref<2xi32, #tpu.memory_space<smem>>) -> (i32, i32) {
    %c0_i32 = arith.constant 0 : i32
    %c0_i32_0 = arith.constant 0 : i32
    %c0_i32_1 = arith.constant 0 : i32
    return %c0_i32, %c0_i32_0 : i32, i32
  }
  func.func @transform_15(%arg0: i32, %arg1: memref<2xi32, #tpu.memory_space<smem>>) -> (i32, i32) {
    %c0_i32 = arith.constant 0 : i32
    %c0_i32_0 = arith.constant 0 : i32
    %c0_i32_1 = arith.constant 0 : i32
    return %c0_i32, %c0_i32_0 : i32, i32
  }
  func.func @transform_16(%arg0: i32, %arg1: memref<2xi32, #tpu.memory_space<smem>>) -> (i32, i32, i32) {
    %c0_i32 = arith.constant 0 : i32
    %c0_i32_0 = arith.constant 0 : i32
    %c0_i32_1 = arith.constant 0 : i32
    %c0_i32_2 = arith.constant 0 : i32
    return %c0_i32, %c0_i32_0, %c0_i32_1 : i32, i32, i32
  }
  func.func @transform_17(%arg0: i32, %arg1: memref<2xi32, #tpu.memory_space<smem>>) -> (i32, i32) {
    %c0_i32 = arith.constant 0 : i32
    %c0_i32_0 = arith.constant 0 : i32
    %c0_i32_1 = arith.constant 0 : i32
    return %c0_i32, %c0_i32_0 : i32, i32
  }
}

</mosaic_0001>

<llo_original>
// kernel: tpu_custom_call.1
$region0: #{tpu_custom_call.1}
  #allocation0 [shape = 'u32[]', space=smem, size = 0x4, offset = 0x4, fixed_abs, tag = 'smem constant byte address 0x4 - core index']
  #allocation1 [shape = 'u32[144,128]{1,0:T(1,128)}', space=vmem, size = 0x12000, scoped, tag = 'internal scratch']
  #allocation2 [shape = 'f32[2,8,96]{2,1,0:T(8,128)}', space=vmem, size = 0x2000, scoped, tag = 'scratch operand']
  #allocation3 [shape = 'f32[2,8,96]{2,1,0:T(8,128)}', space=vmem, size = 0x2000, scoped, tag = 'scratch operand']
  #allocation4 [shape = 'f32[2,8,32]{2,1,0:T(8,128)}', space=vmem, size = 0x2000, scoped, tag = 'scratch operand']
  #allocation5 [shape = 'f32[2,8,32]{2,1,0:T(8,128)}', space=vmem, size = 0x2000, scoped, tag = 'scratch operand']
  #allocation6 [shape = 's32[1]{0}', space=sflag, size = 0x4, scoped, tag = 'scoped memory for tpu_custom_call.1']
  #allocation7 [shape = 'u8[512]{0}', space=smem, size = 0x200, scoped, tag = 'prefetched SMEM operand 0']
  %s0 = inlined_call_operand.hbm [shape: s32[2], index: 0, kind: input, shape index: {}]
  %s1 = inlined_call_operand.hbm [shape: bf16[2,8,16], index: 1, kind: input, shape index: {}]
  %s2 = inlined_call_operand.hbm [shape: bf16[2,8,16], index: 2, kind: input, shape index: {}]
  %s3 = inlined_call_operand.hbm [shape: bf16[16,96], index: 3, kind: input, shape index: {}]
  %s4 = inlined_call_operand.hbm [shape: bf16[32,96], index: 4, kind: input, shape index: {}]
  %s5 = inlined_call_operand.vmem [shape: f32[1,96], index: 5, kind: input, shape index: {}]
  %s6 = inlined_call_operand.hbm [shape: f32[1,96], index: 6, kind: input, shape index: {}]
  %s7 = inlined_call_operand.vmem [shape: bf16[32,32], index: 7, kind: input, shape index: {}]
  %s8 = inlined_call_operand.hbm [shape: f32[1,32], index: 8, kind: input, shape index: {}]
  %s9 = inlined_call_operand.vmem [shape: bf16[32,128], index: 9, kind: input, shape index: {}]
  %s10 = inlined_call_operand.hbm [shape: bf16[32,96], index: 10, kind: input, shape index: {}]
  %s11 = inlined_call_operand.hbm [shape: bf16[16,96], index: 11, kind: input, shape index: {}]
  %s12 = inlined_call_operand.hbm [shape: f32[1,96], index: 12, kind: input, shape index: {}]
  %s13 = inlined_call_operand.hbm [shape: f32[1,96], index: 13, kind: input, shape index: {}]
  %s14 = inlined_call_operand.vmem [shape: bf16[32,128], index: 14, kind: input, shape index: {}]
  %s15 = inlined_call_operand.vmem [shape: f32[1,128], index: 15, kind: input, shape index: {}]
  %s16 = inlined_call_operand.hbm [shape: f32[16,128], index: 16, kind: output, shape index: {0}]
  %s17 = inlined_call_operand.hbm [shape: f32[2,8,32], index: 17, kind: output, shape index: {1}]
  %s18 = inlined_call_operand.hbm [shape: f32[2,32], index: 18, kind: output, shape index: {2}]
  %19 = xla_tuple %s16, %s17, %s18
  %s20 = sld [smem:[#allocation0]]
  $region126: #{tpu_custom_call.1} parent=0
    _
  %s22 = ssub.s32 1, %s20
  %s23 = scalar_select 0, %s22, %s20
  %25 = dma.hbm_to_smem %s0, 16, [#allocation7], [#allocation6]
  %26 = dma.done [#allocation6], 16
  %27 = sfence
  $region1: #{tpu_custom_call.1} parent=0
    #allocation8 [shape = 'u8[4096]{0}', space=vmem, size = 0x1000, scoped, tag = 'input window, operand 1, single buffered']
    #allocation9 [shape = 's32[1]{0}', space=sflag, size = 0x4, scoped, tag = 'scoped memory for tpu_custom_call.1']
    #allocation10 [shape = 's32[1]{0}', space=sflag, size = 0x4, scoped, tag = 'scoped memory for tpu_custom_call.1']
    #allocation11 [shape = 'u8[4096]{0}', space=vmem, size = 0x1000, scoped, tag = 'input window, operand 2, single buffered']
    #allocation12 [shape = 's32[1]{0}', space=sflag, size = 0x4, scoped, tag = 'scoped memory for tpu_custom_call.1']
    #allocation13 [shape = 'u8[4096]{0}', space=vmem, size = 0x1000, scoped, tag = 'input window, operand 3, single buffered']
    #allocation14 [shape = 'u8[8192]{0}', space=vmem, size = 0x2000, scoped, tag = 'input window, operand 4, single buffered']
    #allocation15 [shape = 's32[1]{0}', space=sflag, size = 0x4, scoped, tag = 'scoped memory for tpu_custom_call.1']
    #allocation16 [shape = 'u8[512]{0}', space=vmem, size = 0x400, scoped, tag = 'input window, operand 6, single buffered']
    #allocation17 [shape = 'u8[512]{0}', space=vmem, size = 0x400, scoped, tag = 'input window, operand 8, single buffered']
    #allocation18 [shape = 's32[1]{0}', space=sflag, size = 0x4, scoped, tag = 'scoped memory for tpu_custom_call.1']
    #allocation19 [shape = 'u8[8192]{0}', space=vmem, size = 0x2000, scoped, tag = 'input window, operand 10, single buffered']
    #allocation20 [shape = 'u8[4096]{0}', space=vmem, size = 0x1000, scoped, tag = 'input window, operand 11, single buffered']
    #allocation21 [shape = 's32[1]{0}', space=sflag, size = 0x4, scoped, tag = 'scoped memory for tpu_custom_call.1']
    #allocation22 [shape = 'u8[512]{0}', space=vmem, size = 0x400, scoped, tag = 'input window, operand 12, single buffered']
    #allocation23 [shape = 'u8[512]{0}', space=vmem, size = 0x400, scoped, tag = 'input window, operand 13, single buffered']
    #allocation24 [shape = 's32[1]{0}', space=sflag, size = 0x4, scoped, tag = 'scoped memory for tpu_custom_call.1']
    #allocation25 [shape = 'u8[8192]{0}', space=vmem, size = 0x2000, scoped, tag = 'output window, operand 0, single buffered']
    #allocation26 [shape = 'u8[8192]{0}', space=vmem, size = 0x2000, scoped, tag = 'output window, operand 1, single buffered']
    #allocation27 [shape = 's32[1]{0}', space=sflag, size = 0x4, scoped, tag = 'scoped memory for tpu_custom_call.1']
    #allocation28 [shape = 'u8[1024]{0}', space=vmem, size = 0x400, scoped, tag = 'output window, operand 2, single buffered']
    %28 = vsyncpa [#allocation9], 0
    %29 = vsyncpa [#allocation12], 0
    %30 = vsyncpa [#allocation15], 0
    %31 = vsyncpa [#allocation18], 0
    %32 = vsyncpa [#allocation21], 0
    %33 = vsyncpa [#allocation24], 0
    %34 = vsyncpa [#allocation10], 0
    %35 = vsyncpa [#allocation27], 0
    // Predicated region
    $region2: #{tpu_custom_call.1} parent=1 // pred_check
      _
    $region3: #{tpu_custom_call.1} parent=1 // pred_check_branch
      %37 = sbr.rel (0) target = $region5
    $region4: #{tpu_custom_call.1} parent=1 // pred_region
      %s39 = ssub.s32 128, 128
      %40 = vsyncadd [#allocation9], %s39
      %s41 = sshll.u32 [#allocation8], 4
      %s42 = int_to_ptr.vmem [resolvable:$true] %s41
      %47 = dma.hbm_to_vmem [thread:$0]  %s1, 128, %s42, [#allocation9], 64, 64, 4
    $region5: #{tpu_custom_call.1} parent=1 // pred_fallthru
      _
    // Predicated region
    $region6: #{tpu_custom_call.1} parent=1 // pred_check
      _
    $region7: #{tpu_custom_call.1} parent=1 // pred_check_branch
      %49 = sbr.rel (0) target = $region9
    $region8: #{tpu_custom_call.1} parent=1 // pred_region
      %s51 = ssub.s32 128, 128
      %52 = vsyncadd [#allocation12], %s51
      %s53 = sshll.u32 [#allocation11], 4
      %s54 = int_to_ptr.vmem [resolvable:$true] %s53
      %59 = dma.hbm_to_vmem [thread:$0]  %s2, 128, %s54, [#allocation12], 64, 64, 4
    $region9: #{tpu_custom_call.1} parent=1 // pred_fallthru
      _
    // Predicated region
    $region10: #{tpu_custom_call.1} parent=1 // pred_check
      _
    $region11: #{tpu_custom_call.1} parent=1 // pred_check_branch
      %61 = sbr.rel (0) target = $region13
    $region12: #{tpu_custom_call.1} parent=1 // pred_region
      %s63 = ssub.s32 128, 128
      %64 = vsyncadd [#allocation12], %s63
      %s65 = sshll.u32 [#allocation13], 4
      %s66 = int_to_ptr.vmem [resolvable:$true] %s65
      %71 = dma.hbm_to_vmem [thread:$0]  %s3, 128, %s66, [#allocation12], 64, 64, 4
    $region13: #{tpu_custom_call.1} parent=1 // pred_fallthru
      _
    // Predicated region
    $region14: #{tpu_custom_call.1} parent=1 // pred_check
      _
    $region15: #{tpu_custom_call.1} parent=1 // pred_check_branch
      %73 = sbr.rel (0) target = $region17
    $region16: #{tpu_custom_call.1} parent=1 // pred_region
      %s75 = ssub.s32 256, 256
      %76 = vsyncadd [#allocation15], %s75
      %s77 = sshll.u32 [#allocation14], 4
      %s78 = int_to_ptr.vmem [resolvable:$true] %s77
      %83 = dma.hbm_to_vmem [thread:$0]  %s4, 256, %s78, [#allocation15], 64, 64, 4
    $region17: #{tpu_custom_call.1} parent=1 // pred_fallthru
      _
    // Predicated region
    $region18: #{tpu_custom_call.1} parent=1 // pred_check
      _
    $region19: #{tpu_custom_call.1} parent=1 // pred_check_branch
      %85 = sbr.rel (0) target = $region21
    $region20: #{tpu_custom_call.1} parent=1 // pred_region
      _
    $region21: #{tpu_custom_call.1} parent=1 // pred_fallthru
      _
    // Predicated region
    $region22: #{tpu_custom_call.1} parent=1 // pred_check
      _
    $region23: #{tpu_custom_call.1} parent=1 // pred_check_branch
      %87 = sbr.rel (0) target = $region25
    $region24: #{tpu_custom_call.1} parent=1 // pred_region
      %s89 = ssub.s32 16, 16
      %90 = vsyncadd [#allocation15], %s89
      %s92 = sshll.u32 [#allocation16], 4
      %s93 = int_to_ptr.vmem [resolvable:$true] %s92
      %95 = dma.hbm_to_vmem [thread:$0]  %s6, 16, %s93, [#allocation15]
    $region25: #{tpu_custom_call.1} parent=1 // pred_fallthru
      _
    // Predicated region
    $region26: #{tpu_custom_call.1} parent=1 // pred_check
      _
    $region27: #{tpu_custom_call.1} parent=1 // pred_check_branch
      %97 = sbr.rel (0) target = $region29
    $region28: #{tpu_custom_call.1} parent=1 // pred_region
      _
    $region29: #{tpu_custom_call.1} parent=1 // pred_fallthru
      _
    // Predicated region
    $region30: #{tpu_custom_call.1} parent=1 // pred_check
      _
    $region31: #{tpu_custom_call.1} parent=1 // pred_check_branch
      %99 = sbr.rel (0) target = $region33
    $region32: #{tpu_custom_call.1} parent=1 // pred_region
      %s101 = ssub.s32 16, 16
      %102 = vsyncadd [#allocation18], %s101
      %s104 = sshll.u32 [#allocation17], 4
      %s105 = int_to_ptr.vmem [resolvable:$true] %s104
      %107 = dma.hbm_to_vmem [thread:$0]  %s8, 16, %s105, [#allocation18]
    $region33: #{tpu_custom_call.1} parent=1 // pred_fallthru
      _
    // Predicated region
    $region34: #{tpu_custom_call.1} parent=1 // pred_check
      _
    $region35: #{tpu_custom_call.1} parent=1 // pred_check_branch
      %109 = sbr.rel (0) target = $region37
    $region36: #{tpu_custom_call.1} parent=1 // pred_region
      _
    $region37: #{tpu_custom_call.1} parent=1 // pred_fallthru
      _
    // Predicated region
    $region38: #{tpu_custom_call.1} parent=1 // pred_check
      _
    $region39: #{tpu_custom_call.1} parent=1 // pred_check_branch
      %111 = sbr.rel (0) target = $region41
    $region40: #{tpu_custom_call.1} parent=1 // pred_region
      %s113 = ssub.s32 256, 256
      %114 = vsyncadd [#allocation18], %s113
      %s115 = sshll.u32 [#allocation19], 4
      %s116 = int_to_ptr.vmem [resolvable:$true] %s115
      %121 = dma.hbm_to_vmem [thread:$0]  %s10, 256, %s116, [#allocation18], 64, 64, 4
    $region41: #{tpu_custom_call.1} parent=1 // pred_fallthru
      _
    // Predicated region
    $region42: #{tpu_custom_call.1} parent=1 // pred_check
      _
    $region43: #{tpu_custom_call.1} parent=1 // pred_check_branch
      %123 = sbr.rel (0) target = $region45
    $region44: #{tpu_custom_call.1} parent=1 // pred_region
      %s125 = ssub.s32 128, 128
      %126 = vsyncadd [#allocation21], %s125
      %s127 = sshll.u32 [#allocation20], 4
      %s128 = int_to_ptr.vmem [resolvable:$true] %s127
      %133 = dma.hbm_to_vmem [thread:$0]  %s11, 128, %s128, [#allocation21], 64, 64, 4
    $region45: #{tpu_custom_call.1} parent=1 // pred_fallthru
      _
    // Predicated region
    $region46: #{tpu_custom_call.1} parent=1 // pred_check
      _
    $region47: #{tpu_custom_call.1} parent=1 // pred_check_branch
      %135 = sbr.rel (0) target = $region49
    $region48: #{tpu_custom_call.1} parent=1 // pred_region
      %s137 = ssub.s32 16, 16
      %138 = vsyncadd [#allocation21], %s137
      %s140 = sshll.u32 [#allocation22], 4
      %s141 = int_to_ptr.vmem [resolvable:$true] %s140
      %143 = dma.hbm_to_vmem [thread:$0]  %s12, 16, %s141, [#allocation21]
    $region49: #{tpu_custom_call.1} parent=1 // pred_fallthru
      _
    // Predicated region
    $region50: #{tpu_custom_call.1} parent=1 // pred_check
      _
    $region51: #{tpu_custom_call.1} parent=1 // pred_check_branch
      %145 = sbr.rel (0) target = $region53
    $region52: #{tpu_custom_call.1} parent=1 // pred_region
      %s147 = ssub.s32 16, 16
      %148 = vsyncadd [#allocation24], %s147
      %s150 = sshll.u32 [#allocation23], 4
      %s151 = int_to_ptr.vmem [resolvable:$true] %s150
      %153 = dma.hbm_to_vmem [thread:$0]  %s13, 16, %s151, [#allocation24]
    $region53: #{tpu_custom_call.1} parent=1 // pred_fallthru
      _
    // Predicated region
    $region54: #{tpu_custom_call.1} parent=1 // pred_check
      _
    $region55: #{tpu_custom_call.1} parent=1 // pred_check_branch
      %155 = sbr.rel (0) target = $region57
    $region56: #{tpu_custom_call.1} parent=1 // pred_region
      _
    $region57: #{tpu_custom_call.1} parent=1 // pred_fallthru
      _
    // Predicated region
    $region58: #{tpu_custom_call.1} parent=1 // pred_check
      _
    $region59: #{tpu_custom_call.1} parent=1 // pred_check_branch
      %157 = sbr.rel (0) target = $region61
    $region60: #{tpu_custom_call.1} parent=1 // pred_region
      _
    $region61: #{tpu_custom_call.1} parent=1 // pred_fallthru
      _
    // Predicated region
    $region62: #{tpu_custom_call.1} parent=1 // pred_check
      _
    $region63: #{tpu_custom_call.1} parent=1 // pred_check_branch
      %159 = sbr.rel (0) target = $region65
    $region64: #{tpu_custom_call.1} parent=1 // pred_region
      %160 = dma.done [#allocation9], 128
    $region65: #{tpu_custom_call.1} parent=1 // pred_fallthru
      _
    // Predicated region
    $region66: #{tpu_custom_call.1} parent=1 // pred_check
      _
    $region67: #{tpu_custom_call.1} parent=1 // pred_check_branch
      %162 = sbr.rel (0) target = $region69
    $region68: #{tpu_custom_call.1} parent=1 // pred_region
      %163 = dma.done [#allocation12], 128
    $region69: #{tpu_custom_call.1} parent=1 // pred_fallthru
      _
    // Predicated region
    $region70: #{tpu_custom_call.1} parent=1 // pred_check
      _
    $region71: #{tpu_custom_call.1} parent=1 // pred_check_branch
      %165 = sbr.rel (0) target = $region73
    $region72: #{tpu_custom_call.1} parent=1 // pred_region
      %166 = dma.done [#allocation12], 128
    $region73: #{tpu_custom_call.1} parent=1 // pred_fallthru
      _
    // Predicated region
    $region74: #{tpu_custom_call.1} parent=1 // pred_check
      _
    $region75: #{tpu_custom_call.1} parent=1 // pred_check_branch
      %168 = sbr.rel (0) target = $region77
    $region76: #{tpu_custom_call.1} parent=1 // pred_region
      %169 = dma.done [#allocation15], 256
    $region77: #{tpu_custom_call.1} parent=1 // pred_fallthru
      _
    // Predicated region
    $region78: #{tpu_custom_call.1} parent=1 // pred_check
      _
    $region79: #{tpu_custom_call.1} parent=1 // pred_check_branch
      %171 = sbr.rel (0) target = $region81
    $region80: #{tpu_custom_call.1} parent=1 // pred_region
      %172 = dma.done [#allocation15], 16
    $region81: #{tpu_custom_call.1} parent=1 // pred_fallthru
      _
    // Predicated region
    $region82: #{tpu_custom_call.1} parent=1 // pred_check
      _
    $region83: #{tpu_custom_call.1} parent=1 // pred_check_branch
      %174 = sbr.rel (0) target = $region85
    $region84: #{tpu_custom_call.1} parent=1 // pred_region
      %175 = dma.done [#allocation18], 16
    $region85: #{tpu_custom_call.1} parent=1 // pred_fallthru
      _
    // Predicated region
    $region86: #{tpu_custom_call.1} parent=1 // pred_check
      _
    $region87: #{tpu_custom_call.1} parent=1 // pred_check_branch
      %177 = sbr.rel (0) target = $region89
    $region88: #{tpu_custom_call.1} parent=1 // pred_region
      %178 = dma.done [#allocation18], 256
    $region89: #{tpu_custom_call.1} parent=1 // pred_fallthru
      _
    // Predicated region
    $region90: #{tpu_custom_call.1} parent=1 // pred_check
      _
    $region91: #{tpu_custom_call.1} parent=1 // pred_check_branch
      %180 = sbr.rel (0) target = $region93
    $region92: #{tpu_custom_call.1} parent=1 // pred_region
      %181 = dma.done [#allocation21], 128
    $region93: #{tpu_custom_call.1} parent=1 // pred_fallthru
      _
    // Predicated region
    $region94: #{tpu_custom_call.1} parent=1 // pred_check
      _
    $region95: #{tpu_custom_call.1} parent=1 // pred_check_branch
      %183 = sbr.rel (0) target = $region97
    $region96: #{tpu_custom_call.1} parent=1 // pred_region
      %184 = dma.done [#allocation21], 16
    $region97: #{tpu_custom_call.1} parent=1 // pred_fallthru
      _
    // Predicated region
    $region98: #{tpu_custom_call.1} parent=1 // pred_check
      _
    $region99: #{tpu_custom_call.1} parent=1 // pred_check_branch
      %186 = sbr.rel (0) target = $region101
    $region100: #{tpu_custom_call.1} parent=1 // pred_region
      %187 = dma.done [#allocation24], 16
    $region101: #{tpu_custom_call.1} parent=1 // pred_fallthru
      _
    %v189 = vld [vmem:[#allocation8] sm:$0xf]
    %v190 = vld [vmem:[#allocation8 + $0x4] sm:$0xf]
    %v191 = vld [vmem:[#allocation13] sm:$0xf]
    %v192 = vld [vmem:[#allocation13 + $0x4] sm:$0xf]
    %v193 = vld [vmem:[%s5] sm:$0x1]
    %v195 = vlaneseq
    %v196 = vshrl.u32 %v195, 7
    %v197 = vsub.s32 0, %v196
    %v198 = vrot.slane %v193, %v197
    %v202 = vunpack.c.l.b16 %v189
    %v203 = vunpack.c.l.b16 %v190
    %v204 = vpack.c.b16 %v203, %v202
    %v207 = vunpack.c.l.b16 %v191
    %v208 = vunpack.c.l.b16 %v192
    %v209 = vpack.c.b16 %v208, %v207
    %vm211 = vcmask 130048
    %v213 = vsel %vm211, %v204, 0
    %215 = vmatprep.subr.bf16.mxu0 0
    %216 = vmatpush1.bf16.msra.mxu0 %v209
    %217 = vmatprep.subr.bf16.mxu0 0
    %218 = vmatpush1.bf16.msra.mxu0 0
    %219 = vmatprep.subr.bf16.mxu0 0
    %220 = vmatpush1.bf16.msra.mxu0 0
    %221 = vmatprep.subr.bf16.mxu0 0
    %222 = vmatpush1.bf16.msra.mxu0 0
    %223 = vmatprep.subr.bf16.mxu0 0
    %224 = vmatpush1.bf16.msra.mxu0 0
    %225 = vmatprep.subr.bf16.mxu0 0
    %226 = vmatpush1.bf16.msra.mxu0 0
    %227 = vmatprep.subr.bf16.mxu0 0
    %228 = vmatpush1.bf16.msra.mxu0 0
    %229 = vmatprep.subr.bf16.mxu0 0
    %230 = vmatpush1.bf16.msra.mxu0 0
    %231 = vmatprep.subr.bf16.mxu0 0
    %232 = vmatpush1.bf16.msra.mxu0 0
    %233 = vmatprep.subr.bf16.mxu0 0
    %234 = vmatpush1.bf16.msra.mxu0 0
    %235 = vmatprep.subr.bf16.mxu0 0
    %236 = vmatpush1.bf16.msra.mxu0 0
    %237 = vmatprep.subr.bf16.mxu0 0
    %238 = vmatpush1.bf16.msra.mxu0 0
    %239 = vmatprep.subr.bf16.mxu0 0
    %240 = vmatpush1.bf16.msra.mxu0 0
    %241 = vmatprep.subr.bf16.mxu0 0
    %242 = vmatpush1.bf16.msra.mxu0 0
    %243 = vmatprep.subr.bf16.mxu0 0
    %244 = vmatpush1.bf16.msra.mxu0 0
    %245 = vmatprep.subr.bf16.mxu0 0
    %246 = vmatpush1.bf16.msra.mxu0 0
    %247 = vmatprep.mubr.bf16.mxu0 0
    %248 = vmatmul.mubr.bf16.gmra.mrb[0].mxu0 %v213
    %v249 = vpop.f32.mrb[0].mxu0
    %v250 = vadd.f32 %v198, %v249
    %v251 = vpop.f32.mrb[0].mxu0
    %v252 = vpop.f32.mrb[0].mxu0
    %v253 = vadd.f32 %v198, %v252
    %v254 = vpop.f32.mrb[0].mxu0
    %255 = vdwg.mxu0
    %vm256 = vcmask 785408
    %257 = vst.msk [vmem:[#allocation2] sm:$0xff] %vm256, %v250
    %258 = vst.msk [vmem:[#allocation2 + $0x8] sm:$0xff] %vm256, %v253
    %v259 = vld [vmem:[#allocation11] sm:$0xf]
    %v260 = vld [vmem:[#allocation11 + $0x4] sm:$0xf]
    %v261 = vld [vmem:[#allocation20] sm:$0xf]
    %v262 = vld [vmem:[#allocation20 + $0x4] sm:$0xf]
    %v263 = vld [vmem:[#allocation22] sm:$0x1]
    %v265 = vlaneseq
    %v266 = vshrl.u32 %v265, 7
    %v267 = vsub.s32 0, %v266
    %v268 = vrot.slane %v263, %v267
    %v272 = vunpack.c.l.b16 %v259
    %v273 = vunpack.c.l.b16 %v260
    %v274 = vpack.c.b16 %v273, %v272
    %v277 = vunpack.c.l.b16 %v261
    %v278 = vunpack.c.l.b16 %v262
    %v279 = vpack.c.b16 %v278, %v277
    %v282 = vsel %vm211, %v274, 0
    %284 = vmatprep.subr.bf16.mxu0 0
    %285 = vmatpush1.bf16.msra.mxu0 %v279
    %286 = vmatprep.subr.bf16.mxu0 0
    %287 = vmatpush1.bf16.msra.mxu0 0
    %288 = vmatprep.subr.bf16.mxu0 0
    %289 = vmatpush1.bf16.msra.mxu0 0
    %290 = vmatprep.subr.bf16.mxu0 0
    %291 = vmatpush1.bf16.msra.mxu0 0
    %292 = vmatprep.subr.bf16.mxu0 0
    %293 = vmatpush1.bf16.msra.mxu0 0
    %294 = vmatprep.subr.bf16.mxu0 0
    %295 = vmatpush1.bf16.msra.mxu0 0
    %296 = vmatprep.subr.bf16.mxu0 0
    %297 = vmatpush1.bf16.msra.mxu0 0
    %298 = vmatprep.subr.bf16.mxu0 0
    %299 = vmatpush1.bf16.msra.mxu0 0
    %300 = vmatprep.subr.bf16.mxu0 0
    %301 = vmatpush1.bf16.msra.mxu0 0
    %302 = vmatprep.subr.bf16.mxu0 0
    %303 = vmatpush1.bf16.msra.mxu0 0
    %304 = vmatprep.subr.bf16.mxu0 0
    %305 = vmatpush1.bf16.msra.mxu0 0
    %306 = vmatprep.subr.bf16.mxu0 0
    %307 = vmatpush1.bf16.msra.mxu0 0
    %308 = vmatprep.subr.bf16.mxu0 0
    %309 = vmatpush1.bf16.msra.mxu0 0
    %310 = vmatprep.subr.bf16.mxu0 0
    %311 = vmatpush1.bf16.msra.mxu0 0
    %312 = vmatprep.subr.bf16.mxu0 0
    %313 = vmatpush1.bf16.msra.mxu0 0
    %314 = vmatprep.subr.bf16.mxu0 0
    %315 = vmatpush1.bf16.msra.mxu0 0
    %316 = vmatprep.mubr.bf16.mxu0 0
    %317 = vmatmul.mubr.bf16.gmra.mrb[0].mxu0 %v282
    %v318 = vpop.f32.mrb[0].mxu0
    %v319 = vadd.f32 %v268, %v318
    %v320 = vpop.f32.mrb[0].mxu0
    %v321 = vpop.f32.mrb[0].mxu0
    %v322 = vadd.f32 %v268, %v321
    %v323 = vpop.f32.mrb[0].mxu0
    %324 = vdwg.mxu0
    %325 = vst.msk [vmem:[#allocation3] sm:$0xff] %vm256, %v319
    %326 = vst.msk [vmem:[#allocation3 + $0x8] sm:$0xff] %vm256, %v322
    %v327 = vld [vmem:[#allocation14] sm:$0xf]
    %v328 = vld [vmem:[#allocation14 + $0x4] sm:$0xf]
    %v329 = vld [vmem:[#allocation14 + $0x8] sm:$0xf]
    %v330 = vld [vmem:[#allocation14 + $0xc] sm:$0xf]
    %v331 = vld [vmem:[#allocation16] sm:$0x1]
    %v333 = vlaneseq
    %v334 = vshrl.u32 %v333, 7
    %v335 = vsub.s32 0, %v334
    %v336 = vrot.slane %v331, %v335
    %v342 = vunpack.c.l.b16 %v327
    %v343 = vunpack.c.l.b16 %v328
    %v344 = vunpack.c.l.b16 %v329
    %v345 = vunpack.c.l.b16 %v330
    %v346 = vpack.c.b16 %v343, %v342
    %v347 = vpack.c.b16 %v345, %v344
    %vm350 = vcmask 261120
    %v352 = vsel %vm350, 0, 0
    %354 = vmatprep.subr.bf16.mxu0 0
    %355 = vmatpush1.bf16.msra.mxu0 %v346
    %356 = vmatprep.subr.bf16.mxu0 0
    %357 = vmatpush1.bf16.msra.mxu0 %v347
    %358 = vmatprep.subr.bf16.mxu0 0
    %359 = vmatpush1.bf16.msra.mxu0 0
    %360 = vmatprep.subr.bf16.mxu0 0
    %361 = vmatpush1.bf16.msra.mxu0 0
    %362 = vmatprep.subr.bf16.mxu0 0
    %363 = vmatpush1.bf16.msra.mxu0 0
    %364 = vmatprep.subr.bf16.mxu0 0
    %365 = vmatpush1.bf16.msra.mxu0 0
    %366 = vmatprep.subr.bf16.mxu0 0
    %367 = vmatpush1.bf16.msra.mxu0 0
    %368 = vmatprep.subr.bf16.mxu0 0
    %369 = vmatpush1.bf16.msra.mxu0 0
    %370 = vmatprep.subr.bf16.mxu0 0
    %371 = vmatpush1.bf16.msra.mxu0 0
    %372 = vmatprep.subr.bf16.mxu0 0
    %373 = vmatpush1.bf16.msra.mxu0 0
    %374 = vmatprep.subr.bf16.mxu0 0
    %375 = vmatpush1.bf16.msra.mxu0 0
    %376 = vmatprep.subr.bf16.mxu0 0
    %377 = vmatpush1.bf16.msra.mxu0 0
    %378 = vmatprep.subr.bf16.mxu0 0
    %379 = vmatpush1.bf16.msra.mxu0 0
    %380 = vmatprep.subr.bf16.mxu0 0
    %381 = vmatpush1.bf16.msra.mxu0 0
    %382 = vmatprep.subr.bf16.mxu0 0
    %383 = vmatpush1.bf16.msra.mxu0 0
    %384 = vmatprep.subr.bf16.mxu0 0
    %385 = vmatpush1.bf16.msra.mxu0 0
    %386 = vmatprep.mubr.bf16.mxu0 0
    %387 = vmatmul.mubr.bf16.gmra.mrb[0].mxu0 %v352
    %v388 = vpop.f32.mrb[0].mxu0
    %v389 = vadd.f32 %v336, %v388
    %v390 = vpop.f32.mrb[0].mxu0
    %v391 = vpop.f32.mrb[0].mxu0
    %v392 = vpop.f32.mrb[0].mxu0
    %393 = vdwg.mxu0
    %v394 = vld [vmem:[#allocation2] sm:$0x1]
    %v395 = vld [vmem:[#allocation2 + $0x8] sm:$0x1]
    %v397 = vrot.slane %v389, 1
    %v400 = vadd.f32 %v394, %v389
    %v401 = vadd.f32 %v395, %v397
    %v402 = vxor.u32 %v400, 2147483648
    %v403 = vxor.u32 %v401, 2147483648
    %v404 = vmul.f32 %v402, 1.442695
    %v405 = vpow.pop %v404
    %v406 = vmul.f32 %v403, 1.442695
    %v407 = vpow.pop %v406
    %v408 = vadd.f32 %v405, 1.0
    %v409 = vadd.f32 %v407, 1.0
    %v410 = vrcp.pop %v408
    %v411 = vmul.f32 1.0, %v410
    %v412 = vrcp.pop %v409
    %v413 = vmul.f32 1.0, %v412
    %414 = vrot.lane.b32.xlu0 %v389, 64
    %v415 = vpop.permute.xlu0 %414
    %416 = vrot.lane.b32.xlu0 %v397, 64
    %v417 = vpop.permute.xlu0 %416
    %v420 = vmul.f32 %v411, %v415
    %v421 = vmul.f32 %v413, %v417
    %424 = vrot.lane.b32.xlu0 %v420, 64
    %v425 = vpop.permute.xlu0 %424
    %426 = vrot.lane.b32.xlu0 %v421, 64
    %v427 = vpop.permute.xlu0 %426
    %v430 = vadd.f32 %v394, %v425
    %v431 = vadd.f32 %v395, %v427
    %v432 = vtanh.pop %v430
    %v433 = vtanh.pop %v431
    %v434 = vsub.f32 1.0, %v411
    %v435 = vsub.f32 1.0, %v413
    %438 = vrot.lane.b32.xlu0 %v432, 96
    %v439 = vpop.permute.xlu0 %438
    %440 = vrot.lane.b32.xlu0 %v433, 96
    %v441 = vpop.permute.xlu0 %440
    %v444 = vmul.f32 %v434, %v439
    %v445 = vmul.f32 %v435, %v441
    %v446 = vmul.f32 %v411, 0.0
    %v447 = vmul.f32 %v413, 0.0
    %v448 = vadd.f32 %v444, %v446
    %v449 = vadd.f32 %v445, %v447
    %452 = vrot.lane.b32.xlu0 %v448, 96
    %v453 = vpop.permute.xlu0 %452
    %454 = vrot.lane.b32.xlu0 %v449, 96
    %v455 = vpop.permute.xlu0 %454
    %vm458 = vcmask 253952
    %459 = vst.msk [vmem:[#allocation26] sm:$0x1] %vm458, %v453
    %460 = vst.msk [vmem:[#allocation26 + $0x8] sm:$0x1] %vm458, %v455
    %v461 = vpack.c.bf16 %v448, %v448
    %v462 = vpack.c.bf16 %v449, %v449
    %v465 = vunpack.c.l.b16 %v461
    %v466 = vunpack.c.l.b16 %v462
    %v467 = vrot.slane %v466, 7
    %vm468 = vcmask 1041409
    %v469 = vsel %vm468, %v467, %v465
    %v470 = vpack.c.b16 %v469, %v469
    %471 = vrot.lane.b32.xlu0 %v470, 96
    %v472 = vpop.permute.xlu0 %471
    %v474 = vsel %vm350, %v472, 0
    %476 = vmatprep.subr.bf16.mxu0 0
    %477 = vmatpush1.bf16.msra.mxu0 %v346
    %478 = vmatprep.subr.bf16.mxu0 0
    %479 = vmatpush1.bf16.msra.mxu0 %v347
    %480 = vmatprep.subr.bf16.mxu0 0
    %481 = vmatpush1.bf16.msra.mxu0 0
    %482 = vmatprep.subr.bf16.mxu0 0
    %483 = vmatpush1.bf16.msra.mxu0 0
    %484 = vmatprep.subr.bf16.mxu0 0
    %485 = vmatpush1.bf16.msra.mxu0 0
    %486 = vmatprep.subr.bf16.mxu0 0
    %487 = vmatpush1.bf16.msra.mxu0 0
    %488 = vmatprep.subr.bf16.mxu0 0
    %489 = vmatpush1.bf16.msra.mxu0 0
    %490 = vmatprep.subr.bf16.mxu0 0
    %491 = vmatpush1.bf16.msra.mxu0 0
    %492 = vmatprep.subr.bf16.mxu0 0
    %493 = vmatpush1.bf16.msra.mxu0 0
    %494 = vmatprep.subr.bf16.mxu0 0
    %495 = vmatpush1.bf16.msra.mxu0 0
    %496 = vmatprep.subr.bf16.mxu0 0
    %497 = vmatpush1.bf16.msra.mxu0 0
    %498 = vmatprep.subr.bf16.mxu0 0
    %499 = vmatpush1.bf16.msra.mxu0 0
    %500 = vmatprep.subr.bf16.mxu0 0
    %501 = vmatpush1.bf16.msra.mxu0 0
    %502 = vmatprep.subr.bf16.mxu0 0
    %503 = vmatpush1.bf16.msra.mxu0 0
    %504 = vmatprep.subr.bf16.mxu0 0
    %505 = vmatpush1.bf16.msra.mxu0 0
    %506 = vmatprep.subr.bf16.mxu0 0
    %507 = vmatpush1.bf16.msra.mxu0 0
    %508 = vmatprep.mubr.bf16.mxu0 0
    %509 = vmatmul.mubr.bf16.gmra.mrb[0].mxu0 %v474
    %v510 = vpop.f32.mrb[0].mxu0
    %v511 = vadd.f32 %v336, %v510
    %v512 = vpop.f32.mrb[0].mxu0
    %v513 = vpop.f32.mrb[0].mxu0
    %v514 = vpop.f32.mrb[0].mxu0
    %515 = vdwg.mxu0
    %v516 = vld [vmem:[#allocation2 + $0x1] sm:$0x1]
    %v517 = vld [vmem:[#allocation2 + $0x9] sm:$0x1]
    %v519 = vrot.slane %v511, 1
    %v522 = vadd.f32 %v516, %v511
    %v523 = vadd.f32 %v517, %v519
    %v524 = vxor.u32 %v522, 2147483648
    %v525 = vxor.u32 %v523, 2147483648
    %v526 = vmul.f32 %v524, 1.442695
    %v527 = vpow.pop %v526
    %v528 = vmul.f32 %v525, 1.442695
    %v529 = vpow.pop %v528
    %v530 = vadd.f32 %v527, 1.0
    %v531 = vadd.f32 %v529, 1.0
    %v532 = vrcp.pop %v530
    %v533 = vmul.f32 1.0, %v532
    %v534 = vrcp.pop %v531
    %v535 = vmul.f32 1.0, %v534
    %536 = vrot.lane.b32.xlu0 %v511, 64
    %v537 = vpop.permute.xlu0 %536
    %538 = vrot.lane.b32.xlu0 %v519, 64
    %v539 = vpop.permute.xlu0 %538
    %v542 = vmul.f32 %v533, %v537
    %v543 = vmul.f32 %v535, %v539
    %546 = vrot.lane.b32.xlu0 %v542, 64
    %v547 = vpop.permute.xlu0 %546
    %548 = vrot.lane.b32.xlu0 %v543, 64
    %v549 = vpop.permute.xlu0 %548
    %v552 = vadd.f32 %v516, %v547
    %v553 = vadd.f32 %v517, %v549
    %v554 = vtanh.pop %v552
    %v555 = vtanh.pop %v553
    %v556 = vsub.f32 1.0, %v533
    %v557 = vsub.f32 1.0, %v535
    %560 = vrot.lane.b32.xlu0 %v554, 96
    %v561 = vpop.permute.xlu0 %560
    %562 = vrot.lane.b32.xlu0 %v555, 96
    %v563 = vpop.permute.xlu0 %562
    %v566 = vmul.f32 %v556, %v561
    %v567 = vmul.f32 %v557, %v563
    %v568 = vmul.f32 %v533, %v448
    %v569 = vmul.f32 %v535, %v449
    %v570 = vadd.f32 %v566, %v568
    %v571 = vadd.f32 %v567, %v569
    %574 = vrot.lane.b32.xlu0 %v570, 96
    %v575 = vpop.permute.xlu0 %574
    %576 = vrot.lane.b32.xlu0 %v571, 96
    %v577 = vpop.permute.xlu0 %576
    %580 = vst.msk [vmem:[#allocation26 + $0x1] sm:$0x1] %vm458, %v575
    %581 = vst.msk [vmem:[#allocation26 + $0x9] sm:$0x1] %vm458, %v577
    %v582 = vpack.c.bf16 %v570, %v570
    %v583 = vpack.c.bf16 %v571, %v571
    %v586 = vunpack.c.l.b16 %v582
    %v587 = vunpack.c.l.b16 %v583
    %v588 = vrot.slane %v587, 7
    %v589 = vsel %vm468, %v588, %v586
    %v590 = vpack.c.b16 %v589, %v589
    %591 = vrot.lane.b32.xlu0 %v590, 96
    %v592 = vpop.permute.xlu0 %591
    %v594 = vsel %vm350, %v592, 0
    %596 = vmatprep.subr.bf16.mxu0 0
    %597 = vmatpush1.bf16.msra.mxu0 %v346
    %598 = vmatprep.subr.bf16.mxu0 0
    %599 = vmatpush1.bf16.msra.mxu0 %v347
    %600 = vmatprep.subr.bf16.mxu0 0
    %601 = vmatpush1.bf16.msra.mxu0 0
    %602 = vmatprep.subr.bf16.mxu0 0
    %603 = vmatpush1.bf16.msra.mxu0 0
    %604 = vmatprep.subr.bf16.mxu0 0
    %605 = vmatpush1.bf16.msra.mxu0 0
    %606 = vmatprep.subr.bf16.mxu0 0
    %607 = vmatpush1.bf16.msra.mxu0 0
    %608 = vmatprep.subr.bf16.mxu0 0
    %609 = vmatpush1.bf16.msra.mxu0 0
    %610 = vmatprep.subr.bf16.mxu0 0
    %611 = vmatpush1.bf16.msra.mxu0 0
    %612 = vmatprep.subr.bf16.mxu0 0
    %613 = vmatpush1.bf16.msra.mxu0 0
    %614 = vmatprep.subr.bf16.mxu0 0
    %615 = vmatpush1.bf16.msra.mxu0 0
    %616 = vmatprep.subr.bf16.mxu0 0
    %617 = vmatpush1.bf16.msra.mxu0 0
    %618 = vmatprep.subr.bf16.mxu0 0
    %619 = vmatpush1.bf16.msra.mxu0 0
    %620 = vmatprep.subr.bf16.mxu0 0
    %621 = vmatpush1.bf16.msra.mxu0 0
    %622 = vmatprep.subr.bf16.mxu0 0
    %623 = vmatpush1.bf16.msra.mxu0 0
    %624 = vmatprep.subr.bf16.mxu0 0
    %625 = vmatpush1.bf16.msra.mxu0 0
    %626 = vmatprep.subr.bf16.mxu0 0
    %627 = vmatpush1.bf16.msra.mxu0 0
    %628 = vmatprep.mubr.bf16.mxu0 0
    %629 = vmatmul.mubr.bf16.gmra.mrb[0].mxu0 %v594
    %v630 = vpop.f32.mrb[0].mxu0
    %v631 = vadd.f32 %v336, %v630
    %v632 = vpop.f32.mrb[0].mxu0
    %v633 = vpop.f32.mrb[0].mxu0
    %v634 = vpop.f32.mrb[0].mxu0
    %635 = vdwg.mxu0
    %v636 = vld [vmem:[#allocation2 + $0x2] sm:$0x1]
    %v637 = vld [vmem:[#allocation2 + $0xa] sm:$0x1]
    %v639 = vrot.slane %v631, 1
    %v642 = vadd.f32 %v636, %v631
    %v643 = vadd.f32 %v637, %v639
    %v644 = vxor.u32 %v642, 2147483648
    %v645 = vxor.u32 %v643, 2147483648
    %v646 = vmul.f32 %v644, 1.442695
    %v647 = vpow.pop %v646
    %v648 = vmul.f32 %v645, 1.442695
    %v649 = vpow.pop %v648
    %v650 = vadd.f32 %v647, 1.0
    %v651 = vadd.f32 %v649, 1.0
    %v652 = vrcp.pop %v650
    %v653 = vmul.f32 1.0, %v652
    %v654 = vrcp.pop %v651
    %v655 = vmul.f32 1.0, %v654
    %656 = vrot.lane.b32.xlu0 %v631, 64
    %v657 = vpop.permute.xlu0 %656
    %658 = vrot.lane.b32.xlu0 %v639, 64
    %v659 = vpop.permute.xlu0 %658
    %v662 = vmul.f32 %v653, %v657
    %v663 = vmul.f32 %v655, %v659
    %666 = vrot.lane.b32.xlu0 %v662, 64
    %v667 = vpop.permute.xlu0 %666
    %668 = vrot.lane.b32.xlu0 %v663, 64
    %v669 = vpop.permute.xlu0 %668
    %v672 = vadd.f32 %v636, %v667
    %v673 = vadd.f32 %v637, %v669
    %v674 = vtanh.pop %v672
    %v675 = vtanh.pop %v673
    %v676 = vsub.f32 1.0, %v653
    %v677 = vsub.f32 1.0, %v655
    %680 = vrot.lane.b32.xlu0 %v674, 96
    %v681 = vpop.permute.xlu0 %680
    %682 = vrot.lane.b32.xlu0 %v675, 96
    %v683 = vpop.permute.xlu0 %682
    %v686 = vmul.f32 %v676, %v681
    %v687 = vmul.f32 %v677, %v683
    %v688 = vmul.f32 %v653, %v570
    %v689 = vmul.f32 %v655, %v571
    %v690 = vadd.f32 %v686, %v688
    %v691 = vadd.f32 %v687, %v689
    %694 = vrot.lane.b32.xlu0 %v690, 96
    %v695 = vpop.permute.xlu0 %694
    %696 = vrot.lane.b32.xlu0 %v691, 96
    %v697 = vpop.permute.xlu0 %696
    %700 = vst.msk [vmem:[#allocation26 + $0x2] sm:$0x1] %vm458, %v695
    %701 = vst.msk [vmem:[#allocation26 + $0xa] sm:$0x1] %vm458, %v697
    %v702 = vpack.c.bf16 %v690, %v690
    %v703 = vpack.c.bf16 %v691, %v691
    %v706 = vunpack.c.l.b16 %v702
    %v707 = vunpack.c.l.b16 %v703
    %v708 = vrot.slane %v707, 7
    %v709 = vsel %vm468, %v708, %v706
    %v710 = vpack.c.b16 %v709, %v709
    %711 = vrot.lane.b32.xlu0 %v710, 96
    %v712 = vpop.permute.xlu0 %711
    %v714 = vsel %vm350, %v712, 0
    %716 = vmatprep.subr.bf16.mxu0 0
    %717 = vmatpush1.bf16.msra.mxu0 %v346
    %718 = vmatprep.subr.bf16.mxu0 0
    %719 = vmatpush1.bf16.msra.mxu0 %v347
    %720 = vmatprep.subr.bf16.mxu0 0
    %721 = vmatpush1.bf16.msra.mxu0 0
    %722 = vmatprep.subr.bf16.mxu0 0
    %723 = vmatpush1.bf16.msra.mxu0 0
    %724 = vmatprep.subr.bf16.mxu0 0
    %725 = vmatpush1.bf16.msra.mxu0 0
    %726 = vmatprep.subr.bf16.mxu0 0
    %727 = vmatpush1.bf16.msra.mxu0 0
    %728 = vmatprep.subr.bf16.mxu0 0
    %729 = vmatpush1.bf16.msra.mxu0 0
    %730 = vmatprep.subr.bf16.mxu0 0
    %731 = vmatpush1.bf16.msra.mxu0 0
    %732 = vmatprep.subr.bf16.mxu0 0
    %733 = vmatpush1.bf16.msra.mxu0 0
    %734 = vmatprep.subr.bf16.mxu0 0
    %735 = vmatpush1.bf16.msra.mxu0 0
    %736 = vmatprep.subr.bf16.mxu0 0
    %737 = vmatpush1.bf16.msra.mxu0 0
    %738 = vmatprep.subr.bf16.mxu0 0
    %739 = vmatpush1.bf16.msra.mxu0 0
    %740 = vmatprep.subr.bf16.mxu0 0
    %741 = vmatpush1.bf16.msra.mxu0 0
    %742 = vmatprep.subr.bf16.mxu0 0
    %743 = vmatpush1.bf16.msra.mxu0 0
    %744 = vmatprep.subr.bf16.mxu0 0
    %745 = vmatpush1.bf16.msra.mxu0 0
    %746 = vmatprep.subr.bf16.mxu0 0
    %747 = vmatpush1.bf16.msra.mxu0 0
    %748 = vmatprep.mubr.bf16.mxu0 0
    %749 = vmatmul.mubr.bf16.gmra.mrb[0].mxu0 %v714
    %v750 = vpop.f32.mrb[0].mxu0
    %v751 = vadd.f32 %v336, %v750
    %v752 = vpop.f32.mrb[0].mxu0
    %v753 = vpop.f32.mrb[0].mxu0
    %v754 = vpop.f32.mrb[0].mxu0
    %755 = vdwg.mxu0
    %v756 = vld [vmem:[#allocation2 + $0x3] sm:$0x1]
    %v757 = vld [vmem:[#allocation2 + $0xb] sm:$0x1]
    %v759 = vrot.slane %v751, 1
    %v762 = vadd.f32 %v756, %v751
    %v763 = vadd.f32 %v757, %v759
    %v764 = vxor.u32 %v762, 2147483648
    %v765 = vxor.u32 %v763, 2147483648
    %v766 = vmul.f32 %v764, 1.442695
    %v767 = vpow.pop %v766
    %v768 = vmul.f32 %v765, 1.442695
    %v769 = vpow.pop %v768
    %v770 = vadd.f32 %v767, 1.0
    %v771 = vadd.f32 %v769, 1.0
    %v772 = vrcp.pop %v770
    %v773 = vmul.f32 1.0, %v772
    %v774 = vrcp.pop %v771
    %v775 = vmul.f32 1.0, %v774
    %776 = vrot.lane.b32.xlu0 %v751, 64
    %v777 = vpop.permute.xlu0 %776
    %778 = vrot.lane.b32.xlu0 %v759, 64
    %v779 = vpop.permute.xlu0 %778
    %v782 = vmul.f32 %v773, %v777
    %v783 = vmul.f32 %v775, %v779
    %786 = vrot.lane.b32.xlu0 %v782, 64
    %v787 = vpop.permute.xlu0 %786
    %788 = vrot.lane.b32.xlu0 %v783, 64
    %v789 = vpop.permute.xlu0 %788
    %v792 = vadd.f32 %v756, %v787
    %v793 = vadd.f32 %v757, %v789
    %v794 = vtanh.pop %v792
    %v795 = vtanh.pop %v793
    %v796 = vsub.f32 1.0, %v773
    %v797 = vsub.f32 1.0, %v775
    %800 = vrot.lane.b32.xlu0 %v794, 96
    %v801 = vpop.permute.xlu0 %800
    %802 = vrot.lane.b32.xlu0 %v795, 96
    %v803 = vpop.permute.xlu0 %802
    %v806 = vmul.f32 %v796, %v801
    %v807 = vmul.f32 %v797, %v803
    %v808 = vmul.f32 %v773, %v690
    %v809 = vmul.f32 %v775, %v691
    %v810 = vadd.f32 %v806, %v808
    %v811 = vadd.f32 %v807, %v809
    %814 = vrot.lane.b32.xlu0 %v810, 96
    %v815 = vpop.permute.xlu0 %814
    %816 = vrot.lane.b32.xlu0 %v811, 96
    %v817 = vpop.permute.xlu0 %816
    %820 = vst.msk [vmem:[#allocation26 + $0x3] sm:$0x1] %vm458, %v815
    %821 = vst.msk [vmem:[#allocation26 + $0xb] sm:$0x1] %vm458, %v817
    %v822 = vpack.c.bf16 %v810, %v810
    %v823 = vpack.c.bf16 %v811, %v811
    %v826 = vunpack.c.l.b16 %v822
    %v827 = vunpack.c.l.b16 %v823
    %v828 = vrot.slane %v827, 7
    %v829 = vsel %vm468, %v828, %v826
    %v830 = vpack.c.b16 %v829, %v829
    %831 = vrot.lane.b32.xlu0 %v830, 96
    %v832 = vpop.permute.xlu0 %831
    %v834 = vsel %vm350, %v832, 0
    %836 = vmatprep.subr.bf16.mxu0 0
    %837 = vmatpush1.bf16.msra.mxu0 %v346
    %838 = vmatprep.subr.bf16.mxu0 0
    %839 = vmatpush1.bf16.msra.mxu0 %v347
    %840 = vmatprep.subr.bf16.mxu0 0
    %841 = vmatpush1.bf16.msra.mxu0 0
    %842 = vmatprep.subr.bf16.mxu0 0
    %843 = vmatpush1.bf16.msra.mxu0 0
    %844 = vmatprep.subr.bf16.mxu0 0
    %845 = vmatpush1.bf16.msra.mxu0 0
    %846 = vmatprep.subr.bf16.mxu0 0
    %847 = vmatpush1.bf16.msra.mxu0 0
    %848 = vmatprep.subr.bf16.mxu0 0
    %849 = vmatpush1.bf16.msra.mxu0 0
    %850 = vmatprep.subr.bf16.mxu0 0
    %851 = vmatpush1.bf16.msra.mxu0 0
    %852 = vmatprep.subr.bf16.mxu0 0
    %853 = vmatpush1.bf16.msra.mxu0 0
    %854 = vmatprep.subr.bf16.mxu0 0
    %855 = vmatpush1.bf16.msra.mxu0 0
    %856 = vmatprep.subr.bf16.mxu0 0
    %857 = vmatpush1.bf16.msra.mxu0 0
    %858 = vmatprep.subr.bf16.mxu0 0
    %859 = vmatpush1.bf16.msra.mxu0 0
    %860 = vmatprep.subr.bf16.mxu0 0
    %861 = vmatpush1.bf16.msra.mxu0 0
    %862 = vmatprep.subr.bf16.mxu0 0
    %863 = vmatpush1.bf16.msra.mxu0 0
    %864 = vmatprep.subr.bf16.mxu0 0
    %865 = vmatpush1.bf16.msra.mxu0 0
    %866 = vmatprep.subr.bf16.mxu0 0
    %867 = vmatpush1.bf16.msra.mxu0 0
    %868 = vmatprep.mubr.bf16.mxu0 0
    %869 = vmatmul.mubr.bf16.gmra.mrb[0].mxu0 %v834
    %v870 = vpop.f32.mrb[0].mxu0
    %v871 = vadd.f32 %v336, %v870
    %v872 = vpop.f32.mrb[0].mxu0
    %v873 = vpop.f32.mrb[0].mxu0
    %v874 = vpop.f32.mrb[0].mxu0
    %875 = vdwg.mxu0
    %v876 = vld [vmem:[#allocation2 + $0x4] sm:$0x1]
    %v877 = vld [vmem:[#allocation2 + $0xc] sm:$0x1]
    %v879 = vrot.slane %v871, 1
    %v882 = vadd.f32 %v876, %v871
    %v883 = vadd.f32 %v877, %v879
    %v884 = vxor.u32 %v882, 2147483648
    %v885 = vxor.u32 %v883, 2147483648
    %v886 = vmul.f32 %v884, 1.442695
    %v887 = vpow.pop %v886
    %v888 = vmul.f32 %v885, 1.442695
    %v889 = vpow.pop %v888
    %v890 = vadd.f32 %v887, 1.0
    %v891 = vadd.f32 %v889, 1.0
    %v892 = vrcp.pop %v890
    %v893 = vmul.f32 1.0, %v892
    %v894 = vrcp.pop %v891
    %v895 = vmul.f32 1.0, %v894
    %896 = vrot.lane.b32.xlu0 %v871, 64
    %v897 = vpop.permute.xlu0 %896
    %898 = vrot.lane.b32.xlu0 %v879, 64
    %v899 = vpop.permute.xlu0 %898
    %v902 = vmul.f32 %v893, %v897
    %v903 = vmul.f32 %v895, %v899
    %906 = vrot.lane.b32.xlu0 %v902, 64
    %v907 = vpop.permute.xlu0 %906
    %908 = vrot.lane.b32.xlu0 %v903, 64
    %v909 = vpop.permute.xlu0 %908
    %v912 = vadd.f32 %v876, %v907
    %v913 = vadd.f32 %v877, %v909
    %v914 = vtanh.pop %v912
    %v915 = vtanh.pop %v913
    %v916 = vsub.f32 1.0, %v893
    %v917 = vsub.f32 1.0, %v895
    %920 = vrot.lane.b32.xlu0 %v914, 96
    %v921 = vpop.permute.xlu0 %920
    %922 = vrot.lane.b32.xlu0 %v915, 96
    %v923 = vpop.permute.xlu0 %922
    %v926 = vmul.f32 %v916, %v921
    %v927 = vmul.f32 %v917, %v923
    %v928 = vmul.f32 %v893, %v810
    %v929 = vmul.f32 %v895, %v811
    %v930 = vadd.f32 %v926, %v928
    %v931 = vadd.f32 %v927, %v929
    %934 = vrot.lane.b32.xlu0 %v930, 96
    %v935 = vpop.permute.xlu0 %934
    %936 = vrot.lane.b32.xlu0 %v931, 96
    %v937 = vpop.permute.xlu0 %936
    %940 = vst.msk [vmem:[#allocation26 + $0x4] sm:$0x1] %vm458, %v935
    %941 = vst.msk [vmem:[#allocation26 + $0xc] sm:$0x1] %vm458, %v937
    %v942 = vpack.c.bf16 %v930, %v930
    %v943 = vpack.c.bf16 %v931, %v931
    %v946 = vunpack.c.l.b16 %v942
    %v947 = vunpack.c.l.b16 %v943
    %v948 = vrot.slane %v947, 7
    %v949 = vsel %vm468, %v948, %v946
    %v950 = vpack.c.b16 %v949, %v949
    %951 = vrot.lane.b32.xlu0 %v950, 96
    %v952 = vpop.permute.xlu0 %951
    %v954 = vsel %vm350, %v952, 0
    %956 = vmatprep.subr.bf16.mxu0 0
    %957 = vmatpush1.bf16.msra.mxu0 %v346
    %958 = vmatprep.subr.bf16.mxu0 0
    %959 = vmatpush1.bf16.msra.mxu0 %v347
    %960 = vmatprep.subr.bf16.mxu0 0
    %961 = vmatpush1.bf16.msra.mxu0 0
    %962 = vmatprep.subr.bf16.mxu0 0
    %963 = vmatpush1.bf16.msra.mxu0 0
    %964 = vmatprep.subr.bf16.mxu0 0
    %965 = vmatpush1.bf16.msra.mxu0 0
    %966 = vmatprep.subr.bf16.mxu0 0
    %967 = vmatpush1.bf16.msra.mxu0 0
    %968 = vmatprep.subr.bf16.mxu0 0
    %969 = vmatpush1.bf16.msra.mxu0 0
    %970 = vmatprep.subr.bf16.mxu0 0
    %971 = vmatpush1.bf16.msra.mxu0 0
    %972 = vmatprep.subr.bf16.mxu0 0
    %973 = vmatpush1.bf16.msra.mxu0 0
    %974 = vmatprep.subr.bf16.mxu0 0
    %975 = vmatpush1.bf16.msra.mxu0 0
    %976 = vmatprep.subr.bf16.mxu0 0
    %977 = vmatpush1.bf16.msra.mxu0 0
    %978 = vmatprep.subr.bf16.mxu0 0
    %979 = vmatpush1.bf16.msra.mxu0 0
    %980 = vmatprep.subr.bf16.mxu0 0
    %981 = vmatpush1.bf16.msra.mxu0 0
    %982 = vmatprep.subr.bf16.mxu0 0
    %983 = vmatpush1.bf16.msra.mxu0 0
    %984 = vmatprep.subr.bf16.mxu0 0
    %985 = vmatpush1.bf16.msra.mxu0 0
    %986 = vmatprep.subr.bf16.mxu0 0
    %987 = vmatpush1.bf16.msra.mxu0 0
    %988 = vmatprep.mubr.bf16.mxu0 0
    %989 = vmatmul.mubr.bf16.gmra.mrb[0].mxu0 %v954
    %v990 = vpop.f32.mrb[0].mxu0
    %v991 = vadd.f32 %v336, %v990
    %v992 = vpop.f32.mrb[0].mxu0
    %v993 = vpop.f32.mrb[0].mxu0
    %v994 = vpop.f32.mrb[0].mxu0
    %995 = vdwg.mxu0
    %v996 = vld [vmem:[#allocation2 + $0x5] sm:$0x1]
    %v997 = vld [vmem:[#allocation2 + $0xd] sm:$0x1]
    %v999 = vrot.slane %v991, 1
    %v1002 = vadd.f32 %v996, %v991
    %v1003 = vadd.f32 %v997, %v999
    %v1004 = vxor.u32 %v1002, 2147483648
    %v1005 = vxor.u32 %v1003, 2147483648
    %v1006 = vmul.f32 %v1004, 1.442695
    %v1007 = vpow.pop %v1006
    %v1008 = vmul.f32 %v1005, 1.442695
    %v1009 = vpow.pop %v1008
    %v1010 = vadd.f32 %v1007, 1.0
    %v1011 = vadd.f32 %v1009, 1.0
    %v1012 = vrcp.pop %v1010
    %v1013 = vmul.f32 1.0, %v1012
    %v1014 = vrcp.pop %v1011
    %v1015 = vmul.f32 1.0, %v1014
    %1016 = vrot.lane.b32.xlu0 %v991, 64
    %v1017 = vpop.permute.xlu0 %1016
    %1018 = vrot.lane.b32.xlu0 %v999, 64
    %v1019 = vpop.permute.xlu0 %1018
    %v1022 = vmul.f32 %v1013, %v1017
    %v1023 = vmul.f32 %v1015, %v1019
    %1026 = vrot.lane.b32.xlu0 %v1022, 64
    %v1027 = vpop.permute.xlu0 %1026
    %1028 = vrot.lane.b32.xlu0 %v1023, 64
    %v1029 = vpop.permute.xlu0 %1028
    %v1032 = vadd.f32 %v996, %v1027
    %v1033 = vadd.f32 %v997, %v1029
    %v1034 = vtanh.pop %v1032
    %v1035 = vtanh.pop %v1033
    %v1036 = vsub.f32 1.0, %v1013
    %v1037 = vsub.f32 1.0, %v1015
    %1040 = vrot.lane.b32.xlu0 %v1034, 96
    %v1041 = vpop.permute.xlu0 %1040
    %1042 = vrot.lane.b32.xlu0 %v1035, 96
    %v1043 = vpop.permute.xlu0 %1042
    %v1046 = vmul.f32 %v1036, %v1041
    %v1047 = vmul.f32 %v1037, %v1043
    %v1048 = vmul.f32 %v1013, %v930
    %v1049 = vmul.f32 %v1015, %v931
    %v1050 = vadd.f32 %v1046, %v1048
    %v1051 = vadd.f32 %v1047, %v1049
    %1054 = vrot.lane.b32.xlu0 %v1050, 96
    %v1055 = vpop.permute.xlu0 %1054
    %1056 = vrot.lane.b32.xlu0 %v1051, 96
    %v1057 = vpop.permute.xlu0 %1056
    %1060 = vst.msk [vmem:[#allocation26 + $0x5] sm:$0x1] %vm458, %v1055
    %1061 = vst.msk [vmem:[#allocation26 + $0xd] sm:$0x1] %vm458, %v1057
    %v1062 = vpack.c.bf16 %v1050, %v1050
    %v1063 = vpack.c.bf16 %v1051, %v1051
    %v1066 = vunpack.c.l.b16 %v1062
    %v1067 = vunpack.c.l.b16 %v1063
    %v1068 = vrot.slane %v1067, 7
    %v1069 = vsel %vm468, %v1068, %v1066
    %v1070 = vpack.c.b16 %v1069, %v1069
    %1071 = vrot.lane.b32.xlu0 %v1070, 96
    %v1072 = vpop.permute.xlu0 %1071
    %v1074 = vsel %vm350, %v1072, 0
    %1076 = vmatprep.subr.bf16.mxu0 0
    %1077 = vmatpush1.bf16.msra.mxu0 %v346
    %1078 = vmatprep.subr.bf16.mxu0 0
    %1079 = vmatpush1.bf16.msra.mxu0 %v347
    %1080 = vmatprep.subr.bf16.mxu0 0
    %1081 = vmatpush1.bf16.msra.mxu0 0
    %1082 = vmatprep.subr.bf16.mxu0 0
    %1083 = vmatpush1.bf16.msra.mxu0 0
    %1084 = vmatprep.subr.bf16.mxu0 0
    %1085 = vmatpush1.bf16.msra.mxu0 0
    %1086 = vmatprep.subr.bf16.mxu0 0
    %1087 = vmatpush1.bf16.msra.mxu0 0
    %1088 = vmatprep.subr.bf16.mxu0 0
    %1089 = vmatpush1.bf16.msra.mxu0 0
    %1090 = vmatprep.subr.bf16.mxu0 0
    %1091 = vmatpush1.bf16.msra.mxu0 0
    %1092 = vmatprep.subr.bf16.mxu0 0
    %1093 = vmatpush1.bf16.msra.mxu0 0
    %1094 = vmatprep.subr.bf16.mxu0 0
    %1095 = vmatpush1.bf16.msra.mxu0 0
    %1096 = vmatprep.subr.bf16.mxu0 0
    %1097 = vmatpush1.bf16.msra.mxu0 0
    %1098 = vmatprep.subr.bf16.mxu0 0
    %1099 = vmatpush1.bf16.msra.mxu0 0
    %1100 = vmatprep.subr.bf16.mxu0 0
    %1101 = vmatpush1.bf16.msra.mxu0 0
    %1102 = vmatprep.subr.bf16.mxu0 0
    %1103 = vmatpush1.bf16.msra.mxu0 0
    %1104 = vmatprep.subr.bf16.mxu0 0
    %1105 = vmatpush1.bf16.msra.mxu0 0
    %1106 = vmatprep.subr.bf16.mxu0 0
    %1107 = vmatpush1.bf16.msra.mxu0 0
    %1108 = vmatprep.mubr.bf16.mxu0 0
    %1109 = vmatmul.mubr.bf16.gmra.mrb[0].mxu0 %v1074
    %v1110 = vpop.f32.mrb[0].mxu0
    %v1111 = vadd.f32 %v336, %v1110
    %v1112 = vpop.f32.mrb[0].mxu0
    %v1113 = vpop.f32.mrb[0].mxu0
    %v1114 = vpop.f32.mrb[0].mxu0
    %1115 = vdwg.mxu0
    %v1116 = vld [vmem:[#allocation2 + $0x6] sm:$0x1]
    %v1117 = vld [vmem:[#allocation2 + $0xe] sm:$0x1]
    %v1119 = vrot.slane %v1111, 1
    %v1122 = vadd.f32 %v1116, %v1111
    %v1123 = vadd.f32 %v1117, %v1119
    %v1124 = vxor.u32 %v1122, 2147483648
    %v1125 = vxor.u32 %v1123, 2147483648
    %v1126 = vmul.f32 %v1124, 1.442695
    %v1127 = vpow.pop %v1126
    %v1128 = vmul.f32 %v1125, 1.442695
    %v1129 = vpow.pop %v1128
    %v1130 = vadd.f32 %v1127, 1.0
    %v1131 = vadd.f32 %v1129, 1.0
    %v1132 = vrcp.pop %v1130
    %v1133 = vmul.f32 1.0, %v1132
    %v1134 = vrcp.pop %v1131
    %v1135 = vmul.f32 1.0, %v1134
    %1136 = vrot.lane.b32.xlu0 %v1111, 64
    %v1137 = vpop.permute.xlu0 %1136
    %1138 = vrot.lane.b32.xlu0 %v1119, 64
    %v1139 = vpop.permute.xlu0 %1138
    %v1142 = vmul.f32 %v1133, %v1137
    %v1143 = vmul.f32 %v1135, %v1139
    %1146 = vrot.lane.b32.xlu0 %v1142, 64
    %v1147 = vpop.permute.xlu0 %1146
    %1148 = vrot.lane.b32.xlu0 %v1143, 64
    %v1149 = vpop.permute.xlu0 %1148
    %v1152 = vadd.f32 %v1116, %v1147
    %v1153 = vadd.f32 %v1117, %v1149
    %v1154 = vtanh.pop %v1152
    %v1155 = vtanh.pop %v1153
    %v1156 = vsub.f32 1.0, %v1133
    %v1157 = vsub.f32 1.0, %v1135
    %1160 = vrot.lane.b32.xlu0 %v1154, 96
    %v1161 = vpop.permute.xlu0 %1160
    %1162 = vrot.lane.b32.xlu0 %v1155, 96
    %v1163 = vpop.permute.xlu0 %1162
    %v1166 = vmul.f32 %v1156, %v1161
    %v1167 = vmul.f32 %v1157, %v1163
    %v1168 = vmul.f32 %v1133, %v1050
    %v1169 = vmul.f32 %v1135, %v1051
    %v1170 = vadd.f32 %v1166, %v1168
    %v1171 = vadd.f32 %v1167, %v1169
    %1174 = vrot.lane.b32.xlu0 %v1170, 96
    %v1175 = vpop.permute.xlu0 %1174
    %1176 = vrot.lane.b32.xlu0 %v1171, 96
    %v1177 = vpop.permute.xlu0 %1176
    %1180 = vst.msk [vmem:[#allocation26 + $0x6] sm:$0x1] %vm458, %v1175
    %1181 = vst.msk [vmem:[#allocation26 + $0xe] sm:$0x1] %vm458, %v1177
    %v1182 = vpack.c.bf16 %v1170, %v1170
    %v1183 = vpack.c.bf16 %v1171, %v1171
    %v1186 = vunpack.c.l.b16 %v1182
    %v1187 = vunpack.c.l.b16 %v1183
    %v1188 = vrot.slane %v1187, 7
    %v1189 = vsel %vm468, %v1188, %v1186
    %v1190 = vpack.c.b16 %v1189, %v1189
    %1191 = vrot.lane.b32.xlu0 %v1190, 96
    %v1192 = vpop.permute.xlu0 %1191
    %v1194 = vsel %vm350, %v1192, 0
    %1196 = vmatprep.subr.bf16.mxu0 0
    %1197 = vmatpush1.bf16.msra.mxu0 %v346
    %1198 = vmatprep.subr.bf16.mxu0 0
    %1199 = vmatpush1.bf16.msra.mxu0 %v347
    %1200 = vmatprep.subr.bf16.mxu0 0
    %1201 = vmatpush1.bf16.msra.mxu0 0
    %1202 = vmatprep.subr.bf16.mxu0 0
    %1203 = vmatpush1.bf16.msra.mxu0 0
    %1204 = vmatprep.subr.bf16.mxu0 0
    %1205 = vmatpush1.bf16.msra.mxu0 0
    %1206 = vmatprep.subr.bf16.mxu0 0
    %1207 = vmatpush1.bf16.msra.mxu0 0
    %1208 = vmatprep.subr.bf16.mxu0 0
    %1209 = vmatpush1.bf16.msra.mxu0 0
    %1210 = vmatprep.subr.bf16.mxu0 0
    %1211 = vmatpush1.bf16.msra.mxu0 0
    %1212 = vmatprep.subr.bf16.mxu0 0
    %1213 = vmatpush1.bf16.msra.mxu0 0
    %1214 = vmatprep.subr.bf16.mxu0 0
    %1215 = vmatpush1.bf16.msra.mxu0 0
    %1216 = vmatprep.subr.bf16.mxu0 0
    %1217 = vmatpush1.bf16.msra.mxu0 0
    %1218 = vmatprep.subr.bf16.mxu0 0
    %1219 = vmatpush1.bf16.msra.mxu0 0
    %1220 = vmatprep.subr.bf16.mxu0 0
    %1221 = vmatpush1.bf16.msra.mxu0 0
    %1222 = vmatprep.subr.bf16.mxu0 0
    %1223 = vmatpush1.bf16.msra.mxu0 0
    %1224 = vmatprep.subr.bf16.mxu0 0
    %1225 = vmatpush1.bf16.msra.mxu0 0
    %1226 = vmatprep.subr.bf16.mxu0 0
    %1227 = vmatpush1.bf16.msra.mxu0 0
    %1228 = vmatprep.mubr.bf16.mxu0 0
    %1229 = vmatmul.mubr.bf16.gmra.mrb[0].mxu0 %v1194
    %v1230 = vpop.f32.mrb[0].mxu0
    %v1231 = vadd.f32 %v336, %v1230
    %v1232 = vpop.f32.mrb[0].mxu0
    %v1233 = vpop.f32.mrb[0].mxu0
    %v1234 = vpop.f32.mrb[0].mxu0
    %1235 = vdwg.mxu0
    %v1236 = vld [vmem:[#allocation2 + $0x7] sm:$0x1]
    %v1237 = vld [vmem:[#allocation2 + $0xf] sm:$0x1]
    %v1239 = vrot.slane %v1231, 1
    %v1242 = vadd.f32 %v1236, %v1231
    %v1243 = vadd.f32 %v1237, %v1239
    %v1244 = vxor.u32 %v1242, 2147483648
    %v1245 = vxor.u32 %v1243, 2147483648
    %v1246 = vmul.f32 %v1244, 1.442695
    %v1247 = vpow.pop %v1246
    %v1248 = vmul.f32 %v1245, 1.442695
    %v1249 = vpow.pop %v1248
    %v1250 = vadd.f32 %v1247, 1.0
    %v1251 = vadd.f32 %v1249, 1.0
    %v1252 = vrcp.pop %v1250
    %v1253 = vmul.f32 1.0, %v1252
    %v1254 = vrcp.pop %v1251
    %v1255 = vmul.f32 1.0, %v1254
    %1256 = vrot.lane.b32.xlu0 %v1231, 64
    %v1257 = vpop.permute.xlu0 %1256
    %1258 = vrot.lane.b32.xlu0 %v1239, 64
    %v1259 = vpop.permute.xlu0 %1258
    %v1262 = vmul.f32 %v1253, %v1257
    %v1263 = vmul.f32 %v1255, %v1259
    %1266 = vrot.lane.b32.xlu0 %v1262, 64
    %v1267 = vpop.permute.xlu0 %1266
    %1268 = vrot.lane.b32.xlu0 %v1263, 64
    %v1269 = vpop.permute.xlu0 %1268
    %v1272 = vadd.f32 %v1236, %v1267
    %v1273 = vadd.f32 %v1237, %v1269
    %v1274 = vtanh.pop %v1272
    %v1275 = vtanh.pop %v1273
    %v1276 = vsub.f32 1.0, %v1253
    %v1277 = vsub.f32 1.0, %v1255
    %1280 = vrot.lane.b32.xlu0 %v1274, 96
    %v1281 = vpop.permute.xlu0 %1280
    %1282 = vrot.lane.b32.xlu0 %v1275, 96
    %v1283 = vpop.permute.xlu0 %1282
    %v1286 = vmul.f32 %v1276, %v1281
    %v1287 = vmul.f32 %v1277, %v1283
    %v1288 = vmul.f32 %v1253, %v1170
    %v1289 = vmul.f32 %v1255, %v1171
    %v1290 = vadd.f32 %v1286, %v1288
    %v1291 = vadd.f32 %v1287, %v1289
    %1294 = vrot.lane.b32.xlu0 %v1290, 96
    %v1295 = vpop.permute.xlu0 %1294
    %1296 = vrot.lane.b32.xlu0 %v1291, 96
    %v1297 = vpop.permute.xlu0 %1296
    %1300 = vst.msk [vmem:[#allocation26 + $0x7] sm:$0x1] %vm458, %v1295
    %1301 = vst.msk [vmem:[#allocation26 + $0xf] sm:$0x1] %vm458, %v1297
    %v1302 = vld [vmem:[#allocation26] sm:$0xff]
    %v1303 = vld [vmem:[#allocation26 + $0x8] sm:$0xff]
    %v1304 = vpack.c.bf16 %v1303, %v1302
    %v1305 = vld [vmem:[%s7] sm:$0xf]
    %v1306 = vld [vmem:[%s7 + $0x4] sm:$0xf]
    %v1307 = vld [vmem:[%s7 + $0x8] sm:$0xf]
    %v1308 = vld [vmem:[%s7 + $0xc] sm:$0xf]
    %v1313 = vunpack.c.l.b16 %v1305
    %v1314 = vunpack.c.l.b16 %v1306
    %v1315 = vunpack.c.l.b16 %v1307
    %v1316 = vunpack.c.l.b16 %v1308
    %v1317 = vpack.c.b16 %v1314, %v1313
    %v1318 = vpack.c.b16 %v1316, %v1315
    %v1322 = vsel %vm350, %v1304, 0
    %1324 = vmatprep.subr.bf16.mxu0 0
    %1325 = vmatpush1.bf16.msra.mxu0 %v1317
    %1326 = vmatprep.subr.bf16.mxu0 0
    %1327 = vmatpush1.bf16.msra.mxu0 %v1318
    %1328 = vmatprep.subr.bf16.mxu0 0
    %1329 = vmatpush1.bf16.msra.mxu0 0
    %1330 = vmatprep.subr.bf16.mxu0 0
    %1331 = vmatpush1.bf16.msra.mxu0 0
    %1332 = vmatprep.subr.bf16.mxu0 0
    %1333 = vmatpush1.bf16.msra.mxu0 0
    %1334 = vmatprep.subr.bf16.mxu0 0
    %1335 = vmatpush1.bf16.msra.mxu0 0
    %1336 = vmatprep.subr.bf16.mxu0 0
    %1337 = vmatpush1.bf16.msra.mxu0 0
    %1338 = vmatprep.subr.bf16.mxu0 0
    %1339 = vmatpush1.bf16.msra.mxu0 0
    %1340 = vmatprep.subr.bf16.mxu0 0
    %1341 = vmatpush1.bf16.msra.mxu0 0
    %1342 = vmatprep.subr.bf16.mxu0 0
    %1343 = vmatpush1.bf16.msra.mxu0 0
    %1344 = vmatprep.subr.bf16.mxu0 0
    %1345 = vmatpush1.bf16.msra.mxu0 0
    %1346 = vmatprep.subr.bf16.mxu0 0
    %1347 = vmatpush1.bf16.msra.mxu0 0
    %1348 = vmatprep.subr.bf16.mxu0 0
    %1349 = vmatpush1.bf16.msra.mxu0 0
    %1350 = vmatprep.subr.bf16.mxu0 0
    %1351 = vmatpush1.bf16.msra.mxu0 0
    %1352 = vmatprep.subr.bf16.mxu0 0
    %1353 = vmatpush1.bf16.msra.mxu0 0
    %1354 = vmatprep.subr.bf16.mxu0 0
    %1355 = vmatpush1.bf16.msra.mxu0 0
    %1356 = vmatprep.mubr.bf16.mxu0 0
    %1357 = vmatmul.mubr.bf16.gmra.mrb[0].mxu0 %v1322
    %v1358 = vpop.f32.mrb[0].mxu0
    %v1359 = vadd.f32 0.0, %v1358
    %v1360 = vpop.f32.mrb[0].mxu0
    %v1361 = vpop.f32.mrb[0].mxu0
    %v1362 = vadd.f32 0.0, %v1361
    %v1363 = vpop.f32.mrb[0].mxu0
    %1364 = vdwg.mxu0
    %1365 = vst.msk [vmem:[#allocation4] sm:$0xff] %vm350, %v1359
    %1366 = vst.msk [vmem:[#allocation4 + $0x8] sm:$0xff] %vm350, %v1362
    %v1367 = vlaneseq
    %v1368 = vshrl.u32 %v1367, 7
    %v1369 = vlaneseq
    %v1370 = vand.u32 %v1369, 127
    %vm1371 = vcmp.eq.s32.totalorder %v1368, 0
    %s1372 = sld [smem:[#allocation7]]
    %v1373 = vstv %s1372
    %v1374 = vsel %vm1371, %v1373, 0
    %vm1375 = vcmp.eq.s32.totalorder %v1368, 1
    %s1376 = sld [smem:[#allocation7 + $0x1]]
    %v1377 = vstv %s1376
    %v1378 = vsel %vm1375, %v1377, %v1374
    %vm1379 = vcmp.lt.s32.totalorder %v1370, %v1378
    %v1380 = vsel %vm1379, 0.0, -1000000.0
    %v1381 = vld [vmem:[#allocation17] sm:$0x1]
    %v1383 = vlaneseq
    %v1384 = vshrl.u32 %v1383, 7
    %v1385 = vsub.s32 0, %v1384
    %v1386 = vrot.slane %v1381, %v1385
    %v1388 = vld [vmem:[%s9] sm:$0xf]
    %v1389 = vld [vmem:[%s9 + $0x4] sm:$0xf]
    %v1390 = vld [vmem:[%s9 + $0x8] sm:$0xf]
    %v1391 = vld [vmem:[%s9 + $0xc] sm:$0xf]
    %v1392 = vld [vmem:[#allocation19] sm:$0xf]
    %v1393 = vld [vmem:[#allocation19 + $0x4] sm:$0xf]
    %v1394 = vld [vmem:[#allocation19 + $0x8] sm:$0xf]
    %v1395 = vld [vmem:[#allocation19 + $0xc] sm:$0xf]
    %v1396 = vld [vmem:[#allocation23] sm:$0x1]
    %v1397 = vpack.c.bf16 %v1290, %v1290
    %v1398 = vpack.c.bf16 %v1291, %v1291
    %v1401 = vunpack.c.l.b16 %v1397
    %v1402 = vunpack.c.l.b16 %v1398
    %v1403 = vrot.slane %v1402, 7
    %v1404 = vsel %vm468, %v1403, %v1401
    %v1405 = vpack.c.b16 %v1404, %v1404
    %1406 = vrot.lane.b32.xlu0 %v1405, 96
    %v1407 = vpop.permute.xlu0 %1406
    %v1412 = vunpack.c.l.b16 %v1388
    %v1413 = vunpack.c.l.b16 %v1389
    %v1414 = vunpack.c.l.b16 %v1390
    %v1415 = vunpack.c.l.b16 %v1391
    %v1416 = vpack.c.b16 %v1413, %v1412
    %v1417 = vpack.c.b16 %v1415, %v1414
    %v1421 = vsel %vm350, %v1407, 0
    %1423 = vmatprep.subr.bf16.mxu0 0
    %1424 = vmatpush1.bf16.msra.mxu0 %v1416
    %1425 = vmatprep.subr.bf16.mxu0 0
    %1426 = vmatpush1.bf16.msra.mxu0 %v1417
    %1427 = vmatprep.subr.bf16.mxu0 0
    %1428 = vmatpush1.bf16.msra.mxu0 0
    %1429 = vmatprep.subr.bf16.mxu0 0
    %1430 = vmatpush1.bf16.msra.mxu0 0
    %1431 = vmatprep.subr.bf16.mxu0 0
    %1432 = vmatpush1.bf16.msra.mxu0 0
    %1433 = vmatprep.subr.bf16.mxu0 0
    %1434 = vmatpush1.bf16.msra.mxu0 0
    %1435 = vmatprep.subr.bf16.mxu0 0
    %1436 = vmatpush1.bf16.msra.mxu0 0
    %1437 = vmatprep.subr.bf16.mxu0 0
    %1438 = vmatpush1.bf16.msra.mxu0 0
    %1439 = vmatprep.subr.bf16.mxu0 0
    %1440 = vmatpush1.bf16.msra.mxu0 0
    %1441 = vmatprep.subr.bf16.mxu0 0
    %1442 = vmatpush1.bf16.msra.mxu0 0
    %1443 = vmatprep.subr.bf16.mxu0 0
    %1444 = vmatpush1.bf16.msra.mxu0 0
    %1445 = vmatprep.subr.bf16.mxu0 0
    %1446 = vmatpush1.bf16.msra.mxu0 0
    %1447 = vmatprep.subr.bf16.mxu0 0
    %1448 = vmatpush1.bf16.msra.mxu0 0
    %1449 = vmatprep.subr.bf16.mxu0 0
    %1450 = vmatpush1.bf16.msra.mxu0 0
    %1451 = vmatprep.subr.bf16.mxu0 0
    %1452 = vmatpush1.bf16.msra.mxu0 0
    %1453 = vmatprep.subr.bf16.mxu0 0
    %1454 = vmatpush1.bf16.msra.mxu0 0
    %1455 = vmatprep.mubr.bf16.mxu0 0
    %1456 = vmatmul.mubr.bf16.gmra.mrb[0].mxu0 %v1421
    %v1457 = vpop.f32.mrb[0].mxu0
    %v1458 = vadd.f32 0.0, %v1457
    %v1459 = vpop.f32.mrb[0].mxu0
    %v1460 = vpop.f32.mrb[0].mxu0
    %v1461 = vpop.f32.mrb[0].mxu0
    %1462 = vdwg.mxu0
    %v1464 = vlaneseq
    %v1465 = vshrl.u32 %v1464, 7
    %v1466 = vsub.s32 0, %v1465
    %v1467 = vrot.slane %v1396, %v1466
    %1468 = vrot.lane.b32.xlu0 %v1467, 32
    %v1469 = vpop.permute.xlu0 %1468
    %v1471 = vadd.f32 %v1458, %v1469
    %v1472 = vld [vmem:[#allocation4] sm:$0xff]
    %v1473 = vld [vmem:[#allocation4 + $0x8] sm:$0xff]
    %v1476 = vunpack.c.l.s4 1966171168
    %v1477 = vunpack.c.0.s8 %v1476
    %v1478 = vlaneseq
    %v1479 = vshrl.u32 %v1478, 7
    %v1480 = vsub.s32 %v1477, %v1479
    %v1481 = vrot.slane %v1458, %v1480
    %v1482 = vcombine.high %v1481, %v1481
    %v1484 = vunpack.c.l.s4 1966171168
    %v1485 = vunpack.c.0.s8 %v1484
    %v1486 = vlaneseq
    %v1487 = vshrl.u32 %v1486, 7
    %v1488 = vsub.s32 %v1485, %v1487
    %v1489 = vrot.slane %v1481, %v1488
    %v1491 = vunpack.c.l.s4 1966171168
    %v1492 = vunpack.c.0.s8 %v1491
    %v1493 = vlaneseq
    %v1494 = vshrl.u32 %v1493, 7
    %v1495 = vsub.s32 %v1492, %v1494
    %v1496 = vrot.slane %v1482, %v1495
    %v1497 = vlaneseq
    %v1498 = vshrl.u32 %v1497, 7
    %v1499 = vsub.s32 0, %v1498
    %v1500 = vrot.slane %v1489, %v1499
    %v1501 = vlaneseq
    %v1502 = vshrl.u32 %v1501, 7
    %v1503 = vsub.s32 0, %v1502
    %v1504 = vrot.slane %v1496, %v1503
    %v1507 = vadd.f32 %v1472, %v1500
    %v1508 = vadd.f32 %v1473, %v1504
    %v1509 = vtanh.pop %v1507
    %v1510 = vtanh.pop %v1508
    %v1511 = vmul.f32 %v1509, %v1386
    %v1512 = vmul.f32 %v1510, %v1386
    %v1513 = vsel %vm350, %v1511, 0.0
    %1514 = vadd.xlane.f32.xlu0 %v1513
    %v1515 = vpop.xlane.xlu0 %1514
    %v1516 = vsel %vm350, %v1512, 0.0
    %1517 = vadd.xlane.f32.xlu0 %v1516
    %v1518 = vpop.xlane.xlu0 %1517
    %v1520 = vlaneseq
    %v1521 = vshrl.u32 %v1520, 7
    %v1522 = vsub.s32 0, %v1521
    %v1523 = vrot.slane %v1380, %v1522
    %1525 = vbcast.lane.b32.xlu0 %v1523, 256
    %v1526 = vpop.permute.xlu0 %1525
    %v1527 = vlaneseq
    %v1528 = vshrl.u32 %v1527, 7
    %v1529 = vsub.s32 1, %v1528
    %v1530 = vrot.slane %v1380, %v1529
    %1532 = vbcast.lane.b32.xlu0 %v1530, 256
    %v1533 = vpop.permute.xlu0 %1532
    %v1536 = vadd.f32 %v1515, %v1526
    %v1537 = vadd.f32 %v1518, %v1533
    %1540 = vset.pattern.permute.xlu0 0
    %1541 = vperm.xlu0 %1540, %v1536
    %v1542 = vpop.permute.xlu0 %1541
    %1543 = vset.pattern.permute.xlu0 0
    %1544 = vperm.xlu0 %1543, %v1537
    %v1545 = vpop.permute.xlu0 %1544
    %v1546 = vlaneseq
    %v1547 = vshrl.u32 %v1546, 7
    %v1548 = vsub.s32 %v1370, %v1547
    %v1549 = vrot.slane %v1542, %v1548
    %v1550 = vlaneseq
    %v1551 = vshrl.u32 %v1550, 7
    %v1552 = vsub.s32 %v1370, %v1551
    %v1553 = vrot.slane %v1545, %v1552
    %v1554 = vsel %vm468, %v1553, %v1549
    %vm1556 = vcmask 58368
    %v1557 = vsel %vm1556, %v1554, -inf
    %1558 = vmax.xlane.f32.xlu0 %v1557
    %v1559 = vpop.xlane.xlu0 %1558
    %v1561 = vlaneseq
    %v1562 = vshrl.u32 %v1561, 7
    %v1563 = vsub.s32 0, %v1562
    %v1564 = vrot.slane %v1559, %v1563
    %v1565 = vlaneseq
    %v1566 = vshrl.u32 %v1565, 7
    %v1567 = vsub.s32 1, %v1566
    %v1568 = vrot.slane %v1559, %v1567
    %v1571 = vsub.f32 %v1536, %v1564
    %v1572 = vsub.f32 %v1537, %v1568
    %v1573 = vmul.f32 %v1571, 1.442695
    %v1574 = vpow.pop %v1573
    %v1575 = vmul.f32 %v1572, 1.442695
    %v1576 = vpow.pop %v1575
    %1579 = vset.pattern.permute.xlu0 0
    %1580 = vperm.xlu0 %1579, %v1574
    %v1581 = vpop.permute.xlu0 %1580
    %1582 = vset.pattern.permute.xlu0 0
    %1583 = vperm.xlu0 %1582, %v1576
    %v1584 = vpop.permute.xlu0 %1583
    %v1585 = vlaneseq
    %v1586 = vshrl.u32 %v1585, 7
    %v1587 = vsub.s32 %v1370, %v1586
    %v1588 = vrot.slane %v1581, %v1587
    %v1589 = vlaneseq
    %v1590 = vshrl.u32 %v1589, 7
    %v1591 = vsub.s32 %v1370, %v1590
    %v1592 = vrot.slane %v1584, %v1591
    %v1593 = vsel %vm468, %v1592, %v1588
    %v1595 = vsel %vm1556, %v1593, 0.0
    %1596 = vadd.xlane.f32.xlu0 %v1595
    %v1597 = vpop.xlane.xlu0 %1596
    %v1598 = vrcp.pop %v1597
    %v1600 = vlaneseq
    %v1601 = vshrl.u32 %v1600, 7
    %v1602 = vsub.s32 0, %v1601
    %v1603 = vrot.slane %v1598, %v1602
    %v1604 = vlaneseq
    %v1605 = vshrl.u32 %v1604, 7
    %v1606 = vsub.s32 1, %v1605
    %v1607 = vrot.slane %v1598, %v1606
    %v1610 = vmul.f32 %v1574, %v1603
    %v1611 = vmul.f32 %v1576, %v1607
    %v1612 = vld [vmem:[#allocation26] sm:$0xff]
    %v1613 = vld [vmem:[#allocation26 + $0x8] sm:$0xff]
    %1615 = vset.pattern.permute.xlu0 0
    %1616 = vperm.xlu0 %1615, %v1610
    %v1617 = vpop.permute.xlu0 %1616
    %v1618 = vlaneseq
    %v1619 = vshrl.u32 %v1618, 7
    %v1620 = vsub.s32 %v1370, %v1619
    %v1621 = vrot.slane %v1617, %v1620
    %vm1622 = vcmask 64512
    %v1623 = vsel %vm1622, %v1621, 0
    %1625 = vmatprep.subr.mxu0 0.0
    %1626 = vmatpush1.msra.mxu0 %v1612
    %1627 = vmatprep.subr.mxu0 0.0
    %1628 = vmatpush1.msra.mxu0 0.0
    %1629 = vmatprep.subr.mxu0 0.0
    %1630 = vmatpush1.msra.mxu0 0.0
    %1631 = vmatprep.subr.mxu0 0.0
    %1632 = vmatpush1.msra.mxu0 0.0
    %1633 = vmatprep.subr.mxu0 0.0
    %1634 = vmatpush1.msra.mxu0 0.0
    %1635 = vmatprep.subr.mxu0 0.0
    %1636 = vmatpush1.msra.mxu0 0.0
    %1637 = vmatprep.subr.mxu0 0.0
    %1638 = vmatpush1.msra.mxu0 0.0
    %1639 = vmatprep.subr.mxu0 0.0
    %1640 = vmatpush1.msra.mxu0 0.0
    %1641 = vmatprep.subr.mxu0 0.0
    %1642 = vmatpush1.msra.mxu0 0.0
    %1643 = vmatprep.subr.mxu0 0.0
    %1644 = vmatpush1.msra.mxu0 0.0
    %1645 = vmatprep.subr.mxu0 0.0
    %1646 = vmatpush1.msra.mxu0 0.0
    %1647 = vmatprep.subr.mxu0 0.0
    %1648 = vmatpush1.msra.mxu0 0.0
    %1649 = vmatprep.subr.mxu0 0.0
    %1650 = vmatpush1.msra.mxu0 0.0
    %1651 = vmatprep.subr.mxu0 0.0
    %1652 = vmatpush1.msra.mxu0 0.0
    %1653 = vmatprep.subr.mxu0 0.0
    %1654 = vmatpush1.msra.mxu0 0.0
    %1655 = vmatprep.subr.mxu0 0.0
    %1656 = vmatpush1.msra.mxu0 0.0
    %1657 = vmatprep.subr.mxu0 0.0
    %1658 = vmatpush1.msra.mxu0 0.0
    %1659 = vmatprep.subr.mxu0 0.0
    %1660 = vmatpush1.msra.mxu0 0.0
    %1661 = vmatprep.subr.mxu0 0.0
    %1662 = vmatpush1.msra.mxu0 0.0
    %1663 = vmatprep.subr.mxu0 0.0
    %1664 = vmatpush1.msra.mxu0 0.0
    %1665 = vmatprep.subr.mxu0 0.0
    %1666 = vmatpush1.msra.mxu0 0.0
    %1667 = vmatprep.subr.mxu0 0.0
    %1668 = vmatpush1.msra.mxu0 0.0
    %1669 = vmatprep.subr.mxu0 0.0
    %1670 = vmatpush1.msra.mxu0 0.0
    %1671 = vmatprep.subr.mxu0 0.0
    %1672 = vmatpush1.msra.mxu0 0.0
    %1673 = vmatprep.subr.mxu0 0.0
    %1674 = vmatpush1.msra.mxu0 0.0
    %1675 = vmatprep.subr.mxu0 0.0
    %1676 = vmatpush1.msra.mxu0 0.0
    %1677 = vmatprep.subr.mxu0 0.0
    %1678 = vmatpush1.msra.mxu0 0.0
    %1679 = vmatprep.subr.mxu0 0.0
    %1680 = vmatpush1.msra.mxu0 0.0
    %1681 = vmatprep.subr.mxu0 0.0
    %1682 = vmatpush1.msra.mxu0 0.0
    %1683 = vmatprep.subr.mxu0 0.0
    %1684 = vmatpush1.msra.mxu0 0.0
    %1685 = vmatprep.subr.mxu0 0.0
    %1686 = vmatpush1.msra.mxu0 0.0
    %1687 = vmatprep.subr.mxu0 0.0
    %1688 = vmatpush1.msra.mxu0 0.0
    %1689 = vmatprep.mubr.f32.mxu0 0.0
    %1690 = vmatmul.mubr.f32.gmra.mrb[0].mxu0 %v1623
    %v1691 = vpop.f32.mrb[0].mxu0
    %v1692 = vadd.f32 0.0, %v1691
    %v1693 = vpop.f32.mrb[0].mxu0
    %1694 = vdwg.mxu0
    %1696 = vset.pattern.permute.xlu0 0
    %1697 = vperm.xlu0 %1696, %v1611
    %v1698 = vpop.permute.xlu0 %1697
    %v1699 = vlaneseq
    %v1700 = vshrl.u32 %v1699, 7
    %v1701 = vsub.s32 %v1370, %v1700
    %v1702 = vrot.slane %v1698, %v1701
    %v1703 = vsel %vm1622, %v1702, 0
    %1705 = vmatprep.subr.mxu0 0.0
    %1706 = vmatpush1.msra.mxu0 %v1613
    %1707 = vmatprep.subr.mxu0 0.0
    %1708 = vmatpush1.msra.mxu0 0.0
    %1709 = vmatprep.subr.mxu0 0.0
    %1710 = vmatpush1.msra.mxu0 0.0
    %1711 = vmatprep.subr.mxu0 0.0
    %1712 = vmatpush1.msra.mxu0 0.0
    %1713 = vmatprep.subr.mxu0 0.0
    %1714 = vmatpush1.msra.mxu0 0.0
    %1715 = vmatprep.subr.mxu0 0.0
    %1716 = vmatpush1.msra.mxu0 0.0
    %1717 = vmatprep.subr.mxu0 0.0
    %1718 = vmatpush1.msra.mxu0 0.0
    %1719 = vmatprep.subr.mxu0 0.0
    %1720 = vmatpush1.msra.mxu0 0.0
    %1721 = vmatprep.subr.mxu0 0.0
    %1722 = vmatpush1.msra.mxu0 0.0
    %1723 = vmatprep.subr.mxu0 0.0
    %1724 = vmatpush1.msra.mxu0 0.0
    %1725 = vmatprep.subr.mxu0 0.0
    %1726 = vmatpush1.msra.mxu0 0.0
    %1727 = vmatprep.subr.mxu0 0.0
    %1728 = vmatpush1.msra.mxu0 0.0
    %1729 = vmatprep.subr.mxu0 0.0
    %1730 = vmatpush1.msra.mxu0 0.0
    %1731 = vmatprep.subr.mxu0 0.0
    %1732 = vmatpush1.msra.mxu0 0.0
    %1733 = vmatprep.subr.mxu0 0.0
    %1734 = vmatpush1.msra.mxu0 0.0
    %1735 = vmatprep.subr.mxu0 0.0
    %1736 = vmatpush1.msra.mxu0 0.0
    %1737 = vmatprep.subr.mxu0 0.0
    %1738 = vmatpush1.msra.mxu0 0.0
    %1739 = vmatprep.subr.mxu0 0.0
    %1740 = vmatpush1.msra.mxu0 0.0
    %1741 = vmatprep.subr.mxu0 0.0
    %1742 = vmatpush1.msra.mxu0 0.0
    %1743 = vmatprep.subr.mxu0 0.0
    %1744 = vmatpush1.msra.mxu0 0.0
    %1745 = vmatprep.subr.mxu0 0.0
    %1746 = vmatpush1.msra.mxu0 0.0
    %1747 = vmatprep.subr.mxu0 0.0
    %1748 = vmatpush1.msra.mxu0 0.0
    %1749 = vmatprep.subr.mxu0 0.0
    %1750 = vmatpush1.msra.mxu0 0.0
    %1751 = vmatprep.subr.mxu0 0.0
    %1752 = vmatpush1.msra.mxu0 0.0
    %1753 = vmatprep.subr.mxu0 0.0
    %1754 = vmatpush1.msra.mxu0 0.0
    %1755 = vmatprep.subr.mxu0 0.0
    %1756 = vmatpush1.msra.mxu0 0.0
    %1757 = vmatprep.subr.mxu0 0.0
    %1758 = vmatpush1.msra.mxu0 0.0
    %1759 = vmatprep.subr.mxu0 0.0
    %1760 = vmatpush1.msra.mxu0 0.0
    %1761 = vmatprep.subr.mxu0 0.0
    %1762 = vmatpush1.msra.mxu0 0.0
    %1763 = vmatprep.subr.mxu0 0.0
    %1764 = vmatpush1.msra.mxu0 0.0
    %1765 = vmatprep.subr.mxu0 0.0
    %1766 = vmatpush1.msra.mxu0 0.0
    %1767 = vmatprep.subr.mxu0 0.0
    %1768 = vmatpush1.msra.mxu0 0.0
    %1769 = vmatprep.mubr.f32.mxu0 0.0
    %1770 = vmatmul.mubr.f32.gmra.mrb[0].mxu0 %v1703
    %v1771 = vpop.f32.mrb[0].mxu0
    %v1772 = vadd.f32 0.0, %v1771
    %v1773 = vpop.f32.mrb[0].mxu0
    %1774 = vdwg.mxu0
    %v1775 = vpack.c.bf16 %v1692, %v1692
    %v1776 = vpack.c.bf16 %v1772, %v1772
    %v1777 = vld [vmem:[#allocation3] sm:$0x1]
    %v1778 = vld [vmem:[#allocation3 + $0x8] sm:$0x1]
    %v1781 = vunpack.c.l.b16 %v1775
    %v1782 = vunpack.c.l.b16 %v1776
    %v1783 = vrot.slane %v1782, 7
    %v1784 = vsel %vm468, %v1783, %v1781
    %v1785 = vpack.c.b16 %v1784, %v1784
    %v1790 = vunpack.c.l.b16 %v1392
    %v1791 = vunpack.c.l.b16 %v1393
    %v1792 = vunpack.c.l.b16 %v1394
    %v1793 = vunpack.c.l.b16 %v1395
    %v1794 = vpack.c.b16 %v1791, %v1790
    %v1795 = vpack.c.b16 %v1793, %v1792
    %v1800 = vrot.slane %v1778, 7
    %v1801 = vsel %vm468, %v1800, %v1777
    %v1804 = vsel %vm350, %v1785, 0
    %1806 = vmatprep.subr.bf16.mxu0 0
    %1807 = vmatpush1.bf16.msra.mxu0 %v1794
    %1808 = vmatprep.subr.bf16.mxu0 0
    %1809 = vmatpush1.bf16.msra.mxu0 %v1795
    %1810 = vmatprep.subr.bf16.mxu0 0
    %1811 = vmatpush1.bf16.msra.mxu0 0
    %1812 = vmatprep.subr.bf16.mxu0 0
    %1813 = vmatpush1.bf16.msra.mxu0 0
    %1814 = vmatprep.subr.bf16.mxu0 0
    %1815 = vmatpush1.bf16.msra.mxu0 0
    %1816 = vmatprep.subr.bf16.mxu0 0
    %1817 = vmatpush1.bf16.msra.mxu0 0
    %1818 = vmatprep.subr.bf16.mxu0 0
    %1819 = vmatpush1.bf16.msra.mxu0 0
    %1820 = vmatprep.subr.bf16.mxu0 0
    %1821 = vmatpush1.bf16.msra.mxu0 0
    %1822 = vmatprep.subr.bf16.mxu0 0
    %1823 = vmatpush1.bf16.msra.mxu0 0
    %1824 = vmatprep.subr.bf16.mxu0 0
    %1825 = vmatpush1.bf16.msra.mxu0 0
    %1826 = vmatprep.subr.bf16.mxu0 0
    %1827 = vmatpush1.bf16.msra.mxu0 0
    %1828 = vmatprep.subr.bf16.mxu0 0
    %1829 = vmatpush1.bf16.msra.mxu0 0
    %1830 = vmatprep.subr.bf16.mxu0 0
    %1831 = vmatpush1.bf16.msra.mxu0 0
    %1832 = vmatprep.subr.bf16.mxu0 0
    %1833 = vmatpush1.bf16.msra.mxu0 0
    %1834 = vmatprep.subr.bf16.mxu0 0
    %1835 = vmatpush1.bf16.msra.mxu0 0
    %1836 = vmatprep.subr.bf16.mxu0 0
    %1837 = vmatpush1.bf16.msra.mxu0 0
    %1838 = vmatprep.mubr.bf16.mxu0 0
    %1839 = vmatmul.mubr.bf16.gmra.mrb[0].mxu0 %v1804
    %v1840 = vpop.f32.mrb[0].mxu0
    %v1841 = vadd.f32 %v1801, %v1840
    %v1842 = vpop.f32.mrb[0].mxu0
    %v1843 = vpop.f32.mrb[0].mxu0
    %v1844 = vpop.f32.mrb[0].mxu0
    %1845 = vdwg.mxu0
    %1847 = vrot.lane.b32.xlu0 %v1471, 96
    %v1848 = vpop.permute.xlu0 %1847
    %v1850 = vadd.f32 %v1841, %v1848
    %v1851 = vxor.u32 %v1850, 2147483648
    %v1852 = vmul.f32 %v1851, 1.442695
    %v1853 = vpow.pop %v1852
    %v1854 = vadd.f32 %v1853, 1.0
    %v1855 = vrcp.pop %v1854
    %v1856 = vmul.f32 1.0, %v1855
    %1857 = vrot.lane.b32.xlu0 %v1471, 32
    %v1858 = vpop.permute.xlu0 %1857
    %v1860 = vmul.f32 %v1856, %v1858
    %1862 = vrot.lane.b32.xlu0 %v1860, 64
    %v1863 = vpop.permute.xlu0 %1862
    %v1865 = vadd.f32 %v1841, %v1863
    %v1866 = vtanh.pop %v1865
    %v1867 = vsub.f32 1.0, %v1856
    %1869 = vrot.lane.b32.xlu0 %v1866, 96
    %v1870 = vpop.permute.xlu0 %1869
    %v1872 = vmul.f32 %v1867, %v1870
    %v1873 = vrot.slane %v1291, 7
    %v1874 = vsel %vm468, %v1873, %v1290
    %v1876 = vmul.f32 %v1856, %v1874
    %v1877 = vadd.f32 %v1872, %v1876
    %v1880 = vunpack.c.l.s4 1966171168
    %v1881 = vunpack.c.0.s8 %v1880
    %v1882 = vlaneseq
    %v1883 = vshrl.u32 %v1882, 7
    %v1884 = vsub.s32 %v1881, %v1883
    %v1885 = vrot.slane %v1877, %v1884
    %v1886 = vcombine.high %v1885, %v1885
    %v1888 = vunpack.c.l.s4 1966171168
    %v1889 = vunpack.c.0.s8 %v1888
    %v1890 = vlaneseq
    %v1891 = vshrl.u32 %v1890, 7
    %v1892 = vsub.s32 %v1889, %v1891
    %v1893 = vrot.slane %v1885, %v1892
    %v1895 = vunpack.c.l.s4 1966171168
    %v1896 = vunpack.c.0.s8 %v1895
    %v1897 = vlaneseq
    %v1898 = vshrl.u32 %v1897, 7
    %v1899 = vsub.s32 %v1896, %v1898
    %v1900 = vrot.slane %v1886, %v1899
    %v1901 = vlaneseq
    %v1902 = vshrl.u32 %v1901, 7
    %v1903 = vsub.s32 0, %v1902
    %v1904 = vrot.slane %v1893, %v1903
    %v1905 = vlaneseq
    %v1906 = vshrl.u32 %v1905, 7
    %v1907 = vsub.s32 0, %v1906
    %v1908 = vrot.slane %v1900, %v1907
    %1909 = vrot.lane.b32.xlu0 %v1904, 96
    %v1910 = vpop.permute.xlu0 %1909
    %1911 = vrot.lane.b32.xlu0 %v1908, 96
    %v1912 = vpop.permute.xlu0 %1911
    %1915 = vst.msk [vmem:[#allocation5] sm:$0x1] %vm458, %v1910
    %1916 = vst.msk [vmem:[#allocation5 + $0x8] sm:$0x1] %vm458, %v1912
    %v1917 = vpack.c.bf16 %v1877, %v1877
    %1919 = vrot.lane.b32.xlu0 %v1917, 96
    %v1920 = vpop.permute.xlu0 %1919
    %v1922 = vsel %vm350, %v1920, 0
    %1924 = vmatprep.subr.bf16.mxu0 0
    %1925 = vmatpush1.bf16.msra.mxu0 %v1416
    %1926 = vmatprep.subr.bf16.mxu0 0
    %1927 = vmatpush1.bf16.msra.mxu0 %v1417
    %1928 = vmatprep.subr.bf16.mxu0 0
    %1929 = vmatpush1.bf16.msra.mxu0 0
    %1930 = vmatprep.subr.bf16.mxu0 0
    %1931 = vmatpush1.bf16.msra.mxu0 0
    %1932 = vmatprep.subr.bf16.mxu0 0
    %1933 = vmatpush1.bf16.msra.mxu0 0
    %1934 = vmatprep.subr.bf16.mxu0 0
    %1935 = vmatpush1.bf16.msra.mxu0 0
    %1936 = vmatprep.subr.bf16.mxu0 0
    %1937 = vmatpush1.bf16.msra.mxu0 0
    %1938 = vmatprep.subr.bf16.mxu0 0
    %1939 = vmatpush1.bf16.msra.mxu0 0
    %1940 = vmatprep.subr.bf16.mxu0 0
    %1941 = vmatpush1.bf16.msra.mxu0 0
    %1942 = vmatprep.subr.bf16.mxu0 0
    %1943 = vmatpush1.bf16.msra.mxu0 0
    %1944 = vmatprep.subr.bf16.mxu0 0
    %1945 = vmatpush1.bf16.msra.mxu0 0
    %1946 = vmatprep.subr.bf16.mxu0 0
    %1947 = vmatpush1.bf16.msra.mxu0 0
    %1948 = vmatprep.subr.bf16.mxu0 0
    %1949 = vmatpush1.bf16.msra.mxu0 0
    %1950 = vmatprep.subr.bf16.mxu0 0
    %1951 = vmatpush1.bf16.msra.mxu0 0
    %1952 = vmatprep.subr.bf16.mxu0 0
    %1953 = vmatpush1.bf16.msra.mxu0 0
    %1954 = vmatprep.subr.bf16.mxu0 0
    %1955 = vmatpush1.bf16.msra.mxu0 0
    %1956 = vmatprep.mubr.bf16.mxu0 0
    %1957 = vmatmul.mubr.bf16.gmra.mrb[0].mxu0 %v1922
    %v1958 = vpop.f32.mrb[0].mxu0
    %v1959 = vadd.f32 0.0, %v1958
    %v1960 = vpop.f32.mrb[0].mxu0
    %v1961 = vpop.f32.mrb[0].mxu0
    %v1962 = vpop.f32.mrb[0].mxu0
    %1963 = vdwg.mxu0
    %v1964 = vadd.f32 %v1959, %v1469
    %v1965 = vld [vmem:[#allocation4] sm:$0xff]
    %v1966 = vld [vmem:[#allocation4 + $0x8] sm:$0xff]
    %v1969 = vunpack.c.l.s4 1966171168
    %v1970 = vunpack.c.0.s8 %v1969
    %v1971 = vlaneseq
    %v1972 = vshrl.u32 %v1971, 7
    %v1973 = vsub.s32 %v1970, %v1972
    %v1974 = vrot.slane %v1959, %v1973
    %v1975 = vcombine.high %v1974, %v1974
    %v1977 = vunpack.c.l.s4 1966171168
    %v1978 = vunpack.c.0.s8 %v1977
    %v1979 = vlaneseq
    %v1980 = vshrl.u32 %v1979, 7
    %v1981 = vsub.s32 %v1978, %v1980
    %v1982 = vrot.slane %v1974, %v1981
    %v1984 = vunpack.c.l.s4 1966171168
    %v1985 = vunpack.c.0.s8 %v1984
    %v1986 = vlaneseq
    %v1987 = vshrl.u32 %v1986, 7
    %v1988 = vsub.s32 %v1985, %v1987
    %v1989 = vrot.slane %v1975, %v1988
    %v1990 = vlaneseq
    %v1991 = vshrl.u32 %v1990, 7
    %v1992 = vsub.s32 0, %v1991
    %v1993 = vrot.slane %v1982, %v1992
    %v1994 = vlaneseq
    %v1995 = vshrl.u32 %v1994, 7
    %v1996 = vsub.s32 0, %v1995
    %v1997 = vrot.slane %v1989, %v1996
    %v2000 = vadd.f32 %v1965, %v1993
    %v2001 = vadd.f32 %v1966, %v1997
    %v2002 = vtanh.pop %v2000
    %v2003 = vtanh.pop %v2001
    %v2004 = vmul.f32 %v2002, %v1386
    %v2005 = vmul.f32 %v2003, %v1386
    %v2006 = vsel %vm350, %v2004, 0.0
    %2007 = vadd.xlane.f32.xlu0 %v2006
    %v2008 = vpop.xlane.xlu0 %2007
    %v2009 = vsel %vm350, %v2005, 0.0
    %2010 = vadd.xlane.f32.xlu0 %v2009
    %v2011 = vpop.xlane.xlu0 %2010
    %v2012 = vadd.f32 %v2008, %v1526
    %v2013 = vadd.f32 %v2011, %v1533
    %2016 = vset.pattern.permute.xlu0 0
    %2017 = vperm.xlu0 %2016, %v2012
    %v2018 = vpop.permute.xlu0 %2017
    %2019 = vset.pattern.permute.xlu0 0
    %2020 = vperm.xlu0 %2019, %v2013
    %v2021 = vpop.permute.xlu0 %2020
    %v2022 = vlaneseq
    %v2023 = vshrl.u32 %v2022, 7
    %v2024 = vsub.s32 %v1370, %v2023
    %v2025 = vrot.slane %v2018, %v2024
    %v2026 = vlaneseq
    %v2027 = vshrl.u32 %v2026, 7
    %v2028 = vsub.s32 %v1370, %v2027
    %v2029 = vrot.slane %v2021, %v2028
    %v2030 = vsel %vm468, %v2029, %v2025
    %v2032 = vsel %vm1556, %v2030, -inf
    %2033 = vmax.xlane.f32.xlu0 %v2032
    %v2034 = vpop.xlane.xlu0 %2033
    %v2036 = vlaneseq
    %v2037 = vshrl.u32 %v2036, 7
    %v2038 = vsub.s32 0, %v2037
    %v2039 = vrot.slane %v2034, %v2038
    %v2040 = vlaneseq
    %v2041 = vshrl.u32 %v2040, 7
    %v2042 = vsub.s32 1, %v2041
    %v2043 = vrot.slane %v2034, %v2042
    %v2046 = vsub.f32 %v2012, %v2039
    %v2047 = vsub.f32 %v2013, %v2043
    %v2048 = vmul.f32 %v2046, 1.442695
    %v2049 = vpow.pop %v2048
    %v2050 = vmul.f32 %v2047, 1.442695
    %v2051 = vpow.pop %v2050
    %2054 = vset.pattern.permute.xlu0 0
    %2055 = vperm.xlu0 %2054, %v2049
    %v2056 = vpop.permute.xlu0 %2055
    %2057 = vset.pattern.permute.xlu0 0
    %2058 = vperm.xlu0 %2057, %v2051
    %v2059 = vpop.permute.xlu0 %2058
    %v2060 = vlaneseq
    %v2061 = vshrl.u32 %v2060, 7
    %v2062 = vsub.s32 %v1370, %v2061
    %v2063 = vrot.slane %v2056, %v2062
    %v2064 = vlaneseq
    %v2065 = vshrl.u32 %v2064, 7
    %v2066 = vsub.s32 %v1370, %v2065
    %v2067 = vrot.slane %v2059, %v2066
    %v2068 = vsel %vm468, %v2067, %v2063
    %v2070 = vsel %vm1556, %v2068, 0.0
    %2071 = vadd.xlane.f32.xlu0 %v2070
    %v2072 = vpop.xlane.xlu0 %2071
    %v2073 = vrcp.pop %v2072
    %v2075 = vlaneseq
    %v2076 = vshrl.u32 %v2075, 7
    %v2077 = vsub.s32 0, %v2076
    %v2078 = vrot.slane %v2073, %v2077
    %v2079 = vlaneseq
    %v2080 = vshrl.u32 %v2079, 7
    %v2081 = vsub.s32 1, %v2080
    %v2082 = vrot.slane %v2073, %v2081
    %v2085 = vmul.f32 %v2049, %v2078
    %v2086 = vmul.f32 %v2051, %v2082
    %v2087 = vld [vmem:[#allocation26] sm:$0xff]
    %v2088 = vld [vmem:[#allocation26 + $0x8] sm:$0xff]
    %2090 = vset.pattern.permute.xlu0 0
    %2091 = vperm.xlu0 %2090, %v2085
    %v2092 = vpop.permute.xlu0 %2091
    %v2093 = vlaneseq
    %v2094 = vshrl.u32 %v2093, 7
    %v2095 = vsub.s32 %v1370, %v2094
    %v2096 = vrot.slane %v2092, %v2095
    %v2097 = vsel %vm1622, %v2096, 0
    %2099 = vmatprep.subr.mxu0 0.0
    %2100 = vmatpush1.msra.mxu0 %v2087
    %2101 = vmatprep.subr.mxu0 0.0
    %2102 = vmatpush1.msra.mxu0 0.0
    %2103 = vmatprep.subr.mxu0 0.0
    %2104 = vmatpush1.msra.mxu0 0.0
    %2105 = vmatprep.subr.mxu0 0.0
    %2106 = vmatpush1.msra.mxu0 0.0
    %2107 = vmatprep.subr.mxu0 0.0
    %2108 = vmatpush1.msra.mxu0 0.0
    %2109 = vmatprep.subr.mxu0 0.0
    %2110 = vmatpush1.msra.mxu0 0.0
    %2111 = vmatprep.subr.mxu0 0.0
    %2112 = vmatpush1.msra.mxu0 0.0
    %2113 = vmatprep.subr.mxu0 0.0
    %2114 = vmatpush1.msra.mxu0 0.0
    %2115 = vmatprep.subr.mxu0 0.0
    %2116 = vmatpush1.msra.mxu0 0.0
    %2117 = vmatprep.subr.mxu0 0.0
    %2118 = vmatpush1.msra.mxu0 0.0
    %2119 = vmatprep.subr.mxu0 0.0
    %2120 = vmatpush1.msra.mxu0 0.0
    %2121 = vmatprep.subr.mxu0 0.0
    %2122 = vmatpush1.msra.mxu0 0.0
    %2123 = vmatprep.subr.mxu0 0.0
    %2124 = vmatpush1.msra.mxu0 0.0
    %2125 = vmatprep.subr.mxu0 0.0
    %2126 = vmatpush1.msra.mxu0 0.0
    %2127 = vmatprep.subr.mxu0 0.0
    %2128 = vmatpush1.msra.mxu0 0.0
    %2129 = vmatprep.subr.mxu0 0.0
    %2130 = vmatpush1.msra.mxu0 0.0
    %2131 = vmatprep.subr.mxu0 0.0
    %2132 = vmatpush1.msra.mxu0 0.0
    %2133 = vmatprep.subr.mxu0 0.0
    %2134 = vmatpush1.msra.mxu0 0.0
    %2135 = vmatprep.subr.mxu0 0.0
    %2136 = vmatpush1.msra.mxu0 0.0
    %2137 = vmatprep.subr.mxu0 0.0
    %2138 = vmatpush1.msra.mxu0 0.0
    %2139 = vmatprep.subr.mxu0 0.0
    %2140 = vmatpush1.msra.mxu0 0.0
    %2141 = vmatprep.subr.mxu0 0.0
    %2142 = vmatpush1.msra.mxu0 0.0
    %2143 = vmatprep.subr.mxu0 0.0
    %2144 = vmatpush1.msra.mxu0 0.0
    %2145 = vmatprep.subr.mxu0 0.0
    %2146 = vmatpush1.msra.mxu0 0.0
    %2147 = vmatprep.subr.mxu0 0.0
    %2148 = vmatpush1.msra.mxu0 0.0
    %2149 = vmatprep.subr.mxu0 0.0
    %2150 = vmatpush1.msra.mxu0 0.0
    %2151 = vmatprep.subr.mxu0 0.0
    %2152 = vmatpush1.msra.mxu0 0.0
    %2153 = vmatprep.subr.mxu0 0.0
    %2154 = vmatpush1.msra.mxu0 0.0
    %2155 = vmatprep.subr.mxu0 0.0
    %2156 = vmatpush1.msra.mxu0 0.0
    %2157 = vmatprep.subr.mxu0 0.0
    %2158 = vmatpush1.msra.mxu0 0.0
    %2159 = vmatprep.subr.mxu0 0.0
    %2160 = vmatpush1.msra.mxu0 0.0
    %2161 = vmatprep.subr.mxu0 0.0
    %2162 = vmatpush1.msra.mxu0 0.0
    %2163 = vmatprep.mubr.f32.mxu0 0.0
    %2164 = vmatmul.mubr.f32.gmra.mrb[0].mxu0 %v2097
    %v2165 = vpop.f32.mrb[0].mxu0
    %v2166 = vadd.f32 0.0, %v2165
    %v2167 = vpop.f32.mrb[0].mxu0
    %2168 = vdwg.mxu0
    %2170 = vset.pattern.permute.xlu0 0
    %2171 = vperm.xlu0 %2170, %v2086
    %v2172 = vpop.permute.xlu0 %2171
    %v2173 = vlaneseq
    %v2174 = vshrl.u32 %v2173, 7
    %v2175 = vsub.s32 %v1370, %v2174
    %v2176 = vrot.slane %v2172, %v2175
    %v2177 = vsel %vm1622, %v2176, 0
    %2179 = vmatprep.subr.mxu0 0.0
    %2180 = vmatpush1.msra.mxu0 %v2088
    %2181 = vmatprep.subr.mxu0 0.0
    %2182 = vmatpush1.msra.mxu0 0.0
    %2183 = vmatprep.subr.mxu0 0.0
    %2184 = vmatpush1.msra.mxu0 0.0
    %2185 = vmatprep.subr.mxu0 0.0
    %2186 = vmatpush1.msra.mxu0 0.0
    %2187 = vmatprep.subr.mxu0 0.0
    %2188 = vmatpush1.msra.mxu0 0.0
    %2189 = vmatprep.subr.mxu0 0.0
    %2190 = vmatpush1.msra.mxu0 0.0
    %2191 = vmatprep.subr.mxu0 0.0
    %2192 = vmatpush1.msra.mxu0 0.0
    %2193 = vmatprep.subr.mxu0 0.0
    %2194 = vmatpush1.msra.mxu0 0.0
    %2195 = vmatprep.subr.mxu0 0.0
    %2196 = vmatpush1.msra.mxu0 0.0
    %2197 = vmatprep.subr.mxu0 0.0
    %2198 = vmatpush1.msra.mxu0 0.0
    %2199 = vmatprep.subr.mxu0 0.0
    %2200 = vmatpush1.msra.mxu0 0.0
    %2201 = vmatprep.subr.mxu0 0.0
    %2202 = vmatpush1.msra.mxu0 0.0
    %2203 = vmatprep.subr.mxu0 0.0
    %2204 = vmatpush1.msra.mxu0 0.0
    %2205 = vmatprep.subr.mxu0 0.0
    %2206 = vmatpush1.msra.mxu0 0.0
    %2207 = vmatprep.subr.mxu0 0.0
    %2208 = vmatpush1.msra.mxu0 0.0
    %2209 = vmatprep.subr.mxu0 0.0
    %2210 = vmatpush1.msra.mxu0 0.0
    %2211 = vmatprep.subr.mxu0 0.0
    %2212 = vmatpush1.msra.mxu0 0.0
    %2213 = vmatprep.subr.mxu0 0.0
    %2214 = vmatpush1.msra.mxu0 0.0
    %2215 = vmatprep.subr.mxu0 0.0
    %2216 = vmatpush1.msra.mxu0 0.0
    %2217 = vmatprep.subr.mxu0 0.0
    %2218 = vmatpush1.msra.mxu0 0.0
    %2219 = vmatprep.subr.mxu0 0.0
    %2220 = vmatpush1.msra.mxu0 0.0
    %2221 = vmatprep.subr.mxu0 0.0
    %2222 = vmatpush1.msra.mxu0 0.0
    %2223 = vmatprep.subr.mxu0 0.0
    %2224 = vmatpush1.msra.mxu0 0.0
    %2225 = vmatprep.subr.mxu0 0.0
    %2226 = vmatpush1.msra.mxu0 0.0
    %2227 = vmatprep.subr.mxu0 0.0
    %2228 = vmatpush1.msra.mxu0 0.0
    %2229 = vmatprep.subr.mxu0 0.0
    %2230 = vmatpush1.msra.mxu0 0.0
    %2231 = vmatprep.subr.mxu0 0.0
    %2232 = vmatpush1.msra.mxu0 0.0
    %2233 = vmatprep.subr.mxu0 0.0
    %2234 = vmatpush1.msra.mxu0 0.0
    %2235 = vmatprep.subr.mxu0 0.0
    %2236 = vmatpush1.msra.mxu0 0.0
    %2237 = vmatprep.subr.mxu0 0.0
    %2238 = vmatpush1.msra.mxu0 0.0
    %2239 = vmatprep.subr.mxu0 0.0
    %2240 = vmatpush1.msra.mxu0 0.0
    %2241 = vmatprep.subr.mxu0 0.0
    %2242 = vmatpush1.msra.mxu0 0.0
    %2243 = vmatprep.mubr.f32.mxu0 0.0
    %2244 = vmatmul.mubr.f32.gmra.mrb[0].mxu0 %v2177
    %v2245 = vpop.f32.mrb[0].mxu0
    %v2246 = vadd.f32 0.0, %v2245
    %v2247 = vpop.f32.mrb[0].mxu0
    %2248 = vdwg.mxu0
    %v2249 = vpack.c.bf16 %v2166, %v2166
    %v2250 = vpack.c.bf16 %v2246, %v2246
    %v2251 = vld [vmem:[#allocation3 + $0x1] sm:$0x1]
    %v2252 = vld [vmem:[#allocation3 + $0x9] sm:$0x1]
    %v2255 = vunpack.c.l.b16 %v2249
    %v2256 = vunpack.c.l.b16 %v2250
    %v2257 = vrot.slane %v2256, 7
    %v2258 = vsel %vm468, %v2257, %v2255
    %v2259 = vpack.c.b16 %v2258, %v2258
    %v2262 = vrot.slane %v2252, 7
    %v2263 = vsel %vm468, %v2262, %v2251
    %v2266 = vsel %vm350, %v2259, 0
    %2268 = vmatprep.subr.bf16.mxu0 0
    %2269 = vmatpush1.bf16.msra.mxu0 %v1794
    %2270 = vmatprep.subr.bf16.mxu0 0
    %2271 = vmatpush1.bf16.msra.mxu0 %v1795
    %2272 = vmatprep.subr.bf16.mxu0 0
    %2273 = vmatpush1.bf16.msra.mxu0 0
    %2274 = vmatprep.subr.bf16.mxu0 0
    %2275 = vmatpush1.bf16.msra.mxu0 0
    %2276 = vmatprep.subr.bf16.mxu0 0
    %2277 = vmatpush1.bf16.msra.mxu0 0
    %2278 = vmatprep.subr.bf16.mxu0 0
    %2279 = vmatpush1.bf16.msra.mxu0 0
    %2280 = vmatprep.subr.bf16.mxu0 0
    %2281 = vmatpush1.bf16.msra.mxu0 0
    %2282 = vmatprep.subr.bf16.mxu0 0
    %2283 = vmatpush1.bf16.msra.mxu0 0
    %2284 = vmatprep.subr.bf16.mxu0 0
    %2285 = vmatpush1.bf16.msra.mxu0 0
    %2286 = vmatprep.subr.bf16.mxu0 0
    %2287 = vmatpush1.bf16.msra.mxu0 0
    %2288 = vmatprep.subr.bf16.mxu0 0
    %2289 = vmatpush1.bf16.msra.mxu0 0
    %2290 = vmatprep.subr.bf16.mxu0 0
    %2291 = vmatpush1.bf16.msra.mxu0 0
    %2292 = vmatprep.subr.bf16.mxu0 0
    %2293 = vmatpush1.bf16.msra.mxu0 0
    %2294 = vmatprep.subr.bf16.mxu0 0
    %2295 = vmatpush1.bf16.msra.mxu0 0
    %2296 = vmatprep.subr.bf16.mxu0 0
    %2297 = vmatpush1.bf16.msra.mxu0 0
    %2298 = vmatprep.subr.bf16.mxu0 0
    %2299 = vmatpush1.bf16.msra.mxu0 0
    %2300 = vmatprep.mubr.bf16.mxu0 0
    %2301 = vmatmul.mubr.bf16.gmra.mrb[0].mxu0 %v2266
    %v2302 = vpop.f32.mrb[0].mxu0
    %v2303 = vadd.f32 %v2263, %v2302
    %v2304 = vpop.f32.mrb[0].mxu0
    %v2305 = vpop.f32.mrb[0].mxu0
    %v2306 = vpop.f32.mrb[0].mxu0
    %2307 = vdwg.mxu0
    %2309 = vrot.lane.b32.xlu0 %v1964, 96
    %v2310 = vpop.permute.xlu0 %2309
    %v2312 = vadd.f32 %v2303, %v2310
    %v2313 = vxor.u32 %v2312, 2147483648
    %v2314 = vmul.f32 %v2313, 1.442695
    %v2315 = vpow.pop %v2314
    %v2316 = vadd.f32 %v2315, 1.0
    %v2317 = vrcp.pop %v2316
    %v2318 = vmul.f32 1.0, %v2317
    %2319 = vrot.lane.b32.xlu0 %v1964, 32
    %v2320 = vpop.permute.xlu0 %2319
    %v2322 = vmul.f32 %v2318, %v2320
    %2324 = vrot.lane.b32.xlu0 %v2322, 64
    %v2325 = vpop.permute.xlu0 %2324
    %v2327 = vadd.f32 %v2303, %v2325
    %v2328 = vtanh.pop %v2327
    %v2329 = vsub.f32 1.0, %v2318
    %2331 = vrot.lane.b32.xlu0 %v2328, 96
    %v2332 = vpop.permute.xlu0 %2331
    %v2334 = vmul.f32 %v2329, %v2332
    %v2335 = vmul.f32 %v2318, %v1877
    %v2336 = vadd.f32 %v2334, %v2335
    %v2339 = vunpack.c.l.s4 1966171168
    %v2340 = vunpack.c.0.s8 %v2339
    %v2341 = vlaneseq
    %v2342 = vshrl.u32 %v2341, 7
    %v2343 = vsub.s32 %v2340, %v2342
    %v2344 = vrot.slane %v2336, %v2343
    %v2345 = vcombine.high %v2344, %v2344
    %v2347 = vunpack.c.l.s4 1966171168
    %v2348 = vunpack.c.0.s8 %v2347
    %v2349 = vlaneseq
    %v2350 = vshrl.u32 %v2349, 7
    %v2351 = vsub.s32 %v2348, %v2350
    %v2352 = vrot.slane %v2344, %v2351
    %v2354 = vunpack.c.l.s4 1966171168
    %v2355 = vunpack.c.0.s8 %v2354
    %v2356 = vlaneseq
    %v2357 = vshrl.u32 %v2356, 7
    %v2358 = vsub.s32 %v2355, %v2357
    %v2359 = vrot.slane %v2345, %v2358
    %v2360 = vlaneseq
    %v2361 = vshrl.u32 %v2360, 7
    %v2362 = vsub.s32 0, %v2361
    %v2363 = vrot.slane %v2352, %v2362
    %v2364 = vlaneseq
    %v2365 = vshrl.u32 %v2364, 7
    %v2366 = vsub.s32 0, %v2365
    %v2367 = vrot.slane %v2359, %v2366
    %2368 = vrot.lane.b32.xlu0 %v2363, 96
    %v2369 = vpop.permute.xlu0 %2368
    %2370 = vrot.lane.b32.xlu0 %v2367, 96
    %v2371 = vpop.permute.xlu0 %2370
    %2374 = vst.msk [vmem:[#allocation5 + $0x1] sm:$0x1] %vm458, %v2369
    %2375 = vst.msk [vmem:[#allocation5 + $0x9] sm:$0x1] %vm458, %v2371
    %v2376 = vpack.c.bf16 %v2336, %v2336
    %2378 = vrot.lane.b32.xlu0 %v2376, 96
    %v2379 = vpop.permute.xlu0 %2378
    %v2381 = vsel %vm350, %v2379, 0
    %2383 = vmatprep.subr.bf16.mxu0 0
    %2384 = vmatpush1.bf16.msra.mxu0 %v1416
    %2385 = vmatprep.subr.bf16.mxu0 0
    %2386 = vmatpush1.bf16.msra.mxu0 %v1417
    %2387 = vmatprep.subr.bf16.mxu0 0
    %2388 = vmatpush1.bf16.msra.mxu0 0
    %2389 = vmatprep.subr.bf16.mxu0 0
    %2390 = vmatpush1.bf16.msra.mxu0 0
    %2391 = vmatprep.subr.bf16.mxu0 0
    %2392 = vmatpush1.bf16.msra.mxu0 0
    %2393 = vmatprep.subr.bf16.mxu0 0
    %2394 = vmatpush1.bf16.msra.mxu0 0
    %2395 = vmatprep.subr.bf16.mxu0 0
    %2396 = vmatpush1.bf16.msra.mxu0 0
    %2397 = vmatprep.subr.bf16.mxu0 0
    %2398 = vmatpush1.bf16.msra.mxu0 0
    %2399 = vmatprep.subr.bf16.mxu0 0
    %2400 = vmatpush1.bf16.msra.mxu0 0
    %2401 = vmatprep.subr.bf16.mxu0 0
    %2402 = vmatpush1.bf16.msra.mxu0 0
    %2403 = vmatprep.subr.bf16.mxu0 0
    %2404 = vmatpush1.bf16.msra.mxu0 0
    %2405 = vmatprep.subr.bf16.mxu0 0
    %2406 = vmatpush1.bf16.msra.mxu0 0
    %2407 = vmatprep.subr.bf16.mxu0 0
    %2408 = vmatpush1.bf16.msra.mxu0 0
    %2409 = vmatprep.subr.bf16.mxu0 0
    %2410 = vmatpush1.bf16.msra.mxu0 0
    %2411 = vmatprep.subr.bf16.mxu0 0
    %2412 = vmatpush1.bf16.msra.mxu0 0
    %2413 = vmatprep.subr.bf16.mxu0 0
    %2414 = vmatpush1.bf16.msra.mxu0 0
    %2415 = vmatprep.mubr.bf16.mxu0 0
    %2416 = vmatmul.mubr.bf16.gmra.mrb[0].mxu0 %v2381
    %v2417 = vpop.f32.mrb[0].mxu0
    %v2418 = vadd.f32 0.0, %v2417
    %v2419 = vpop.f32.mrb[0].mxu0
    %v2420 = vpop.f32.mrb[0].mxu0
    %v2421 = vpop.f32.mrb[0].mxu0
    %2422 = vdwg.mxu0
    %v2423 = vadd.f32 %v2418, %v1469
    %v2424 = vld [vmem:[#allocation4] sm:$0xff]
    %v2425 = vld [vmem:[#allocation4 + $0x8] sm:$0xff]
    %v2428 = vunpack.c.l.s4 1966171168
    %v2429 = vunpack.c.0.s8 %v2428
    %v2430 = vlaneseq
    %v2431 = vshrl.u32 %v2430, 7
    %v2432 = vsub.s32 %v2429, %v2431
    %v2433 = vrot.slane %v2418, %v2432
    %v2434 = vcombine.high %v2433, %v2433
    %v2436 = vunpack.c.l.s4 1966171168
    %v2437 = vunpack.c.0.s8 %v2436
    %v2438 = vlaneseq
    %v2439 = vshrl.u32 %v2438, 7
    %v2440 = vsub.s32 %v2437, %v2439
    %v2441 = vrot.slane %v2433, %v2440
    %v2443 = vunpack.c.l.s4 1966171168
    %v2444 = vunpack.c.0.s8 %v2443
    %v2445 = vlaneseq
    %v2446 = vshrl.u32 %v2445, 7
    %v2447 = vsub.s32 %v2444, %v2446
    %v2448 = vrot.slane %v2434, %v2447
    %v2449 = vlaneseq
    %v2450 = vshrl.u32 %v2449, 7
    %v2451 = vsub.s32 0, %v2450
    %v2452 = vrot.slane %v2441, %v2451
    %v2453 = vlaneseq
    %v2454 = vshrl.u32 %v2453, 7
    %v2455 = vsub.s32 0, %v2454
    %v2456 = vrot.slane %v2448, %v2455
    %v2459 = vadd.f32 %v2424, %v2452
    %v2460 = vadd.f32 %v2425, %v2456
    %v2461 = vtanh.pop %v2459
    %v2462 = vtanh.pop %v2460
    %v2463 = vmul.f32 %v2461, %v1386
    %v2464 = vmul.f32 %v2462, %v1386
    %v2465 = vsel %vm350, %v2463, 0.0
    %2466 = vadd.xlane.f32.xlu0 %v2465
    %v2467 = vpop.xlane.xlu0 %2466
    %v2468 = vsel %vm350, %v2464, 0.0
    %2469 = vadd.xlane.f32.xlu0 %v2468
    %v2470 = vpop.xlane.xlu0 %2469
    %v2471 = vadd.f32 %v2467, %v1526
    %v2472 = vadd.f32 %v2470, %v1533
    %2475 = vset.pattern.permute.xlu0 0
    %2476 = vperm.xlu0 %2475, %v2471
    %v2477 = vpop.permute.xlu0 %2476
    %2478 = vset.pattern.permute.xlu0 0
    %2479 = vperm.xlu0 %2478, %v2472
    %v2480 = vpop.permute.xlu0 %2479
    %v2481 = vlaneseq
    %v2482 = vshrl.u32 %v2481, 7
    %v2483 = vsub.s32 %v1370, %v2482
    %v2484 = vrot.slane %v2477, %v2483
    %v2485 = vlaneseq
    %v2486 = vshrl.u32 %v2485, 7
    %v2487 = vsub.s32 %v1370, %v2486
    %v2488 = vrot.slane %v2480, %v2487
    %v2489 = vsel %vm468, %v2488, %v2484
    %v2491 = vsel %vm1556, %v2489, -inf
    %2492 = vmax.xlane.f32.xlu0 %v2491
    %v2493 = vpop.xlane.xlu0 %2492
    %v2495 = vlaneseq
    %v2496 = vshrl.u32 %v2495, 7
    %v2497 = vsub.s32 0, %v2496
    %v2498 = vrot.slane %v2493, %v2497
    %v2499 = vlaneseq
    %v2500 = vshrl.u32 %v2499, 7
    %v2501 = vsub.s32 1, %v2500
    %v2502 = vrot.slane %v2493, %v2501
    %v2505 = vsub.f32 %v2471, %v2498
    %v2506 = vsub.f32 %v2472, %v2502
    %v2507 = vmul.f32 %v2505, 1.442695
    %v2508 = vpow.pop %v2507
    %v2509 = vmul.f32 %v2506, 1.442695
    %v2510 = vpow.pop %v2509
    %2513 = vset.pattern.permute.xlu0 0
    %2514 = vperm.xlu0 %2513, %v2508
    %v2515 = vpop.permute.xlu0 %2514
    %2516 = vset.pattern.permute.xlu0 0
    %2517 = vperm.xlu0 %2516, %v2510
    %v2518 = vpop.permute.xlu0 %2517
    %v2519 = vlaneseq
    %v2520 = vshrl.u32 %v2519, 7
    %v2521 = vsub.s32 %v1370, %v2520
    %v2522 = vrot.slane %v2515, %v2521
    %v2523 = vlaneseq
    %v2524 = vshrl.u32 %v2523, 7
    %v2525 = vsub.s32 %v1370, %v2524
    %v2526 = vrot.slane %v2518, %v2525
    %v2527 = vsel %vm468, %v2526, %v2522
    %v2529 = vsel %vm1556, %v2527, 0.0
    %2530 = vadd.xlane.f32.xlu0 %v2529
    %v2531 = vpop.xlane.xlu0 %2530
    %v2532 = vrcp.pop %v2531
    %v2534 = vlaneseq
    %v2535 = vshrl.u32 %v2534, 7
    %v2536 = vsub.s32 0, %v2535
    %v2537 = vrot.slane %v2532, %v2536
    %v2538 = vlaneseq
    %v2539 = vshrl.u32 %v2538, 7
    %v2540 = vsub.s32 1, %v2539
    %v2541 = vrot.slane %v2532, %v2540
    %v2544 = vmul.f32 %v2508, %v2537
    %v2545 = vmul.f32 %v2510, %v2541
    %v2546 = vld [vmem:[#allocation26] sm:$0xff]
    %v2547 = vld [vmem:[#allocation26 + $0x8] sm:$0xff]
    %2549 = vset.pattern.permute.xlu0 0
    %2550 = vperm.xlu0 %2549, %v2544
    %v2551 = vpop.permute.xlu0 %2550
    %v2552 = vlaneseq
    %v2553 = vshrl.u32 %v2552, 7
    %v2554 = vsub.s32 %v1370, %v2553
    %v2555 = vrot.slane %v2551, %v2554
    %v2556 = vsel %vm1622, %v2555, 0
    %2558 = vmatprep.subr.mxu0 0.0
    %2559 = vmatpush1.msra.mxu0 %v2546
    %2560 = vmatprep.subr.mxu0 0.0
    %2561 = vmatpush1.msra.mxu0 0.0
    %2562 = vmatprep.subr.mxu0 0.0
    %2563 = vmatpush1.msra.mxu0 0.0
    %2564 = vmatprep.subr.mxu0 0.0
    %2565 = vmatpush1.msra.mxu0 0.0
    %2566 = vmatprep.subr.mxu0 0.0
    %2567 = vmatpush1.msra.mxu0 0.0
    %2568 = vmatprep.subr.mxu0 0.0
    %2569 = vmatpush1.msra.mxu0 0.0
    %2570 = vmatprep.subr.mxu0 0.0
    %2571 = vmatpush1.msra.mxu0 0.0
    %2572 = vmatprep.subr.mxu0 0.0
    %2573 = vmatpush1.msra.mxu0 0.0
    %2574 = vmatprep.subr.mxu0 0.0
    %2575 = vmatpush1.msra.mxu0 0.0
    %2576 = vmatprep.subr.mxu0 0.0
    %2577 = vmatpush1.msra.mxu0 0.0
    %2578 = vmatprep.subr.mxu0 0.0
    %2579 = vmatpush1.msra.mxu0 0.0
    %2580 = vmatprep.subr.mxu0 0.0
    %2581 = vmatpush1.msra.mxu0 0.0
    %2582 = vmatprep.subr.mxu0 0.0
    %2583 = vmatpush1.msra.mxu0 0.0
    %2584 = vmatprep.subr.mxu0 0.0
    %2585 = vmatpush1.msra.mxu0 0.0
    %2586 = vmatprep.subr.mxu0 0.0
    %2587 = vmatpush1.msra.mxu0 0.0
    %2588 = vmatprep.subr.mxu0 0.0
    %2589 = vmatpush1.msra.mxu0 0.0
    %2590 = vmatprep.subr.mxu0 0.0
    %2591 = vmatpush1.msra.mxu0 0.0
    %2592 = vmatprep.subr.mxu0 0.0
    %2593 = vmatpush1.msra.mxu0 0.0
    %2594 = vmatprep.subr.mxu0 0.0
    %2595 = vmatpush1.msra.mxu0 0.0
    %2596 = vmatprep.subr.mxu0 0.0
    %2597 = vmatpush1.msra.mxu0 0.0
    %2598 = vmatprep.subr.mxu0 0.0
    %2599 = vmatpush1.msra.mxu0 0.0
    %2600 = vmatprep.subr.mxu0 0.0
    %2601 = vmatpush1.msra.mxu0 0.0
    %2602 = vmatprep.subr.mxu0 0.0
    %2603 = vmatpush1.msra.mxu0 0.0
    %2604 = vmatprep.subr.mxu0 0.0
    %2605 = vmatpush1.msra.mxu0 0.0
    %2606 = vmatprep.subr.mxu0 0.0
    %2607 = vmatpush1.msra.mxu0 0.0
    %2608 = vmatprep.subr.mxu0 0.0
    %2609 = vmatpush1.msra.mxu0 0.0
    %2610 = vmatprep.subr.mxu0 0.0
    %2611 = vmatpush1.msra.mxu0 0.0
    %2612 = vmatprep.subr.mxu0 0.0
    %2613 = vmatpush1.msra.mxu0 0.0
    %2614 = vmatprep.subr.mxu0 0.0
    %2615 = vmatpush1.msra.mxu0 0.0
    %2616 = vmatprep.subr.mxu0 0.0
    %2617 = vmatpush1.msra.mxu0 0.0
    %2618 = vmatprep.subr.mxu0 0.0
    %2619 = vmatpush1.msra.mxu0 0.0
    %2620 = vmatprep.subr.mxu0 0.0
    %2621 = vmatpush1.msra.mxu0 0.0
    %2622 = vmatprep.mubr.f32.mxu0 0.0
    %2623 = vmatmul.mubr.f32.gmra.mrb[0].mxu0 %v2556
    %v2624 = vpop.f32.mrb[0].mxu0
    %v2625 = vadd.f32 0.0, %v2624
    %v2626 = vpop.f32.mrb[0].mxu0
    %2627 = vdwg.mxu0
    %2629 = vset.pattern.permute.xlu0 0
    %2630 = vperm.xlu0 %2629, %v2545
    %v2631 = vpop.permute.xlu0 %2630
    %v2632 = vlaneseq
    %v2633 = vshrl.u32 %v2632, 7
    %v2634 = vsub.s32 %v1370, %v2633
    %v2635 = vrot.slane %v2631, %v2634
    %v2636 = vsel %vm1622, %v2635, 0
    %2638 = vmatprep.subr.mxu0 0.0
    %2639 = vmatpush1.msra.mxu0 %v2547
    %2640 = vmatprep.subr.mxu0 0.0
    %2641 = vmatpush1.msra.mxu0 0.0
    %2642 = vmatprep.subr.mxu0 0.0
    %2643 = vmatpush1.msra.mxu0 0.0
    %2644 = vmatprep.subr.mxu0 0.0
    %2645 = vmatpush1.msra.mxu0 0.0
    %2646 = vmatprep.subr.mxu0 0.0
    %2647 = vmatpush1.msra.mxu0 0.0
    %2648 = vmatprep.subr.mxu0 0.0
    %2649 = vmatpush1.msra.mxu0 0.0
    %2650 = vmatprep.subr.mxu0 0.0
    %2651 = vmatpush1.msra.mxu0 0.0
    %2652 = vmatprep.subr.mxu0 0.0
    %2653 = vmatpush1.msra.mxu0 0.0
    %2654 = vmatprep.subr.mxu0 0.0
    %2655 = vmatpush1.msra.mxu0 0.0
    %2656 = vmatprep.subr.mxu0 0.0
    %2657 = vmatpush1.msra.mxu0 0.0
    %2658 = vmatprep.subr.mxu0 0.0
    %2659 = vmatpush1.msra.mxu0 0.0
    %2660 = vmatprep.subr.mxu0 0.0
    %2661 = vmatpush1.msra.mxu0 0.0
    %2662 = vmatprep.subr.mxu0 0.0
    %2663 = vmatpush1.msra.mxu0 0.0
    %2664 = vmatprep.subr.mxu0 0.0
    %2665 = vmatpush1.msra.mxu0 0.0
    %2666 = vmatprep.subr.mxu0 0.0
    %2667 = vmatpush1.msra.mxu0 0.0
    %2668 = vmatprep.subr.mxu0 0.0
    %2669 = vmatpush1.msra.mxu0 0.0
    %2670 = vmatprep.subr.mxu0 0.0
    %2671 = vmatpush1.msra.mxu0 0.0
    %2672 = vmatprep.subr.mxu0 0.0
    %2673 = vmatpush1.msra.mxu0 0.0
    %2674 = vmatprep.subr.mxu0 0.0
    %2675 = vmatpush1.msra.mxu0 0.0
    %2676 = vmatprep.subr.mxu0 0.0
    %2677 = vmatpush1.msra.mxu0 0.0
    %2678 = vmatprep.subr.mxu0 0.0
    %2679 = vmatpush1.msra.mxu0 0.0
    %2680 = vmatprep.subr.mxu0 0.0
    %2681 = vmatpush1.msra.mxu0 0.0
    %2682 = vmatprep.subr.mxu0 0.0
    %2683 = vmatpush1.msra.mxu0 0.0
    %2684 = vmatprep.subr.mxu0 0.0
    %2685 = vmatpush1.msra.mxu0 0.0
    %2686 = vmatprep.subr.mxu0 0.0
    %2687 = vmatpush1.msra.mxu0 0.0
    %2688 = vmatprep.subr.mxu0 0.0
    %2689 = vmatpush1.msra.mxu0 0.0
    %2690 = vmatprep.subr.mxu0 0.0
    %2691 = vmatpush1.msra.mxu0 0.0
    %2692 = vmatprep.subr.mxu0 0.0
    %2693 = vmatpush1.msra.mxu0 0.0
    %2694 = vmatprep.subr.mxu0 0.0
    %2695 = vmatpush1.msra.mxu0 0.0
    %2696 = vmatprep.subr.mxu0 0.0
    %2697 = vmatpush1.msra.mxu0 0.0
    %2698 = vmatprep.subr.mxu0 0.0
    %2699 = vmatpush1.msra.mxu0 0.0
    %2700 = vmatprep.subr.mxu0 0.0
    %2701 = vmatpush1.msra.mxu0 0.0
    %2702 = vmatprep.mubr.f32.mxu0 0.0
    %2703 = vmatmul.mubr.f32.gmra.mrb[0].mxu0 %v2636
    %v2704 = vpop.f32.mrb[0].mxu0
    %v2705 = vadd.f32 0.0, %v2704
    %v2706 = vpop.f32.mrb[0].mxu0
    %2707 = vdwg.mxu0
    %v2708 = vpack.c.bf16 %v2625, %v2625
    %v2709 = vpack.c.bf16 %v2705, %v2705
    %v2710 = vld [vmem:[#allocation3 + $0x2] sm:$0x1]
    %v2711 = vld [vmem:[#allocation3 + $0xa] sm:$0x1]
    %v2714 = vunpack.c.l.b16 %v2708
    %v2715 = vunpack.c.l.b16 %v2709
    %v2716 = vrot.slane %v2715, 7
    %v2717 = vsel %vm468, %v2716, %v2714
    %v2718 = vpack.c.b16 %v2717, %v2717
    %v2721 = vrot.slane %v2711, 7
    %v2722 = vsel %vm468, %v2721, %v2710
    %v2725 = vsel %vm350, %v2718, 0
    %2727 = vmatprep.subr.bf16.mxu0 0
    %2728 = vmatpush1.bf16.msra.mxu0 %v1794
    %2729 = vmatprep.subr.bf16.mxu0 0
    %2730 = vmatpush1.bf16.msra.mxu0 %v1795
    %2731 = vmatprep.subr.bf16.mxu0 0
    %2732 = vmatpush1.bf16.msra.mxu0 0
    %2733 = vmatprep.subr.bf16.mxu0 0
    %2734 = vmatpush1.bf16.msra.mxu0 0
    %2735 = vmatprep.subr.bf16.mxu0 0
    %2736 = vmatpush1.bf16.msra.mxu0 0
    %2737 = vmatprep.subr.bf16.mxu0 0
    %2738 = vmatpush1.bf16.msra.mxu0 0
    %2739 = vmatprep.subr.bf16.mxu0 0
    %2740 = vmatpush1.bf16.msra.mxu0 0
    %2741 = vmatprep.subr.bf16.mxu0 0
    %2742 = vmatpush1.bf16.msra.mxu0 0
    %2743 = vmatprep.subr.bf16.mxu0 0
    %2744 = vmatpush1.bf16.msra.mxu0 0
    %2745 = vmatprep.subr.bf16.mxu0 0
    %2746 = vmatpush1.bf16.msra.mxu0 0
    %2747 = vmatprep.subr.bf16.mxu0 0
    %2748 = vmatpush1.bf16.msra.mxu0 0
    %2749 = vmatprep.subr.bf16.mxu0 0
    %2750 = vmatpush1.bf16.msra.mxu0 0
    %2751 = vmatprep.subr.bf16.mxu0 0
    %2752 = vmatpush1.bf16.msra.mxu0 0
    %2753 = vmatprep.subr.bf16.mxu0 0
    %2754 = vmatpush1.bf16.msra.mxu0 0
    %2755 = vmatprep.subr.bf16.mxu0 0
    %2756 = vmatpush1.bf16.msra.mxu0 0
    %2757 = vmatprep.subr.bf16.mxu0 0
    %2758 = vmatpush1.bf16.msra.mxu0 0
    %2759 = vmatprep.mubr.bf16.mxu0 0
    %2760 = vmatmul.mubr.bf16.gmra.mrb[0].mxu0 %v2725
    %v2761 = vpop.f32.mrb[0].mxu0
    %v2762 = vadd.f32 %v2722, %v2761
    %v2763 = vpop.f32.mrb[0].mxu0
    %v2764 = vpop.f32.mrb[0].mxu0
    %v2765 = vpop.f32.mrb[0].mxu0
    %2766 = vdwg.mxu0
    %2768 = vrot.lane.b32.xlu0 %v2423, 96
    %v2769 = vpop.permute.xlu0 %2768
    %v2771 = vadd.f32 %v2762, %v2769
    %v2772 = vxor.u32 %v2771, 2147483648
    %v2773 = vmul.f32 %v2772, 1.442695
    %v2774 = vpow.pop %v2773
    %v2775 = vadd.f32 %v2774, 1.0
    %v2776 = vrcp.pop %v2775
    %v2777 = vmul.f32 1.0, %v2776
    %2778 = vrot.lane.b32.xlu0 %v2423, 32
    %v2779 = vpop.permute.xlu0 %2778
    %v2781 = vmul.f32 %v2777, %v2779
    %2783 = vrot.lane.b32.xlu0 %v2781, 64
    %v2784 = vpop.permute.xlu0 %2783
    %v2786 = vadd.f32 %v2762, %v2784
    %v2787 = vtanh.pop %v2786
    %v2788 = vsub.f32 1.0, %v2777
    %2790 = vrot.lane.b32.xlu0 %v2787, 96
    %v2791 = vpop.permute.xlu0 %2790
    %v2793 = vmul.f32 %v2788, %v2791
    %v2794 = vmul.f32 %v2777, %v2336
    %v2795 = vadd.f32 %v2793, %v2794
    %v2798 = vunpack.c.l.s4 1966171168
    %v2799 = vunpack.c.0.s8 %v2798
    %v2800 = vlaneseq
    %v2801 = vshrl.u32 %v2800, 7
    %v2802 = vsub.s32 %v2799, %v2801
    %v2803 = vrot.slane %v2795, %v2802
    %v2804 = vcombine.high %v2803, %v2803
    %v2806 = vunpack.c.l.s4 1966171168
    %v2807 = vunpack.c.0.s8 %v2806
    %v2808 = vlaneseq
    %v2809 = vshrl.u32 %v2808, 7
    %v2810 = vsub.s32 %v2807, %v2809
    %v2811 = vrot.slane %v2803, %v2810
    %v2813 = vunpack.c.l.s4 1966171168
    %v2814 = vunpack.c.0.s8 %v2813
    %v2815 = vlaneseq
    %v2816 = vshrl.u32 %v2815, 7
    %v2817 = vsub.s32 %v2814, %v2816
    %v2818 = vrot.slane %v2804, %v2817
    %v2819 = vlaneseq
    %v2820 = vshrl.u32 %v2819, 7
    %v2821 = vsub.s32 0, %v2820
    %v2822 = vrot.slane %v2811, %v2821
    %v2823 = vlaneseq
    %v2824 = vshrl.u32 %v2823, 7
    %v2825 = vsub.s32 0, %v2824
    %v2826 = vrot.slane %v2818, %v2825
    %2827 = vrot.lane.b32.xlu0 %v2822, 96
    %v2828 = vpop.permute.xlu0 %2827
    %2829 = vrot.lane.b32.xlu0 %v2826, 96
    %v2830 = vpop.permute.xlu0 %2829
    %2833 = vst.msk [vmem:[#allocation5 + $0x2] sm:$0x1] %vm458, %v2828
    %2834 = vst.msk [vmem:[#allocation5 + $0xa] sm:$0x1] %vm458, %v2830
    %v2835 = vpack.c.bf16 %v2795, %v2795
    %2837 = vrot.lane.b32.xlu0 %v2835, 96
    %v2838 = vpop.permute.xlu0 %2837
    %v2840 = vsel %vm350, %v2838, 0
    %2842 = vmatprep.subr.bf16.mxu0 0
    %2843 = vmatpush1.bf16.msra.mxu0 %v1416
    %2844 = vmatprep.subr.bf16.mxu0 0
    %2845 = vmatpush1.bf16.msra.mxu0 %v1417
    %2846 = vmatprep.subr.bf16.mxu0 0
    %2847 = vmatpush1.bf16.msra.mxu0 0
    %2848 = vmatprep.subr.bf16.mxu0 0
    %2849 = vmatpush1.bf16.msra.mxu0 0
    %2850 = vmatprep.subr.bf16.mxu0 0
    %2851 = vmatpush1.bf16.msra.mxu0 0
    %2852 = vmatprep.subr.bf16.mxu0 0
    %2853 = vmatpush1.bf16.msra.mxu0 0
    %2854 = vmatprep.subr.bf16.mxu0 0
    %2855 = vmatpush1.bf16.msra.mxu0 0
    %2856 = vmatprep.subr.bf16.mxu0 0
    %2857 = vmatpush1.bf16.msra.mxu0 0
    %2858 = vmatprep.subr.bf16.mxu0 0
    %2859 = vmatpush1.bf16.msra.mxu0 0
    %2860 = vmatprep.subr.bf16.mxu0 0
    %2861 = vmatpush1.bf16.msra.mxu0 0
    %2862 = vmatprep.subr.bf16.mxu0 0
    %2863 = vmatpush1.bf16.msra.mxu0 0
    %2864 = vmatprep.subr.bf16.mxu0 0
    %2865 = vmatpush1.bf16.msra.mxu0 0
    %2866 = vmatprep.subr.bf16.mxu0 0
    %2867 = vmatpush1.bf16.msra.mxu0 0
    %2868 = vmatprep.subr.bf16.mxu0 0
    %2869 = vmatpush1.bf16.msra.mxu0 0
    %2870 = vmatprep.subr.bf16.mxu0 0
    %2871 = vmatpush1.bf16.msra.mxu0 0
    %2872 = vmatprep.subr.bf16.mxu0 0
    %2873 = vmatpush1.bf16.msra.mxu0 0
    %2874 = vmatprep.mubr.bf16.mxu0 0
    %2875 = vmatmul.mubr.bf16.gmra.mrb[0].mxu0 %v2840
    %v2876 = vpop.f32.mrb[0].mxu0
    %v2877 = vadd.f32 0.0, %v2876
    %v2878 = vpop.f32.mrb[0].mxu0
    %v2879 = vpop.f32.mrb[0].mxu0
    %v2880 = vpop.f32.mrb[0].mxu0
    %2881 = vdwg.mxu0
    %v2882 = vadd.f32 %v2877, %v1469
    %v2883 = vld [vmem:[#allocation4] sm:$0xff]
    %v2884 = vld [vmem:[#allocation4 + $0x8] sm:$0xff]
    %v2887 = vunpack.c.l.s4 1966171168
    %v2888 = vunpack.c.0.s8 %v2887
    %v2889 = vlaneseq
    %v2890 = vshrl.u32 %v2889, 7
    %v2891 = vsub.s32 %v2888, %v2890
    %v2892 = vrot.slane %v2877, %v2891
    %v2893 = vcombine.high %v2892, %v2892
    %v2895 = vunpack.c.l.s4 1966171168
    %v2896 = vunpack.c.0.s8 %v2895
    %v2897 = vlaneseq
    %v2898 = vshrl.u32 %v2897, 7
    %v2899 = vsub.s32 %v2896, %v2898
    %v2900 = vrot.slane %v2892, %v2899
    %v2902 = vunpack.c.l.s4 1966171168
    %v2903 = vunpack.c.0.s8 %v2902
    %v2904 = vlaneseq
    %v2905 = vshrl.u32 %v2904, 7
    %v2906 = vsub.s32 %v2903, %v2905
    %v2907 = vrot.slane %v2893, %v2906
    %v2908 = vlaneseq
    %v2909 = vshrl.u32 %v2908, 7
    %v2910 = vsub.s32 0, %v2909
    %v2911 = vrot.slane %v2900, %v2910
    %v2912 = vlaneseq
    %v2913 = vshrl.u32 %v2912, 7
    %v2914 = vsub.s32 0, %v2913
    %v2915 = vrot.slane %v2907, %v2914
    %v2918 = vadd.f32 %v2883, %v2911
    %v2919 = vadd.f32 %v2884, %v2915
    %v2920 = vtanh.pop %v2918
    %v2921 = vtanh.pop %v2919
    %v2922 = vmul.f32 %v2920, %v1386
    %v2923 = vmul.f32 %v2921, %v1386
    %v2924 = vsel %vm350, %v2922, 0.0
    %2925 = vadd.xlane.f32.xlu0 %v2924
    %v2926 = vpop.xlane.xlu0 %2925
    %v2927 = vsel %vm350, %v2923, 0.0
    %2928 = vadd.xlane.f32.xlu0 %v2927
    %v2929 = vpop.xlane.xlu0 %2928
    %v2930 = vadd.f32 %v2926, %v1526
    %v2931 = vadd.f32 %v2929, %v1533
    %2934 = vset.pattern.permute.xlu0 0
    %2935 = vperm.xlu0 %2934, %v2930
    %v2936 = vpop.permute.xlu0 %2935
    %2937 = vset.pattern.permute.xlu0 0
    %2938 = vperm.xlu0 %2937, %v2931
    %v2939 = vpop.permute.xlu0 %2938
    %v2940 = vlaneseq
    %v2941 = vshrl.u32 %v2940, 7
    %v2942 = vsub.s32 %v1370, %v2941
    %v2943 = vrot.slane %v2936, %v2942
    %v2944 = vlaneseq
    %v2945 = vshrl.u32 %v2944, 7
    %v2946 = vsub.s32 %v1370, %v2945
    %v2947 = vrot.slane %v2939, %v2946
    %v2948 = vsel %vm468, %v2947, %v2943
    %v2950 = vsel %vm1556, %v2948, -inf
    %2951 = vmax.xlane.f32.xlu0 %v2950
    %v2952 = vpop.xlane.xlu0 %2951
    %v2954 = vlaneseq
    %v2955 = vshrl.u32 %v2954, 7
    %v2956 = vsub.s32 0, %v2955
    %v2957 = vrot.slane %v2952, %v2956
    %v2958 = vlaneseq
    %v2959 = vshrl.u32 %v2958, 7
    %v2960 = vsub.s32 1, %v2959
    %v2961 = vrot.slane %v2952, %v2960
    %v2964 = vsub.f32 %v2930, %v2957
    %v2965 = vsub.f32 %v2931, %v2961
    %v2966 = vmul.f32 %v2964, 1.442695
    %v2967 = vpow.pop %v2966
    %v2968 = vmul.f32 %v2965, 1.442695
    %v2969 = vpow.pop %v2968
    %2972 = vset.pattern.permute.xlu0 0
    %2973 = vperm.xlu0 %2972, %v2967
    %v2974 = vpop.permute.xlu0 %2973
    %2975 = vset.pattern.permute.xlu0 0
    %2976 = vperm.xlu0 %2975, %v2969
    %v2977 = vpop.permute.xlu0 %2976
    %v2978 = vlaneseq
    %v2979 = vshrl.u32 %v2978, 7
    %v2980 = vsub.s32 %v1370, %v2979
    %v2981 = vrot.slane %v2974, %v2980
    %v2982 = vlaneseq
    %v2983 = vshrl.u32 %v2982, 7
    %v2984 = vsub.s32 %v1370, %v2983
    %v2985 = vrot.slane %v2977, %v2984
    %v2986 = vsel %vm468, %v2985, %v2981
    %v2988 = vsel %vm1556, %v2986, 0.0
    %2989 = vadd.xlane.f32.xlu0 %v2988
    %v2990 = vpop.xlane.xlu0 %2989
    %v2991 = vrcp.pop %v2990
    %v2993 = vlaneseq
    %v2994 = vshrl.u32 %v2993, 7
    %v2995 = vsub.s32 0, %v2994
    %v2996 = vrot.slane %v2991, %v2995
    %v2997 = vlaneseq
    %v2998 = vshrl.u32 %v2997, 7
    %v2999 = vsub.s32 1, %v2998
    %v3000 = vrot.slane %v2991, %v2999
    %v3003 = vmul.f32 %v2967, %v2996
    %v3004 = vmul.f32 %v2969, %v3000
    %v3005 = vld [vmem:[#allocation26] sm:$0xff]
    %v3006 = vld [vmem:[#allocation26 + $0x8] sm:$0xff]
    %3008 = vset.pattern.permute.xlu0 0
    %3009 = vperm.xlu0 %3008, %v3003
    %v3010 = vpop.permute.xlu0 %3009
    %v3011 = vlaneseq
    %v3012 = vshrl.u32 %v3011, 7
    %v3013 = vsub.s32 %v1370, %v3012
    %v3014 = vrot.slane %v3010, %v3013
    %v3015 = vsel %vm1622, %v3014, 0
    %3017 = vmatprep.subr.mxu0 0.0
    %3018 = vmatpush1.msra.mxu0 %v3005
    %3019 = vmatprep.subr.mxu0 0.0
    %3020 = vmatpush1.msra.mxu0 0.0
    %3021 = vmatprep.subr.mxu0 0.0
    %3022 = vmatpush1.msra.mxu0 0.0
    %3023 = vmatprep.subr.mxu0 0.0
    %3024 = vmatpush1.msra.mxu0 0.0
    %3025 = vmatprep.subr.mxu0 0.0
    %3026 = vmatpush1.msra.mxu0 0.0
    %3027 = vmatprep.subr.mxu0 0.0
    %3028 = vmatpush1.msra.mxu0 0.0
    %3029 = vmatprep.subr.mxu0 0.0
    %3030 = vmatpush1.msra.mxu0 0.0
    %3031 = vmatprep.subr.mxu0 0.0
    %3032 = vmatpush1.msra.mxu0 0.0
    %3033 = vmatprep.subr.mxu0 0.0
    %3034 = vmatpush1.msra.mxu0 0.0
    %3035 = vmatprep.subr.mxu0 0.0
    %3036 = vmatpush1.msra.mxu0 0.0
    %3037 = vmatprep.subr.mxu0 0.0
    %3038 = vmatpush1.msra.mxu0 0.0
    %3039 = vmatprep.subr.mxu0 0.0
    %3040 = vmatpush1.msra.mxu0 0.0
    %3041 = vmatprep.subr.mxu0 0.0
    %3042 = vmatpush1.msra.mxu0 0.0
    %3043 = vmatprep.subr.mxu0 0.0
    %3044 = vmatpush1.msra.mxu0 0.0
    %3045 = vmatprep.subr.mxu0 0.0
    %3046 = vmatpush1.msra.mxu0 0.0
    %3047 = vmatprep.subr.mxu0 0.0
    %3048 = vmatpush1.msra.mxu0 0.0
    %3049 = vmatprep.subr.mxu0 0.0
    %3050 = vmatpush1.msra.mxu0 0.0
    %3051 = vmatprep.subr.mxu0 0.0
    %3052 = vmatpush1.msra.mxu0 0.0
    %3053 = vmatprep.subr.mxu0 0.0
    %3054 = vmatpush1.msra.mxu0 0.0
    %3055 = vmatprep.subr.mxu0 0.0
    %3056 = vmatpush1.msra.mxu0 0.0
    %3057 = vmatprep.subr.mxu0 0.0
    %3058 = vmatpush1.msra.mxu0 0.0
    %3059 = vmatprep.subr.mxu0 0.0
    %3060 = vmatpush1.msra.mxu0 0.0
    %3061 = vmatprep.subr.mxu0 0.0
    %3062 = vmatpush1.msra.mxu0 0.0
    %3063 = vmatprep.subr.mxu0 0.0
    %3064 = vmatpush1.msra.mxu0 0.0
    %3065 = vmatprep.subr.mxu0 0.0
    %3066 = vmatpush1.msra.mxu0 0.0
    %3067 = vmatprep.subr.mxu0 0.0
    %3068 = vmatpush1.msra.mxu0 0.0
    %3069 = vmatprep.subr.mxu0 0.0
    %3070 = vmatpush1.msra.mxu0 0.0
    %3071 = vmatprep.subr.mxu0 0.0
    %3072 = vmatpush1.msra.mxu0 0.0
    %3073 = vmatprep.subr.mxu0 0.0
    %3074 = vmatpush1.msra.mxu0 0.0
    %3075 = vmatprep.subr.mxu0 0.0
    %3076 = vmatpush1.msra.mxu0 0.0
    %3077 = vmatprep.subr.mxu0 0.0
    %3078 = vmatpush1.msra.mxu0 0.0
    %3079 = vmatprep.subr.mxu0 0.0
    %3080 = vmatpush1.msra.mxu0 0.0
    %3081 = vmatprep.mubr.f32.mxu0 0.0
    %3082 = vmatmul.mubr.f32.gmra.mrb[0].mxu0 %v3015
    %v3083 = vpop.f32.mrb[0].mxu0
    %v3084 = vadd.f32 0.0, %v3083
    %v3085 = vpop.f32.mrb[0].mxu0
    %3086 = vdwg.mxu0
    %3088 = vset.pattern.permute.xlu0 0
    %3089 = vperm.xlu0 %3088, %v3004
    %v3090 = vpop.permute.xlu0 %3089
    %v3091 = vlaneseq
    %v3092 = vshrl.u32 %v3091, 7
    %v3093 = vsub.s32 %v1370, %v3092
    %v3094 = vrot.slane %v3090, %v3093
    %v3095 = vsel %vm1622, %v3094, 0
    %3097 = vmatprep.subr.mxu0 0.0
    %3098 = vmatpush1.msra.mxu0 %v3006
    %3099 = vmatprep.subr.mxu0 0.0
    %3100 = vmatpush1.msra.mxu0 0.0
    %3101 = vmatprep.subr.mxu0 0.0
    %3102 = vmatpush1.msra.mxu0 0.0
    %3103 = vmatprep.subr.mxu0 0.0
    %3104 = vmatpush1.msra.mxu0 0.0
    %3105 = vmatprep.subr.mxu0 0.0
    %3106 = vmatpush1.msra.mxu0 0.0
    %3107 = vmatprep.subr.mxu0 0.0
    %3108 = vmatpush1.msra.mxu0 0.0
    %3109 = vmatprep.subr.mxu0 0.0
    %3110 = vmatpush1.msra.mxu0 0.0
    %3111 = vmatprep.subr.mxu0 0.0
    %3112 = vmatpush1.msra.mxu0 0.0
    %3113 = vmatprep.subr.mxu0 0.0
    %3114 = vmatpush1.msra.mxu0 0.0
    %3115 = vmatprep.subr.mxu0 0.0
    %3116 = vmatpush1.msra.mxu0 0.0
    %3117 = vmatprep.subr.mxu0 0.0
    %3118 = vmatpush1.msra.mxu0 0.0
    %3119 = vmatprep.subr.mxu0 0.0
    %3120 = vmatpush1.msra.mxu0 0.0
    %3121 = vmatprep.subr.mxu0 0.0
    %3122 = vmatpush1.msra.mxu0 0.0
    %3123 = vmatprep.subr.mxu0 0.0
    %3124 = vmatpush1.msra.mxu0 0.0
    %3125 = vmatprep.subr.mxu0 0.0
    %3126 = vmatpush1.msra.mxu0 0.0
    %3127 = vmatprep.subr.mxu0 0.0
    %3128 = vmatpush1.msra.mxu0 0.0
    %3129 = vmatprep.subr.mxu0 0.0
    %3130 = vmatpush1.msra.mxu0 0.0
    %3131 = vmatprep.subr.mxu0 0.0
    %3132 = vmatpush1.msra.mxu0 0.0
    %3133 = vmatprep.subr.mxu0 0.0
    %3134 = vmatpush1.msra.mxu0 0.0
    %3135 = vmatprep.subr.mxu0 0.0
    %3136 = vmatpush1.msra.mxu0 0.0
    %3137 = vmatprep.subr.mxu0 0.0
    %3138 = vmatpush1.msra.mxu0 0.0
    %3139 = vmatprep.subr.mxu0 0.0
    %3140 = vmatpush1.msra.mxu0 0.0
    %3141 = vmatprep.subr.mxu0 0.0
    %3142 = vmatpush1.msra.mxu0 0.0
    %3143 = vmatprep.subr.mxu0 0.0
    %3144 = vmatpush1.msra.mxu0 0.0
    %3145 = vmatprep.subr.mxu0 0.0
    %3146 = vmatpush1.msra.mxu0 0.0
    %3147 = vmatprep.subr.mxu0 0.0
    %3148 = vmatpush1.msra.mxu0 0.0
    %3149 = vmatprep.subr.mxu0 0.0
    %3150 = vmatpush1.msra.mxu0 0.0
    %3151 = vmatprep.subr.mxu0 0.0
    %3152 = vmatpush1.msra.mxu0 0.0
    %3153 = vmatprep.subr.mxu0 0.0
    %3154 = vmatpush1.msra.mxu0 0.0
    %3155 = vmatprep.subr.mxu0 0.0
    %3156 = vmatpush1.msra.mxu0 0.0
    %3157 = vmatprep.subr.mxu0 0.0
    %3158 = vmatpush1.msra.mxu0 0.0
    %3159 = vmatprep.subr.mxu0 0.0
    %3160 = vmatpush1.msra.mxu0 0.0
    %3161 = vmatprep.mubr.f32.mxu0 0.0
    %3162 = vmatmul.mubr.f32.gmra.mrb[0].mxu0 %v3095
    %v3163 = vpop.f32.mrb[0].mxu0
    %v3164 = vadd.f32 0.0, %v3163
    %v3165 = vpop.f32.mrb[0].mxu0
    %3166 = vdwg.mxu0
    %v3167 = vpack.c.bf16 %v3084, %v3084
    %v3168 = vpack.c.bf16 %v3164, %v3164
    %v3169 = vld [vmem:[#allocation3 + $0x3] sm:$0x1]
    %v3170 = vld [vmem:[#allocation3 + $0xb] sm:$0x1]
    %v3173 = vunpack.c.l.b16 %v3167
    %v3174 = vunpack.c.l.b16 %v3168
    %v3175 = vrot.slane %v3174, 7
    %v3176 = vsel %vm468, %v3175, %v3173
    %v3177 = vpack.c.b16 %v3176, %v3176
    %v3180 = vrot.slane %v3170, 7
    %v3181 = vsel %vm468, %v3180, %v3169
    %v3184 = vsel %vm350, %v3177, 0
    %3186 = vmatprep.subr.bf16.mxu0 0
    %3187 = vmatpush1.bf16.msra.mxu0 %v1794
    %3188 = vmatprep.subr.bf16.mxu0 0
    %3189 = vmatpush1.bf16.msra.mxu0 %v1795
    %3190 = vmatprep.subr.bf16.mxu0 0
    %3191 = vmatpush1.bf16.msra.mxu0 0
    %3192 = vmatprep.subr.bf16.mxu0 0
    %3193 = vmatpush1.bf16.msra.mxu0 0
    %3194 = vmatprep.subr.bf16.mxu0 0
    %3195 = vmatpush1.bf16.msra.mxu0 0
    %3196 = vmatprep.subr.bf16.mxu0 0
    %3197 = vmatpush1.bf16.msra.mxu0 0
    %3198 = vmatprep.subr.bf16.mxu0 0
    %3199 = vmatpush1.bf16.msra.mxu0 0
    %3200 = vmatprep.subr.bf16.mxu0 0
    %3201 = vmatpush1.bf16.msra.mxu0 0
    %3202 = vmatprep.subr.bf16.mxu0 0
    %3203 = vmatpush1.bf16.msra.mxu0 0
    %3204 = vmatprep.subr.bf16.mxu0 0
    %3205 = vmatpush1.bf16.msra.mxu0 0
    %3206 = vmatprep.subr.bf16.mxu0 0
    %3207 = vmatpush1.bf16.msra.mxu0 0
    %3208 = vmatprep.subr.bf16.mxu0 0
    %3209 = vmatpush1.bf16.msra.mxu0 0
    %3210 = vmatprep.subr.bf16.mxu0 0
    %3211 = vmatpush1.bf16.msra.mxu0 0
    %3212 = vmatprep.subr.bf16.mxu0 0
    %3213 = vmatpush1.bf16.msra.mxu0 0
    %3214 = vmatprep.subr.bf16.mxu0 0
    %3215 = vmatpush1.bf16.msra.mxu0 0
    %3216 = vmatprep.subr.bf16.mxu0 0
    %3217 = vmatpush1.bf16.msra.mxu0 0
    %3218 = vmatprep.mubr.bf16.mxu0 0
    %3219 = vmatmul.mubr.bf16.gmra.mrb[0].mxu0 %v3184
    %v3220 = vpop.f32.mrb[0].mxu0
    %v3221 = vadd.f32 %v3181, %v3220
    %v3222 = vpop.f32.mrb[0].mxu0
    %v3223 = vpop.f32.mrb[0].mxu0
    %v3224 = vpop.f32.mrb[0].mxu0
    %3225 = vdwg.mxu0
    %3227 = vrot.lane.b32.xlu0 %v2882, 96
    %v3228 = vpop.permute.xlu0 %3227
    %v3230 = vadd.f32 %v3221, %v3228
    %v3231 = vxor.u32 %v3230, 2147483648
    %v3232 = vmul.f32 %v3231, 1.442695
    %v3233 = vpow.pop %v3232
    %v3234 = vadd.f32 %v3233, 1.0
    %v3235 = vrcp.pop %v3234
    %v3236 = vmul.f32 1.0, %v3235
    %3237 = vrot.lane.b32.xlu0 %v2882, 32
    %v3238 = vpop.permute.xlu0 %3237
    %v3240 = vmul.f32 %v3236, %v3238
    %3242 = vrot.lane.b32.xlu0 %v3240, 64
    %v3243 = vpop.permute.xlu0 %3242
    %v3245 = vadd.f32 %v3221, %v3243
    %v3246 = vtanh.pop %v3245
    %v3247 = vsub.f32 1.0, %v3236
    %3249 = vrot.lane.b32.xlu0 %v3246, 96
    %v3250 = vpop.permute.xlu0 %3249
    %v3252 = vmul.f32 %v3247, %v3250
    %v3253 = vmul.f32 %v3236, %v2795
    %v3254 = vadd.f32 %v3252, %v3253
    %v3257 = vunpack.c.l.s4 1966171168
    %v3258 = vunpack.c.0.s8 %v3257
    %v3259 = vlaneseq
    %v3260 = vshrl.u32 %v3259, 7
    %v3261 = vsub.s32 %v3258, %v3260
    %v3262 = vrot.slane %v3254, %v3261
    %v3263 = vcombine.high %v3262, %v3262
    %v3265 = vunpack.c.l.s4 1966171168
    %v3266 = vunpack.c.0.s8 %v3265
    %v3267 = vlaneseq
    %v3268 = vshrl.u32 %v3267, 7
    %v3269 = vsub.s32 %v3266, %v3268
    %v3270 = vrot.slane %v3262, %v3269
    %v3272 = vunpack.c.l.s4 1966171168
    %v3273 = vunpack.c.0.s8 %v3272
    %v3274 = vlaneseq
    %v3275 = vshrl.u32 %v3274, 7
    %v3276 = vsub.s32 %v3273, %v3275
    %v3277 = vrot.slane %v3263, %v3276
    %v3278 = vlaneseq
    %v3279 = vshrl.u32 %v3278, 7
    %v3280 = vsub.s32 0, %v3279
    %v3281 = vrot.slane %v3270, %v3280
    %v3282 = vlaneseq
    %v3283 = vshrl.u32 %v3282, 7
    %v3284 = vsub.s32 0, %v3283
    %v3285 = vrot.slane %v3277, %v3284
    %3286 = vrot.lane.b32.xlu0 %v3281, 96
    %v3287 = vpop.permute.xlu0 %3286
    %3288 = vrot.lane.b32.xlu0 %v3285, 96
    %v3289 = vpop.permute.xlu0 %3288
    %3292 = vst.msk [vmem:[#allocation5 + $0x3] sm:$0x1] %vm458, %v3287
    %3293 = vst.msk [vmem:[#allocation5 + $0xb] sm:$0x1] %vm458, %v3289
    %v3294 = vpack.c.bf16 %v3254, %v3254
    %3296 = vrot.lane.b32.xlu0 %v3294, 96
    %v3297 = vpop.permute.xlu0 %3296
    %v3299 = vsel %vm350, %v3297, 0
    %3301 = vmatprep.subr.bf16.mxu0 0
    %3302 = vmatpush1.bf16.msra.mxu0 %v1416
    %3303 = vmatprep.subr.bf16.mxu0 0
    %3304 = vmatpush1.bf16.msra.mxu0 %v1417
    %3305 = vmatprep.subr.bf16.mxu0 0
    %3306 = vmatpush1.bf16.msra.mxu0 0
    %3307 = vmatprep.subr.bf16.mxu0 0
    %3308 = vmatpush1.bf16.msra.mxu0 0
    %3309 = vmatprep.subr.bf16.mxu0 0
    %3310 = vmatpush1.bf16.msra.mxu0 0
    %3311 = vmatprep.subr.bf16.mxu0 0
    %3312 = vmatpush1.bf16.msra.mxu0 0
    %3313 = vmatprep.subr.bf16.mxu0 0
    %3314 = vmatpush1.bf16.msra.mxu0 0
    %3315 = vmatprep.subr.bf16.mxu0 0
    %3316 = vmatpush1.bf16.msra.mxu0 0
    %3317 = vmatprep.subr.bf16.mxu0 0
    %3318 = vmatpush1.bf16.msra.mxu0 0
    %3319 = vmatprep.subr.bf16.mxu0 0
    %3320 = vmatpush1.bf16.msra.mxu0 0
    %3321 = vmatprep.subr.bf16.mxu0 0
    %3322 = vmatpush1.bf16.msra.mxu0 0
    %3323 = vmatprep.subr.bf16.mxu0 0
    %3324 = vmatpush1.bf16.msra.mxu0 0
    %3325 = vmatprep.subr.bf16.mxu0 0
    %3326 = vmatpush1.bf16.msra.mxu0 0
    %3327 = vmatprep.subr.bf16.mxu0 0
    %3328 = vmatpush1.bf16.msra.mxu0 0
    %3329 = vmatprep.subr.bf16.mxu0 0
    %3330 = vmatpush1.bf16.msra.mxu0 0
    %3331 = vmatprep.subr.bf16.mxu0 0
    %3332 = vmatpush1.bf16.msra.mxu0 0
    %3333 = vmatprep.mubr.bf16.mxu0 0
    %3334 = vmatmul.mubr.bf16.gmra.mrb[0].mxu0 %v3299
    %v3335 = vpop.f32.mrb[0].mxu0
    %v3336 = vadd.f32 0.0, %v3335
    %v3337 = vpop.f32.mrb[0].mxu0
    %v3338 = vpop.f32.mrb[0].mxu0
    %v3339 = vpop.f32.mrb[0].mxu0
    %3340 = vdwg.mxu0
    %v3341 = vadd.f32 %v3336, %v1469
    %v3342 = vld [vmem:[#allocation4] sm:$0xff]
    %v3343 = vld [vmem:[#allocation4 + $0x8] sm:$0xff]
    %v3346 = vunpack.c.l.s4 1966171168
    %v3347 = vunpack.c.0.s8 %v3346
    %v3348 = vlaneseq
    %v3349 = vshrl.u32 %v3348, 7
    %v3350 = vsub.s32 %v3347, %v3349
    %v3351 = vrot.slane %v3336, %v3350
    %v3352 = vcombine.high %v3351, %v3351
    %v3354 = vunpack.c.l.s4 1966171168
    %v3355 = vunpack.c.0.s8 %v3354
    %v3356 = vlaneseq
    %v3357 = vshrl.u32 %v3356, 7
    %v3358 = vsub.s32 %v3355, %v3357
    %v3359 = vrot.slane %v3351, %v3358
    %v3361 = vunpack.c.l.s4 1966171168
    %v3362 = vunpack.c.0.s8 %v3361
    %v3363 = vlaneseq
    %v3364 = vshrl.u32 %v3363, 7
    %v3365 = vsub.s32 %v3362, %v3364
    %v3366 = vrot.slane %v3352, %v3365
    %v3367 = vlaneseq
    %v3368 = vshrl.u32 %v3367, 7
    %v3369 = vsub.s32 0, %v3368
    %v3370 = vrot.slane %v3359, %v3369
    %v3371 = vlaneseq
    %v3372 = vshrl.u32 %v3371, 7
    %v3373 = vsub.s32 0, %v3372
    %v3374 = vrot.slane %v3366, %v3373
    %v3377 = vadd.f32 %v3342, %v3370
    %v3378 = vadd.f32 %v3343, %v3374
    %v3379 = vtanh.pop %v3377
    %v3380 = vtanh.pop %v3378
    %v3381 = vmul.f32 %v3379, %v1386
    %v3382 = vmul.f32 %v3380, %v1386
    %v3383 = vsel %vm350, %v3381, 0.0
    %3384 = vadd.xlane.f32.xlu0 %v3383
    %v3385 = vpop.xlane.xlu0 %3384
    %v3386 = vsel %vm350, %v3382, 0.0
    %3387 = vadd.xlane.f32.xlu0 %v3386
    %v3388 = vpop.xlane.xlu0 %3387
    %v3389 = vadd.f32 %v3385, %v1526
    %v3390 = vadd.f32 %v3388, %v1533
    %3393 = vset.pattern.permute.xlu0 0
    %3394 = vperm.xlu0 %3393, %v3389
    %v3395 = vpop.permute.xlu0 %3394
    %3396 = vset.pattern.permute.xlu0 0
    %3397 = vperm.xlu0 %3396, %v3390
    %v3398 = vpop.permute.xlu0 %3397
    %v3399 = vlaneseq
    %v3400 = vshrl.u32 %v3399, 7
    %v3401 = vsub.s32 %v1370, %v3400
    %v3402 = vrot.slane %v3395, %v3401
    %v3403 = vlaneseq
    %v3404 = vshrl.u32 %v3403, 7
    %v3405 = vsub.s32 %v1370, %v3404
    %v3406 = vrot.slane %v3398, %v3405
    %v3407 = vsel %vm468, %v3406, %v3402
    %v3409 = vsel %vm1556, %v3407, -inf
    %3410 = vmax.xlane.f32.xlu0 %v3409
    %v3411 = vpop.xlane.xlu0 %3410
    %v3413 = vlaneseq
    %v3414 = vshrl.u32 %v3413, 7
    %v3415 = vsub.s32 0, %v3414
    %v3416 = vrot.slane %v3411, %v3415
    %v3417 = vlaneseq
    %v3418 = vshrl.u32 %v3417, 7
    %v3419 = vsub.s32 1, %v3418
    %v3420 = vrot.slane %v3411, %v3419
    %v3423 = vsub.f32 %v3389, %v3416
    %v3424 = vsub.f32 %v3390, %v3420
    %v3425 = vmul.f32 %v3423, 1.442695
    %v3426 = vpow.pop %v3425
    %v3427 = vmul.f32 %v3424, 1.442695
    %v3428 = vpow.pop %v3427
    %3431 = vset.pattern.permute.xlu0 0
    %3432 = vperm.xlu0 %3431, %v3426
    %v3433 = vpop.permute.xlu0 %3432
    %3434 = vset.pattern.permute.xlu0 0
    %3435 = vperm.xlu0 %3434, %v3428
    %v3436 = vpop.permute.xlu0 %3435
    %v3437 = vlaneseq
    %v3438 = vshrl.u32 %v3437, 7
    %v3439 = vsub.s32 %v1370, %v3438
    %v3440 = vrot.slane %v3433, %v3439
    %v3441 = vlaneseq
    %v3442 = vshrl.u32 %v3441, 7
    %v3443 = vsub.s32 %v1370, %v3442
    %v3444 = vrot.slane %v3436, %v3443
    %v3445 = vsel %vm468, %v3444, %v3440
    %v3447 = vsel %vm1556, %v3445, 0.0
    %3448 = vadd.xlane.f32.xlu0 %v3447
    %v3449 = vpop.xlane.xlu0 %3448
    %v3450 = vrcp.pop %v3449
    %v3452 = vlaneseq
    %v3453 = vshrl.u32 %v3452, 7
    %v3454 = vsub.s32 0, %v3453
    %v3455 = vrot.slane %v3450, %v3454
    %v3456 = vlaneseq
    %v3457 = vshrl.u32 %v3456, 7
    %v3458 = vsub.s32 1, %v3457
    %v3459 = vrot.slane %v3450, %v3458
    %v3462 = vmul.f32 %v3426, %v3455
    %v3463 = vmul.f32 %v3428, %v3459
    %v3464 = vld [vmem:[#allocation26] sm:$0xff]
    %v3465 = vld [vmem:[#allocation26 + $0x8] sm:$0xff]
    %3467 = vset.pattern.permute.xlu0 0
    %3468 = vperm.xlu0 %3467, %v3462
    %v3469 = vpop.permute.xlu0 %3468
    %v3470 = vlaneseq
    %v3471 = vshrl.u32 %v3470, 7
    %v3472 = vsub.s32 %v1370, %v3471
    %v3473 = vrot.slane %v3469, %v3472
    %v3474 = vsel %vm1622, %v3473, 0
    %3476 = vmatprep.subr.mxu0 0.0
    %3477 = vmatpush1.msra.mxu0 %v3464
    %3478 = vmatprep.subr.mxu0 0.0
    %3479 = vmatpush1.msra.mxu0 0.0
    %3480 = vmatprep.subr.mxu0 0.0
    %3481 = vmatpush1.msra.mxu0 0.0
    %3482 = vmatprep.subr.mxu0 0.0
    %3483 = vmatpush1.msra.mxu0 0.0
    %3484 = vmatprep.subr.mxu0 0.0
    %3485 = vmatpush1.msra.mxu0 0.0
    %3486 = vmatprep.subr.mxu0 0.0
    %3487 = vmatpush1.msra.mxu0 0.0
    %3488 = vmatprep.subr.mxu0 0.0
    %3489 = vmatpush1.msra.mxu0 0.0
    %3490 = vmatprep.subr.mxu0 0.0
    %3491 = vmatpush1.msra.mxu0 0.0
    %3492 = vmatprep.subr.mxu0 0.0
    %3493 = vmatpush1.msra.mxu0 0.0
    %3494 = vmatprep.subr.mxu0 0.0
    %3495 = vmatpush1.msra.mxu0 0.0
    %3496 = vmatprep.subr.mxu0 0.0
    %3497 = vmatpush1.msra.mxu0 0.0
    %3498 = vmatprep.subr.mxu0 0.0
    %3499 = vmatpush1.msra.mxu0 0.0
    %3500 = vmatprep.subr.mxu0 0.0
    %3501 = vmatpush1.msra.mxu0 0.0
    %3502 = vmatprep.subr.mxu0 0.0
    %3503 = vmatpush1.msra.mxu0 0.0
    %3504 = vmatprep.subr.mxu0 0.0
    %3505 = vmatpush1.msra.mxu0 0.0
    %3506 = vmatprep.subr.mxu0 0.0
    %3507 = vmatpush1.msra.mxu0 0.0
    %3508 = vmatprep.subr.mxu0 0.0
    %3509 = vmatpush1.msra.mxu0 0.0
    %3510 = vmatprep.subr.mxu0 0.0
    %3511 = vmatpush1.msra.mxu0 0.0
    %3512 = vmatprep.subr.mxu0 0.0
    %3513 = vmatpush1.msra.mxu0 0.0
    %3514 = vmatprep.subr.mxu0 0.0
    %3515 = vmatpush1.msra.mxu0 0.0
    %3516 = vmatprep.subr.mxu0 0.0
    %3517 = vmatpush1.msra.mxu0 0.0
    %3518 = vmatprep.subr.mxu0 0.0
    %3519 = vmatpush1.msra.mxu0 0.0
    %3520 = vmatprep.subr.mxu0 0.0
    %3521 = vmatpush1.msra.mxu0 0.0
    %3522 = vmatprep.subr.mxu0 0.0
    %3523 = vmatpush1.msra.mxu0 0.0
    %3524 = vmatprep.subr.mxu0 0.0
    %3525 = vmatpush1.msra.mxu0 0.0
    %3526 = vmatprep.subr.mxu0 0.0
    %3527 = vmatpush1.msra.mxu0 0.0
    %3528 = vmatprep.subr.mxu0 0.0
    %3529 = vmatpush1.msra.mxu0 0.0
    %3530 = vmatprep.subr.mxu0 0.0
    %3531 = vmatpush1.msra.mxu0 0.0
    %3532 = vmatprep.subr.mxu0 0.0
    %3533 = vmatpush1.msra.mxu0 0.0
    %3534 = vmatprep.subr.mxu0 0.0
    %3535 = vmatpush1.msra.mxu0 0.0
    %3536 = vmatprep.subr.mxu0 0.0
    %3537 = vmatpush1.msra.mxu0 0.0
    %3538 = vmatprep.subr.mxu0 0.0
    %3539 = vmatpush1.msra.mxu0 0.0
    %3540 = vmatprep.mubr.f32.mxu0 0.0
    %3541 = vmatmul.mubr.f32.gmra.mrb[0].mxu0 %v3474
    %v3542 = vpop.f32.mrb[0].mxu0
    %v3543 = vadd.f32 0.0, %v3542
    %v3544 = vpop.f32.mrb[0].mxu0
    %3545 = vdwg.mxu0
    %3547 = vset.pattern.permute.xlu0 0
    %3548 = vperm.xlu0 %3547, %v3463
    %v3549 = vpop.permute.xlu0 %3548
    %v3550 = vlaneseq
    %v3551 = vshrl.u32 %v3550, 7
    %v3552 = vsub.s32 %v1370, %v3551
    %v3553 = vrot.slane %v3549, %v3552
    %v3554 = vsel %vm1622, %v3553, 0
    %3556 = vmatprep.subr.mxu0 0.0
    %3557 = vmatpush1.msra.mxu0 %v3465
    %3558 = vmatprep.subr.mxu0 0.0
    %3559 = vmatpush1.msra.mxu0 0.0
    %3560 = vmatprep.subr.mxu0 0.0
    %3561 = vmatpush1.msra.mxu0 0.0
    %3562 = vmatprep.subr.mxu0 0.0
    %3563 = vmatpush1.msra.mxu0 0.0
    %3564 = vmatprep.subr.mxu0 0.0
    %3565 = vmatpush1.msra.mxu0 0.0
    %3566 = vmatprep.subr.mxu0 0.0
    %3567 = vmatpush1.msra.mxu0 0.0
    %3568 = vmatprep.subr.mxu0 0.0
    %3569 = vmatpush1.msra.mxu0 0.0
    %3570 = vmatprep.subr.mxu0 0.0
    %3571 = vmatpush1.msra.mxu0 0.0
    %3572 = vmatprep.subr.mxu0 0.0
    %3573 = vmatpush1.msra.mxu0 0.0
    %3574 = vmatprep.subr.mxu0 0.0
    %3575 = vmatpush1.msra.mxu0 0.0
    %3576 = vmatprep.subr.mxu0 0.0
    %3577 = vmatpush1.msra.mxu0 0.0
    %3578 = vmatprep.subr.mxu0 0.0
    %3579 = vmatpush1.msra.mxu0 0.0
    %3580 = vmatprep.subr.mxu0 0.0
    %3581 = vmatpush1.msra.mxu0 0.0
    %3582 = vmatprep.subr.mxu0 0.0
    %3583 = vmatpush1.msra.mxu0 0.0
    %3584 = vmatprep.subr.mxu0 0.0
    %3585 = vmatpush1.msra.mxu0 0.0
    %3586 = vmatprep.subr.mxu0 0.0
    %3587 = vmatpush1.msra.mxu0 0.0
    %3588 = vmatprep.subr.mxu0 0.0
    %3589 = vmatpush1.msra.mxu0 0.0
    %3590 = vmatprep.subr.mxu0 0.0
    %3591 = vmatpush1.msra.mxu0 0.0
    %3592 = vmatprep.subr.mxu0 0.0
    %3593 = vmatpush1.msra.mxu0 0.0
    %3594 = vmatprep.subr.mxu0 0.0
    %3595 = vmatpush1.msra.mxu0 0.0
    %3596 = vmatprep.subr.mxu0 0.0
    %3597 = vmatpush1.msra.mxu0 0.0
    %3598 = vmatprep.subr.mxu0 0.0
    %3599 = vmatpush1.msra.mxu0 0.0
    %3600 = vmatprep.subr.mxu0 0.0
    %3601 = vmatpush1.msra.mxu0 0.0
    %3602 = vmatprep.subr.mxu0 0.0
    %3603 = vmatpush1.msra.mxu0 0.0
    %3604 = vmatprep.subr.mxu0 0.0
    %3605 = vmatpush1.msra.mxu0 0.0
    %3606 = vmatprep.subr.mxu0 0.0
    %3607 = vmatpush1.msra.mxu0 0.0
    %3608 = vmatprep.subr.mxu0 0.0
    %3609 = vmatpush1.msra.mxu0 0.0
    %3610 = vmatprep.subr.mxu0 0.0
    %3611 = vmatpush1.msra.mxu0 0.0
    %3612 = vmatprep.subr.mxu0 0.0
    %3613 = vmatpush1.msra.mxu0 0.0
    %3614 = vmatprep.subr.mxu0 0.0
    %3615 = vmatpush1.msra.mxu0 0.0
    %3616 = vmatprep.subr.mxu0 0.0
    %3617 = vmatpush1.msra.mxu0 0.0
    %3618 = vmatprep.subr.mxu0 0.0
    %3619 = vmatpush1.msra.mxu0 0.0
    %3620 = vmatprep.mubr.f32.mxu0 0.0
    %3621 = vmatmul.mubr.f32.gmra.mrb[0].mxu0 %v3554
    %v3622 = vpop.f32.mrb[0].mxu0
    %v3623 = vadd.f32 0.0, %v3622
    %v3624 = vpop.f32.mrb[0].mxu0
    %3625 = vdwg.mxu0
    %v3626 = vpack.c.bf16 %v3543, %v3543
    %v3627 = vpack.c.bf16 %v3623, %v3623
    %v3628 = vld [vmem:[#allocation3 + $0x4] sm:$0x1]
    %v3629 = vld [vmem:[#allocation3 + $0xc] sm:$0x1]
    %v3632 = vunpack.c.l.b16 %v3626
    %v3633 = vunpack.c.l.b16 %v3627
    %v3634 = vrot.slane %v3633, 7
    %v3635 = vsel %vm468, %v3634, %v3632
    %v3636 = vpack.c.b16 %v3635, %v3635
    %v3639 = vrot.slane %v3629, 7
    %v3640 = vsel %vm468, %v3639, %v3628
    %v3643 = vsel %vm350, %v3636, 0
    %3645 = vmatprep.subr.bf16.mxu0 0
    %3646 = vmatpush1.bf16.msra.mxu0 %v1794
    %3647 = vmatprep.subr.bf16.mxu0 0
    %3648 = vmatpush1.bf16.msra.mxu0 %v1795
    %3649 = vmatprep.subr.bf16.mxu0 0
    %3650 = vmatpush1.bf16.msra.mxu0 0
    %3651 = vmatprep.subr.bf16.mxu0 0
    %3652 = vmatpush1.bf16.msra.mxu0 0
    %3653 = vmatprep.subr.bf16.mxu0 0
    %3654 = vmatpush1.bf16.msra.mxu0 0
    %3655 = vmatprep.subr.bf16.mxu0 0
    %3656 = vmatpush1.bf16.msra.mxu0 0
    %3657 = vmatprep.subr.bf16.mxu0 0
    %3658 = vmatpush1.bf16.msra.mxu0 0
    %3659 = vmatprep.subr.bf16.mxu0 0
    %3660 = vmatpush1.bf16.msra.mxu0 0
    %3661 = vmatprep.subr.bf16.mxu0 0
    %3662 = vmatpush1.bf16.msra.mxu0 0
    %3663 = vmatprep.subr.bf16.mxu0 0
    %3664 = vmatpush1.bf16.msra.mxu0 0
    %3665 = vmatprep.subr.bf16.mxu0 0
    %3666 = vmatpush1.bf16.msra.mxu0 0
    %3667 = vmatprep.subr.bf16.mxu0 0
    %3668 = vmatpush1.bf16.msra.mxu0 0
    %3669 = vmatprep.subr.bf16.mxu0 0
    %3670 = vmatpush1.bf16.msra.mxu0 0
    %3671 = vmatprep.subr.bf16.mxu0 0
    %3672 = vmatpush1.bf16.msra.mxu0 0
    %3673 = vmatprep.subr.bf16.mxu0 0
    %3674 = vmatpush1.bf16.msra.mxu0 0
    %3675 = vmatprep.subr.bf16.mxu0 0
    %3676 = vmatpush1.bf16.msra.mxu0 0
    %3677 = vmatprep.mubr.bf16.mxu0 0
    %3678 = vmatmul.mubr.bf16.gmra.mrb[0].mxu0 %v3643
    %v3679 = vpop.f32.mrb[0].mxu0
    %v3680 = vadd.f32 %v3640, %v3679
    %v3681 = vpop.f32.mrb[0].mxu0
    %v3682 = vpop.f32.mrb[0].mxu0
    %v3683 = vpop.f32.mrb[0].mxu0
    %3684 = vdwg.mxu0
    %3686 = vrot.lane.b32.xlu0 %v3341, 96
    %v3687 = vpop.permute.xlu0 %3686
    %v3689 = vadd.f32 %v3680, %v3687
    %v3690 = vxor.u32 %v3689, 2147483648
    %v3691 = vmul.f32 %v3690, 1.442695
    %v3692 = vpow.pop %v3691
    %v3693 = vadd.f32 %v3692, 1.0
    %v3694 = vrcp.pop %v3693
    %v3695 = vmul.f32 1.0, %v3694
    %3696 = vrot.lane.b32.xlu0 %v3341, 32
    %v3697 = vpop.permute.xlu0 %3696
    %v3699 = vmul.f32 %v3695, %v3697
    %3701 = vrot.lane.b32.xlu0 %v3699, 64
    %v3702 = vpop.permute.xlu0 %3701
    %v3704 = vadd.f32 %v3680, %v3702
    %v3705 = vtanh.pop %v3704
    %v3706 = vsub.f32 1.0, %v3695
    %3708 = vrot.lane.b32.xlu0 %v3705, 96
    %v3709 = vpop.permute.xlu0 %3708
    %v3711 = vmul.f32 %v3706, %v3709
    %v3712 = vmul.f32 %v3695, %v3254
    %v3713 = vadd.f32 %v3711, %v3712
    %v3716 = vunpack.c.l.s4 1966171168
    %v3717 = vunpack.c.0.s8 %v3716
    %v3718 = vlaneseq
    %v3719 = vshrl.u32 %v3718, 7
    %v3720 = vsub.s32 %v3717, %v3719
    %v3721 = vrot.slane %v3713, %v3720
    %v3722 = vcombine.high %v3721, %v3721
    %v3724 = vunpack.c.l.s4 1966171168
    %v3725 = vunpack.c.0.s8 %v3724
    %v3726 = vlaneseq
    %v3727 = vshrl.u32 %v3726, 7
    %v3728 = vsub.s32 %v3725, %v3727
    %v3729 = vrot.slane %v3721, %v3728
    %v3731 = vunpack.c.l.s4 1966171168
    %v3732 = vunpack.c.0.s8 %v3731
    %v3733 = vlaneseq
    %v3734 = vshrl.u32 %v3733, 7
    %v3735 = vsub.s32 %v3732, %v3734
    %v3736 = vrot.slane %v3722, %v3735
    %v3737 = vlaneseq
    %v3738 = vshrl.u32 %v3737, 7
    %v3739 = vsub.s32 0, %v3738
    %v3740 = vrot.slane %v3729, %v3739
    %v3741 = vlaneseq
    %v3742 = vshrl.u32 %v3741, 7
    %v3743 = vsub.s32 0, %v3742
    %v3744 = vrot.slane %v3736, %v3743
    %3745 = vrot.lane.b32.xlu0 %v3740, 96
    %v3746 = vpop.permute.xlu0 %3745
    %3747 = vrot.lane.b32.xlu0 %v3744, 96
    %v3748 = vpop.permute.xlu0 %3747
    %3751 = vst.msk [vmem:[#allocation5 + $0x4] sm:$0x1] %vm458, %v3746
    %3752 = vst.msk [vmem:[#allocation5 + $0xc] sm:$0x1] %vm458, %v3748
    %v3753 = vpack.c.bf16 %v3713, %v3713
    %3755 = vrot.lane.b32.xlu0 %v3753, 96
    %v3756 = vpop.permute.xlu0 %3755
    %v3758 = vsel %vm350, %v3756, 0
    %3760 = vmatprep.subr.bf16.mxu0 0
    %3761 = vmatpush1.bf16.msra.mxu0 %v1416
    %3762 = vmatprep.subr.bf16.mxu0 0
    %3763 = vmatpush1.bf16.msra.mxu0 %v1417
    %3764 = vmatprep.subr.bf16.mxu0 0
    %3765 = vmatpush1.bf16.msra.mxu0 0
    %3766 = vmatprep.subr.bf16.mxu0 0
    %3767 = vmatpush1.bf16.msra.mxu0 0
    %3768 = vmatprep.subr.bf16.mxu0 0
    %3769 = vmatpush1.bf16.msra.mxu0 0
    %3770 = vmatprep.subr.bf16.mxu0 0
    %3771 = vmatpush1.bf16.msra.mxu0 0
    %3772 = vmatprep.subr.bf16.mxu0 0
    %3773 = vmatpush1.bf16.msra.mxu0 0
    %3774 = vmatprep.subr.bf16.mxu0 0
    %3775 = vmatpush1.bf16.msra.mxu0 0
    %3776 = vmatprep.subr.bf16.mxu0 0
    %3777 = vmatpush1.bf16.msra.mxu0 0
    %3778 = vmatprep.subr.bf16.mxu0 0
    %3779 = vmatpush1.bf16.msra.mxu0 0
    %3780 = vmatprep.subr.bf16.mxu0 0
    %3781 = vmatpush1.bf16.msra.mxu0 0
    %3782 = vmatprep.subr.bf16.mxu0 0
    %3783 = vmatpush1.bf16.msra.mxu0 0
    %3784 = vmatprep.subr.bf16.mxu0 0
    %3785 = vmatpush1.bf16.msra.mxu0 0
    %3786 = vmatprep.subr.bf16.mxu0 0
    %3787 = vmatpush1.bf16.msra.mxu0 0
    %3788 = vmatprep.subr.bf16.mxu0 0
    %3789 = vmatpush1.bf16.msra.mxu0 0
    %3790 = vmatprep.subr.bf16.mxu0 0
    %3791 = vmatpush1.bf16.msra.mxu0 0
    %3792 = vmatprep.mubr.bf16.mxu0 0
    %3793 = vmatmul.mubr.bf16.gmra.mrb[0].mxu0 %v3758
    %v3794 = vpop.f32.mrb[0].mxu0
    %v3795 = vadd.f32 0.0, %v3794
    %v3796 = vpop.f32.mrb[0].mxu0
    %v3797 = vpop.f32.mrb[0].mxu0
    %v3798 = vpop.f32.mrb[0].mxu0
    %3799 = vdwg.mxu0
    %v3800 = vadd.f32 %v3795, %v1469
    %v3801 = vld [vmem:[#allocation4] sm:$0xff]
    %v3802 = vld [vmem:[#allocation4 + $0x8] sm:$0xff]
    %v3805 = vunpack.c.l.s4 1966171168
    %v3806 = vunpack.c.0.s8 %v3805
    %v3807 = vlaneseq
    %v3808 = vshrl.u32 %v3807, 7
    %v3809 = vsub.s32 %v3806, %v3808
    %v3810 = vrot.slane %v3795, %v3809
    %v3811 = vcombine.high %v3810, %v3810
    %v3813 = vunpack.c.l.s4 1966171168
    %v3814 = vunpack.c.0.s8 %v3813
    %v3815 = vlaneseq
    %v3816 = vshrl.u32 %v3815, 7
    %v3817 = vsub.s32 %v3814, %v3816
    %v3818 = vrot.slane %v3810, %v3817
    %v3820 = vunpack.c.l.s4 1966171168
    %v3821 = vunpack.c.0.s8 %v3820
    %v3822 = vlaneseq
    %v3823 = vshrl.u32 %v3822, 7
    %v3824 = vsub.s32 %v3821, %v3823
    %v3825 = vrot.slane %v3811, %v3824
    %v3826 = vlaneseq
    %v3827 = vshrl.u32 %v3826, 7
    %v3828 = vsub.s32 0, %v3827
    %v3829 = vrot.slane %v3818, %v3828
    %v3830 = vlaneseq
    %v3831 = vshrl.u32 %v3830, 7
    %v3832 = vsub.s32 0, %v3831
    %v3833 = vrot.slane %v3825, %v3832
    %v3836 = vadd.f32 %v3801, %v3829
    %v3837 = vadd.f32 %v3802, %v3833
    %v3838 = vtanh.pop %v3836
    %v3839 = vtanh.pop %v3837
    %v3840 = vmul.f32 %v3838, %v1386
    %v3841 = vmul.f32 %v3839, %v1386
    %v3842 = vsel %vm350, %v3840, 0.0
    %3843 = vadd.xlane.f32.xlu0 %v3842
    %v3844 = vpop.xlane.xlu0 %3843
    %v3845 = vsel %vm350, %v3841, 0.0
    %3846 = vadd.xlane.f32.xlu0 %v3845
    %v3847 = vpop.xlane.xlu0 %3846
    %v3848 = vadd.f32 %v3844, %v1526
    %v3849 = vadd.f32 %v3847, %v1533
    %3852 = vset.pattern.permute.xlu0 0
    %3853 = vperm.xlu0 %3852, %v3848
    %v3854 = vpop.permute.xlu0 %3853
    %3855 = vset.pattern.permute.xlu0 0
    %3856 = vperm.xlu0 %3855, %v3849
    %v3857 = vpop.permute.xlu0 %3856
    %v3858 = vlaneseq
    %v3859 = vshrl.u32 %v3858, 7
    %v3860 = vsub.s32 %v1370, %v3859
    %v3861 = vrot.slane %v3854, %v3860
    %v3862 = vlaneseq
    %v3863 = vshrl.u32 %v3862, 7
    %v3864 = vsub.s32 %v1370, %v3863
    %v3865 = vrot.slane %v3857, %v3864
    %v3866 = vsel %vm468, %v3865, %v3861
    %v3868 = vsel %vm1556, %v3866, -inf
    %3869 = vmax.xlane.f32.xlu0 %v3868
    %v3870 = vpop.xlane.xlu0 %3869
    %v3872 = vlaneseq
    %v3873 = vshrl.u32 %v3872, 7
    %v3874 = vsub.s32 0, %v3873
    %v3875 = vrot.slane %v3870, %v3874
    %v3876 = vlaneseq
    %v3877 = vshrl.u32 %v3876, 7
    %v3878 = vsub.s32 1, %v3877
    %v3879 = vrot.slane %v3870, %v3878
    %v3882 = vsub.f32 %v3848, %v3875
    %v3883 = vsub.f32 %v3849, %v3879
    %v3884 = vmul.f32 %v3882, 1.442695
    %v3885 = vpow.pop %v3884
    %v3886 = vmul.f32 %v3883, 1.442695
    %v3887 = vpow.pop %v3886
    %3890 = vset.pattern.permute.xlu0 0
    %3891 = vperm.xlu0 %3890, %v3885
    %v3892 = vpop.permute.xlu0 %3891
    %3893 = vset.pattern.permute.xlu0 0
    %3894 = vperm.xlu0 %3893, %v3887
    %v3895 = vpop.permute.xlu0 %3894
    %v3896 = vlaneseq
    %v3897 = vshrl.u32 %v3896, 7
    %v3898 = vsub.s32 %v1370, %v3897
    %v3899 = vrot.slane %v3892, %v3898
    %v3900 = vlaneseq
    %v3901 = vshrl.u32 %v3900, 7
    %v3902 = vsub.s32 %v1370, %v3901
    %v3903 = vrot.slane %v3895, %v3902
    %v3904 = vsel %vm468, %v3903, %v3899
    %v3906 = vsel %vm1556, %v3904, 0.0
    %3907 = vadd.xlane.f32.xlu0 %v3906
    %v3908 = vpop.xlane.xlu0 %3907
    %v3909 = vrcp.pop %v3908
    %v3911 = vlaneseq
    %v3912 = vshrl.u32 %v3911, 7
    %v3913 = vsub.s32 0, %v3912
    %v3914 = vrot.slane %v3909, %v3913
    %v3915 = vlaneseq
    %v3916 = vshrl.u32 %v3915, 7
    %v3917 = vsub.s32 1, %v3916
    %v3918 = vrot.slane %v3909, %v3917
    %v3921 = vmul.f32 %v3885, %v3914
    %v3922 = vmul.f32 %v3887, %v3918
    %v3923 = vld [vmem:[#allocation26] sm:$0xff]
    %v3924 = vld [vmem:[#allocation26 + $0x8] sm:$0xff]
    %3926 = vset.pattern.permute.xlu0 0
    %3927 = vperm.xlu0 %3926, %v3921
    %v3928 = vpop.permute.xlu0 %3927
    %v3929 = vlaneseq
    %v3930 = vshrl.u32 %v3929, 7
    %v3931 = vsub.s32 %v1370, %v3930
    %v3932 = vrot.slane %v3928, %v3931
    %v3933 = vsel %vm1622, %v3932, 0
    %3935 = vmatprep.subr.mxu0 0.0
    %3936 = vmatpush1.msra.mxu0 %v3923
    %3937 = vmatprep.subr.mxu0 0.0
    %3938 = vmatpush1.msra.mxu0 0.0
    %3939 = vmatprep.subr.mxu0 0.0
    %3940 = vmatpush1.msra.mxu0 0.0
    %3941 = vmatprep.subr.mxu0 0.0
    %3942 = vmatpush1.msra.mxu0 0.0
    %3943 = vmatprep.subr.mxu0 0.0
    %3944 = vmatpush1.msra.mxu0 0.0
    %3945 = vmatprep.subr.mxu0 0.0
    %3946 = vmatpush1.msra.mxu0 0.0
    %3947 = vmatprep.subr.mxu0 0.0
    %3948 = vmatpush1.msra.mxu0 0.0
    %3949 = vmatprep.subr.mxu0 0.0
    %3950 = vmatpush1.msra.mxu0 0.0
    %3951 = vmatprep.subr.mxu0 0.0
    %3952 = vmatpush1.msra.mxu0 0.0
    %3953 = vmatprep.subr.mxu0 0.0
    %3954 = vmatpush1.msra.mxu0 0.0
    %3955 = vmatprep.subr.mxu0 0.0
    %3956 = vmatpush1.msra.mxu0 0.0
    %3957 = vmatprep.subr.mxu0 0.0
    %3958 = vmatpush1.msra.mxu0 0.0
    %3959 = vmatprep.subr.mxu0 0.0
    %3960 = vmatpush1.msra.mxu0 0.0
    %3961 = vmatprep.subr.mxu0 0.0
    %3962 = vmatpush1.msra.mxu0 0.0
    %3963 = vmatprep.subr.mxu0 0.0
    %3964 = vmatpush1.msra.mxu0 0.0
    %3965 = vmatprep.subr.mxu0 0.0
    %3966 = vmatpush1.msra.mxu0 0.0
    %3967 = vmatprep.subr.mxu0 0.0
    %3968 = vmatpush1.msra.mxu0 0.0
    %3969 = vmatprep.subr.mxu0 0.0
    %3970 = vmatpush1.msra.mxu0 0.0
    %3971 = vmatprep.subr.mxu0 0.0
    %3972 = vmatpush1.msra.mxu0 0.0
    %3973 = vmatprep.subr.mxu0 0.0
    %3974 = vmatpush1.msra.mxu0 0.0
    %3975 = vmatprep.subr.mxu0 0.0
    %3976 = vmatpush1.msra.mxu0 0.0
    %3977 = vmatprep.subr.mxu0 0.0
    %3978 = vmatpush1.msra.mxu0 0.0
    %3979 = vmatprep.subr.mxu0 0.0
    %3980 = vmatpush1.msra.mxu0 0.0
    %3981 = vmatprep.subr.mxu0 0.0
    %3982 = vmatpush1.msra.mxu0 0.0
    %3983 = vmatprep.subr.mxu0 0.0
    %3984 = vmatpush1.msra.mxu0 0.0
    %3985 = vmatprep.subr.mxu0 0.0
    %3986 = vmatpush1.msra.mxu0 0.0
    %3987 = vmatprep.subr.mxu0 0.0
    %3988 = vmatpush1.msra.mxu0 0.0
    %3989 = vmatprep.subr.mxu0 0.0
    %3990 = vmatpush1.msra.mxu0 0.0
    %3991 = vmatprep.subr.mxu0 0.0
    %3992 = vmatpush1.msra.mxu0 0.0
    %3993 = vmatprep.subr.mxu0 0.0
    %3994 = vmatpush1.msra.mxu0 0.0
    %3995 = vmatprep.subr.mxu0 0.0
    %3996 = vmatpush1.msra.mxu0 0.0
    %3997 = vmatprep.subr.mxu0 0.0
    %3998 = vmatpush1.msra.mxu0 0.0
    %3999 = vmatprep.mubr.f32.mxu0 0.0
    %4000 = vmatmul.mubr.f32.gmra.mrb[0].mxu0 %v3933
    %v4001 = vpop.f32.mrb[0].mxu0
    %v4002 = vadd.f32 0.0, %v4001
    %v4003 = vpop.f32.mrb[0].mxu0
    %4004 = vdwg.mxu0
    %4006 = vset.pattern.permute.xlu0 0
    %4007 = vperm.xlu0 %4006, %v3922
    %v4008 = vpop.permute.xlu0 %4007
    %v4009 = vlaneseq
    %v4010 = vshrl.u32 %v4009, 7
    %v4011 = vsub.s32 %v1370, %v4010
    %v4012 = vrot.slane %v4008, %v4011
    %v4013 = vsel %vm1622, %v4012, 0
    %4015 = vmatprep.subr.mxu0 0.0
    %4016 = vmatpush1.msra.mxu0 %v3924
    %4017 = vmatprep.subr.mxu0 0.0
    %4018 = vmatpush1.msra.mxu0 0.0
    %4019 = vmatprep.subr.mxu0 0.0
    %4020 = vmatpush1.msra.mxu0 0.0
    %4021 = vmatprep.subr.mxu0 0.0
    %4022 = vmatpush1.msra.mxu0 0.0
    %4023 = vmatprep.subr.mxu0 0.0
    %4024 = vmatpush1.msra.mxu0 0.0
    %4025 = vmatprep.subr.mxu0 0.0
    %4026 = vmatpush1.msra.mxu0 0.0
    %4027 = vmatprep.subr.mxu0 0.0
    %4028 = vmatpush1.msra.mxu0 0.0
    %4029 = vmatprep.subr.mxu0 0.0
    %4030 = vmatpush1.msra.mxu0 0.0
    %4031 = vmatprep.subr.mxu0 0.0
    %4032 = vmatpush1.msra.mxu0 0.0
    %4033 = vmatprep.subr.mxu0 0.0
    %4034 = vmatpush1.msra.mxu0 0.0
    %4035 = vmatprep.subr.mxu0 0.0
    %4036 = vmatpush1.msra.mxu0 0.0
    %4037 = vmatprep.subr.mxu0 0.0
    %4038 = vmatpush1.msra.mxu0 0.0
    %4039 = vmatprep.subr.mxu0 0.0
    %4040 = vmatpush1.msra.mxu0 0.0
    %4041 = vmatprep.subr.mxu0 0.0
    %4042 = vmatpush1.msra.mxu0 0.0
    %4043 = vmatprep.subr.mxu0 0.0
    %4044 = vmatpush1.msra.mxu0 0.0
    %4045 = vmatprep.subr.mxu0 0.0
    %4046 = vmatpush1.msra.mxu0 0.0
    %4047 = vmatprep.subr.mxu0 0.0
    %4048 = vmatpush1.msra.mxu0 0.0
    %4049 = vmatprep.subr.mxu0 0.0
    %4050 = vmatpush1.msra.mxu0 0.0
    %4051 = vmatprep.subr.mxu0 0.0
    %4052 = vmatpush1.msra.mxu0 0.0
    %4053 = vmatprep.subr.mxu0 0.0
    %4054 = vmatpush1.msra.mxu0 0.0
    %4055 = vmatprep.subr.mxu0 0.0
    %4056 = vmatpush1.msra.mxu0 0.0
    %4057 = vmatprep.subr.mxu0 0.0
    %4058 = vmatpush1.msra.mxu0 0.0
    %4059 = vmatprep.subr.mxu0 0.0
    %4060 = vmatpush1.msra.mxu0 0.0
    %4061 = vmatprep.subr.mxu0 0.0
    %4062 = vmatpush1.msra.mxu0 0.0
    %4063 = vmatprep.subr.mxu0 0.0
    %4064 = vmatpush1.msra.mxu0 0.0
    %4065 = vmatprep.subr.mxu0 0.0
    %4066 = vmatpush1.msra.mxu0 0.0
    %4067 = vmatprep.subr.mxu0 0.0
    %4068 = vmatpush1.msra.mxu0 0.0
    %4069 = vmatprep.subr.mxu0 0.0
    %4070 = vmatpush1.msra.mxu0 0.0
    %4071 = vmatprep.subr.mxu0 0.0
    %4072 = vmatpush1.msra.mxu0 0.0
    %4073 = vmatprep.subr.mxu0 0.0
    %4074 = vmatpush1.msra.mxu0 0.0
    %4075 = vmatprep.subr.mxu0 0.0
    %4076 = vmatpush1.msra.mxu0 0.0
    %4077 = vmatprep.subr.mxu0 0.0
    %4078 = vmatpush1.msra.mxu0 0.0
    %4079 = vmatprep.mubr.f32.mxu0 0.0
    %4080 = vmatmul.mubr.f32.gmra.mrb[0].mxu0 %v4013
    %v4081 = vpop.f32.mrb[0].mxu0
    %v4082 = vadd.f32 0.0, %v4081
    %v4083 = vpop.f32.mrb[0].mxu0
    %4084 = vdwg.mxu0
    %v4085 = vpack.c.bf16 %v4002, %v4002
    %v4086 = vpack.c.bf16 %v4082, %v4082
    %v4087 = vld [vmem:[#allocation3 + $0x5] sm:$0x1]
    %v4088 = vld [vmem:[#allocation3 + $0xd] sm:$0x1]
    %v4091 = vunpack.c.l.b16 %v4085
    %v4092 = vunpack.c.l.b16 %v4086
    %v4093 = vrot.slane %v4092, 7
    %v4094 = vsel %vm468, %v4093, %v4091
    %v4095 = vpack.c.b16 %v4094, %v4094
    %v4098 = vrot.slane %v4088, 7
    %v4099 = vsel %vm468, %v4098, %v4087
    %v4102 = vsel %vm350, %v4095, 0
    %4104 = vmatprep.subr.bf16.mxu0 0
    %4105 = vmatpush1.bf16.msra.mxu0 %v1794
    %4106 = vmatprep.subr.bf16.mxu0 0
    %4107 = vmatpush1.bf16.msra.mxu0 %v1795
    %4108 = vmatprep.subr.bf16.mxu0 0
    %4109 = vmatpush1.bf16.msra.mxu0 0
    %4110 = vmatprep.subr.bf16.mxu0 0
    %4111 = vmatpush1.bf16.msra.mxu0 0
    %4112 = vmatprep.subr.bf16.mxu0 0
    %4113 = vmatpush1.bf16.msra.mxu0 0
    %4114 = vmatprep.subr.bf16.mxu0 0
    %4115 = vmatpush1.bf16.msra.mxu0 0
    %4116 = vmatprep.subr.bf16.mxu0 0
    %4117 = vmatpush1.bf16.msra.mxu0 0
    %4118 = vmatprep.subr.bf16.mxu0 0
    %4119 = vmatpush1.bf16.msra.mxu0 0
    %4120 = vmatprep.subr.bf16.mxu0 0
    %4121 = vmatpush1.bf16.msra.mxu0 0
    %4122 = vmatprep.subr.bf16.mxu0 0
    %4123 = vmatpush1.bf16.msra.mxu0 0
    %4124 = vmatprep.subr.bf16.mxu0 0
    %4125 = vmatpush1.bf16.msra.mxu0 0
    %4126 = vmatprep.subr.bf16.mxu0 0
    %4127 = vmatpush1.bf16.msra.mxu0 0
    %4128 = vmatprep.subr.bf16.mxu0 0
    %4129 = vmatpush1.bf16.msra.mxu0 0
    %4130 = vmatprep.subr.bf16.mxu0 0
    %4131 = vmatpush1.bf16.msra.mxu0 0
    %4132 = vmatprep.subr.bf16.mxu0 0
    %4133 = vmatpush1.bf16.msra.mxu0 0
    %4134 = vmatprep.subr.bf16.mxu0 0
    %4135 = vmatpush1.bf16.msra.mxu0 0
    %4136 = vmatprep.mubr.bf16.mxu0 0
    %4137 = vmatmul.mubr.bf16.gmra.mrb[0].mxu0 %v4102
    %v4138 = vpop.f32.mrb[0].mxu0
    %v4139 = vadd.f32 %v4099, %v4138
    %v4140 = vpop.f32.mrb[0].mxu0
    %v4141 = vpop.f32.mrb[0].mxu0
    %v4142 = vpop.f32.mrb[0].mxu0
    %4143 = vdwg.mxu0
    %4145 = vrot.lane.b32.xlu0 %v3800, 96
    %v4146 = vpop.permute.xlu0 %4145
    %v4148 = vadd.f32 %v4139, %v4146
    %v4149 = vxor.u32 %v4148, 2147483648
    %v4150 = vmul.f32 %v4149, 1.442695
    %v4151 = vpow.pop %v4150
    %v4152 = vadd.f32 %v4151, 1.0
    %v4153 = vrcp.pop %v4152
    %v4154 = vmul.f32 1.0, %v4153
    %4155 = vrot.lane.b32.xlu0 %v3800, 32
    %v4156 = vpop.permute.xlu0 %4155
    %v4158 = vmul.f32 %v4154, %v4156
    %4160 = vrot.lane.b32.xlu0 %v4158, 64
    %v4161 = vpop.permute.xlu0 %4160
    %v4163 = vadd.f32 %v4139, %v4161
    %v4164 = vtanh.pop %v4163
    %v4165 = vsub.f32 1.0, %v4154
    %4167 = vrot.lane.b32.xlu0 %v4164, 96
    %v4168 = vpop.permute.xlu0 %4167
    %v4170 = vmul.f32 %v4165, %v4168
    %v4171 = vmul.f32 %v4154, %v3713
    %v4172 = vadd.f32 %v4170, %v4171
    %v4175 = vunpack.c.l.s4 1966171168
    %v4176 = vunpack.c.0.s8 %v4175
    %v4177 = vlaneseq
    %v4178 = vshrl.u32 %v4177, 7
    %v4179 = vsub.s32 %v4176, %v4178
    %v4180 = vrot.slane %v4172, %v4179
    %v4181 = vcombine.high %v4180, %v4180
    %v4183 = vunpack.c.l.s4 1966171168
    %v4184 = vunpack.c.0.s8 %v4183
    %v4185 = vlaneseq
    %v4186 = vshrl.u32 %v4185, 7
    %v4187 = vsub.s32 %v4184, %v4186
    %v4188 = vrot.slane %v4180, %v4187
    %v4190 = vunpack.c.l.s4 1966171168
    %v4191 = vunpack.c.0.s8 %v4190
    %v4192 = vlaneseq
    %v4193 = vshrl.u32 %v4192, 7
    %v4194 = vsub.s32 %v4191, %v4193
    %v4195 = vrot.slane %v4181, %v4194
    %v4196 = vlaneseq
    %v4197 = vshrl.u32 %v4196, 7
    %v4198 = vsub.s32 0, %v4197
    %v4199 = vrot.slane %v4188, %v4198
    %v4200 = vlaneseq
    %v4201 = vshrl.u32 %v4200, 7
    %v4202 = vsub.s32 0, %v4201
    %v4203 = vrot.slane %v4195, %v4202
    %4204 = vrot.lane.b32.xlu0 %v4199, 96
    %v4205 = vpop.permute.xlu0 %4204
    %4206 = vrot.lane.b32.xlu0 %v4203, 96
    %v4207 = vpop.permute.xlu0 %4206
    %4210 = vst.msk [vmem:[#allocation5 + $0x5] sm:$0x1] %vm458, %v4205
    %4211 = vst.msk [vmem:[#allocation5 + $0xd] sm:$0x1] %vm458, %v4207
    %v4212 = vpack.c.bf16 %v4172, %v4172
    %4214 = vrot.lane.b32.xlu0 %v4212, 96
    %v4215 = vpop.permute.xlu0 %4214
    %v4217 = vsel %vm350, %v4215, 0
    %4219 = vmatprep.subr.bf16.mxu0 0
    %4220 = vmatpush1.bf16.msra.mxu0 %v1416
    %4221 = vmatprep.subr.bf16.mxu0 0
    %4222 = vmatpush1.bf16.msra.mxu0 %v1417
    %4223 = vmatprep.subr.bf16.mxu0 0
    %4224 = vmatpush1.bf16.msra.mxu0 0
    %4225 = vmatprep.subr.bf16.mxu0 0
    %4226 = vmatpush1.bf16.msra.mxu0 0
    %4227 = vmatprep.subr.bf16.mxu0 0
    %4228 = vmatpush1.bf16.msra.mxu0 0
    %4229 = vmatprep.subr.bf16.mxu0 0
    %4230 = vmatpush1.bf16.msra.mxu0 0
    %4231 = vmatprep.subr.bf16.mxu0 0
    %4232 = vmatpush1.bf16.msra.mxu0 0
    %4233 = vmatprep.subr.bf16.mxu0 0
    %4234 = vmatpush1.bf16.msra.mxu0 0
    %4235 = vmatprep.subr.bf16.mxu0 0
    %4236 = vmatpush1.bf16.msra.mxu0 0
    %4237 = vmatprep.subr.bf16.mxu0 0
    %4238 = vmatpush1.bf16.msra.mxu0 0
    %4239 = vmatprep.subr.bf16.mxu0 0
    %4240 = vmatpush1.bf16.msra.mxu0 0
    %4241 = vmatprep.subr.bf16.mxu0 0
    %4242 = vmatpush1.bf16.msra.mxu0 0
    %4243 = vmatprep.subr.bf16.mxu0 0
    %4244 = vmatpush1.bf16.msra.mxu0 0
    %4245 = vmatprep.subr.bf16.mxu0 0
    %4246 = vmatpush1.bf16.msra.mxu0 0
    %4247 = vmatprep.subr.bf16.mxu0 0
    %4248 = vmatpush1.bf16.msra.mxu0 0
    %4249 = vmatprep.subr.bf16.mxu0 0
    %4250 = vmatpush1.bf16.msra.mxu0 0
    %4251 = vmatprep.mubr.bf16.mxu0 0
    %4252 = vmatmul.mubr.bf16.gmra.mrb[0].mxu0 %v4217
    %v4253 = vpop.f32.mrb[0].mxu0
    %v4254 = vadd.f32 0.0, %v4253
    %v4255 = vpop.f32.mrb[0].mxu0
    %v4256 = vpop.f32.mrb[0].mxu0
    %v4257 = vpop.f32.mrb[0].mxu0
    %4258 = vdwg.mxu0
    %v4259 = vadd.f32 %v4254, %v1469
    %v4260 = vld [vmem:[#allocation4] sm:$0xff]
    %v4261 = vld [vmem:[#allocation4 + $0x8] sm:$0xff]
    %v4264 = vunpack.c.l.s4 1966171168
    %v4265 = vunpack.c.0.s8 %v4264
    %v4266 = vlaneseq
    %v4267 = vshrl.u32 %v4266, 7
    %v4268 = vsub.s32 %v4265, %v4267
    %v4269 = vrot.slane %v4254, %v4268
    %v4270 = vcombine.high %v4269, %v4269
    %v4272 = vunpack.c.l.s4 1966171168
    %v4273 = vunpack.c.0.s8 %v4272
    %v4274 = vlaneseq
    %v4275 = vshrl.u32 %v4274, 7
    %v4276 = vsub.s32 %v4273, %v4275
    %v4277 = vrot.slane %v4269, %v4276
    %v4279 = vunpack.c.l.s4 1966171168
    %v4280 = vunpack.c.0.s8 %v4279
    %v4281 = vlaneseq
    %v4282 = vshrl.u32 %v4281, 7
    %v4283 = vsub.s32 %v4280, %v4282
    %v4284 = vrot.slane %v4270, %v4283
    %v4285 = vlaneseq
    %v4286 = vshrl.u32 %v4285, 7
    %v4287 = vsub.s32 0, %v4286
    %v4288 = vrot.slane %v4277, %v4287
    %v4289 = vlaneseq
    %v4290 = vshrl.u32 %v4289, 7
    %v4291 = vsub.s32 0, %v4290
    %v4292 = vrot.slane %v4284, %v4291
    %v4295 = vadd.f32 %v4260, %v4288
    %v4296 = vadd.f32 %v4261, %v4292
    %v4297 = vtanh.pop %v4295
    %v4298 = vtanh.pop %v4296
    %v4299 = vmul.f32 %v4297, %v1386
    %v4300 = vmul.f32 %v4298, %v1386
    %v4301 = vsel %vm350, %v4299, 0.0
    %4302 = vadd.xlane.f32.xlu0 %v4301
    %v4303 = vpop.xlane.xlu0 %4302
    %v4304 = vsel %vm350, %v4300, 0.0
    %4305 = vadd.xlane.f32.xlu0 %v4304
    %v4306 = vpop.xlane.xlu0 %4305
    %v4307 = vadd.f32 %v4303, %v1526
    %v4308 = vadd.f32 %v4306, %v1533
    %4311 = vset.pattern.permute.xlu0 0
    %4312 = vperm.xlu0 %4311, %v4307
    %v4313 = vpop.permute.xlu0 %4312
    %4314 = vset.pattern.permute.xlu0 0
    %4315 = vperm.xlu0 %4314, %v4308
    %v4316 = vpop.permute.xlu0 %4315
    %v4317 = vlaneseq
    %v4318 = vshrl.u32 %v4317, 7
    %v4319 = vsub.s32 %v1370, %v4318
    %v4320 = vrot.slane %v4313, %v4319
    %v4321 = vlaneseq
    %v4322 = vshrl.u32 %v4321, 7
    %v4323 = vsub.s32 %v1370, %v4322
    %v4324 = vrot.slane %v4316, %v4323
    %v4325 = vsel %vm468, %v4324, %v4320
    %v4327 = vsel %vm1556, %v4325, -inf
    %4328 = vmax.xlane.f32.xlu0 %v4327
    %v4329 = vpop.xlane.xlu0 %4328
    %v4331 = vlaneseq
    %v4332 = vshrl.u32 %v4331, 7
    %v4333 = vsub.s32 0, %v4332
    %v4334 = vrot.slane %v4329, %v4333
    %v4335 = vlaneseq
    %v4336 = vshrl.u32 %v4335, 7
    %v4337 = vsub.s32 1, %v4336
    %v4338 = vrot.slane %v4329, %v4337
    %v4341 = vsub.f32 %v4307, %v4334
    %v4342 = vsub.f32 %v4308, %v4338
    %v4343 = vmul.f32 %v4341, 1.442695
    %v4344 = vpow.pop %v4343
    %v4345 = vmul.f32 %v4342, 1.442695
    %v4346 = vpow.pop %v4345
    %4349 = vset.pattern.permute.xlu0 0
    %4350 = vperm.xlu0 %4349, %v4344
    %v4351 = vpop.permute.xlu0 %4350
    %4352 = vset.pattern.permute.xlu0 0
    %4353 = vperm.xlu0 %4352, %v4346
    %v4354 = vpop.permute.xlu0 %4353
    %v4355 = vlaneseq
    %v4356 = vshrl.u32 %v4355, 7
    %v4357 = vsub.s32 %v1370, %v4356
    %v4358 = vrot.slane %v4351, %v4357
    %v4359 = vlaneseq
    %v4360 = vshrl.u32 %v4359, 7
    %v4361 = vsub.s32 %v1370, %v4360
    %v4362 = vrot.slane %v4354, %v4361
    %v4363 = vsel %vm468, %v4362, %v4358
    %v4365 = vsel %vm1556, %v4363, 0.0
    %4366 = vadd.xlane.f32.xlu0 %v4365
    %v4367 = vpop.xlane.xlu0 %4366
    %v4368 = vrcp.pop %v4367
    %v4370 = vlaneseq
    %v4371 = vshrl.u32 %v4370, 7
    %v4372 = vsub.s32 0, %v4371
    %v4373 = vrot.slane %v4368, %v4372
    %v4374 = vlaneseq
    %v4375 = vshrl.u32 %v4374, 7
    %v4376 = vsub.s32 1, %v4375
    %v4377 = vrot.slane %v4368, %v4376
    %v4380 = vmul.f32 %v4344, %v4373
    %v4381 = vmul.f32 %v4346, %v4377
    %v4382 = vld [vmem:[#allocation26] sm:$0xff]
    %v4383 = vld [vmem:[#allocation26 + $0x8] sm:$0xff]
    %4385 = vset.pattern.permute.xlu0 0
    %4386 = vperm.xlu0 %4385, %v4380
    %v4387 = vpop.permute.xlu0 %4386
    %v4388 = vlaneseq
    %v4389 = vshrl.u32 %v4388, 7
    %v4390 = vsub.s32 %v1370, %v4389
    %v4391 = vrot.slane %v4387, %v4390
    %v4392 = vsel %vm1622, %v4391, 0
    %4394 = vmatprep.subr.mxu0 0.0
    %4395 = vmatpush1.msra.mxu0 %v4382
    %4396 = vmatprep.subr.mxu0 0.0
    %4397 = vmatpush1.msra.mxu0 0.0
    %4398 = vmatprep.subr.mxu0 0.0
    %4399 = vmatpush1.msra.mxu0 0.0
    %4400 = vmatprep.subr.mxu0 0.0
    %4401 = vmatpush1.msra.mxu0 0.0
    %4402 = vmatprep.subr.mxu0 0.0
    %4403 = vmatpush1.msra.mxu0 0.0
    %4404 = vmatprep.subr.mxu0 0.0
    %4405 = vmatpush1.msra.mxu0 0.0
    %4406 = vmatprep.subr.mxu0 0.0
    %4407 = vmatpush1.msra.mxu0 0.0
    %4408 = vmatprep.subr.mxu0 0.0
    %4409 = vmatpush1.msra.mxu0 0.0
    %4410 = vmatprep.subr.mxu0 0.0
    %4411 = vmatpush1.msra.mxu0 0.0
    %4412 = vmatprep.subr.mxu0 0.0
    %4413 = vmatpush1.msra.mxu0 0.0
    %4414 = vmatprep.subr.mxu0 0.0
    %4415 = vmatpush1.msra.mxu0 0.0
    %4416 = vmatprep.subr.mxu0 0.0
    %4417 = vmatpush1.msra.mxu0 0.0
    %4418 = vmatprep.subr.mxu0 0.0
    %4419 = vmatpush1.msra.mxu0 0.0
    %4420 = vmatprep.subr.mxu0 0.0
    %4421 = vmatpush1.msra.mxu0 0.0
    %4422 = vmatprep.subr.mxu0 0.0
    %4423 = vmatpush1.msra.mxu0 0.0
    %4424 = vmatprep.subr.mxu0 0.0
    %4425 = vmatpush1.msra.mxu0 0.0
    %4426 = vmatprep.subr.mxu0 0.0
    %4427 = vmatpush1.msra.mxu0 0.0
    %4428 = vmatprep.subr.mxu0 0.0
    %4429 = vmatpush1.msra.mxu0 0.0
    %4430 = vmatprep.subr.mxu0 0.0
    %4431 = vmatpush1.msra.mxu0 0.0
    %4432 = vmatprep.subr.mxu0 0.0
    %4433 = vmatpush1.msra.mxu0 0.0
    %4434 = vmatprep.subr.mxu0 0.0
    %4435 = vmatpush1.msra.mxu0 0.0
    %4436 = vmatprep.subr.mxu0 0.0
    %4437 = vmatpush1.msra.mxu0 0.0
    %4438 = vmatprep.subr.mxu0 0.0
    %4439 = vmatpush1.msra.mxu0 0.0
    %4440 = vmatprep.subr.mxu0 0.0
    %4441 = vmatpush1.msra.mxu0 0.0
    %4442 = vmatprep.subr.mxu0 0.0
    %4443 = vmatpush1.msra.mxu0 0.0
    %4444 = vmatprep.subr.mxu0 0.0
    %4445 = vmatpush1.msra.mxu0 0.0
    %4446 = vmatprep.subr.mxu0 0.0
    %4447 = vmatpush1.msra.mxu0 0.0
    %4448 = vmatprep.subr.mxu0 0.0
    %4449 = vmatpush1.msra.mxu0 0.0
    %4450 = vmatprep.subr.mxu0 0.0
    %4451 = vmatpush1.msra.mxu0 0.0
    %4452 = vmatprep.subr.mxu0 0.0
    %4453 = vmatpush1.msra.mxu0 0.0
    %4454 = vmatprep.subr.mxu0 0.0
    %4455 = vmatpush1.msra.mxu0 0.0
    %4456 = vmatprep.subr.mxu0 0.0
    %4457 = vmatpush1.msra.mxu0 0.0
    %4458 = vmatprep.mubr.f32.mxu0 0.0
    %4459 = vmatmul.mubr.f32.gmra.mrb[0].mxu0 %v4392
    %v4460 = vpop.f32.mrb[0].mxu0
    %v4461 = vadd.f32 0.0, %v4460
    %v4462 = vpop.f32.mrb[0].mxu0
    %4463 = vdwg.mxu0
    %4465 = vset.pattern.permute.xlu0 0
    %4466 = vperm.xlu0 %4465, %v4381
    %v4467 = vpop.permute.xlu0 %4466
    %v4468 = vlaneseq
    %v4469 = vshrl.u32 %v4468, 7
    %v4470 = vsub.s32 %v1370, %v4469
    %v4471 = vrot.slane %v4467, %v4470
    %v4472 = vsel %vm1622, %v4471, 0
    %4474 = vmatprep.subr.mxu0 0.0
    %4475 = vmatpush1.msra.mxu0 %v4383
    %4476 = vmatprep.subr.mxu0 0.0
    %4477 = vmatpush1.msra.mxu0 0.0
    %4478 = vmatprep.subr.mxu0 0.0
    %4479 = vmatpush1.msra.mxu0 0.0
    %4480 = vmatprep.subr.mxu0 0.0
    %4481 = vmatpush1.msra.mxu0 0.0
    %4482 = vmatprep.subr.mxu0 0.0
    %4483 = vmatpush1.msra.mxu0 0.0
    %4484 = vmatprep.subr.mxu0 0.0
    %4485 = vmatpush1.msra.mxu0 0.0
    %4486 = vmatprep.subr.mxu0 0.0
    %4487 = vmatpush1.msra.mxu0 0.0
    %4488 = vmatprep.subr.mxu0 0.0
    %4489 = vmatpush1.msra.mxu0 0.0
    %4490 = vmatprep.subr.mxu0 0.0
    %4491 = vmatpush1.msra.mxu0 0.0
    %4492 = vmatprep.subr.mxu0 0.0
    %4493 = vmatpush1.msra.mxu0 0.0
    %4494 = vmatprep.subr.mxu0 0.0
    %4495 = vmatpush1.msra.mxu0 0.0
    %4496 = vmatprep.subr.mxu0 0.0
    %4497 = vmatpush1.msra.mxu0 0.0
    %4498 = vmatprep.subr.mxu0 0.0
    %4499 = vmatpush1.msra.mxu0 0.0
    %4500 = vmatprep.subr.mxu0 0.0
    %4501 = vmatpush1.msra.mxu0 0.0
    %4502 = vmatprep.subr.mxu0 0.0
    %4503 = vmatpush1.msra.mxu0 0.0
    %4504 = vmatprep.subr.mxu0 0.0
    %4505 = vmatpush1.msra.mxu0 0.0
    %4506 = vmatprep.subr.mxu0 0.0
    %4507 = vmatpush1.msra.mxu0 0.0
    %4508 = vmatprep.subr.mxu0 0.0
    %4509 = vmatpush1.msra.mxu0 0.0
    %4510 = vmatprep.subr.mxu0 0.0
    %4511 = vmatpush1.msra.mxu0 0.0
    %4512 = vmatprep.subr.mxu0 0.0
    %4513 = vmatpush1.msra.mxu0 0.0
    %4514 = vmatprep.subr.mxu0 0.0
    %4515 = vmatpush1.msra.mxu0 0.0
    %4516 = vmatprep.subr.mxu0 0.0
    %4517 = vmatpush1.msra.mxu0 0.0
    %4518 = vmatprep.subr.mxu0 0.0
    %4519 = vmatpush1.msra.mxu0 0.0
    %4520 = vmatprep.subr.mxu0 0.0
    %4521 = vmatpush1.msra.mxu0 0.0
    %4522 = vmatprep.subr.mxu0 0.0
    %4523 = vmatpush1.msra.mxu0 0.0
    %4524 = vmatprep.subr.mxu0 0.0
    %4525 = vmatpush1.msra.mxu0 0.0
    %4526 = vmatprep.subr.mxu0 0.0
    %4527 = vmatpush1.msra.mxu0 0.0
    %4528 = vmatprep.subr.mxu0 0.0
    %4529 = vmatpush1.msra.mxu0 0.0
    %4530 = vmatprep.subr.mxu0 0.0
    %4531 = vmatpush1.msra.mxu0 0.0
    %4532 = vmatprep.subr.mxu0 0.0
    %4533 = vmatpush1.msra.mxu0 0.0
    %4534 = vmatprep.subr.mxu0 0.0
    %4535 = vmatpush1.msra.mxu0 0.0
    %4536 = vmatprep.subr.mxu0 0.0
    %4537 = vmatpush1.msra.mxu0 0.0
    %4538 = vmatprep.mubr.f32.mxu0 0.0
    %4539 = vmatmul.mubr.f32.gmra.mrb[0].mxu0 %v4472
    %v4540 = vpop.f32.mrb[0].mxu0
    %v4541 = vadd.f32 0.0, %v4540
    %v4542 = vpop.f32.mrb[0].mxu0
    %4543 = vdwg.mxu0
    %v4544 = vpack.c.bf16 %v4461, %v4461
    %v4545 = vpack.c.bf16 %v4541, %v4541
    %v4546 = vld [vmem:[#allocation3 + $0x6] sm:$0x1]
    %v4547 = vld [vmem:[#allocation3 + $0xe] sm:$0x1]
    %v4550 = vunpack.c.l.b16 %v4544
    %v4551 = vunpack.c.l.b16 %v4545
    %v4552 = vrot.slane %v4551, 7
    %v4553 = vsel %vm468, %v4552, %v4550
    %v4554 = vpack.c.b16 %v4553, %v4553
    %v4557 = vrot.slane %v4547, 7
    %v4558 = vsel %vm468, %v4557, %v4546
    %v4561 = vsel %vm350, %v4554, 0
    %4563 = vmatprep.subr.bf16.mxu0 0
    %4564 = vmatpush1.bf16.msra.mxu0 %v1794
    %4565 = vmatprep.subr.bf16.mxu0 0
    %4566 = vmatpush1.bf16.msra.mxu0 %v1795
    %4567 = vmatprep.subr.bf16.mxu0 0
    %4568 = vmatpush1.bf16.msra.mxu0 0
    %4569 = vmatprep.subr.bf16.mxu0 0
    %4570 = vmatpush1.bf16.msra.mxu0 0
    %4571 = vmatprep.subr.bf16.mxu0 0
    %4572 = vmatpush1.bf16.msra.mxu0 0
    %4573 = vmatprep.subr.bf16.mxu0 0
    %4574 = vmatpush1.bf16.msra.mxu0 0
    %4575 = vmatprep.subr.bf16.mxu0 0
    %4576 = vmatpush1.bf16.msra.mxu0 0
    %4577 = vmatprep.subr.bf16.mxu0 0
    %4578 = vmatpush1.bf16.msra.mxu0 0
    %4579 = vmatprep.subr.bf16.mxu0 0
    %4580 = vmatpush1.bf16.msra.mxu0 0
    %4581 = vmatprep.subr.bf16.mxu0 0
    %4582 = vmatpush1.bf16.msra.mxu0 0
    %4583 = vmatprep.subr.bf16.mxu0 0
    %4584 = vmatpush1.bf16.msra.mxu0 0
    %4585 = vmatprep.subr.bf16.mxu0 0
    %4586 = vmatpush1.bf16.msra.mxu0 0
    %4587 = vmatprep.subr.bf16.mxu0 0
    %4588 = vmatpush1.bf16.msra.mxu0 0
    %4589 = vmatprep.subr.bf16.mxu0 0
    %4590 = vmatpush1.bf16.msra.mxu0 0
    %4591 = vmatprep.subr.bf16.mxu0 0
    %4592 = vmatpush1.bf16.msra.mxu0 0
    %4593 = vmatprep.subr.bf16.mxu0 0
    %4594 = vmatpush1.bf16.msra.mxu0 0
    %4595 = vmatprep.mubr.bf16.mxu0 0
    %4596 = vmatmul.mubr.bf16.gmra.mrb[0].mxu0 %v4561
    %v4597 = vpop.f32.mrb[0].mxu0
    %v4598 = vadd.f32 %v4558, %v4597
    %v4599 = vpop.f32.mrb[0].mxu0
    %v4600 = vpop.f32.mrb[0].mxu0
    %v4601 = vpop.f32.mrb[0].mxu0
    %4602 = vdwg.mxu0
    %4604 = vrot.lane.b32.xlu0 %v4259, 96
    %v4605 = vpop.permute.xlu0 %4604
    %v4607 = vadd.f32 %v4598, %v4605
    %v4608 = vxor.u32 %v4607, 2147483648
    %v4609 = vmul.f32 %v4608, 1.442695
    %v4610 = vpow.pop %v4609
    %v4611 = vadd.f32 %v4610, 1.0
    %v4612 = vrcp.pop %v4611
    %v4613 = vmul.f32 1.0, %v4612
    %4614 = vrot.lane.b32.xlu0 %v4259, 32
    %v4615 = vpop.permute.xlu0 %4614
    %v4617 = vmul.f32 %v4613, %v4615
    %4619 = vrot.lane.b32.xlu0 %v4617, 64
    %v4620 = vpop.permute.xlu0 %4619
    %v4622 = vadd.f32 %v4598, %v4620
    %v4623 = vtanh.pop %v4622
    %v4624 = vsub.f32 1.0, %v4613
    %4626 = vrot.lane.b32.xlu0 %v4623, 96
    %v4627 = vpop.permute.xlu0 %4626
    %v4629 = vmul.f32 %v4624, %v4627
    %v4630 = vmul.f32 %v4613, %v4172
    %v4631 = vadd.f32 %v4629, %v4630
    %v4634 = vunpack.c.l.s4 1966171168
    %v4635 = vunpack.c.0.s8 %v4634
    %v4636 = vlaneseq
    %v4637 = vshrl.u32 %v4636, 7
    %v4638 = vsub.s32 %v4635, %v4637
    %v4639 = vrot.slane %v4631, %v4638
    %v4640 = vcombine.high %v4639, %v4639
    %v4642 = vunpack.c.l.s4 1966171168
    %v4643 = vunpack.c.0.s8 %v4642
    %v4644 = vlaneseq
    %v4645 = vshrl.u32 %v4644, 7
    %v4646 = vsub.s32 %v4643, %v4645
    %v4647 = vrot.slane %v4639, %v4646
    %v4649 = vunpack.c.l.s4 1966171168
    %v4650 = vunpack.c.0.s8 %v4649
    %v4651 = vlaneseq
    %v4652 = vshrl.u32 %v4651, 7
    %v4653 = vsub.s32 %v4650, %v4652
    %v4654 = vrot.slane %v4640, %v4653
    %v4655 = vlaneseq
    %v4656 = vshrl.u32 %v4655, 7
    %v4657 = vsub.s32 0, %v4656
    %v4658 = vrot.slane %v4647, %v4657
    %v4659 = vlaneseq
    %v4660 = vshrl.u32 %v4659, 7
    %v4661 = vsub.s32 0, %v4660
    %v4662 = vrot.slane %v4654, %v4661
    %4663 = vrot.lane.b32.xlu0 %v4658, 96
    %v4664 = vpop.permute.xlu0 %4663
    %4665 = vrot.lane.b32.xlu0 %v4662, 96
    %v4666 = vpop.permute.xlu0 %4665
    %4669 = vst.msk [vmem:[#allocation5 + $0x6] sm:$0x1] %vm458, %v4664
    %4670 = vst.msk [vmem:[#allocation5 + $0xe] sm:$0x1] %vm458, %v4666
    %v4671 = vpack.c.bf16 %v4631, %v4631
    %4673 = vrot.lane.b32.xlu0 %v4671, 96
    %v4674 = vpop.permute.xlu0 %4673
    %v4676 = vsel %vm350, %v4674, 0
    %4678 = vmatprep.subr.bf16.mxu0 0
    %4679 = vmatpush1.bf16.msra.mxu0 %v1416
    %4680 = vmatprep.subr.bf16.mxu0 0
    %4681 = vmatpush1.bf16.msra.mxu0 %v1417
    %4682 = vmatprep.subr.bf16.mxu0 0
    %4683 = vmatpush1.bf16.msra.mxu0 0
    %4684 = vmatprep.subr.bf16.mxu0 0
    %4685 = vmatpush1.bf16.msra.mxu0 0
    %4686 = vmatprep.subr.bf16.mxu0 0
    %4687 = vmatpush1.bf16.msra.mxu0 0
    %4688 = vmatprep.subr.bf16.mxu0 0
    %4689 = vmatpush1.bf16.msra.mxu0 0
    %4690 = vmatprep.subr.bf16.mxu0 0
    %4691 = vmatpush1.bf16.msra.mxu0 0
    %4692 = vmatprep.subr.bf16.mxu0 0
    %4693 = vmatpush1.bf16.msra.mxu0 0
    %4694 = vmatprep.subr.bf16.mxu0 0
    %4695 = vmatpush1.bf16.msra.mxu0 0
    %4696 = vmatprep.subr.bf16.mxu0 0
    %4697 = vmatpush1.bf16.msra.mxu0 0
    %4698 = vmatprep.subr.bf16.mxu0 0
    %4699 = vmatpush1.bf16.msra.mxu0 0
    %4700 = vmatprep.subr.bf16.mxu0 0
    %4701 = vmatpush1.bf16.msra.mxu0 0
    %4702 = vmatprep.subr.bf16.mxu0 0
    %4703 = vmatpush1.bf16.msra.mxu0 0
    %4704 = vmatprep.subr.bf16.mxu0 0
    %4705 = vmatpush1.bf16.msra.mxu0 0
    %4706 = vmatprep.subr.bf16.mxu0 0
    %4707 = vmatpush1.bf16.msra.mxu0 0
    %4708 = vmatprep.subr.bf16.mxu0 0
    %4709 = vmatpush1.bf16.msra.mxu0 0
    %4710 = vmatprep.mubr.bf16.mxu0 0
    %4711 = vmatmul.mubr.bf16.gmra.mrb[0].mxu0 %v4676
    %v4712 = vpop.f32.mrb[0].mxu0
    %v4713 = vadd.f32 0.0, %v4712
    %v4714 = vpop.f32.mrb[0].mxu0
    %v4715 = vpop.f32.mrb[0].mxu0
    %v4716 = vpop.f32.mrb[0].mxu0
    %4717 = vdwg.mxu0
    %v4718 = vadd.f32 %v4713, %v1469
    %v4719 = vld [vmem:[#allocation4] sm:$0xff]
    %v4720 = vld [vmem:[#allocation4 + $0x8] sm:$0xff]
    %v4723 = vunpack.c.l.s4 1966171168
    %v4724 = vunpack.c.0.s8 %v4723
    %v4725 = vlaneseq
    %v4726 = vshrl.u32 %v4725, 7
    %v4727 = vsub.s32 %v4724, %v4726
    %v4728 = vrot.slane %v4713, %v4727
    %v4729 = vcombine.high %v4728, %v4728
    %v4731 = vunpack.c.l.s4 1966171168
    %v4732 = vunpack.c.0.s8 %v4731
    %v4733 = vlaneseq
    %v4734 = vshrl.u32 %v4733, 7
    %v4735 = vsub.s32 %v4732, %v4734
    %v4736 = vrot.slane %v4728, %v4735
    %v4738 = vunpack.c.l.s4 1966171168
    %v4739 = vunpack.c.0.s8 %v4738
    %v4740 = vlaneseq
    %v4741 = vshrl.u32 %v4740, 7
    %v4742 = vsub.s32 %v4739, %v4741
    %v4743 = vrot.slane %v4729, %v4742
    %v4744 = vlaneseq
    %v4745 = vshrl.u32 %v4744, 7
    %v4746 = vsub.s32 0, %v4745
    %v4747 = vrot.slane %v4736, %v4746
    %v4748 = vlaneseq
    %v4749 = vshrl.u32 %v4748, 7
    %v4750 = vsub.s32 0, %v4749
    %v4751 = vrot.slane %v4743, %v4750
    %v4754 = vadd.f32 %v4719, %v4747
    %v4755 = vadd.f32 %v4720, %v4751
    %v4756 = vtanh.pop %v4754
    %v4757 = vtanh.pop %v4755
    %v4758 = vmul.f32 %v4756, %v1386
    %v4759 = vmul.f32 %v4757, %v1386
    %v4760 = vsel %vm350, %v4758, 0.0
    %4761 = vadd.xlane.f32.xlu0 %v4760
    %v4762 = vpop.xlane.xlu0 %4761
    %v4763 = vsel %vm350, %v4759, 0.0
    %4764 = vadd.xlane.f32.xlu0 %v4763
    %v4765 = vpop.xlane.xlu0 %4764
    %v4766 = vadd.f32 %v4762, %v1526
    %v4767 = vadd.f32 %v4765, %v1533
    %4770 = vset.pattern.permute.xlu0 0
    %4771 = vperm.xlu0 %4770, %v4766
    %v4772 = vpop.permute.xlu0 %4771
    %4773 = vset.pattern.permute.xlu0 0
    %4774 = vperm.xlu0 %4773, %v4767
    %v4775 = vpop.permute.xlu0 %4774
    %v4776 = vlaneseq
    %v4777 = vshrl.u32 %v4776, 7
    %v4778 = vsub.s32 %v1370, %v4777
    %v4779 = vrot.slane %v4772, %v4778
    %v4780 = vlaneseq
    %v4781 = vshrl.u32 %v4780, 7
    %v4782 = vsub.s32 %v1370, %v4781
    %v4783 = vrot.slane %v4775, %v4782
    %v4784 = vsel %vm468, %v4783, %v4779
    %v4786 = vsel %vm1556, %v4784, -inf
    %4787 = vmax.xlane.f32.xlu0 %v4786
    %v4788 = vpop.xlane.xlu0 %4787
    %v4790 = vlaneseq
    %v4791 = vshrl.u32 %v4790, 7
    %v4792 = vsub.s32 0, %v4791
    %v4793 = vrot.slane %v4788, %v4792
    %v4794 = vlaneseq
    %v4795 = vshrl.u32 %v4794, 7
    %v4796 = vsub.s32 1, %v4795
    %v4797 = vrot.slane %v4788, %v4796
    %v4800 = vsub.f32 %v4766, %v4793
    %v4801 = vsub.f32 %v4767, %v4797
    %v4802 = vmul.f32 %v4800, 1.442695
    %v4803 = vpow.pop %v4802
    %v4804 = vmul.f32 %v4801, 1.442695
    %v4805 = vpow.pop %v4804
    %4808 = vset.pattern.permute.xlu0 0
    %4809 = vperm.xlu0 %4808, %v4803
    %v4810 = vpop.permute.xlu0 %4809
    %4811 = vset.pattern.permute.xlu0 0
    %4812 = vperm.xlu0 %4811, %v4805
    %v4813 = vpop.permute.xlu0 %4812
    %v4814 = vlaneseq
    %v4815 = vshrl.u32 %v4814, 7
    %v4816 = vsub.s32 %v1370, %v4815
    %v4817 = vrot.slane %v4810, %v4816
    %v4818 = vlaneseq
    %v4819 = vshrl.u32 %v4818, 7
    %v4820 = vsub.s32 %v1370, %v4819
    %v4821 = vrot.slane %v4813, %v4820
    %v4822 = vsel %vm468, %v4821, %v4817
    %v4824 = vsel %vm1556, %v4822, 0.0
    %4825 = vadd.xlane.f32.xlu0 %v4824
    %v4826 = vpop.xlane.xlu0 %4825
    %v4827 = vrcp.pop %v4826
    %v4829 = vlaneseq
    %v4830 = vshrl.u32 %v4829, 7
    %v4831 = vsub.s32 0, %v4830
    %v4832 = vrot.slane %v4827, %v4831
    %v4833 = vlaneseq
    %v4834 = vshrl.u32 %v4833, 7
    %v4835 = vsub.s32 1, %v4834
    %v4836 = vrot.slane %v4827, %v4835
    %v4839 = vmul.f32 %v4803, %v4832
    %v4840 = vmul.f32 %v4805, %v4836
    %v4841 = vld [vmem:[#allocation26] sm:$0xff]
    %v4842 = vld [vmem:[#allocation26 + $0x8] sm:$0xff]
    %4844 = vset.pattern.permute.xlu0 0
    %4845 = vperm.xlu0 %4844, %v4839
    %v4846 = vpop.permute.xlu0 %4845
    %v4847 = vlaneseq
    %v4848 = vshrl.u32 %v4847, 7
    %v4849 = vsub.s32 %v1370, %v4848
    %v4850 = vrot.slane %v4846, %v4849
    %v4851 = vsel %vm1622, %v4850, 0
    %4853 = vmatprep.subr.mxu0 0.0
    %4854 = vmatpush1.msra.mxu0 %v4841
    %4855 = vmatprep.subr.mxu0 0.0
    %4856 = vmatpush1.msra.mxu0 0.0
    %4857 = vmatprep.subr.mxu0 0.0
    %4858 = vmatpush1.msra.mxu0 0.0
    %4859 = vmatprep.subr.mxu0 0.0
    %4860 = vmatpush1.msra.mxu0 0.0
    %4861 = vmatprep.subr.mxu0 0.0
    %4862 = vmatpush1.msra.mxu0 0.0
    %4863 = vmatprep.subr.mxu0 0.0
    %4864 = vmatpush1.msra.mxu0 0.0
    %4865 = vmatprep.subr.mxu0 0.0
    %4866 = vmatpush1.msra.mxu0 0.0
    %4867 = vmatprep.subr.mxu0 0.0
    %4868 = vmatpush1.msra.mxu0 0.0
    %4869 = vmatprep.subr.mxu0 0.0
    %4870 = vmatpush1.msra.mxu0 0.0
    %4871 = vmatprep.subr.mxu0 0.0
    %4872 = vmatpush1.msra.mxu0 0.0
    %4873 = vmatprep.subr.mxu0 0.0
    %4874 = vmatpush1.msra.mxu0 0.0
    %4875 = vmatprep.subr.mxu0 0.0
    %4876 = vmatpush1.msra.mxu0 0.0
    %4877 = vmatprep.subr.mxu0 0.0
    %4878 = vmatpush1.msra.mxu0 0.0
    %4879 = vmatprep.subr.mxu0 0.0
    %4880 = vmatpush1.msra.mxu0 0.0
    %4881 = vmatprep.subr.mxu0 0.0
    %4882 = vmatpush1.msra.mxu0 0.0
    %4883 = vmatprep.subr.mxu0 0.0
    %4884 = vmatpush1.msra.mxu0 0.0
    %4885 = vmatprep.subr.mxu0 0.0
    %4886 = vmatpush1.msra.mxu0 0.0
    %4887 = vmatprep.subr.mxu0 0.0
    %4888 = vmatpush1.msra.mxu0 0.0
    %4889 = vmatprep.subr.mxu0 0.0
    %4890 = vmatpush1.msra.mxu0 0.0
    %4891 = vmatprep.subr.mxu0 0.0
    %4892 = vmatpush1.msra.mxu0 0.0
    %4893 = vmatprep.subr.mxu0 0.0
    %4894 = vmatpush1.msra.mxu0 0.0
    %4895 = vmatprep.subr.mxu0 0.0
    %4896 = vmatpush1.msra.mxu0 0.0
    %4897 = vmatprep.subr.mxu0 0.0
    %4898 = vmatpush1.msra.mxu0 0.0
    %4899 = vmatprep.subr.mxu0 0.0
    %4900 = vmatpush1.msra.mxu0 0.0
    %4901 = vmatprep.subr.mxu0 0.0
    %4902 = vmatpush1.msra.mxu0 0.0
    %4903 = vmatprep.subr.mxu0 0.0
    %4904 = vmatpush1.msra.mxu0 0.0
    %4905 = vmatprep.subr.mxu0 0.0
    %4906 = vmatpush1.msra.mxu0 0.0
    %4907 = vmatprep.subr.mxu0 0.0
    %4908 = vmatpush1.msra.mxu0 0.0
    %4909 = vmatprep.subr.mxu0 0.0
    %4910 = vmatpush1.msra.mxu0 0.0
    %4911 = vmatprep.subr.mxu0 0.0
    %4912 = vmatpush1.msra.mxu0 0.0
    %4913 = vmatprep.subr.mxu0 0.0
    %4914 = vmatpush1.msra.mxu0 0.0
    %4915 = vmatprep.subr.mxu0 0.0
    %4916 = vmatpush1.msra.mxu0 0.0
    %4917 = vmatprep.mubr.f32.mxu0 0.0
    %4918 = vmatmul.mubr.f32.gmra.mrb[0].mxu0 %v4851
    %v4919 = vpop.f32.mrb[0].mxu0
    %v4920 = vadd.f32 0.0, %v4919
    %v4921 = vpop.f32.mrb[0].mxu0
    %4922 = vdwg.mxu0
    %4924 = vset.pattern.permute.xlu0 0
    %4925 = vperm.xlu0 %4924, %v4840
    %v4926 = vpop.permute.xlu0 %4925
    %v4927 = vlaneseq
    %v4928 = vshrl.u32 %v4927, 7
    %v4929 = vsub.s32 %v1370, %v4928
    %v4930 = vrot.slane %v4926, %v4929
    %v4931 = vsel %vm1622, %v4930, 0
    %4933 = vmatprep.subr.mxu0 0.0
    %4934 = vmatpush1.msra.mxu0 %v4842
    %4935 = vmatprep.subr.mxu0 0.0
    %4936 = vmatpush1.msra.mxu0 0.0
    %4937 = vmatprep.subr.mxu0 0.0
    %4938 = vmatpush1.msra.mxu0 0.0
    %4939 = vmatprep.subr.mxu0 0.0
    %4940 = vmatpush1.msra.mxu0 0.0
    %4941 = vmatprep.subr.mxu0 0.0
    %4942 = vmatpush1.msra.mxu0 0.0
    %4943 = vmatprep.subr.mxu0 0.0
    %4944 = vmatpush1.msra.mxu0 0.0
    %4945 = vmatprep.subr.mxu0 0.0
    %4946 = vmatpush1.msra.mxu0 0.0
    %4947 = vmatprep.subr.mxu0 0.0
    %4948 = vmatpush1.msra.mxu0 0.0
    %4949 = vmatprep.subr.mxu0 0.0
    %4950 = vmatpush1.msra.mxu0 0.0
    %4951 = vmatprep.subr.mxu0 0.0
    %4952 = vmatpush1.msra.mxu0 0.0
    %4953 = vmatprep.subr.mxu0 0.0
    %4954 = vmatpush1.msra.mxu0 0.0
    %4955 = vmatprep.subr.mxu0 0.0
    %4956 = vmatpush1.msra.mxu0 0.0
    %4957 = vmatprep.subr.mxu0 0.0
    %4958 = vmatpush1.msra.mxu0 0.0
    %4959 = vmatprep.subr.mxu0 0.0
    %4960 = vmatpush1.msra.mxu0 0.0
    %4961 = vmatprep.subr.mxu0 0.0
    %4962 = vmatpush1.msra.mxu0 0.0
    %4963 = vmatprep.subr.mxu0 0.0
    %4964 = vmatpush1.msra.mxu0 0.0
    %4965 = vmatprep.subr.mxu0 0.0
    %4966 = vmatpush1.msra.mxu0 0.0
    %4967 = vmatprep.subr.mxu0 0.0
    %4968 = vmatpush1.msra.mxu0 0.0
    %4969 = vmatprep.subr.mxu0 0.0
    %4970 = vmatpush1.msra.mxu0 0.0
    %4971 = vmatprep.subr.mxu0 0.0
    %4972 = vmatpush1.msra.mxu0 0.0
    %4973 = vmatprep.subr.mxu0 0.0
    %4974 = vmatpush1.msra.mxu0 0.0
    %4975 = vmatprep.subr.mxu0 0.0
    %4976 = vmatpush1.msra.mxu0 0.0
    %4977 = vmatprep.subr.mxu0 0.0
    %4978 = vmatpush1.msra.mxu0 0.0
    %4979 = vmatprep.subr.mxu0 0.0
    %4980 = vmatpush1.msra.mxu0 0.0
    %4981 = vmatprep.subr.mxu0 0.0
    %4982 = vmatpush1.msra.mxu0 0.0
    %4983 = vmatprep.subr.mxu0 0.0
    %4984 = vmatpush1.msra.mxu0 0.0
    %4985 = vmatprep.subr.mxu0 0.0
    %4986 = vmatpush1.msra.mxu0 0.0
    %4987 = vmatprep.subr.mxu0 0.0
    %4988 = vmatpush1.msra.mxu0 0.0
    %4989 = vmatprep.subr.mxu0 0.0
    %4990 = vmatpush1.msra.mxu0 0.0
    %4991 = vmatprep.subr.mxu0 0.0
    %4992 = vmatpush1.msra.mxu0 0.0
    %4993 = vmatprep.subr.mxu0 0.0
    %4994 = vmatpush1.msra.mxu0 0.0
    %4995 = vmatprep.subr.mxu0 0.0
    %4996 = vmatpush1.msra.mxu0 0.0
    %4997 = vmatprep.mubr.f32.mxu0 0.0
    %4998 = vmatmul.mubr.f32.gmra.mrb[0].mxu0 %v4931
    %v4999 = vpop.f32.mrb[0].mxu0
    %v5000 = vadd.f32 0.0, %v4999
    %v5001 = vpop.f32.mrb[0].mxu0
    %5002 = vdwg.mxu0
    %v5003 = vpack.c.bf16 %v4920, %v4920
    %v5004 = vpack.c.bf16 %v5000, %v5000
    %v5005 = vld [vmem:[#allocation3 + $0x7] sm:$0x1]
    %v5006 = vld [vmem:[#allocation3 + $0xf] sm:$0x1]
    %v5009 = vunpack.c.l.b16 %v5003
    %v5010 = vunpack.c.l.b16 %v5004
    %v5011 = vrot.slane %v5010, 7
    %v5012 = vsel %vm468, %v5011, %v5009
    %v5013 = vpack.c.b16 %v5012, %v5012
    %v5016 = vrot.slane %v5006, 7
    %v5017 = vsel %vm468, %v5016, %v5005
    %v5020 = vsel %vm350, %v5013, 0
    %5022 = vmatprep.subr.bf16.mxu0 0
    %5023 = vmatpush1.bf16.msra.mxu0 %v1794
    %5024 = vmatprep.subr.bf16.mxu0 0
    %5025 = vmatpush1.bf16.msra.mxu0 %v1795
    %5026 = vmatprep.subr.bf16.mxu0 0
    %5027 = vmatpush1.bf16.msra.mxu0 0
    %5028 = vmatprep.subr.bf16.mxu0 0
    %5029 = vmatpush1.bf16.msra.mxu0 0
    %5030 = vmatprep.subr.bf16.mxu0 0
    %5031 = vmatpush1.bf16.msra.mxu0 0
    %5032 = vmatprep.subr.bf16.mxu0 0
    %5033 = vmatpush1.bf16.msra.mxu0 0
    %5034 = vmatprep.subr.bf16.mxu0 0
    %5035 = vmatpush1.bf16.msra.mxu0 0
    %5036 = vmatprep.subr.bf16.mxu0 0
    %5037 = vmatpush1.bf16.msra.mxu0 0
    %5038 = vmatprep.subr.bf16.mxu0 0
    %5039 = vmatpush1.bf16.msra.mxu0 0
    %5040 = vmatprep.subr.bf16.mxu0 0
    %5041 = vmatpush1.bf16.msra.mxu0 0
    %5042 = vmatprep.subr.bf16.mxu0 0
    %5043 = vmatpush1.bf16.msra.mxu0 0
    %5044 = vmatprep.subr.bf16.mxu0 0
    %5045 = vmatpush1.bf16.msra.mxu0 0
    %5046 = vmatprep.subr.bf16.mxu0 0
    %5047 = vmatpush1.bf16.msra.mxu0 0
    %5048 = vmatprep.subr.bf16.mxu0 0
    %5049 = vmatpush1.bf16.msra.mxu0 0
    %5050 = vmatprep.subr.bf16.mxu0 0
    %5051 = vmatpush1.bf16.msra.mxu0 0
    %5052 = vmatprep.subr.bf16.mxu0 0
    %5053 = vmatpush1.bf16.msra.mxu0 0
    %5054 = vmatprep.mubr.bf16.mxu0 0
    %5055 = vmatmul.mubr.bf16.gmra.mrb[0].mxu0 %v5020
    %v5056 = vpop.f32.mrb[0].mxu0
    %v5057 = vadd.f32 %v5017, %v5056
    %v5058 = vpop.f32.mrb[0].mxu0
    %v5059 = vpop.f32.mrb[0].mxu0
    %v5060 = vpop.f32.mrb[0].mxu0
    %5061 = vdwg.mxu0
    %5063 = vrot.lane.b32.xlu0 %v4718, 96
    %v5064 = vpop.permute.xlu0 %5063
    %v5066 = vadd.f32 %v5057, %v5064
    %v5067 = vxor.u32 %v5066, 2147483648
    %v5068 = vmul.f32 %v5067, 1.442695
    %v5069 = vpow.pop %v5068
    %v5070 = vadd.f32 %v5069, 1.0
    %v5071 = vrcp.pop %v5070
    %v5072 = vmul.f32 1.0, %v5071
    %5073 = vrot.lane.b32.xlu0 %v4718, 32
    %v5074 = vpop.permute.xlu0 %5073
    %v5076 = vmul.f32 %v5072, %v5074
    %5078 = vrot.lane.b32.xlu0 %v5076, 64
    %v5079 = vpop.permute.xlu0 %5078
    %v5081 = vadd.f32 %v5057, %v5079
    %v5082 = vtanh.pop %v5081
    %v5083 = vsub.f32 1.0, %v5072
    %5085 = vrot.lane.b32.xlu0 %v5082, 96
    %v5086 = vpop.permute.xlu0 %5085
    %v5088 = vmul.f32 %v5083, %v5086
    %v5089 = vmul.f32 %v5072, %v4631
    %v5090 = vadd.f32 %v5088, %v5089
    %v5093 = vunpack.c.l.s4 1966171168
    %v5094 = vunpack.c.0.s8 %v5093
    %v5095 = vlaneseq
    %v5096 = vshrl.u32 %v5095, 7
    %v5097 = vsub.s32 %v5094, %v5096
    %v5098 = vrot.slane %v5090, %v5097
    %v5099 = vcombine.high %v5098, %v5098
    %v5101 = vunpack.c.l.s4 1966171168
    %v5102 = vunpack.c.0.s8 %v5101
    %v5103 = vlaneseq
    %v5104 = vshrl.u32 %v5103, 7
    %v5105 = vsub.s32 %v5102, %v5104
    %v5106 = vrot.slane %v5098, %v5105
    %v5108 = vunpack.c.l.s4 1966171168
    %v5109 = vunpack.c.0.s8 %v5108
    %v5110 = vlaneseq
    %v5111 = vshrl.u32 %v5110, 7
    %v5112 = vsub.s32 %v5109, %v5111
    %v5113 = vrot.slane %v5099, %v5112
    %v5114 = vlaneseq
    %v5115 = vshrl.u32 %v5114, 7
    %v5116 = vsub.s32 0, %v5115
    %v5117 = vrot.slane %v5106, %v5116
    %v5118 = vlaneseq
    %v5119 = vshrl.u32 %v5118, 7
    %v5120 = vsub.s32 0, %v5119
    %v5121 = vrot.slane %v5113, %v5120
    %5122 = vrot.lane.b32.xlu0 %v5117, 96
    %v5123 = vpop.permute.xlu0 %5122
    %5124 = vrot.lane.b32.xlu0 %v5121, 96
    %v5125 = vpop.permute.xlu0 %5124
    %5128 = vst.msk [vmem:[#allocation5 + $0x7] sm:$0x1] %vm458, %v5123
    %5129 = vst.msk [vmem:[#allocation5 + $0xf] sm:$0x1] %vm458, %v5125
    %5130 = vrot.lane.b32.xlu0 %v5090, 96
    %v5131 = vpop.permute.xlu0 %5130
    %vm5133 = vcmask 254976
    %5134 = vst.msk [vmem:[#allocation28] sm:$0x3] %vm5133, %v5131
    %v5135 = vld [vmem:[#allocation5] sm:$0xff]
    %v5136 = vld [vmem:[#allocation5 + $0x8] sm:$0xff]
    %v5137 = vpack.c.bf16 %v5136, %v5135
    %v5138 = vld [vmem:[%s14] sm:$0xf]
    %v5139 = vld [vmem:[%s14 + $0x4] sm:$0xf]
    %v5140 = vld [vmem:[%s14 + $0x8] sm:$0xf]
    %v5141 = vld [vmem:[%s14 + $0xc] sm:$0xf]
    %v5142 = vld [vmem:[%s15] sm:$0x1]
    %v5144 = vlaneseq
    %v5145 = vshrl.u32 %v5144, 7
    %v5146 = vsub.s32 0, %v5145
    %v5147 = vrot.slane %v5142, %v5146
    %v5153 = vunpack.c.l.b16 %v5138
    %v5154 = vunpack.c.l.b16 %v5139
    %v5155 = vunpack.c.l.b16 %v5140
    %v5156 = vunpack.c.l.b16 %v5141
    %v5157 = vpack.c.b16 %v5154, %v5153
    %v5158 = vpack.c.b16 %v5156, %v5155
    %v5162 = vsel %vm350, %v5137, 0
    %5164 = vmatprep.subr.bf16.mxu0 0
    %5165 = vmatpush1.bf16.msra.mxu0 %v5157
    %5166 = vmatprep.subr.bf16.mxu0 0
    %5167 = vmatpush1.bf16.msra.mxu0 %v5158
    %5168 = vmatprep.subr.bf16.mxu0 0
    %5169 = vmatpush1.bf16.msra.mxu0 0
    %5170 = vmatprep.subr.bf16.mxu0 0
    %5171 = vmatpush1.bf16.msra.mxu0 0
    %5172 = vmatprep.subr.bf16.mxu0 0
    %5173 = vmatpush1.bf16.msra.mxu0 0
    %5174 = vmatprep.subr.bf16.mxu0 0
    %5175 = vmatpush1.bf16.msra.mxu0 0
    %5176 = vmatprep.subr.bf16.mxu0 0
    %5177 = vmatpush1.bf16.msra.mxu0 0
    %5178 = vmatprep.subr.bf16.mxu0 0
    %5179 = vmatpush1.bf16.msra.mxu0 0
    %5180 = vmatprep.subr.bf16.mxu0 0
    %5181 = vmatpush1.bf16.msra.mxu0 0
    %5182 = vmatprep.subr.bf16.mxu0 0
    %5183 = vmatpush1.bf16.msra.mxu0 0
    %5184 = vmatprep.subr.bf16.mxu0 0
    %5185 = vmatpush1.bf16.msra.mxu0 0
    %5186 = vmatprep.subr.bf16.mxu0 0
    %5187 = vmatpush1.bf16.msra.mxu0 0
    %5188 = vmatprep.subr.bf16.mxu0 0
    %5189 = vmatpush1.bf16.msra.mxu0 0
    %5190 = vmatprep.subr.bf16.mxu0 0
    %5191 = vmatpush1.bf16.msra.mxu0 0
    %5192 = vmatprep.subr.bf16.mxu0 0
    %5193 = vmatpush1.bf16.msra.mxu0 0
    %5194 = vmatprep.subr.bf16.mxu0 0
    %5195 = vmatpush1.bf16.msra.mxu0 0
    %5196 = vmatprep.mubr.bf16.mxu0 0
    %5197 = vmatmul.mubr.bf16.gmra.mrb[0].mxu0 %v5162
    %v5198 = vpop.f32.mrb[0].mxu0
    %v5199 = vadd.f32 %v5147, %v5198
    %v5200 = vpop.f32.mrb[0].mxu0
    %v5201 = vpop.f32.mrb[0].mxu0
    %v5202 = vadd.f32 %v5147, %v5201
    %v5203 = vpop.f32.mrb[0].mxu0
    %5204 = vdwg.mxu0
    %5205 = vst [vmem:[#allocation25] sm:$0xff] %v5199
    %5206 = vst [vmem:[#allocation25 + $0x8] sm:$0xff] %v5202
    // Predicated region
    $region102: #{tpu_custom_call.1} parent=1 // pred_check
      _
    $region103: #{tpu_custom_call.1} parent=1 // pred_check_branch
      %5208 = sbr.rel (0) target = $region105
    $region104: #{tpu_custom_call.1} parent=1 // pred_region
      %s5210 = ssub.s32 256, 256
      %5211 = vsyncadd [#allocation10], %s5210
      %s5212 = sshll.u32 [#allocation25], 4
      %s5213 = int_to_ptr.vmem [resolvable:$true] %s5212
      %5218 = dma.vmem_to_hbm [thread:$0]  %s5213, 256, %s16, [#allocation10], 128, 128, 8
    $region105: #{tpu_custom_call.1} parent=1 // pred_fallthru
      _
    // Predicated region
    $region106: #{tpu_custom_call.1} parent=1 // pred_check
      _
    $region107: #{tpu_custom_call.1} parent=1 // pred_check_branch
      %5220 = sbr.rel (0) target = $region109
    $region108: #{tpu_custom_call.1} parent=1 // pred_region
      %s5222 = ssub.s32 256, 256
      %5223 = vsyncadd [#allocation27], %s5222
      %s5224 = sshll.u32 [#allocation26], 4
      %s5225 = int_to_ptr.vmem [resolvable:$true] %s5224
      %5230 = dma.vmem_to_hbm [thread:$0]  %s5225, 256, %s17, [#allocation27], 128, 128, 8
    $region109: #{tpu_custom_call.1} parent=1 // pred_fallthru
      _
    // Predicated region
    $region110: #{tpu_custom_call.1} parent=1 // pred_check
      _
    $region111: #{tpu_custom_call.1} parent=1 // pred_check_branch
      %5232 = sbr.rel (0) target = $region113
    $region112: #{tpu_custom_call.1} parent=1 // pred_region
      %s5234 = ssub.s32 32, 32
      %5235 = vsyncadd [#allocation27], %s5234
      %s5237 = sshll.u32 [#allocation28], 4
      %s5238 = int_to_ptr.vmem [resolvable:$true] %s5237
      %5240 = dma.vmem_to_hbm [thread:$0]  %s5238, 32, %s18, [#allocation27]
    $region113: #{tpu_custom_call.1} parent=1 // pred_fallthru
      _
    // Predicated region
    $region114: #{tpu_custom_call.1} parent=1 // pred_check
      _
    $region115: #{tpu_custom_call.1} parent=1 // pred_check_branch
      %5242 = sbr.rel (0) target = $region117
    $region116: #{tpu_custom_call.1} parent=1 // pred_region
      %5243 = dma.done [#allocation10], 256
    $region117: #{tpu_custom_call.1} parent=1 // pred_fallthru
      _
    // Predicated region
    $region118: #{tpu_custom_call.1} parent=1 // pred_check
      _
    $region119: #{tpu_custom_call.1} parent=1 // pred_check_branch
      %5245 = sbr.rel (0) target = $region121
    $region120: #{tpu_custom_call.1} parent=1 // pred_region
      %5246 = dma.done [#allocation27], 256
    $region121: #{tpu_custom_call.1} parent=1 // pred_fallthru
      _
    // Predicated region
    $region122: #{tpu_custom_call.1} parent=1 // pred_check
      _
    $region123: #{tpu_custom_call.1} parent=1 // pred_check_branch
      %5248 = sbr.rel (0) target = $region125
    $region124: #{tpu_custom_call.1} parent=1 // pred_region
      %5249 = dma.done [#allocation27], 32
    $region125: #{tpu_custom_call.1} parent=1 // pred_fallthru
      _
    %5250 = vsyncpa [#allocation9], 1
    %5251 = vsyncpa [#allocation12], 1
    %5252 = vsyncpa [#allocation15], 1
    %5253 = vsyncpa [#allocation18], 1
    %5254 = vsyncpa [#allocation21], 1
    %5255 = vsyncpa [#allocation24], 1
    %5256 = vsyncpa [#allocation10], 1
    %5257 = vsyncpa [#allocation27], 1

</llo_original>
